<compile_context>
chip_gen: v7x
topology: tpu7x:2x2x1
jax: 0.10.0
libtpu: 0.0.40
codegen_flags: <defaults>
</compile_context>

<pallas_src>
import functools
import math

import jax
import jax.numpy as jnp
from jax import lax
from jax.experimental import pallas as pl
from jax.experimental.pallas import tpu as pltpu


# ---------------------------------------------------------------------------
# Fully fused forward kernel (one grid step per batch element)
# ---------------------------------------------------------------------------

def _detection_kernel(*refs, treedef, D, H):
    x_ref = refs[0]
    o_ref = refs[-1]
    p_refs = jax.tree_util.tree_unflatten(treedef, refs[1:-1])
    # All weights are resident in VMEM; load them once as values.
    w = jax.tree_util.tree_map(lambda r: r[...], p_refs)

    dh = D // H
    scale = 1.0 / math.sqrt(dh)
    trans_b = (((1,), (1,)), ((), ()))  # contract last dims (q @ k^T without transpose)

    def mha(q, k, v, wo, bo):
        """Multi-head attention on [Lq, D], [Lk, D], [Lk, D]; output proj fused per head."""
        out = None
        for h in range(H):
            lo, hi = h * dh, (h + 1) * dh
            qh = q[:, lo:hi]
            kh = k[:, lo:hi]
            vh = v[:, lo:hi]
            s = lax.dot_general(qh, kh, trans_b,
                                preferred_element_type=jnp.float32) * scale
            m = jnp.max(s, axis=-1, keepdims=True)
            e = jnp.exp(s - m)
            inv = pl.reciprocal(jnp.sum(e, axis=-1, keepdims=True), approx=True)
            pr = e * inv
            oh = jnp.dot(pr, vh, preferred_element_type=jnp.float32)          # [Lq, dh]
            contrib = jnp.dot(oh, wo[lo:hi, :],
                              preferred_element_type=jnp.float32)             # [Lq, D]
            out = contrib if out is None else out + contrib
        return out + bo

    def layer_norm(x, g, b):
        mu = jnp.mean(x, axis=-1, keepdims=True)
        var = jnp.mean((x - mu) ** 2, axis=-1, keepdims=True)
        return (x - mu) * lax.rsqrt(var + 1e-5) * g + b

    def ffn(x, w1, b1, w2, b2):
        h = jnp.maximum(jnp.dot(x, w1, preferred_element_type=jnp.float32) + b1, 0.0)
        return jnp.dot(h, w2, preferred_element_type=jnp.float32) + b2

    x = x_ref[0].astype(jnp.float32)          # [S, D]
    pos = w["pos"]                            # [S, D]
    qe = w["query"]                           # [Q, D]

    # ------------------- encoder layer (post-norm) -------------------
    enc = w["enc"]
    qk_in = x + pos
    qk = jnp.dot(qk_in, enc["wqk"], preferred_element_type=jnp.float32) + enc["bqk"]
    v = jnp.dot(x, enc["wv"], preferred_element_type=jnp.float32) + enc["bv"]
    attn = mha(qk[:, :D], qk[:, D:2 * D], v, enc["wo"], enc["bo"])
    x1 = layer_norm(x + attn, enc["ln1g"], enc["ln1b"])
    mem = layer_norm(x1 + ffn(x1, enc["w1"], enc["b1"], enc["w2"], enc["b2"]),
                     enc["ln2g"], enc["ln2b"])

    # ------------------- decoder layer (post-norm) -------------------
    dec = w["dec"]
    tgt = qe
    qkv = jnp.dot(tgt, dec["sa_wqkv"], preferred_element_type=jnp.float32) + dec["sa_bqkv"]
    sa = mha(qkv[:, :D], qkv[:, D:2 * D], qkv[:, 2 * D:3 * D],
             dec["sa_wo"], dec["sa_bo"])
    t1 = layer_norm(tgt + sa, dec["ln1g"], dec["ln1b"])
    cq = jnp.dot(t1, dec["ca_wq"], preferred_element_type=jnp.float32) + dec["ca_bq"]
    ck = jnp.dot(mem + pos, dec["ca_wk"], preferred_element_type=jnp.float32) + dec["ca_bk"]
    cv = jnp.dot(mem, dec["ca_wv"], preferred_element_type=jnp.float32) + dec["ca_bv"]
    ca = mha(cq, ck, cv, dec["ca_wo"], dec["ca_bo"])
    t2 = layer_norm(t1 + ca, dec["ln2g"], dec["ln2b"])
    hs = layer_norm(t2 + ffn(t2, dec["w1"], dec["b1"], dec["w2"], dec["b2"]),
                    dec["ln3g"], dec["ln3b"])

    # ------------- prediction heads (sigmoid MLPs, fused output) -------------
    def head_hidden(x, layers):
        h = x
        for wi, bi in layers:
            h = jax.nn.sigmoid(jnp.dot(h, wi, preferred_element_type=jnp.float32) + bi)
        return h

    h_ba = head_hidden(hs, w["ba"])           # [Q, D]
    h_az = head_hidden(hs, w["az"])           # [Q, 3D]
    h_el = head_hidden(hs, w["el"])           # [Q, 3D]

    # Final layers of the three heads were zero-padded into disjoint lane ranges of a
    # single 128-wide projection at pack time -> one lane-dense output store.
    out = (jnp.dot(h_ba, w["fw_ba"], preferred_element_type=jnp.float32)
           + jnp.dot(h_az, w["fw_az"], preferred_element_type=jnp.float32)
           + jnp.dot(h_el, w["fw_el"], preferred_element_type=jnp.float32)
           + w["fb"])                         # [Q, 128]
    o_ref[0] = out.astype(o_ref.dtype)


# ---------------------------------------------------------------------------
# Wrapper
# ---------------------------------------------------------------------------

def detection_forward(params, x, *, num_heads, num_deg):
    B, S, D = x.shape
    params = dict(params)
    params["pos"] = params["pos"][:S]
    Q = params["query"].shape[0]
    out_w = params["fb"].shape[1]

    leaves, treedef = jax.tree_util.tree_flatten(params)
    kernel = functools.partial(_detection_kernel, treedef=treedef, D=D, H=num_heads)

    in_specs = [pl.BlockSpec((1, S, D), lambda b: (b, 0, 0))]
    for leaf in leaves:
        in_specs.append(
            pl.BlockSpec(leaf.shape, lambda b, nd=leaf.ndim: (0,) * nd))

    out = pl.pallas_call(
        kernel,
        out_shape=jax.ShapeDtypeStruct((B, Q, out_w), jnp.float32),
        grid=(B,),
        in_specs=in_specs,
        out_specs=pl.BlockSpec((1, Q, out_w), lambda b: (b, 0, 0)),
        compiler_params=pltpu.CompilerParams(dimension_semantics=("parallel",)),
    )(x, *leaves)

    nba = num_deg + 1
    return {
        "pred_ba": out[..., :nba],
        "pred_az": out[..., nba:nba + 1],
        "pred_el": out[..., nba + 1:nba + 2],
    }


# ---------------------------------------------------------------------------
# Parameter init (deterministic, PyTorch-Linear-like uniform(-1/sqrt(in), ...))
# ---------------------------------------------------------------------------

class KeyGen:
    def __init__(self, key):
        self.key = key

    def __call__(self):
        self.key, sub = jax.random.split(self.key)
        return sub


def init_linear_params(kg, din, dout):
    lim = 1.0 / math.sqrt(din)
    w = jax.random.uniform(kg(), (din, dout), jnp.float32, -lim, lim)
    b = jax.random.uniform(kg(), (1, dout), jnp.float32, -lim, lim)
    return w, b


def init_attn_params(kg, d):
    p = {}
    for name in ("q", "k", "v", "o"):
        w, b = init_linear_params(kg, d, d)
        p["w" + name] = w
        p["b" + name] = b
    return p


def init_encoder_layer(kg, d, dff):
    w1, b1 = init_linear_params(kg, d, dff)
    w2, b2 = init_linear_params(kg, dff, d)
    return dict(self_attn=init_attn_params(kg, d),
                ff_w1=w1, ff_b1=b1, ff_w2=w2, ff_b2=b2,
                ln1_g=jnp.ones((1, d), jnp.float32), ln1_b=jnp.zeros((1, d), jnp.float32),
                ln2_g=jnp.ones((1, d), jnp.float32), ln2_b=jnp.zeros((1, d), jnp.float32))


def init_decoder_layer(kg, d, dff):
    w1, b1 = init_linear_params(kg, d, dff)
    w2, b2 = init_linear_params(kg, dff, d)
    return dict(self_attn=init_attn_params(kg, d),
                cross_attn=init_attn_params(kg, d),
                ff_w1=w1, ff_b1=b1, ff_w2=w2, ff_b2=b2,
                ln1_g=jnp.ones((1, d), jnp.float32), ln1_b=jnp.zeros((1, d), jnp.float32),
                ln2_g=jnp.ones((1, d), jnp.float32), ln2_b=jnp.zeros((1, d), jnp.float32),
                ln3_g=jnp.ones((1, d), jnp.float32), ln3_b=jnp.zeros((1, d), jnp.float32))


def init_mlp(kg, din, dh, dout, nlayers):
    dims = [din] + [dh] * (nlayers - 1) + [dout]
    return [init_linear_params(kg, dims[i], dims[i + 1]) for i in range(nlayers)]


def init_detection_params(key, d, dff, num_queries, num_deg, max_len):
    kg = KeyGen(key)
    return dict(
        pos_embed=0.02 * jax.random.normal(kg(), (max_len, d), jnp.float32),
        query_embed=0.02 * jax.random.normal(kg(), (num_queries, d), jnp.float32),
        encoder=init_encoder_layer(kg, d, dff),
        decoder=init_decoder_layer(kg, d, dff),
        ba_embed=init_mlp(kg, d, d, num_deg + 1, 4),       # MLP(hidden, hidden, num_deg+1, 4)
        az_embed=init_mlp(kg, d, d * 3, 1, 4),             # MLP(hidden, hidden*3, 1, 4)
        el_embed=init_mlp(kg, d, d * 3, 1, 4),             # MLP(hidden, hidden*3, 1, 4)
    )


def pack_params(p, d, num_deg, out_w=128):
    """Pack raw params into the fused layout consumed by the kernel."""
    enc = p["encoder"]
    dec = p["decoder"]
    ea = enc["self_attn"]
    sa = dec["self_attn"]
    ca = dec["cross_attn"]
    nba = num_deg + 1

    def pad_final(wf, col_start, width):
        out = jnp.zeros((wf.shape[0], out_w), jnp.float32)
        return out.at[:, col_start:col_start + width].set(wf)

    ba_layers, az_layers, el_layers = p["ba_embed"], p["az_embed"], p["el_embed"]
    fb = jnp.zeros((1, out_w), jnp.float32)
    fb = fb.at[:, :nba].set(ba_layers[-1][1])
    fb = fb.at[:, nba:nba + 1].set(az_layers[-1][1])
    fb = fb.at[:, nba + 1:nba + 2].set(el_layers[-1][1])

    return {
        "pos": p["pos_embed"],
        "query": p["query_embed"],
        "enc": {
            "wqk": jnp.concatenate([ea["wq"], ea["wk"]], axis=1),
            "bqk": jnp.concatenate([ea["bq"], ea["bk"]], axis=1),
            "wv": ea["wv"], "bv": ea["bv"], "wo": ea["wo"], "bo": ea["bo"],
            "w1": enc["ff_w1"], "b1": enc["ff_b1"],
            "w2": enc["ff_w2"], "b2": enc["ff_b2"],
            "ln1g": enc["ln1_g"], "ln1b": enc["ln1_b"],
            "ln2g": enc["ln2_g"], "ln2b": enc["ln2_b"],
        },
        "dec": {
            "sa_wqkv": jnp.concatenate([sa["wq"], sa["wk"], sa["wv"]], axis=1),
            "sa_bqkv": jnp.concatenate([sa["bq"], sa["bk"], sa["bv"]], axis=1),
            "sa_wo": sa["wo"], "sa_bo": sa["bo"],
            "ca_wq": ca["wq"], "ca_bq": ca["bq"],
            "ca_wk": ca["wk"], "ca_bk": ca["bk"],
            "ca_wv": ca["wv"], "ca_bv": ca["bv"],
            "ca_wo": ca["wo"], "ca_bo": ca["bo"],
            "w1": dec["ff_w1"], "b1": dec["ff_b1"],
            "w2": dec["ff_w2"], "b2": dec["ff_b2"],
            "ln1g": dec["ln1_g"], "ln1b": dec["ln1_b"],
            "ln2g": dec["ln2_g"], "ln2b": dec["ln2_b"],
            "ln3g": dec["ln3_g"], "ln3b": dec["ln3_b"],
        },
        # hidden (sigmoid) layers of each head
        "ba": [(wi, bi) for wi, bi in ba_layers[:-1]],
        "az": [(wi, bi) for wi, bi in az_layers[:-1]],
        "el": [(wi, bi) for wi, bi in el_layers[:-1]],
        # final layers padded into disjoint lanes of one 128-wide projection
        "fw_ba": pad_final(ba_layers[-1][0], 0, nba),
        "fw_az": pad_final(az_layers[-1][0], nba, 1),
        "fw_el": pad_final(el_layers[-1][0], nba + 1, 1),
        "fb": fb,
    }


# ---------------------------------------------------------------------------
# Demo / smoke test
# ---------------------------------------------------------------------------

if __name__ == "__main__":
    B, S, D = 2, 16, 32          # batch, sequence, hidden (d_model)
    num_heads, dff = 4, 64
    num_queries, num_deg = 8, 12

    key = jax.random.PRNGKey(0)
    kp, kx = jax.random.split(key)
    raw_params = init_detection_params(kp, D, dff, num_queries, num_deg, max_len=S)
    packed_params = pack_params(raw_params, D, num_deg)
    x = jax.random.normal(kx, (B, S, D), jnp.float32)

    fwd = jax.jit(functools.partial(detection_forward,
                                    num_heads=num_heads, num_deg=num_deg))
    out = fwd(packed_params, x)
    out = jax.block_until_ready(out)

    assert out["pred_ba"].shape == (B, num_queries, num_deg + 1)
    assert out["pred_az"].shape == (B, num_queries, 1)
    assert out["pred_el"].shape == (B, num_queries, 1)
    assert all(bool(jnp.isfinite(v).all()) for v in out.values())
    print("KERNEL_OK")
</pallas_src>

<mosaic_0001>
module attributes {stable_mosaic.version = 11 : i64} {
  func.func @_detection_kernel(%arg0: i32, %arg1: memref<1x16x32xf32, #tpu.memory_space<vmem>>, %arg2: memref<32x96xf32, #tpu.memory_space<vmem>>, %arg3: memref<1x96xf32, #tpu.memory_space<vmem>>, %arg4: memref<96x96xf32, #tpu.memory_space<vmem>>, %arg5: memref<1x96xf32, #tpu.memory_space<vmem>>, %arg6: memref<96x96xf32, #tpu.memory_space<vmem>>, %arg7: memref<1x96xf32, #tpu.memory_space<vmem>>, %arg8: memref<32x32xf32, #tpu.memory_space<vmem>>, %arg9: memref<1x32xf32, #tpu.memory_space<vmem>>, %arg10: memref<32x32xf32, #tpu.memory_space<vmem>>, %arg11: memref<1x32xf32, #tpu.memory_space<vmem>>, %arg12: memref<32x32xf32, #tpu.memory_space<vmem>>, %arg13: memref<1x32xf32, #tpu.memory_space<vmem>>, %arg14: memref<1x64xf32, #tpu.memory_space<vmem>>, %arg15: memref<1x32xf32, #tpu.memory_space<vmem>>, %arg16: memref<1x32xf32, #tpu.memory_space<vmem>>, %arg17: memref<1x32xf32, #tpu.memory_space<vmem>>, %arg18: memref<1x32xf32, #tpu.memory_space<vmem>>, %arg19: memref<1x32xf32, #tpu.memory_space<vmem>>, %arg20: memref<32x32xf32, #tpu.memory_space<vmem>>, %arg21: memref<32x32xf32, #tpu.memory_space<vmem>>, %arg22: memref<32x32xf32, #tpu.memory_space<vmem>>, %arg23: memref<32x32xf32, #tpu.memory_space<vmem>>, %arg24: memref<1x32xf32, #tpu.memory_space<vmem>>, %arg25: memref<1x32xf32, #tpu.memory_space<vmem>>, %arg26: memref<1x32xf32, #tpu.memory_space<vmem>>, %arg27: memref<1x32xf32, #tpu.memory_space<vmem>>, %arg28: memref<1x32xf32, #tpu.memory_space<vmem>>, %arg29: memref<1x32xf32, #tpu.memory_space<vmem>>, %arg30: memref<1x32xf32, #tpu.memory_space<vmem>>, %arg31: memref<1x96xf32, #tpu.memory_space<vmem>>, %arg32: memref<32x32xf32, #tpu.memory_space<vmem>>, %arg33: memref<32x96xf32, #tpu.memory_space<vmem>>, %arg34: memref<32x64xf32, #tpu.memory_space<vmem>>, %arg35: memref<64x32xf32, #tpu.memory_space<vmem>>, %arg36: memref<32x96xf32, #tpu.memory_space<vmem>>, %arg37: memref<1x96xf32, #tpu.memory_space<vmem>>, %arg38: memref<96x96xf32, #tpu.memory_space<vmem>>, %arg39: memref<1x96xf32, #tpu.memory_space<vmem>>, %arg40: memref<96x96xf32, #tpu.memory_space<vmem>>, %arg41: memref<1x96xf32, #tpu.memory_space<vmem>>, %arg42: memref<1x64xf32, #tpu.memory_space<vmem>>, %arg43: memref<1x32xf32, #tpu.memory_space<vmem>>, %arg44: memref<1x32xf32, #tpu.memory_space<vmem>>, %arg45: memref<1x64xf32, #tpu.memory_space<vmem>>, %arg46: memref<1x32xf32, #tpu.memory_space<vmem>>, %arg47: memref<1x32xf32, #tpu.memory_space<vmem>>, %arg48: memref<1x32xf32, #tpu.memory_space<vmem>>, %arg49: memref<1x32xf32, #tpu.memory_space<vmem>>, %arg50: memref<1x32xf32, #tpu.memory_space<vmem>>, %arg51: memref<32x64xf32, #tpu.memory_space<vmem>>, %arg52: memref<64x32xf32, #tpu.memory_space<vmem>>, %arg53: memref<32x32xf32, #tpu.memory_space<vmem>>, %arg54: memref<32x64xf32, #tpu.memory_space<vmem>>, %arg55: memref<32x32xf32, #tpu.memory_space<vmem>>, %arg56: memref<1x128xf32, #tpu.memory_space<vmem>>, %arg57: memref<96x128xf32, #tpu.memory_space<vmem>>, %arg58: memref<32x128xf32, #tpu.memory_space<vmem>>, %arg59: memref<96x128xf32, #tpu.memory_space<vmem>>, %arg60: memref<16x32xf32, #tpu.memory_space<vmem>>, %arg61: memref<8x32xf32, #tpu.memory_space<vmem>>, %arg62: memref<1x8x128xf32, #tpu.memory_space<vmem>>) attributes {dimension_semantics = [#tpu.dimension_semantics<parallel>], iteration_bounds = array<i64: 2>, scalar_prefetch = 0 : i64, scratch_operands = 0 : i64, tpu.core_type = #tpu.core_type<tc>, window_params = [{transform_indices = @transform_0, window_bounds = array<i64: 1, 16, 32>}, {pipeline_mode = #tpu.pipeline_mode<synchronous>, transform_indices = @transform_1, window_bounds = array<i64: 32, 96>}, {pipeline_mode = #tpu.pipeline_mode<synchronous>, transform_indices = @transform_2, window_bounds = array<i64: 1, 96>}, {pipeline_mode = #tpu.pipeline_mode<synchronous>, transform_indices = @transform_3, window_bounds = array<i64: 96, 96>}, {pipeline_mode = #tpu.pipeline_mode<synchronous>, transform_indices = @transform_4, window_bounds = array<i64: 1, 96>}, {pipeline_mode = #tpu.pipeline_mode<synchronous>, transform_indices = @transform_5, window_bounds = array<i64: 96, 96>}, {pipeline_mode = #tpu.pipeline_mode<synchronous>, transform_indices = @transform_6, window_bounds = array<i64: 1, 96>}, {pipeline_mode = #tpu.pipeline_mode<synchronous>, transform_indices = @transform_7, window_bounds = array<i64: 32, 32>}, {pipeline_mode = #tpu.pipeline_mode<synchronous>, transform_indices = @transform_8, window_bounds = array<i64: 1, 32>}, {pipeline_mode = #tpu.pipeline_mode<synchronous>, transform_indices = @transform_9, window_bounds = array<i64: 32, 32>}, {pipeline_mode = #tpu.pipeline_mode<synchronous>, transform_indices = @transform_10, window_bounds = array<i64: 1, 32>}, {pipeline_mode = #tpu.pipeline_mode<synchronous>, transform_indices = @transform_11, window_bounds = array<i64: 32, 32>}, {pipeline_mode = #tpu.pipeline_mode<synchronous>, transform_indices = @transform_12, window_bounds = array<i64: 1, 32>}, {pipeline_mode = #tpu.pipeline_mode<synchronous>, transform_indices = @transform_13, window_bounds = array<i64: 1, 64>}, {pipeline_mode = #tpu.pipeline_mode<synchronous>, transform_indices = @transform_14, window_bounds = array<i64: 1, 32>}, {pipeline_mode = #tpu.pipeline_mode<synchronous>, transform_indices = @transform_15, window_bounds = array<i64: 1, 32>}, {pipeline_mode = #tpu.pipeline_mode<synchronous>, transform_indices = @transform_16, window_bounds = array<i64: 1, 32>}, {pipeline_mode = #tpu.pipeline_mode<synchronous>, transform_indices = @transform_17, window_bounds = array<i64: 1, 32>}, {pipeline_mode = #tpu.pipeline_mode<synchronous>, transform_indices = @transform_18, window_bounds = array<i64: 1, 32>}, {pipeline_mode = #tpu.pipeline_mode<synchronous>, transform_indices = @transform_19, window_bounds = array<i64: 32, 32>}, {pipeline_mode = #tpu.pipeline_mode<synchronous>, transform_indices = @transform_20, window_bounds = array<i64: 32, 32>}, {pipeline_mode = #tpu.pipeline_mode<synchronous>, transform_indices = @transform_21, window_bounds = array<i64: 32, 32>}, {pipeline_mode = #tpu.pipeline_mode<synchronous>, transform_indices = @transform_22, window_bounds = array<i64: 32, 32>}, {pipeline_mode = #tpu.pipeline_mode<synchronous>, transform_indices = @transform_23, window_bounds = array<i64: 1, 32>}, {pipeline_mode = #tpu.pipeline_mode<synchronous>, transform_indices = @transform_24, window_bounds = array<i64: 1, 32>}, {pipeline_mode = #tpu.pipeline_mode<synchronous>, transform_indices = @transform_25, window_bounds = array<i64: 1, 32>}, {pipeline_mode = #tpu.pipeline_mode<synchronous>, transform_indices = @transform_26, window_bounds = array<i64: 1, 32>}, {pipeline_mode = #tpu.pipeline_mode<synchronous>, transform_indices = @transform_27, window_bounds = array<i64: 1, 32>}, {pipeline_mode = #tpu.pipeline_mode<synchronous>, transform_indices = @transform_28, window_bounds = array<i64: 1, 32>}, {pipeline_mode = #tpu.pipeline_mode<synchronous>, transform_indices = @transform_29, window_bounds = array<i64: 1, 32>}, {pipeline_mode = #tpu.pipeline_mode<synchronous>, transform_indices = @transform_30, window_bounds = array<i64: 1, 96>}, {pipeline_mode = #tpu.pipeline_mode<synchronous>, transform_indices = @transform_31, window_bounds = array<i64: 32, 32>}, {pipeline_mode = #tpu.pipeline_mode<synchronous>, transform_indices = @transform_32, window_bounds = array<i64: 32, 96>}, {pipeline_mode = #tpu.pipeline_mode<synchronous>, transform_indices = @transform_33, window_bounds = array<i64: 32, 64>}, {pipeline_mode = #tpu.pipeline_mode<synchronous>, transform_indices = @transform_34, window_bounds = array<i64: 64, 32>}, {pipeline_mode = #tpu.pipeline_mode<synchronous>, transform_indices = @transform_35, window_bounds = array<i64: 32, 96>}, {pipeline_mode = #tpu.pipeline_mode<synchronous>, transform_indices = @transform_36, window_bounds = array<i64: 1, 96>}, {pipeline_mode = #tpu.pipeline_mode<synchronous>, transform_indices = @transform_37, window_bounds = array<i64: 96, 96>}, {pipeline_mode = #tpu.pipeline_mode<synchronous>, transform_indices = @transform_38, window_bounds = array<i64: 1, 96>}, {pipeline_mode = #tpu.pipeline_mode<synchronous>, transform_indices = @transform_39, window_bounds = array<i64: 96, 96>}, {pipeline_mode = #tpu.pipeline_mode<synchronous>, transform_indices = @transform_40, window_bounds = array<i64: 1, 96>}, {pipeline_mode = #tpu.pipeline_mode<synchronous>, transform_indices = @transform_41, window_bounds = array<i64: 1, 64>}, {pipeline_mode = #tpu.pipeline_mode<synchronous>, transform_indices = @transform_42, window_bounds = array<i64: 1, 32>}, {pipeline_mode = #tpu.pipeline_mode<synchronous>, transform_indices = @transform_43, window_bounds = array<i64: 1, 32>}, {pipeline_mode = #tpu.pipeline_mode<synchronous>, transform_indices = @transform_44, window_bounds = array<i64: 1, 64>}, {pipeline_mode = #tpu.pipeline_mode<synchronous>, transform_indices = @transform_45, window_bounds = array<i64: 1, 32>}, {pipeline_mode = #tpu.pipeline_mode<synchronous>, transform_indices = @transform_46, window_bounds = array<i64: 1, 32>}, {pipeline_mode = #tpu.pipeline_mode<synchronous>, transform_indices = @transform_47, window_bounds = array<i64: 1, 32>}, {pipeline_mode = #tpu.pipeline_mode<synchronous>, transform_indices = @transform_48, window_bounds = array<i64: 1, 32>}, {pipeline_mode = #tpu.pipeline_mode<synchronous>, transform_indices = @transform_49, window_bounds = array<i64: 1, 32>}, {pipeline_mode = #tpu.pipeline_mode<synchronous>, transform_indices = @transform_50, window_bounds = array<i64: 32, 64>}, {pipeline_mode = #tpu.pipeline_mode<synchronous>, transform_indices = @transform_51, window_bounds = array<i64: 64, 32>}, {pipeline_mode = #tpu.pipeline_mode<synchronous>, transform_indices = @transform_52, window_bounds = array<i64: 32, 32>}, {pipeline_mode = #tpu.pipeline_mode<synchronous>, transform_indices = @transform_53, window_bounds = array<i64: 32, 64>}, {pipeline_mode = #tpu.pipeline_mode<synchronous>, transform_indices = @transform_54, window_bounds = array<i64: 32, 32>}, {pipeline_mode = #tpu.pipeline_mode<synchronous>, transform_indices = @transform_55, window_bounds = array<i64: 1, 128>}, {pipeline_mode = #tpu.pipeline_mode<synchronous>, transform_indices = @transform_56, window_bounds = array<i64: 96, 128>}, {pipeline_mode = #tpu.pipeline_mode<synchronous>, transform_indices = @transform_57, window_bounds = array<i64: 32, 128>}, {pipeline_mode = #tpu.pipeline_mode<synchronous>, transform_indices = @transform_58, window_bounds = array<i64: 96, 128>}, {pipeline_mode = #tpu.pipeline_mode<synchronous>, transform_indices = @transform_59, window_bounds = array<i64: 16, 32>}, {pipeline_mode = #tpu.pipeline_mode<synchronous>, transform_indices = @transform_60, window_bounds = array<i64: 8, 32>}, {transform_indices = @transform_61, window_bounds = array<i64: 1, 8, 128>}]} {
    %c0 = arith.constant 0 : index
    %c0_0 = arith.constant 0 : index
    %0 = vector.load %arg2[%c0, %c0_0] : memref<32x96xf32, #tpu.memory_space<vmem>>, vector<32x96xf32>
    %c0_1 = arith.constant 0 : index
    %c0_2 = arith.constant 0 : index
    %1 = vector.load %arg3[%c0_1, %c0_2] : memref<1x96xf32, #tpu.memory_space<vmem>>, vector<1x96xf32>
    %c0_3 = arith.constant 0 : index
    %c0_4 = arith.constant 0 : index
    %2 = vector.load %arg4[%c0_3, %c0_4] : memref<96x96xf32, #tpu.memory_space<vmem>>, vector<96x96xf32>
    %c0_5 = arith.constant 0 : index
    %c0_6 = arith.constant 0 : index
    %3 = vector.load %arg5[%c0_5, %c0_6] : memref<1x96xf32, #tpu.memory_space<vmem>>, vector<1x96xf32>
    %c0_7 = arith.constant 0 : index
    %c0_8 = arith.constant 0 : index
    %4 = vector.load %arg6[%c0_7, %c0_8] : memref<96x96xf32, #tpu.memory_space<vmem>>, vector<96x96xf32>
    %c0_9 = arith.constant 0 : index
    %c0_10 = arith.constant 0 : index
    %5 = vector.load %arg7[%c0_9, %c0_10] : memref<1x96xf32, #tpu.memory_space<vmem>>, vector<1x96xf32>
    %c0_11 = arith.constant 0 : index
    %c0_12 = arith.constant 0 : index
    %6 = vector.load %arg8[%c0_11, %c0_12] : memref<32x32xf32, #tpu.memory_space<vmem>>, vector<32x32xf32>
    %c0_13 = arith.constant 0 : index
    %c0_14 = arith.constant 0 : index
    %7 = vector.load %arg9[%c0_13, %c0_14] : memref<1x32xf32, #tpu.memory_space<vmem>>, vector<1x32xf32>
    %c0_15 = arith.constant 0 : index
    %c0_16 = arith.constant 0 : index
    %8 = vector.load %arg10[%c0_15, %c0_16] : memref<32x32xf32, #tpu.memory_space<vmem>>, vector<32x32xf32>
    %c0_17 = arith.constant 0 : index
    %c0_18 = arith.constant 0 : index
    %9 = vector.load %arg11[%c0_17, %c0_18] : memref<1x32xf32, #tpu.memory_space<vmem>>, vector<1x32xf32>
    %c0_19 = arith.constant 0 : index
    %c0_20 = arith.constant 0 : index
    %10 = vector.load %arg12[%c0_19, %c0_20] : memref<32x32xf32, #tpu.memory_space<vmem>>, vector<32x32xf32>
    %c0_21 = arith.constant 0 : index
    %c0_22 = arith.constant 0 : index
    %11 = vector.load %arg13[%c0_21, %c0_22] : memref<1x32xf32, #tpu.memory_space<vmem>>, vector<1x32xf32>
    %c0_23 = arith.constant 0 : index
    %c0_24 = arith.constant 0 : index
    %12 = vector.load %arg14[%c0_23, %c0_24] : memref<1x64xf32, #tpu.memory_space<vmem>>, vector<1x64xf32>
    %c0_25 = arith.constant 0 : index
    %c0_26 = arith.constant 0 : index
    %13 = vector.load %arg15[%c0_25, %c0_26] : memref<1x32xf32, #tpu.memory_space<vmem>>, vector<1x32xf32>
    %c0_27 = arith.constant 0 : index
    %c0_28 = arith.constant 0 : index
    %14 = vector.load %arg16[%c0_27, %c0_28] : memref<1x32xf32, #tpu.memory_space<vmem>>, vector<1x32xf32>
    %c0_29 = arith.constant 0 : index
    %c0_30 = arith.constant 0 : index
    %15 = vector.load %arg17[%c0_29, %c0_30] : memref<1x32xf32, #tpu.memory_space<vmem>>, vector<1x32xf32>
    %c0_31 = arith.constant 0 : index
    %c0_32 = arith.constant 0 : index
    %16 = vector.load %arg18[%c0_31, %c0_32] : memref<1x32xf32, #tpu.memory_space<vmem>>, vector<1x32xf32>
    %c0_33 = arith.constant 0 : index
    %c0_34 = arith.constant 0 : index
    %17 = vector.load %arg19[%c0_33, %c0_34] : memref<1x32xf32, #tpu.memory_space<vmem>>, vector<1x32xf32>
    %c0_35 = arith.constant 0 : index
    %c0_36 = arith.constant 0 : index
    %18 = vector.load %arg20[%c0_35, %c0_36] : memref<32x32xf32, #tpu.memory_space<vmem>>, vector<32x32xf32>
    %c0_37 = arith.constant 0 : index
    %c0_38 = arith.constant 0 : index
    %19 = vector.load %arg21[%c0_37, %c0_38] : memref<32x32xf32, #tpu.memory_space<vmem>>, vector<32x32xf32>
    %c0_39 = arith.constant 0 : index
    %c0_40 = arith.constant 0 : index
    %20 = vector.load %arg22[%c0_39, %c0_40] : memref<32x32xf32, #tpu.memory_space<vmem>>, vector<32x32xf32>
    %c0_41 = arith.constant 0 : index
    %c0_42 = arith.constant 0 : index
    %21 = vector.load %arg23[%c0_41, %c0_42] : memref<32x32xf32, #tpu.memory_space<vmem>>, vector<32x32xf32>
    %c0_43 = arith.constant 0 : index
    %c0_44 = arith.constant 0 : index
    %22 = vector.load %arg24[%c0_43, %c0_44] : memref<1x32xf32, #tpu.memory_space<vmem>>, vector<1x32xf32>
    %c0_45 = arith.constant 0 : index
    %c0_46 = arith.constant 0 : index
    %23 = vector.load %arg25[%c0_45, %c0_46] : memref<1x32xf32, #tpu.memory_space<vmem>>, vector<1x32xf32>
    %c0_47 = arith.constant 0 : index
    %c0_48 = arith.constant 0 : index
    %24 = vector.load %arg26[%c0_47, %c0_48] : memref<1x32xf32, #tpu.memory_space<vmem>>, vector<1x32xf32>
    %c0_49 = arith.constant 0 : index
    %c0_50 = arith.constant 0 : index
    %25 = vector.load %arg27[%c0_49, %c0_50] : memref<1x32xf32, #tpu.memory_space<vmem>>, vector<1x32xf32>
    %c0_51 = arith.constant 0 : index
    %c0_52 = arith.constant 0 : index
    %26 = vector.load %arg28[%c0_51, %c0_52] : memref<1x32xf32, #tpu.memory_space<vmem>>, vector<1x32xf32>
    %c0_53 = arith.constant 0 : index
    %c0_54 = arith.constant 0 : index
    %27 = vector.load %arg29[%c0_53, %c0_54] : memref<1x32xf32, #tpu.memory_space<vmem>>, vector<1x32xf32>
    %c0_55 = arith.constant 0 : index
    %c0_56 = arith.constant 0 : index
    %28 = vector.load %arg30[%c0_55, %c0_56] : memref<1x32xf32, #tpu.memory_space<vmem>>, vector<1x32xf32>
    %c0_57 = arith.constant 0 : index
    %c0_58 = arith.constant 0 : index
    %29 = vector.load %arg31[%c0_57, %c0_58] : memref<1x96xf32, #tpu.memory_space<vmem>>, vector<1x96xf32>
    %c0_59 = arith.constant 0 : index
    %c0_60 = arith.constant 0 : index
    %30 = vector.load %arg32[%c0_59, %c0_60] : memref<32x32xf32, #tpu.memory_space<vmem>>, vector<32x32xf32>
    %c0_61 = arith.constant 0 : index
    %c0_62 = arith.constant 0 : index
    %31 = vector.load %arg33[%c0_61, %c0_62] : memref<32x96xf32, #tpu.memory_space<vmem>>, vector<32x96xf32>
    %c0_63 = arith.constant 0 : index
    %c0_64 = arith.constant 0 : index
    %32 = vector.load %arg34[%c0_63, %c0_64] : memref<32x64xf32, #tpu.memory_space<vmem>>, vector<32x64xf32>
    %c0_65 = arith.constant 0 : index
    %c0_66 = arith.constant 0 : index
    %33 = vector.load %arg35[%c0_65, %c0_66] : memref<64x32xf32, #tpu.memory_space<vmem>>, vector<64x32xf32>
    %c0_67 = arith.constant 0 : index
    %c0_68 = arith.constant 0 : index
    %34 = vector.load %arg36[%c0_67, %c0_68] : memref<32x96xf32, #tpu.memory_space<vmem>>, vector<32x96xf32>
    %c0_69 = arith.constant 0 : index
    %c0_70 = arith.constant 0 : index
    %35 = vector.load %arg37[%c0_69, %c0_70] : memref<1x96xf32, #tpu.memory_space<vmem>>, vector<1x96xf32>
    %c0_71 = arith.constant 0 : index
    %c0_72 = arith.constant 0 : index
    %36 = vector.load %arg38[%c0_71, %c0_72] : memref<96x96xf32, #tpu.memory_space<vmem>>, vector<96x96xf32>
    %c0_73 = arith.constant 0 : index
    %c0_74 = arith.constant 0 : index
    %37 = vector.load %arg39[%c0_73, %c0_74] : memref<1x96xf32, #tpu.memory_space<vmem>>, vector<1x96xf32>
    %c0_75 = arith.constant 0 : index
    %c0_76 = arith.constant 0 : index
    %38 = vector.load %arg40[%c0_75, %c0_76] : memref<96x96xf32, #tpu.memory_space<vmem>>, vector<96x96xf32>
    %c0_77 = arith.constant 0 : index
    %c0_78 = arith.constant 0 : index
    %39 = vector.load %arg41[%c0_77, %c0_78] : memref<1x96xf32, #tpu.memory_space<vmem>>, vector<1x96xf32>
    %c0_79 = arith.constant 0 : index
    %c0_80 = arith.constant 0 : index
    %40 = vector.load %arg42[%c0_79, %c0_80] : memref<1x64xf32, #tpu.memory_space<vmem>>, vector<1x64xf32>
    %c0_81 = arith.constant 0 : index
    %c0_82 = arith.constant 0 : index
    %41 = vector.load %arg43[%c0_81, %c0_82] : memref<1x32xf32, #tpu.memory_space<vmem>>, vector<1x32xf32>
    %c0_83 = arith.constant 0 : index
    %c0_84 = arith.constant 0 : index
    %42 = vector.load %arg44[%c0_83, %c0_84] : memref<1x32xf32, #tpu.memory_space<vmem>>, vector<1x32xf32>
    %c0_85 = arith.constant 0 : index
    %c0_86 = arith.constant 0 : index
    %43 = vector.load %arg45[%c0_85, %c0_86] : memref<1x64xf32, #tpu.memory_space<vmem>>, vector<1x64xf32>
    %c0_87 = arith.constant 0 : index
    %c0_88 = arith.constant 0 : index
    %44 = vector.load %arg46[%c0_87, %c0_88] : memref<1x32xf32, #tpu.memory_space<vmem>>, vector<1x32xf32>
    %c0_89 = arith.constant 0 : index
    %c0_90 = arith.constant 0 : index
    %45 = vector.load %arg47[%c0_89, %c0_90] : memref<1x32xf32, #tpu.memory_space<vmem>>, vector<1x32xf32>
    %c0_91 = arith.constant 0 : index
    %c0_92 = arith.constant 0 : index
    %46 = vector.load %arg48[%c0_91, %c0_92] : memref<1x32xf32, #tpu.memory_space<vmem>>, vector<1x32xf32>
    %c0_93 = arith.constant 0 : index
    %c0_94 = arith.constant 0 : index
    %47 = vector.load %arg49[%c0_93, %c0_94] : memref<1x32xf32, #tpu.memory_space<vmem>>, vector<1x32xf32>
    %c0_95 = arith.constant 0 : index
    %c0_96 = arith.constant 0 : index
    %48 = vector.load %arg50[%c0_95, %c0_96] : memref<1x32xf32, #tpu.memory_space<vmem>>, vector<1x32xf32>
    %c0_97 = arith.constant 0 : index
    %c0_98 = arith.constant 0 : index
    %49 = vector.load %arg51[%c0_97, %c0_98] : memref<32x64xf32, #tpu.memory_space<vmem>>, vector<32x64xf32>
    %c0_99 = arith.constant 0 : index
    %c0_100 = arith.constant 0 : index
    %50 = vector.load %arg52[%c0_99, %c0_100] : memref<64x32xf32, #tpu.memory_space<vmem>>, vector<64x32xf32>
    %c0_101 = arith.constant 0 : index
    %c0_102 = arith.constant 0 : index
    %51 = vector.load %arg53[%c0_101, %c0_102] : memref<32x32xf32, #tpu.memory_space<vmem>>, vector<32x32xf32>
    %c0_103 = arith.constant 0 : index
    %c0_104 = arith.constant 0 : index
    %52 = vector.load %arg54[%c0_103, %c0_104] : memref<32x64xf32, #tpu.memory_space<vmem>>, vector<32x64xf32>
    %c0_105 = arith.constant 0 : index
    %c0_106 = arith.constant 0 : index
    %53 = vector.load %arg55[%c0_105, %c0_106] : memref<32x32xf32, #tpu.memory_space<vmem>>, vector<32x32xf32>
    %c0_107 = arith.constant 0 : index
    %c0_108 = arith.constant 0 : index
    %54 = vector.load %arg56[%c0_107, %c0_108] : memref<1x128xf32, #tpu.memory_space<vmem>>, vector<1x128xf32>
    %c0_109 = arith.constant 0 : index
    %c0_110 = arith.constant 0 : index
    %55 = vector.load %arg57[%c0_109, %c0_110] : memref<96x128xf32, #tpu.memory_space<vmem>>, vector<96x128xf32>
    %c0_111 = arith.constant 0 : index
    %c0_112 = arith.constant 0 : index
    %56 = vector.load %arg58[%c0_111, %c0_112] : memref<32x128xf32, #tpu.memory_space<vmem>>, vector<32x128xf32>
    %c0_113 = arith.constant 0 : index
    %c0_114 = arith.constant 0 : index
    %57 = vector.load %arg59[%c0_113, %c0_114] : memref<96x128xf32, #tpu.memory_space<vmem>>, vector<96x128xf32>
    %c0_115 = arith.constant 0 : index
    %c0_116 = arith.constant 0 : index
    %58 = vector.load %arg60[%c0_115, %c0_116] : memref<16x32xf32, #tpu.memory_space<vmem>>, vector<16x32xf32>
    %c0_117 = arith.constant 0 : index
    %c0_118 = arith.constant 0 : index
    %59 = vector.load %arg61[%c0_117, %c0_118] : memref<8x32xf32, #tpu.memory_space<vmem>>, vector<8x32xf32>
    %c0_119 = arith.constant 0 : index
    %c0_120 = arith.constant 0 : index
    %c0_121 = arith.constant 0 : index
    %60 = vector.load %arg1[%c0_119, %c0_120, %c0_121] : memref<1x16x32xf32, #tpu.memory_space<vmem>>, vector<1x16x32xf32>
    %61 = vector.shape_cast %60 : vector<1x16x32xf32> to vector<16x32xf32>
    %62 = arith.addf %61, %58 : vector<16x32xf32>
    %cst = arith.constant dense<0.000000e+00> : vector<16x64xf32>
    %63 = tpu.matmul %62, %52, %cst {dimension_numbers = #tpu.dot_dimension_numbers<[1], [0], [0], [1], [0, 0, 1, 1], [], []>} : vector<16x32xf32>, vector<32x64xf32>, vector<16x64xf32> -> vector<16x64xf32>
    %64 = vector.broadcast %43 : vector<1x64xf32> to vector<16x64xf32>
    %65 = arith.addf %63, %64 : vector<16x64xf32>
    %cst_122 = arith.constant dense<0.000000e+00> : vector<16x32xf32>
    %66 = tpu.matmul %61, %53, %cst_122 {dimension_numbers = #tpu.dot_dimension_numbers<[1], [0], [0], [1], [0, 0, 1, 1], [], []>} : vector<16x32xf32>, vector<32x32xf32>, vector<16x32xf32> -> vector<16x32xf32>
    %67 = vector.broadcast %44 : vector<1x32xf32> to vector<16x32xf32>
    %68 = arith.addf %66, %67 : vector<16x32xf32>
    %69 = vector.extract_strided_slice %65 {offsets = [0, 0], sizes = [16, 32], strides = [1, 1]} : vector<16x64xf32> to vector<16x32xf32>
    %70 = vector.extract_strided_slice %65 {offsets = [0, 32], sizes = [16, 32], strides = [1, 1]} : vector<16x64xf32> to vector<16x32xf32>
    %71 = vector.extract_strided_slice %69 {offsets = [0, 0], sizes = [16, 8], strides = [1, 1]} : vector<16x32xf32> to vector<16x8xf32>
    %72 = vector.extract_strided_slice %70 {offsets = [0, 0], sizes = [16, 8], strides = [1, 1]} : vector<16x32xf32> to vector<16x8xf32>
    %73 = vector.extract_strided_slice %68 {offsets = [0, 0], sizes = [16, 8], strides = [1, 1]} : vector<16x32xf32> to vector<16x8xf32>
    %cst_123 = arith.constant dense<0.000000e+00> : vector<16x16xf32>
    %74 = tpu.matmul %71, %72, %cst_123 {dimension_numbers = #tpu.dot_dimension_numbers<[1], [1], [0], [0], [0, 0, 1, 0], [], []>} : vector<16x8xf32>, vector<16x8xf32>, vector<16x16xf32> -> vector<16x16xf32>
    %cst_124 = arith.constant 0.353553385 : f32
    %75 = vector.broadcast %cst_124 : f32 to vector<16x16xf32>
    %76 = arith.mulf %74, %75 : vector<16x16xf32>
    %cst_125 = arith.constant dense<0xFF800000> : vector<16xf32>
    %77 = vector.multi_reduction <maximumf>, %76, %cst_125 [1] : vector<16x16xf32> to vector<16xf32>
    %78 = vector.shape_cast %77 : vector<16xf32> to vector<16x1xf32>
    %79 = vector.broadcast %78 : vector<16x1xf32> to vector<16x16xf32>
    %80 = arith.subf %76, %79 : vector<16x16xf32>
    %81 = math.exp %80 : vector<16x16xf32>
    %cst_126 = arith.constant dense<0.000000e+00> : vector<16xf32>
    %82 = vector.multi_reduction <add>, %81, %cst_126 [1] : vector<16x16xf32> to vector<16xf32>
    %83 = vector.shape_cast %82 : vector<16xf32> to vector<16x1xf32>
    %84 = tpu.reciprocal %83 {approx = true} : vector<16x1xf32> -> vector<16x1xf32>
    %85 = vector.broadcast %84 : vector<16x1xf32> to vector<16x16xf32>
    %86 = arith.mulf %81, %85 : vector<16x16xf32>
    %cst_127 = arith.constant dense<0.000000e+00> : vector<16x8xf32>
    %87 = tpu.matmul %86, %73, %cst_127 {dimension_numbers = #tpu.dot_dimension_numbers<[1], [0], [0], [1], [0, 0, 1, 1], [], []>} : vector<16x16xf32>, vector<16x8xf32>, vector<16x8xf32> -> vector<16x8xf32>
    %88 = vector.extract_strided_slice %51 {offsets = [0, 0], sizes = [8, 32], strides = [1, 1]} : vector<32x32xf32> to vector<8x32xf32>
    %cst_128 = arith.constant dense<0.000000e+00> : vector<16x32xf32>
    %89 = tpu.matmul %87, %88, %cst_128 {dimension_numbers = #tpu.dot_dimension_numbers<[1], [0], [0], [1], [0, 0, 1, 1], [], []>} : vector<16x8xf32>, vector<8x32xf32>, vector<16x32xf32> -> vector<16x32xf32>
    %90 = vector.extract_strided_slice %69 {offsets = [0, 8], sizes = [16, 8], strides = [1, 1]} : vector<16x32xf32> to vector<16x8xf32>
    %91 = vector.extract_strided_slice %70 {offsets = [0, 8], sizes = [16, 8], strides = [1, 1]} : vector<16x32xf32> to vector<16x8xf32>
    %92 = vector.extract_strided_slice %68 {offsets = [0, 8], sizes = [16, 8], strides = [1, 1]} : vector<16x32xf32> to vector<16x8xf32>
    %cst_129 = arith.constant dense<0.000000e+00> : vector<16x16xf32>
    %93 = tpu.matmul %90, %91, %cst_129 {dimension_numbers = #tpu.dot_dimension_numbers<[1], [1], [0], [0], [0, 0, 1, 0], [], []>} : vector<16x8xf32>, vector<16x8xf32>, vector<16x16xf32> -> vector<16x16xf32>
    %cst_130 = arith.constant 0.353553385 : f32
    %94 = vector.broadcast %cst_130 : f32 to vector<16x16xf32>
    %95 = arith.mulf %93, %94 : vector<16x16xf32>
    %cst_131 = arith.constant dense<0xFF800000> : vector<16xf32>
    %96 = vector.multi_reduction <maximumf>, %95, %cst_131 [1] : vector<16x16xf32> to vector<16xf32>
    %97 = vector.shape_cast %96 : vector<16xf32> to vector<16x1xf32>
    %98 = vector.broadcast %97 : vector<16x1xf32> to vector<16x16xf32>
    %99 = arith.subf %95, %98 : vector<16x16xf32>
    %100 = math.exp %99 : vector<16x16xf32>
    %cst_132 = arith.constant dense<0.000000e+00> : vector<16xf32>
    %101 = vector.multi_reduction <add>, %100, %cst_132 [1] : vector<16x16xf32> to vector<16xf32>
    %102 = vector.shape_cast %101 : vector<16xf32> to vector<16x1xf32>
    %103 = tpu.reciprocal %102 {approx = true} : vector<16x1xf32> -> vector<16x1xf32>
    %104 = vector.broadcast %103 : vector<16x1xf32> to vector<16x16xf32>
    %105 = arith.mulf %100, %104 : vector<16x16xf32>
    %cst_133 = arith.constant dense<0.000000e+00> : vector<16x8xf32>
    %106 = tpu.matmul %105, %92, %cst_133 {dimension_numbers = #tpu.dot_dimension_numbers<[1], [0], [0], [1], [0, 0, 1, 1], [], []>} : vector<16x16xf32>, vector<16x8xf32>, vector<16x8xf32> -> vector<16x8xf32>
    %107 = vector.extract_strided_slice %51 {offsets = [8, 0], sizes = [8, 32], strides = [1, 1]} : vector<32x32xf32> to vector<8x32xf32>
    %cst_134 = arith.constant dense<0.000000e+00> : vector<16x32xf32>
    %108 = tpu.matmul %106, %107, %cst_134 {dimension_numbers = #tpu.dot_dimension_numbers<[1], [0], [0], [1], [0, 0, 1, 1], [], []>} : vector<16x8xf32>, vector<8x32xf32>, vector<16x32xf32> -> vector<16x32xf32>
    %109 = arith.addf %89, %108 : vector<16x32xf32>
    %110 = vector.extract_strided_slice %69 {offsets = [0, 16], sizes = [16, 8], strides = [1, 1]} : vector<16x32xf32> to vector<16x8xf32>
    %111 = vector.extract_strided_slice %70 {offsets = [0, 16], sizes = [16, 8], strides = [1, 1]} : vector<16x32xf32> to vector<16x8xf32>
    %112 = vector.extract_strided_slice %68 {offsets = [0, 16], sizes = [16, 8], strides = [1, 1]} : vector<16x32xf32> to vector<16x8xf32>
    %cst_135 = arith.constant dense<0.000000e+00> : vector<16x16xf32>
    %113 = tpu.matmul %110, %111, %cst_135 {dimension_numbers = #tpu.dot_dimension_numbers<[1], [1], [0], [0], [0, 0, 1, 0], [], []>} : vector<16x8xf32>, vector<16x8xf32>, vector<16x16xf32> -> vector<16x16xf32>
    %cst_136 = arith.constant 0.353553385 : f32
    %114 = vector.broadcast %cst_136 : f32 to vector<16x16xf32>
    %115 = arith.mulf %113, %114 : vector<16x16xf32>
    %cst_137 = arith.constant dense<0xFF800000> : vector<16xf32>
    %116 = vector.multi_reduction <maximumf>, %115, %cst_137 [1] : vector<16x16xf32> to vector<16xf32>
    %117 = vector.shape_cast %116 : vector<16xf32> to vector<16x1xf32>
    %118 = vector.broadcast %117 : vector<16x1xf32> to vector<16x16xf32>
    %119 = arith.subf %115, %118 : vector<16x16xf32>
    %120 = math.exp %119 : vector<16x16xf32>
    %cst_138 = arith.constant dense<0.000000e+00> : vector<16xf32>
    %121 = vector.multi_reduction <add>, %120, %cst_138 [1] : vector<16x16xf32> to vector<16xf32>
    %122 = vector.shape_cast %121 : vector<16xf32> to vector<16x1xf32>
    %123 = tpu.reciprocal %122 {approx = true} : vector<16x1xf32> -> vector<16x1xf32>
    %124 = vector.broadcast %123 : vector<16x1xf32> to vector<16x16xf32>
    %125 = arith.mulf %120, %124 : vector<16x16xf32>
    %cst_139 = arith.constant dense<0.000000e+00> : vector<16x8xf32>
    %126 = tpu.matmul %125, %112, %cst_139 {dimension_numbers = #tpu.dot_dimension_numbers<[1], [0], [0], [1], [0, 0, 1, 1], [], []>} : vector<16x16xf32>, vector<16x8xf32>, vector<16x8xf32> -> vector<16x8xf32>
    %127 = vector.extract_strided_slice %51 {offsets = [16, 0], sizes = [8, 32], strides = [1, 1]} : vector<32x32xf32> to vector<8x32xf32>
    %cst_140 = arith.constant dense<0.000000e+00> : vector<16x32xf32>
    %128 = tpu.matmul %126, %127, %cst_140 {dimension_numbers = #tpu.dot_dimension_numbers<[1], [0], [0], [1], [0, 0, 1, 1], [], []>} : vector<16x8xf32>, vector<8x32xf32>, vector<16x32xf32> -> vector<16x32xf32>
    %129 = arith.addf %109, %128 : vector<16x32xf32>
    %130 = vector.extract_strided_slice %69 {offsets = [0, 24], sizes = [16, 8], strides = [1, 1]} : vector<16x32xf32> to vector<16x8xf32>
    %131 = vector.extract_strided_slice %70 {offsets = [0, 24], sizes = [16, 8], strides = [1, 1]} : vector<16x32xf32> to vector<16x8xf32>
    %132 = vector.extract_strided_slice %68 {offsets = [0, 24], sizes = [16, 8], strides = [1, 1]} : vector<16x32xf32> to vector<16x8xf32>
    %cst_141 = arith.constant dense<0.000000e+00> : vector<16x16xf32>
    %133 = tpu.matmul %130, %131, %cst_141 {dimension_numbers = #tpu.dot_dimension_numbers<[1], [1], [0], [0], [0, 0, 1, 0], [], []>} : vector<16x8xf32>, vector<16x8xf32>, vector<16x16xf32> -> vector<16x16xf32>
    %cst_142 = arith.constant 0.353553385 : f32
    %134 = vector.broadcast %cst_142 : f32 to vector<16x16xf32>
    %135 = arith.mulf %133, %134 : vector<16x16xf32>
    %cst_143 = arith.constant dense<0xFF800000> : vector<16xf32>
    %136 = vector.multi_reduction <maximumf>, %135, %cst_143 [1] : vector<16x16xf32> to vector<16xf32>
    %137 = vector.shape_cast %136 : vector<16xf32> to vector<16x1xf32>
    %138 = vector.broadcast %137 : vector<16x1xf32> to vector<16x16xf32>
    %139 = arith.subf %135, %138 : vector<16x16xf32>
    %140 = math.exp %139 : vector<16x16xf32>
    %cst_144 = arith.constant dense<0.000000e+00> : vector<16xf32>
    %141 = vector.multi_reduction <add>, %140, %cst_144 [1] : vector<16x16xf32> to vector<16xf32>
    %142 = vector.shape_cast %141 : vector<16xf32> to vector<16x1xf32>
    %143 = tpu.reciprocal %142 {approx = true} : vector<16x1xf32> -> vector<16x1xf32>
    %144 = vector.broadcast %143 : vector<16x1xf32> to vector<16x16xf32>
    %145 = arith.mulf %140, %144 : vector<16x16xf32>
    %cst_145 = arith.constant dense<0.000000e+00> : vector<16x8xf32>
    %146 = tpu.matmul %145, %132, %cst_145 {dimension_numbers = #tpu.dot_dimension_numbers<[1], [0], [0], [1], [0, 0, 1, 1], [], []>} : vector<16x16xf32>, vector<16x8xf32>, vector<16x8xf32> -> vector<16x8xf32>
    %147 = vector.extract_strided_slice %51 {offsets = [24, 0], sizes = [8, 32], strides = [1, 1]} : vector<32x32xf32> to vector<8x32xf32>
    %cst_146 = arith.constant dense<0.000000e+00> : vector<16x32xf32>
    %148 = tpu.matmul %146, %147, %cst_146 {dimension_numbers = #tpu.dot_dimension_numbers<[1], [0], [0], [1], [0, 0, 1, 1], [], []>} : vector<16x8xf32>, vector<8x32xf32>, vector<16x32xf32> -> vector<16x32xf32>
    %149 = arith.addf %129, %148 : vector<16x32xf32>
    %150 = vector.broadcast %42 : vector<1x32xf32> to vector<16x32xf32>
    %151 = arith.addf %149, %150 : vector<16x32xf32>
    %152 = arith.addf %61, %151 : vector<16x32xf32>
    %cst_147 = arith.constant dense<0.000000e+00> : vector<16xf32>
    %153 = vector.multi_reduction <add>, %152, %cst_147 [1] : vector<16x32xf32> to vector<16xf32>
    %154 = vector.shape_cast %153 : vector<16xf32> to vector<16x1xf32>
    %cst_148 = arith.constant 3.200000e+01 : f32
    %155 = vector.broadcast %cst_148 : f32 to vector<16x1xf32>
    %156 = arith.divf %154, %155 : vector<16x1xf32>
    %157 = vector.broadcast %156 : vector<16x1xf32> to vector<16x32xf32>
    %158 = arith.subf %152, %157 : vector<16x32xf32>
    %159 = arith.mulf %158, %158 : vector<16x32xf32>
    %cst_149 = arith.constant dense<0.000000e+00> : vector<16xf32>
    %160 = vector.multi_reduction <add>, %159, %cst_149 [1] : vector<16x32xf32> to vector<16xf32>
    %161 = vector.shape_cast %160 : vector<16xf32> to vector<16x1xf32>
    %cst_150 = arith.constant 3.200000e+01 : f32
    %162 = vector.broadcast %cst_150 : f32 to vector<16x1xf32>
    %163 = arith.divf %161, %162 : vector<16x1xf32>
    %164 = vector.broadcast %156 : vector<16x1xf32> to vector<16x32xf32>
    %165 = arith.subf %152, %164 : vector<16x32xf32>
    %cst_151 = arith.constant 9.99999974E-6 : f32
    %166 = vector.broadcast %cst_151 : f32 to vector<16x1xf32>
    %167 = arith.addf %163, %166 : vector<16x1xf32>
    %168 = math.rsqrt %167 : vector<16x1xf32>
    %169 = vector.broadcast %168 : vector<16x1xf32> to vector<16x32xf32>
    %170 = arith.mulf %165, %169 : vector<16x32xf32>
    %171 = vector.broadcast %46 : vector<1x32xf32> to vector<16x32xf32>
    %172 = arith.mulf %170, %171 : vector<16x32xf32>
    %173 = vector.broadcast %45 : vector<1x32xf32> to vector<16x32xf32>
    %174 = arith.addf %172, %173 : vector<16x32xf32>
    %cst_152 = arith.constant dense<0.000000e+00> : vector<16x64xf32>
    %175 = tpu.matmul %174, %49, %cst_152 {dimension_numbers = #tpu.dot_dimension_numbers<[1], [0], [0], [1], [0, 0, 1, 1], [], []>} : vector<16x32xf32>, vector<32x64xf32>, vector<16x64xf32> -> vector<16x64xf32>
    %176 = vector.broadcast %40 : vector<1x64xf32> to vector<16x64xf32>
    %177 = arith.addf %175, %176 : vector<16x64xf32>
    %cst_153 = arith.constant 0.000000e+00 : f32
    %178 = vector.broadcast %cst_153 : f32 to vector<16x64xf32>
    %179 = arith.maximumf %177, %178 : vector<16x64xf32>
    %cst_154 = arith.constant dense<0.000000e+00> : vector<16x32xf32>
    %180 = tpu.matmul %179, %50, %cst_154 {dimension_numbers = #tpu.dot_dimension_numbers<[1], [0], [0], [1], [0, 0, 1, 1], [], []>} : vector<16x64xf32>, vector<64x32xf32>, vector<16x32xf32> -> vector<16x32xf32>
    %181 = vector.broadcast %41 : vector<1x32xf32> to vector<16x32xf32>
    %182 = arith.addf %180, %181 : vector<16x32xf32>
    %183 = arith.addf %174, %182 : vector<16x32xf32>
    %cst_155 = arith.constant dense<0.000000e+00> : vector<16xf32>
    %184 = vector.multi_reduction <add>, %183, %cst_155 [1] : vector<16x32xf32> to vector<16xf32>
    %185 = vector.shape_cast %184 : vector<16xf32> to vector<16x1xf32>
    %cst_156 = arith.constant 3.200000e+01 : f32
    %186 = vector.broadcast %cst_156 : f32 to vector<16x1xf32>
    %187 = arith.divf %185, %186 : vector<16x1xf32>
    %188 = vector.broadcast %187 : vector<16x1xf32> to vector<16x32xf32>
    %189 = arith.subf %183, %188 : vector<16x32xf32>
    %190 = arith.mulf %189, %189 : vector<16x32xf32>
    %cst_157 = arith.constant dense<0.000000e+00> : vector<16xf32>
    %191 = vector.multi_reduction <add>, %190, %cst_157 [1] : vector<16x32xf32> to vector<16xf32>
    %192 = vector.shape_cast %191 : vector<16xf32> to vector<16x1xf32>
    %cst_158 = arith.constant 3.200000e+01 : f32
    %193 = vector.broadcast %cst_158 : f32 to vector<16x1xf32>
    %194 = arith.divf %192, %193 : vector<16x1xf32>
    %195 = vector.broadcast %187 : vector<16x1xf32> to vector<16x32xf32>
    %196 = arith.subf %183, %195 : vector<16x32xf32>
    %cst_159 = arith.constant 9.99999974E-6 : f32
    %197 = vector.broadcast %cst_159 : f32 to vector<16x1xf32>
    %198 = arith.addf %194, %197 : vector<16x1xf32>
    %199 = math.rsqrt %198 : vector<16x1xf32>
    %200 = vector.broadcast %199 : vector<16x1xf32> to vector<16x32xf32>
    %201 = arith.mulf %196, %200 : vector<16x32xf32>
    %202 = vector.broadcast %48 : vector<1x32xf32> to vector<16x32xf32>
    %203 = arith.mulf %201, %202 : vector<16x32xf32>
    %204 = vector.broadcast %47 : vector<1x32xf32> to vector<16x32xf32>
    %205 = arith.addf %203, %204 : vector<16x32xf32>
    %cst_160 = arith.constant dense<0.000000e+00> : vector<8x96xf32>
    %206 = tpu.matmul %59, %31, %cst_160 {dimension_numbers = #tpu.dot_dimension_numbers<[1], [0], [0], [1], [0, 0, 1, 1], [], []>} : vector<8x32xf32>, vector<32x96xf32>, vector<8x96xf32> -> vector<8x96xf32>
    %207 = vector.broadcast %29 : vector<1x96xf32> to vector<8x96xf32>
    %208 = arith.addf %206, %207 : vector<8x96xf32>
    %209 = vector.extract_strided_slice %208 {offsets = [0, 0], sizes = [8, 32], strides = [1, 1]} : vector<8x96xf32> to vector<8x32xf32>
    %210 = vector.extract_strided_slice %208 {offsets = [0, 32], sizes = [8, 32], strides = [1, 1]} : vector<8x96xf32> to vector<8x32xf32>
    %211 = vector.extract_strided_slice %208 {offsets = [0, 64], sizes = [8, 32], strides = [1, 1]} : vector<8x96xf32> to vector<8x32xf32>
    %212 = vector.extract_strided_slice %209 {offsets = [0, 0], sizes = [8, 8], strides = [1, 1]} : vector<8x32xf32> to vector<8x8xf32>
    %213 = vector.extract_strided_slice %210 {offsets = [0, 0], sizes = [8, 8], strides = [1, 1]} : vector<8x32xf32> to vector<8x8xf32>
    %214 = vector.extract_strided_slice %211 {offsets = [0, 0], sizes = [8, 8], strides = [1, 1]} : vector<8x32xf32> to vector<8x8xf32>
    %cst_161 = arith.constant dense<0.000000e+00> : vector<8x8xf32>
    %215 = tpu.matmul %212, %213, %cst_161 {dimension_numbers = #tpu.dot_dimension_numbers<[1], [1], [0], [0], [0, 0, 1, 0], [], []>} : vector<8x8xf32>, vector<8x8xf32>, vector<8x8xf32> -> vector<8x8xf32>
    %cst_162 = arith.constant 0.353553385 : f32
    %216 = vector.broadcast %cst_162 : f32 to vector<8x8xf32>
    %217 = arith.mulf %215, %216 : vector<8x8xf32>
    %cst_163 = arith.constant dense<0xFF800000> : vector<8xf32>
    %218 = vector.multi_reduction <maximumf>, %217, %cst_163 [1] : vector<8x8xf32> to vector<8xf32>
    %219 = vector.shape_cast %218 : vector<8xf32> to vector<8x1xf32>
    %220 = vector.broadcast %219 : vector<8x1xf32> to vector<8x8xf32>
    %221 = arith.subf %217, %220 : vector<8x8xf32>
    %222 = math.exp %221 : vector<8x8xf32>
    %cst_164 = arith.constant dense<0.000000e+00> : vector<8xf32>
    %223 = vector.multi_reduction <add>, %222, %cst_164 [1] : vector<8x8xf32> to vector<8xf32>
    %224 = vector.shape_cast %223 : vector<8xf32> to vector<8x1xf32>
    %225 = tpu.reciprocal %224 {approx = true} : vector<8x1xf32> -> vector<8x1xf32>
    %226 = vector.broadcast %225 : vector<8x1xf32> to vector<8x8xf32>
    %227 = arith.mulf %222, %226 : vector<8x8xf32>
    %cst_165 = arith.constant dense<0.000000e+00> : vector<8x8xf32>
    %228 = tpu.matmul %227, %214, %cst_165 {dimension_numbers = #tpu.dot_dimension_numbers<[1], [0], [0], [1], [0, 0, 1, 1], [], []>} : vector<8x8xf32>, vector<8x8xf32>, vector<8x8xf32> -> vector<8x8xf32>
    %229 = vector.extract_strided_slice %30 {offsets = [0, 0], sizes = [8, 32], strides = [1, 1]} : vector<32x32xf32> to vector<8x32xf32>
    %cst_166 = arith.constant dense<0.000000e+00> : vector<8x32xf32>
    %230 = tpu.matmul %228, %229, %cst_166 {dimension_numbers = #tpu.dot_dimension_numbers<[1], [0], [0], [1], [0, 0, 1, 1], [], []>} : vector<8x8xf32>, vector<8x32xf32>, vector<8x32xf32> -> vector<8x32xf32>
    %231 = vector.extract_strided_slice %209 {offsets = [0, 8], sizes = [8, 8], strides = [1, 1]} : vector<8x32xf32> to vector<8x8xf32>
    %232 = vector.extract_strided_slice %210 {offsets = [0, 8], sizes = [8, 8], strides = [1, 1]} : vector<8x32xf32> to vector<8x8xf32>
    %233 = vector.extract_strided_slice %211 {offsets = [0, 8], sizes = [8, 8], strides = [1, 1]} : vector<8x32xf32> to vector<8x8xf32>
    %cst_167 = arith.constant dense<0.000000e+00> : vector<8x8xf32>
    %234 = tpu.matmul %231, %232, %cst_167 {dimension_numbers = #tpu.dot_dimension_numbers<[1], [1], [0], [0], [0, 0, 1, 0], [], []>} : vector<8x8xf32>, vector<8x8xf32>, vector<8x8xf32> -> vector<8x8xf32>
    %cst_168 = arith.constant 0.353553385 : f32
    %235 = vector.broadcast %cst_168 : f32 to vector<8x8xf32>
    %236 = arith.mulf %234, %235 : vector<8x8xf32>
    %cst_169 = arith.constant dense<0xFF800000> : vector<8xf32>
    %237 = vector.multi_reduction <maximumf>, %236, %cst_169 [1] : vector<8x8xf32> to vector<8xf32>
    %238 = vector.shape_cast %237 : vector<8xf32> to vector<8x1xf32>
    %239 = vector.broadcast %238 : vector<8x1xf32> to vector<8x8xf32>
    %240 = arith.subf %236, %239 : vector<8x8xf32>
    %241 = math.exp %240 : vector<8x8xf32>
    %cst_170 = arith.constant dense<0.000000e+00> : vector<8xf32>
    %242 = vector.multi_reduction <add>, %241, %cst_170 [1] : vector<8x8xf32> to vector<8xf32>
    %243 = vector.shape_cast %242 : vector<8xf32> to vector<8x1xf32>
    %244 = tpu.reciprocal %243 {approx = true} : vector<8x1xf32> -> vector<8x1xf32>
    %245 = vector.broadcast %244 : vector<8x1xf32> to vector<8x8xf32>
    %246 = arith.mulf %241, %245 : vector<8x8xf32>
    %cst_171 = arith.constant dense<0.000000e+00> : vector<8x8xf32>
    %247 = tpu.matmul %246, %233, %cst_171 {dimension_numbers = #tpu.dot_dimension_numbers<[1], [0], [0], [1], [0, 0, 1, 1], [], []>} : vector<8x8xf32>, vector<8x8xf32>, vector<8x8xf32> -> vector<8x8xf32>
    %248 = vector.extract_strided_slice %30 {offsets = [8, 0], sizes = [8, 32], strides = [1, 1]} : vector<32x32xf32> to vector<8x32xf32>
    %cst_172 = arith.constant dense<0.000000e+00> : vector<8x32xf32>
    %249 = tpu.matmul %247, %248, %cst_172 {dimension_numbers = #tpu.dot_dimension_numbers<[1], [0], [0], [1], [0, 0, 1, 1], [], []>} : vector<8x8xf32>, vector<8x32xf32>, vector<8x32xf32> -> vector<8x32xf32>
    %250 = arith.addf %230, %249 : vector<8x32xf32>
    %251 = vector.extract_strided_slice %209 {offsets = [0, 16], sizes = [8, 8], strides = [1, 1]} : vector<8x32xf32> to vector<8x8xf32>
    %252 = vector.extract_strided_slice %210 {offsets = [0, 16], sizes = [8, 8], strides = [1, 1]} : vector<8x32xf32> to vector<8x8xf32>
    %253 = vector.extract_strided_slice %211 {offsets = [0, 16], sizes = [8, 8], strides = [1, 1]} : vector<8x32xf32> to vector<8x8xf32>
    %cst_173 = arith.constant dense<0.000000e+00> : vector<8x8xf32>
    %254 = tpu.matmul %251, %252, %cst_173 {dimension_numbers = #tpu.dot_dimension_numbers<[1], [1], [0], [0], [0, 0, 1, 0], [], []>} : vector<8x8xf32>, vector<8x8xf32>, vector<8x8xf32> -> vector<8x8xf32>
    %cst_174 = arith.constant 0.353553385 : f32
    %255 = vector.broadcast %cst_174 : f32 to vector<8x8xf32>
    %256 = arith.mulf %254, %255 : vector<8x8xf32>
    %cst_175 = arith.constant dense<0xFF800000> : vector<8xf32>
    %257 = vector.multi_reduction <maximumf>, %256, %cst_175 [1] : vector<8x8xf32> to vector<8xf32>
    %258 = vector.shape_cast %257 : vector<8xf32> to vector<8x1xf32>
    %259 = vector.broadcast %258 : vector<8x1xf32> to vector<8x8xf32>
    %260 = arith.subf %256, %259 : vector<8x8xf32>
    %261 = math.exp %260 : vector<8x8xf32>
    %cst_176 = arith.constant dense<0.000000e+00> : vector<8xf32>
    %262 = vector.multi_reduction <add>, %261, %cst_176 [1] : vector<8x8xf32> to vector<8xf32>
    %263 = vector.shape_cast %262 : vector<8xf32> to vector<8x1xf32>
    %264 = tpu.reciprocal %263 {approx = true} : vector<8x1xf32> -> vector<8x1xf32>
    %265 = vector.broadcast %264 : vector<8x1xf32> to vector<8x8xf32>
    %266 = arith.mulf %261, %265 : vector<8x8xf32>
    %cst_177 = arith.constant dense<0.000000e+00> : vector<8x8xf32>
    %267 = tpu.matmul %266, %253, %cst_177 {dimension_numbers = #tpu.dot_dimension_numbers<[1], [0], [0], [1], [0, 0, 1, 1], [], []>} : vector<8x8xf32>, vector<8x8xf32>, vector<8x8xf32> -> vector<8x8xf32>
    %268 = vector.extract_strided_slice %30 {offsets = [16, 0], sizes = [8, 32], strides = [1, 1]} : vector<32x32xf32> to vector<8x32xf32>
    %cst_178 = arith.constant dense<0.000000e+00> : vector<8x32xf32>
    %269 = tpu.matmul %267, %268, %cst_178 {dimension_numbers = #tpu.dot_dimension_numbers<[1], [0], [0], [1], [0, 0, 1, 1], [], []>} : vector<8x8xf32>, vector<8x32xf32>, vector<8x32xf32> -> vector<8x32xf32>
    %270 = arith.addf %250, %269 : vector<8x32xf32>
    %271 = vector.extract_strided_slice %209 {offsets = [0, 24], sizes = [8, 8], strides = [1, 1]} : vector<8x32xf32> to vector<8x8xf32>
    %272 = vector.extract_strided_slice %210 {offsets = [0, 24], sizes = [8, 8], strides = [1, 1]} : vector<8x32xf32> to vector<8x8xf32>
    %273 = vector.extract_strided_slice %211 {offsets = [0, 24], sizes = [8, 8], strides = [1, 1]} : vector<8x32xf32> to vector<8x8xf32>
    %cst_179 = arith.constant dense<0.000000e+00> : vector<8x8xf32>
    %274 = tpu.matmul %271, %272, %cst_179 {dimension_numbers = #tpu.dot_dimension_numbers<[1], [1], [0], [0], [0, 0, 1, 0], [], []>} : vector<8x8xf32>, vector<8x8xf32>, vector<8x8xf32> -> vector<8x8xf32>
    %cst_180 = arith.constant 0.353553385 : f32
    %275 = vector.broadcast %cst_180 : f32 to vector<8x8xf32>
    %276 = arith.mulf %274, %275 : vector<8x8xf32>
    %cst_181 = arith.constant dense<0xFF800000> : vector<8xf32>
    %277 = vector.multi_reduction <maximumf>, %276, %cst_181 [1] : vector<8x8xf32> to vector<8xf32>
    %278 = vector.shape_cast %277 : vector<8xf32> to vector<8x1xf32>
    %279 = vector.broadcast %278 : vector<8x1xf32> to vector<8x8xf32>
    %280 = arith.subf %276, %279 : vector<8x8xf32>
    %281 = math.exp %280 : vector<8x8xf32>
    %cst_182 = arith.constant dense<0.000000e+00> : vector<8xf32>
    %282 = vector.multi_reduction <add>, %281, %cst_182 [1] : vector<8x8xf32> to vector<8xf32>
    %283 = vector.shape_cast %282 : vector<8xf32> to vector<8x1xf32>
    %284 = tpu.reciprocal %283 {approx = true} : vector<8x1xf32> -> vector<8x1xf32>
    %285 = vector.broadcast %284 : vector<8x1xf32> to vector<8x8xf32>
    %286 = arith.mulf %281, %285 : vector<8x8xf32>
    %cst_183 = arith.constant dense<0.000000e+00> : vector<8x8xf32>
    %287 = tpu.matmul %286, %273, %cst_183 {dimension_numbers = #tpu.dot_dimension_numbers<[1], [0], [0], [1], [0, 0, 1, 1], [], []>} : vector<8x8xf32>, vector<8x8xf32>, vector<8x8xf32> -> vector<8x8xf32>
    %288 = vector.extract_strided_slice %30 {offsets = [24, 0], sizes = [8, 32], strides = [1, 1]} : vector<32x32xf32> to vector<8x32xf32>
    %cst_184 = arith.constant dense<0.000000e+00> : vector<8x32xf32>
    %289 = tpu.matmul %287, %288, %cst_184 {dimension_numbers = #tpu.dot_dimension_numbers<[1], [0], [0], [1], [0, 0, 1, 1], [], []>} : vector<8x8xf32>, vector<8x32xf32>, vector<8x32xf32> -> vector<8x32xf32>
    %290 = arith.addf %270, %289 : vector<8x32xf32>
    %291 = vector.broadcast %28 : vector<1x32xf32> to vector<8x32xf32>
    %292 = arith.addf %290, %291 : vector<8x32xf32>
    %293 = arith.addf %59, %292 : vector<8x32xf32>
    %cst_185 = arith.constant dense<0.000000e+00> : vector<8xf32>
    %294 = vector.multi_reduction <add>, %293, %cst_185 [1] : vector<8x32xf32> to vector<8xf32>
    %295 = vector.shape_cast %294 : vector<8xf32> to vector<8x1xf32>
    %cst_186 = arith.constant 3.200000e+01 : f32
    %296 = vector.broadcast %cst_186 : f32 to vector<8x1xf32>
    %297 = arith.divf %295, %296 : vector<8x1xf32>
    %298 = vector.broadcast %297 : vector<8x1xf32> to vector<8x32xf32>
    %299 = arith.subf %293, %298 : vector<8x32xf32>
    %300 = arith.mulf %299, %299 : vector<8x32xf32>
    %cst_187 = arith.constant dense<0.000000e+00> : vector<8xf32>
    %301 = vector.multi_reduction <add>, %300, %cst_187 [1] : vector<8x32xf32> to vector<8xf32>
    %302 = vector.shape_cast %301 : vector<8xf32> to vector<8x1xf32>
    %cst_188 = arith.constant 3.200000e+01 : f32
    %303 = vector.broadcast %cst_188 : f32 to vector<8x1xf32>
    %304 = arith.divf %302, %303 : vector<8x1xf32>
    %305 = vector.broadcast %297 : vector<8x1xf32> to vector<8x32xf32>
    %306 = arith.subf %293, %305 : vector<8x32xf32>
    %cst_189 = arith.constant 9.99999974E-6 : f32
    %307 = vector.broadcast %cst_189 : f32 to vector<8x1xf32>
    %308 = arith.addf %304, %307 : vector<8x1xf32>
    %309 = math.rsqrt %308 : vector<8x1xf32>
    %310 = vector.broadcast %309 : vector<8x1xf32> to vector<8x32xf32>
    %311 = arith.mulf %306, %310 : vector<8x32xf32>
    %312 = vector.broadcast %23 : vector<1x32xf32> to vector<8x32xf32>
    %313 = arith.mulf %311, %312 : vector<8x32xf32>
    %314 = vector.broadcast %22 : vector<1x32xf32> to vector<8x32xf32>
    %315 = arith.addf %313, %314 : vector<8x32xf32>
    %cst_190 = arith.constant dense<0.000000e+00> : vector<8x32xf32>
    %316 = tpu.matmul %315, %20, %cst_190 {dimension_numbers = #tpu.dot_dimension_numbers<[1], [0], [0], [1], [0, 0, 1, 1], [], []>} : vector<8x32xf32>, vector<32x32xf32>, vector<8x32xf32> -> vector<8x32xf32>
    %317 = vector.broadcast %16 : vector<1x32xf32> to vector<8x32xf32>
    %318 = arith.addf %316, %317 : vector<8x32xf32>
    %319 = arith.addf %205, %58 : vector<16x32xf32>
    %cst_191 = arith.constant dense<0.000000e+00> : vector<16x32xf32>
    %320 = tpu.matmul %319, %18, %cst_191 {dimension_numbers = #tpu.dot_dimension_numbers<[1], [0], [0], [1], [0, 0, 1, 1], [], []>} : vector<16x32xf32>, vector<32x32xf32>, vector<16x32xf32> -> vector<16x32xf32>
    %321 = vector.broadcast %14 : vector<1x32xf32> to vector<16x32xf32>
    %322 = arith.addf %320, %321 : vector<16x32xf32>
    %cst_192 = arith.constant dense<0.000000e+00> : vector<16x32xf32>
    %323 = tpu.matmul %205, %21, %cst_192 {dimension_numbers = #tpu.dot_dimension_numbers<[1], [0], [0], [1], [0, 0, 1, 1], [], []>} : vector<16x32xf32>, vector<32x32xf32>, vector<16x32xf32> -> vector<16x32xf32>
    %324 = vector.broadcast %17 : vector<1x32xf32> to vector<16x32xf32>
    %325 = arith.addf %323, %324 : vector<16x32xf32>
    %326 = vector.extract_strided_slice %318 {offsets = [0, 0], sizes = [8, 8], strides = [1, 1]} : vector<8x32xf32> to vector<8x8xf32>
    %327 = vector.extract_strided_slice %322 {offsets = [0, 0], sizes = [16, 8], strides = [1, 1]} : vector<16x32xf32> to vector<16x8xf32>
    %328 = vector.extract_strided_slice %325 {offsets = [0, 0], sizes = [16, 8], strides = [1, 1]} : vector<16x32xf32> to vector<16x8xf32>
    %cst_193 = arith.constant dense<0.000000e+00> : vector<8x16xf32>
    %329 = tpu.matmul %326, %327, %cst_193 {dimension_numbers = #tpu.dot_dimension_numbers<[1], [1], [0], [0], [0, 0, 1, 0], [], []>} : vector<8x8xf32>, vector<16x8xf32>, vector<8x16xf32> -> vector<8x16xf32>
    %cst_194 = arith.constant 0.353553385 : f32
    %330 = vector.broadcast %cst_194 : f32 to vector<8x16xf32>
    %331 = arith.mulf %329, %330 : vector<8x16xf32>
    %cst_195 = arith.constant dense<0xFF800000> : vector<8xf32>
    %332 = vector.multi_reduction <maximumf>, %331, %cst_195 [1] : vector<8x16xf32> to vector<8xf32>
    %333 = vector.shape_cast %332 : vector<8xf32> to vector<8x1xf32>
    %334 = vector.broadcast %333 : vector<8x1xf32> to vector<8x16xf32>
    %335 = arith.subf %331, %334 : vector<8x16xf32>
    %336 = math.exp %335 : vector<8x16xf32>
    %cst_196 = arith.constant dense<0.000000e+00> : vector<8xf32>
    %337 = vector.multi_reduction <add>, %336, %cst_196 [1] : vector<8x16xf32> to vector<8xf32>
    %338 = vector.shape_cast %337 : vector<8xf32> to vector<8x1xf32>
    %339 = tpu.reciprocal %338 {approx = true} : vector<8x1xf32> -> vector<8x1xf32>
    %340 = vector.broadcast %339 : vector<8x1xf32> to vector<8x16xf32>
    %341 = arith.mulf %336, %340 : vector<8x16xf32>
    %cst_197 = arith.constant dense<0.000000e+00> : vector<8x8xf32>
    %342 = tpu.matmul %341, %328, %cst_197 {dimension_numbers = #tpu.dot_dimension_numbers<[1], [0], [0], [1], [0, 0, 1, 1], [], []>} : vector<8x16xf32>, vector<16x8xf32>, vector<8x8xf32> -> vector<8x8xf32>
    %343 = vector.extract_strided_slice %19 {offsets = [0, 0], sizes = [8, 32], strides = [1, 1]} : vector<32x32xf32> to vector<8x32xf32>
    %cst_198 = arith.constant dense<0.000000e+00> : vector<8x32xf32>
    %344 = tpu.matmul %342, %343, %cst_198 {dimension_numbers = #tpu.dot_dimension_numbers<[1], [0], [0], [1], [0, 0, 1, 1], [], []>} : vector<8x8xf32>, vector<8x32xf32>, vector<8x32xf32> -> vector<8x32xf32>
    %345 = vector.extract_strided_slice %318 {offsets = [0, 8], sizes = [8, 8], strides = [1, 1]} : vector<8x32xf32> to vector<8x8xf32>
    %346 = vector.extract_strided_slice %322 {offsets = [0, 8], sizes = [16, 8], strides = [1, 1]} : vector<16x32xf32> to vector<16x8xf32>
    %347 = vector.extract_strided_slice %325 {offsets = [0, 8], sizes = [16, 8], strides = [1, 1]} : vector<16x32xf32> to vector<16x8xf32>
    %cst_199 = arith.constant dense<0.000000e+00> : vector<8x16xf32>
    %348 = tpu.matmul %345, %346, %cst_199 {dimension_numbers = #tpu.dot_dimension_numbers<[1], [1], [0], [0], [0, 0, 1, 0], [], []>} : vector<8x8xf32>, vector<16x8xf32>, vector<8x16xf32> -> vector<8x16xf32>
    %cst_200 = arith.constant 0.353553385 : f32
    %349 = vector.broadcast %cst_200 : f32 to vector<8x16xf32>
    %350 = arith.mulf %348, %349 : vector<8x16xf32>
    %cst_201 = arith.constant dense<0xFF800000> : vector<8xf32>
    %351 = vector.multi_reduction <maximumf>, %350, %cst_201 [1] : vector<8x16xf32> to vector<8xf32>
    %352 = vector.shape_cast %351 : vector<8xf32> to vector<8x1xf32>
    %353 = vector.broadcast %352 : vector<8x1xf32> to vector<8x16xf32>
    %354 = arith.subf %350, %353 : vector<8x16xf32>
    %355 = math.exp %354 : vector<8x16xf32>
    %cst_202 = arith.constant dense<0.000000e+00> : vector<8xf32>
    %356 = vector.multi_reduction <add>, %355, %cst_202 [1] : vector<8x16xf32> to vector<8xf32>
    %357 = vector.shape_cast %356 : vector<8xf32> to vector<8x1xf32>
    %358 = tpu.reciprocal %357 {approx = true} : vector<8x1xf32> -> vector<8x1xf32>
    %359 = vector.broadcast %358 : vector<8x1xf32> to vector<8x16xf32>
    %360 = arith.mulf %355, %359 : vector<8x16xf32>
    %cst_203 = arith.constant dense<0.000000e+00> : vector<8x8xf32>
    %361 = tpu.matmul %360, %347, %cst_203 {dimension_numbers = #tpu.dot_dimension_numbers<[1], [0], [0], [1], [0, 0, 1, 1], [], []>} : vector<8x16xf32>, vector<16x8xf32>, vector<8x8xf32> -> vector<8x8xf32>
    %362 = vector.extract_strided_slice %19 {offsets = [8, 0], sizes = [8, 32], strides = [1, 1]} : vector<32x32xf32> to vector<8x32xf32>
    %cst_204 = arith.constant dense<0.000000e+00> : vector<8x32xf32>
    %363 = tpu.matmul %361, %362, %cst_204 {dimension_numbers = #tpu.dot_dimension_numbers<[1], [0], [0], [1], [0, 0, 1, 1], [], []>} : vector<8x8xf32>, vector<8x32xf32>, vector<8x32xf32> -> vector<8x32xf32>
    %364 = arith.addf %344, %363 : vector<8x32xf32>
    %365 = vector.extract_strided_slice %318 {offsets = [0, 16], sizes = [8, 8], strides = [1, 1]} : vector<8x32xf32> to vector<8x8xf32>
    %366 = vector.extract_strided_slice %322 {offsets = [0, 16], sizes = [16, 8], strides = [1, 1]} : vector<16x32xf32> to vector<16x8xf32>
    %367 = vector.extract_strided_slice %325 {offsets = [0, 16], sizes = [16, 8], strides = [1, 1]} : vector<16x32xf32> to vector<16x8xf32>
    %cst_205 = arith.constant dense<0.000000e+00> : vector<8x16xf32>
    %368 = tpu.matmul %365, %366, %cst_205 {dimension_numbers = #tpu.dot_dimension_numbers<[1], [1], [0], [0], [0, 0, 1, 0], [], []>} : vector<8x8xf32>, vector<16x8xf32>, vector<8x16xf32> -> vector<8x16xf32>
    %cst_206 = arith.constant 0.353553385 : f32
    %369 = vector.broadcast %cst_206 : f32 to vector<8x16xf32>
    %370 = arith.mulf %368, %369 : vector<8x16xf32>
    %cst_207 = arith.constant dense<0xFF800000> : vector<8xf32>
    %371 = vector.multi_reduction <maximumf>, %370, %cst_207 [1] : vector<8x16xf32> to vector<8xf32>
    %372 = vector.shape_cast %371 : vector<8xf32> to vector<8x1xf32>
    %373 = vector.broadcast %372 : vector<8x1xf32> to vector<8x16xf32>
    %374 = arith.subf %370, %373 : vector<8x16xf32>
    %375 = math.exp %374 : vector<8x16xf32>
    %cst_208 = arith.constant dense<0.000000e+00> : vector<8xf32>
    %376 = vector.multi_reduction <add>, %375, %cst_208 [1] : vector<8x16xf32> to vector<8xf32>
    %377 = vector.shape_cast %376 : vector<8xf32> to vector<8x1xf32>
    %378 = tpu.reciprocal %377 {approx = true} : vector<8x1xf32> -> vector<8x1xf32>
    %379 = vector.broadcast %378 : vector<8x1xf32> to vector<8x16xf32>
    %380 = arith.mulf %375, %379 : vector<8x16xf32>
    %cst_209 = arith.constant dense<0.000000e+00> : vector<8x8xf32>
    %381 = tpu.matmul %380, %367, %cst_209 {dimension_numbers = #tpu.dot_dimension_numbers<[1], [0], [0], [1], [0, 0, 1, 1], [], []>} : vector<8x16xf32>, vector<16x8xf32>, vector<8x8xf32> -> vector<8x8xf32>
    %382 = vector.extract_strided_slice %19 {offsets = [16, 0], sizes = [8, 32], strides = [1, 1]} : vector<32x32xf32> to vector<8x32xf32>
    %cst_210 = arith.constant dense<0.000000e+00> : vector<8x32xf32>
    %383 = tpu.matmul %381, %382, %cst_210 {dimension_numbers = #tpu.dot_dimension_numbers<[1], [0], [0], [1], [0, 0, 1, 1], [], []>} : vector<8x8xf32>, vector<8x32xf32>, vector<8x32xf32> -> vector<8x32xf32>
    %384 = arith.addf %364, %383 : vector<8x32xf32>
    %385 = vector.extract_strided_slice %318 {offsets = [0, 24], sizes = [8, 8], strides = [1, 1]} : vector<8x32xf32> to vector<8x8xf32>
    %386 = vector.extract_strided_slice %322 {offsets = [0, 24], sizes = [16, 8], strides = [1, 1]} : vector<16x32xf32> to vector<16x8xf32>
    %387 = vector.extract_strided_slice %325 {offsets = [0, 24], sizes = [16, 8], strides = [1, 1]} : vector<16x32xf32> to vector<16x8xf32>
    %cst_211 = arith.constant dense<0.000000e+00> : vector<8x16xf32>
    %388 = tpu.matmul %385, %386, %cst_211 {dimension_numbers = #tpu.dot_dimension_numbers<[1], [1], [0], [0], [0, 0, 1, 0], [], []>} : vector<8x8xf32>, vector<16x8xf32>, vector<8x16xf32> -> vector<8x16xf32>
    %cst_212 = arith.constant 0.353553385 : f32
    %389 = vector.broadcast %cst_212 : f32 to vector<8x16xf32>
    %390 = arith.mulf %388, %389 : vector<8x16xf32>
    %cst_213 = arith.constant dense<0xFF800000> : vector<8xf32>
    %391 = vector.multi_reduction <maximumf>, %390, %cst_213 [1] : vector<8x16xf32> to vector<8xf32>
    %392 = vector.shape_cast %391 : vector<8xf32> to vector<8x1xf32>
    %393 = vector.broadcast %392 : vector<8x1xf32> to vector<8x16xf32>
    %394 = arith.subf %390, %393 : vector<8x16xf32>
    %395 = math.exp %394 : vector<8x16xf32>
    %cst_214 = arith.constant dense<0.000000e+00> : vector<8xf32>
    %396 = vector.multi_reduction <add>, %395, %cst_214 [1] : vector<8x16xf32> to vector<8xf32>
    %397 = vector.shape_cast %396 : vector<8xf32> to vector<8x1xf32>
    %398 = tpu.reciprocal %397 {approx = true} : vector<8x1xf32> -> vector<8x1xf32>
    %399 = vector.broadcast %398 : vector<8x1xf32> to vector<8x16xf32>
    %400 = arith.mulf %395, %399 : vector<8x16xf32>
    %cst_215 = arith.constant dense<0.000000e+00> : vector<8x8xf32>
    %401 = tpu.matmul %400, %387, %cst_215 {dimension_numbers = #tpu.dot_dimension_numbers<[1], [0], [0], [1], [0, 0, 1, 1], [], []>} : vector<8x16xf32>, vector<16x8xf32>, vector<8x8xf32> -> vector<8x8xf32>
    %402 = vector.extract_strided_slice %19 {offsets = [24, 0], sizes = [8, 32], strides = [1, 1]} : vector<32x32xf32> to vector<8x32xf32>
    %cst_216 = arith.constant dense<0.000000e+00> : vector<8x32xf32>
    %403 = tpu.matmul %401, %402, %cst_216 {dimension_numbers = #tpu.dot_dimension_numbers<[1], [0], [0], [1], [0, 0, 1, 1], [], []>} : vector<8x8xf32>, vector<8x32xf32>, vector<8x32xf32> -> vector<8x32xf32>
    %404 = arith.addf %384, %403 : vector<8x32xf32>
    %405 = vector.broadcast %15 : vector<1x32xf32> to vector<8x32xf32>
    %406 = arith.addf %404, %405 : vector<8x32xf32>
    %407 = arith.addf %315, %406 : vector<8x32xf32>
    %cst_217 = arith.constant dense<0.000000e+00> : vector<8xf32>
    %408 = vector.multi_reduction <add>, %407, %cst_217 [1] : vector<8x32xf32> to vector<8xf32>
    %409 = vector.shape_cast %408 : vector<8xf32> to vector<8x1xf32>
    %cst_218 = arith.constant 3.200000e+01 : f32
    %410 = vector.broadcast %cst_218 : f32 to vector<8x1xf32>
    %411 = arith.divf %409, %410 : vector<8x1xf32>
    %412 = vector.broadcast %411 : vector<8x1xf32> to vector<8x32xf32>
    %413 = arith.subf %407, %412 : vector<8x32xf32>
    %414 = arith.mulf %413, %413 : vector<8x32xf32>
    %cst_219 = arith.constant dense<0.000000e+00> : vector<8xf32>
    %415 = vector.multi_reduction <add>, %414, %cst_219 [1] : vector<8x32xf32> to vector<8xf32>
    %416 = vector.shape_cast %415 : vector<8xf32> to vector<8x1xf32>
    %cst_220 = arith.constant 3.200000e+01 : f32
    %417 = vector.broadcast %cst_220 : f32 to vector<8x1xf32>
    %418 = arith.divf %416, %417 : vector<8x1xf32>
    %419 = vector.broadcast %411 : vector<8x1xf32> to vector<8x32xf32>
    %420 = arith.subf %407, %419 : vector<8x32xf32>
    %cst_221 = arith.constant 9.99999974E-6 : f32
    %421 = vector.broadcast %cst_221 : f32 to vector<8x1xf32>
    %422 = arith.addf %418, %421 : vector<8x1xf32>
    %423 = math.rsqrt %422 : vector<8x1xf32>
    %424 = vector.broadcast %423 : vector<8x1xf32> to vector<8x32xf32>
    %425 = arith.mulf %420, %424 : vector<8x32xf32>
    %426 = vector.broadcast %25 : vector<1x32xf32> to vector<8x32xf32>
    %427 = arith.mulf %425, %426 : vector<8x32xf32>
    %428 = vector.broadcast %24 : vector<1x32xf32> to vector<8x32xf32>
    %429 = arith.addf %427, %428 : vector<8x32xf32>
    %cst_222 = arith.constant dense<0.000000e+00> : vector<8x64xf32>
    %430 = tpu.matmul %429, %32, %cst_222 {dimension_numbers = #tpu.dot_dimension_numbers<[1], [0], [0], [1], [0, 0, 1, 1], [], []>} : vector<8x32xf32>, vector<32x64xf32>, vector<8x64xf32> -> vector<8x64xf32>
    %431 = vector.broadcast %12 : vector<1x64xf32> to vector<8x64xf32>
    %432 = arith.addf %430, %431 : vector<8x64xf32>
    %cst_223 = arith.constant 0.000000e+00 : f32
    %433 = vector.broadcast %cst_223 : f32 to vector<8x64xf32>
    %434 = arith.maximumf %432, %433 : vector<8x64xf32>
    %cst_224 = arith.constant dense<0.000000e+00> : vector<8x32xf32>
    %435 = tpu.matmul %434, %33, %cst_224 {dimension_numbers = #tpu.dot_dimension_numbers<[1], [0], [0], [1], [0, 0, 1, 1], [], []>} : vector<8x64xf32>, vector<64x32xf32>, vector<8x32xf32> -> vector<8x32xf32>
    %436 = vector.broadcast %13 : vector<1x32xf32> to vector<8x32xf32>
    %437 = arith.addf %435, %436 : vector<8x32xf32>
    %438 = arith.addf %429, %437 : vector<8x32xf32>
    %cst_225 = arith.constant dense<0.000000e+00> : vector<8xf32>
    %439 = vector.multi_reduction <add>, %438, %cst_225 [1] : vector<8x32xf32> to vector<8xf32>
    %440 = vector.shape_cast %439 : vector<8xf32> to vector<8x1xf32>
    %cst_226 = arith.constant 3.200000e+01 : f32
    %441 = vector.broadcast %cst_226 : f32 to vector<8x1xf32>
    %442 = arith.divf %440, %441 : vector<8x1xf32>
    %443 = vector.broadcast %442 : vector<8x1xf32> to vector<8x32xf32>
    %444 = arith.subf %438, %443 : vector<8x32xf32>
    %445 = arith.mulf %444, %444 : vector<8x32xf32>
    %cst_227 = arith.constant dense<0.000000e+00> : vector<8xf32>
    %446 = vector.multi_reduction <add>, %445, %cst_227 [1] : vector<8x32xf32> to vector<8xf32>
    %447 = vector.shape_cast %446 : vector<8xf32> to vector<8x1xf32>
    %cst_228 = arith.constant 3.200000e+01 : f32
    %448 = vector.broadcast %cst_228 : f32 to vector<8x1xf32>
    %449 = arith.divf %447, %448 : vector<8x1xf32>
    %450 = vector.broadcast %442 : vector<8x1xf32> to vector<8x32xf32>
    %451 = arith.subf %438, %450 : vector<8x32xf32>
    %cst_229 = arith.constant 9.99999974E-6 : f32
    %452 = vector.broadcast %cst_229 : f32 to vector<8x1xf32>
    %453 = arith.addf %449, %452 : vector<8x1xf32>
    %454 = math.rsqrt %453 : vector<8x1xf32>
    %455 = vector.broadcast %454 : vector<8x1xf32> to vector<8x32xf32>
    %456 = arith.mulf %451, %455 : vector<8x32xf32>
    %457 = vector.broadcast %27 : vector<1x32xf32> to vector<8x32xf32>
    %458 = arith.mulf %456, %457 : vector<8x32xf32>
    %459 = vector.broadcast %26 : vector<1x32xf32> to vector<8x32xf32>
    %460 = arith.addf %458, %459 : vector<8x32xf32>
    %cst_230 = arith.constant dense<0.000000e+00> : vector<8x32xf32>
    %461 = tpu.matmul %460, %6, %cst_230 {dimension_numbers = #tpu.dot_dimension_numbers<[1], [0], [0], [1], [0, 0, 1, 1], [], []>} : vector<8x32xf32>, vector<32x32xf32>, vector<8x32xf32> -> vector<8x32xf32>
    %462 = vector.broadcast %7 : vector<1x32xf32> to vector<8x32xf32>
    %463 = arith.addf %461, %462 : vector<8x32xf32>
    %464 = arith.negf %463 : vector<8x32xf32>
    %465 = math.exp %464 : vector<8x32xf32>
    %cst_231 = arith.constant 1.000000e+00 : f32
    %466 = vector.broadcast %cst_231 : f32 to vector<8x32xf32>
    %467 = arith.addf %466, %465 : vector<8x32xf32>
    %468 = arith.divf %466, %467 : vector<8x32xf32>
    %cst_232 = arith.constant dense<0.000000e+00> : vector<8x32xf32>
    %469 = tpu.matmul %468, %8, %cst_232 {dimension_numbers = #tpu.dot_dimension_numbers<[1], [0], [0], [1], [0, 0, 1, 1], [], []>} : vector<8x32xf32>, vector<32x32xf32>, vector<8x32xf32> -> vector<8x32xf32>
    %470 = vector.broadcast %9 : vector<1x32xf32> to vector<8x32xf32>
    %471 = arith.addf %469, %470 : vector<8x32xf32>
    %472 = arith.negf %471 : vector<8x32xf32>
    %473 = math.exp %472 : vector<8x32xf32>
    %cst_233 = arith.constant 1.000000e+00 : f32
    %474 = vector.broadcast %cst_233 : f32 to vector<8x32xf32>
    %475 = arith.addf %474, %473 : vector<8x32xf32>
    %476 = arith.divf %474, %475 : vector<8x32xf32>
    %cst_234 = arith.constant dense<0.000000e+00> : vector<8x32xf32>
    %477 = tpu.matmul %476, %10, %cst_234 {dimension_numbers = #tpu.dot_dimension_numbers<[1], [0], [0], [1], [0, 0, 1, 1], [], []>} : vector<8x32xf32>, vector<32x32xf32>, vector<8x32xf32> -> vector<8x32xf32>
    %478 = vector.broadcast %11 : vector<1x32xf32> to vector<8x32xf32>
    %479 = arith.addf %477, %478 : vector<8x32xf32>
    %480 = arith.negf %479 : vector<8x32xf32>
    %481 = math.exp %480 : vector<8x32xf32>
    %cst_235 = arith.constant 1.000000e+00 : f32
    %482 = vector.broadcast %cst_235 : f32 to vector<8x32xf32>
    %483 = arith.addf %482, %481 : vector<8x32xf32>
    %484 = arith.divf %482, %483 : vector<8x32xf32>
    %cst_236 = arith.constant dense<0.000000e+00> : vector<8x96xf32>
    %485 = tpu.matmul %460, %0, %cst_236 {dimension_numbers = #tpu.dot_dimension_numbers<[1], [0], [0], [1], [0, 0, 1, 1], [], []>} : vector<8x32xf32>, vector<32x96xf32>, vector<8x96xf32> -> vector<8x96xf32>
    %486 = vector.broadcast %1 : vector<1x96xf32> to vector<8x96xf32>
    %487 = arith.addf %485, %486 : vector<8x96xf32>
    %488 = arith.negf %487 : vector<8x96xf32>
    %489 = math.exp %488 : vector<8x96xf32>
    %cst_237 = arith.constant 1.000000e+00 : f32
    %490 = vector.broadcast %cst_237 : f32 to vector<8x96xf32>
    %491 = arith.addf %490, %489 : vector<8x96xf32>
    %492 = arith.divf %490, %491 : vector<8x96xf32>
    %cst_238 = arith.constant dense<0.000000e+00> : vector<8x96xf32>
    %493 = tpu.matmul %492, %2, %cst_238 {dimension_numbers = #tpu.dot_dimension_numbers<[1], [0], [0], [1], [0, 0, 1, 1], [], []>} : vector<8x96xf32>, vector<96x96xf32>, vector<8x96xf32> -> vector<8x96xf32>
    %494 = vector.broadcast %3 : vector<1x96xf32> to vector<8x96xf32>
    %495 = arith.addf %493, %494 : vector<8x96xf32>
    %496 = arith.negf %495 : vector<8x96xf32>
    %497 = math.exp %496 : vector<8x96xf32>
    %cst_239 = arith.constant 1.000000e+00 : f32
    %498 = vector.broadcast %cst_239 : f32 to vector<8x96xf32>
    %499 = arith.addf %498, %497 : vector<8x96xf32>
    %500 = arith.divf %498, %499 : vector<8x96xf32>
    %cst_240 = arith.constant dense<0.000000e+00> : vector<8x96xf32>
    %501 = tpu.matmul %500, %4, %cst_240 {dimension_numbers = #tpu.dot_dimension_numbers<[1], [0], [0], [1], [0, 0, 1, 1], [], []>} : vector<8x96xf32>, vector<96x96xf32>, vector<8x96xf32> -> vector<8x96xf32>
    %502 = vector.broadcast %5 : vector<1x96xf32> to vector<8x96xf32>
    %503 = arith.addf %501, %502 : vector<8x96xf32>
    %504 = arith.negf %503 : vector<8x96xf32>
    %505 = math.exp %504 : vector<8x96xf32>
    %cst_241 = arith.constant 1.000000e+00 : f32
    %506 = vector.broadcast %cst_241 : f32 to vector<8x96xf32>
    %507 = arith.addf %506, %505 : vector<8x96xf32>
    %508 = arith.divf %506, %507 : vector<8x96xf32>
    %cst_242 = arith.constant dense<0.000000e+00> : vector<8x96xf32>
    %509 = tpu.matmul %460, %34, %cst_242 {dimension_numbers = #tpu.dot_dimension_numbers<[1], [0], [0], [1], [0, 0, 1, 1], [], []>} : vector<8x32xf32>, vector<32x96xf32>, vector<8x96xf32> -> vector<8x96xf32>
    %510 = vector.broadcast %35 : vector<1x96xf32> to vector<8x96xf32>
    %511 = arith.addf %509, %510 : vector<8x96xf32>
    %512 = arith.negf %511 : vector<8x96xf32>
    %513 = math.exp %512 : vector<8x96xf32>
    %cst_243 = arith.constant 1.000000e+00 : f32
    %514 = vector.broadcast %cst_243 : f32 to vector<8x96xf32>
    %515 = arith.addf %514, %513 : vector<8x96xf32>
    %516 = arith.divf %514, %515 : vector<8x96xf32>
    %cst_244 = arith.constant dense<0.000000e+00> : vector<8x96xf32>
    %517 = tpu.matmul %516, %36, %cst_244 {dimension_numbers = #tpu.dot_dimension_numbers<[1], [0], [0], [1], [0, 0, 1, 1], [], []>} : vector<8x96xf32>, vector<96x96xf32>, vector<8x96xf32> -> vector<8x96xf32>
    %518 = vector.broadcast %37 : vector<1x96xf32> to vector<8x96xf32>
    %519 = arith.addf %517, %518 : vector<8x96xf32>
    %520 = arith.negf %519 : vector<8x96xf32>
    %521 = math.exp %520 : vector<8x96xf32>
    %cst_245 = arith.constant 1.000000e+00 : f32
    %522 = vector.broadcast %cst_245 : f32 to vector<8x96xf32>
    %523 = arith.addf %522, %521 : vector<8x96xf32>
    %524 = arith.divf %522, %523 : vector<8x96xf32>
    %cst_246 = arith.constant dense<0.000000e+00> : vector<8x96xf32>
    %525 = tpu.matmul %524, %38, %cst_246 {dimension_numbers = #tpu.dot_dimension_numbers<[1], [0], [0], [1], [0, 0, 1, 1], [], []>} : vector<8x96xf32>, vector<96x96xf32>, vector<8x96xf32> -> vector<8x96xf32>
    %526 = vector.broadcast %39 : vector<1x96xf32> to vector<8x96xf32>
    %527 = arith.addf %525, %526 : vector<8x96xf32>
    %528 = arith.negf %527 : vector<8x96xf32>
    %529 = math.exp %528 : vector<8x96xf32>
    %cst_247 = arith.constant 1.000000e+00 : f32
    %530 = vector.broadcast %cst_247 : f32 to vector<8x96xf32>
    %531 = arith.addf %530, %529 : vector<8x96xf32>
    %532 = arith.divf %530, %531 : vector<8x96xf32>
    %cst_248 = arith.constant dense<0.000000e+00> : vector<8x128xf32>
    %533 = tpu.matmul %484, %56, %cst_248 {dimension_numbers = #tpu.dot_dimension_numbers<[1], [0], [0], [1], [0, 0, 1, 1], [], []>} : vector<8x32xf32>, vector<32x128xf32>, vector<8x128xf32> -> vector<8x128xf32>
    %cst_249 = arith.constant dense<0.000000e+00> : vector<8x128xf32>
    %534 = tpu.matmul %508, %55, %cst_249 {dimension_numbers = #tpu.dot_dimension_numbers<[1], [0], [0], [1], [0, 0, 1, 1], [], []>} : vector<8x96xf32>, vector<96x128xf32>, vector<8x128xf32> -> vector<8x128xf32>
    %535 = arith.addf %533, %534 : vector<8x128xf32>
    %cst_250 = arith.constant dense<0.000000e+00> : vector<8x128xf32>
    %536 = tpu.matmul %532, %57, %cst_250 {dimension_numbers = #tpu.dot_dimension_numbers<[1], [0], [0], [1], [0, 0, 1, 1], [], []>} : vector<8x96xf32>, vector<96x128xf32>, vector<8x128xf32> -> vector<8x128xf32>
    %537 = arith.addf %535, %536 : vector<8x128xf32>
    %538 = vector.broadcast %54 : vector<1x128xf32> to vector<8x128xf32>
    %539 = arith.addf %537, %538 : vector<8x128xf32>
    %c0_251 = arith.constant 0 : index
    %c0_252 = arith.constant 0 : index
    %c0_253 = arith.constant 0 : index
    %540 = vector.load %arg62[%c0_251, %c0_252, %c0_253] : memref<1x8x128xf32, #tpu.memory_space<vmem>>, vector<1x8x128xf32>
    %541 = vector.shape_cast %540 : vector<1x8x128xf32> to vector<8x128xf32>
    %542 = vector.shape_cast %539 : vector<8x128xf32> to vector<1x8x128xf32>
    tpu.vector_store %arg62[%c0_251, %c0_252, %c0_253], %542 {strides = array<i32>} : memref<1x8x128xf32, #tpu.memory_space<vmem>>, vector<1x8x128xf32>,
    return
  }
  func.func @transform_0(%arg0: i32) -> (i32, i32, i32) {
    %c0_i32 = arith.constant 0 : i32
    %c0_i32_0 = arith.constant 0 : i32
    %c0_i32_1 = arith.constant 0 : i32
    return %arg0, %c0_i32, %c0_i32_0 : i32, i32, i32
  }
  func.func @transform_1(%arg0: i32) -> (i32, i32) {
    %c0_i32 = arith.constant 0 : i32
    %c0_i32_0 = arith.constant 0 : i32
    %c0_i32_1 = arith.constant 0 : i32
    return %c0_i32, %c0_i32_0 : i32, i32
  }
  func.func @transform_2(%arg0: i32) -> (i32, i32) {
    %c0_i32 = arith.constant 0 : i32
    %c0_i32_0 = arith.constant 0 : i32
    %c0_i32_1 = arith.constant 0 : i32
    return %c0_i32, %c0_i32_0 : i32, i32
  }
  func.func @transform_3(%arg0: i32) -> (i32, i32) {
    %c0_i32 = arith.constant 0 : i32
    %c0_i32_0 = arith.constant 0 : i32
    %c0_i32_1 = arith.constant 0 : i32
    return %c0_i32, %c0_i32_0 : i32, i32
  }
  func.func @transform_4(%arg0: i32) -> (i32, i32) {
    %c0_i32 = arith.constant 0 : i32
    %c0_i32_0 = arith.constant 0 : i32
    %c0_i32_1 = arith.constant 0 : i32
    return %c0_i32, %c0_i32_0 : i32, i32
  }
  func.func @transform_5(%arg0: i32) -> (i32, i32) {
    %c0_i32 = arith.constant 0 : i32
    %c0_i32_0 = arith.constant 0 : i32
    %c0_i32_1 = arith.constant 0 : i32
    return %c0_i32, %c0_i32_0 : i32, i32
  }
  func.func @transform_6(%arg0: i32) -> (i32, i32) {
    %c0_i32 = arith.constant 0 : i32
    %c0_i32_0 = arith.constant 0 : i32
    %c0_i32_1 = arith.constant 0 : i32
    return %c0_i32, %c0_i32_0 : i32, i32
  }
  func.func @transform_7(%arg0: i32) -> (i32, i32) {
    %c0_i32 = arith.constant 0 : i32
    %c0_i32_0 = arith.constant 0 : i32
    %c0_i32_1 = arith.constant 0 : i32
    return %c0_i32, %c0_i32_0 : i32, i32
  }
  func.func @transform_8(%arg0: i32) -> (i32, i32) {
    %c0_i32 = arith.constant 0 : i32
    %c0_i32_0 = arith.constant 0 : i32
    %c0_i32_1 = arith.constant 0 : i32
    return %c0_i32, %c0_i32_0 : i32, i32
  }
  func.func @transform_9(%arg0: i32) -> (i32, i32) {
    %c0_i32 = arith.constant 0 : i32
    %c0_i32_0 = arith.constant 0 : i32
    %c0_i32_1 = arith.constant 0 : i32
    return %c0_i32, %c0_i32_0 : i32, i32
  }
  func.func @transform_10(%arg0: i32) -> (i32, i32) {
    %c0_i32 = arith.constant 0 : i32
    %c0_i32_0 = arith.constant 0 : i32
    %c0_i32_1 = arith.constant 0 : i32
    return %c0_i32, %c0_i32_0 : i32, i32
  }
  func.func @transform_11(%arg0: i32) -> (i32, i32) {
    %c0_i32 = arith.constant 0 : i32
    %c0_i32_0 = arith.constant 0 : i32
    %c0_i32_1 = arith.constant 0 : i32
    return %c0_i32, %c0_i32_0 : i32, i32
  }
  func.func @transform_12(%arg0: i32) -> (i32, i32) {
    %c0_i32 = arith.constant 0 : i32
    %c0_i32_0 = arith.constant 0 : i32
    %c0_i32_1 = arith.constant 0 : i32
    return %c0_i32, %c0_i32_0 : i32, i32
  }
  func.func @transform_13(%arg0: i32) -> (i32, i32) {
    %c0_i32 = arith.constant 0 : i32
    %c0_i32_0 = arith.constant 0 : i32
    %c0_i32_1 = arith.constant 0 : i32
    return %c0_i32, %c0_i32_0 : i32, i32
  }
  func.func @transform_14(%arg0: i32) -> (i32, i32) {
    %c0_i32 = arith.constant 0 : i32
    %c0_i32_0 = arith.constant 0 : i32
    %c0_i32_1 = arith.constant 0 : i32
    return %c0_i32, %c0_i32_0 : i32, i32
  }
  func.func @transform_15(%arg0: i32) -> (i32, i32) {
    %c0_i32 = arith.constant 0 : i32
    %c0_i32_0 = arith.constant 0 : i32
    %c0_i32_1 = arith.constant 0 : i32
    return %c0_i32, %c0_i32_0 : i32, i32
  }
  func.func @transform_16(%arg0: i32) -> (i32, i32) {
    %c0_i32 = arith.constant 0 : i32
    %c0_i32_0 = arith.constant 0 : i32
    %c0_i32_1 = arith.constant 0 : i32
    return %c0_i32, %c0_i32_0 : i32, i32
  }
  func.func @transform_17(%arg0: i32) -> (i32, i32) {
    %c0_i32 = arith.constant 0 : i32
    %c0_i32_0 = arith.constant 0 : i32
    %c0_i32_1 = arith.constant 0 : i32
    return %c0_i32, %c0_i32_0 : i32, i32
  }
  func.func @transform_18(%arg0: i32) -> (i32, i32) {
    %c0_i32 = arith.constant 0 : i32
    %c0_i32_0 = arith.constant 0 : i32
    %c0_i32_1 = arith.constant 0 : i32
    return %c0_i32, %c0_i32_0 : i32, i32
  }
  func.func @transform_19(%arg0: i32) -> (i32, i32) {
    %c0_i32 = arith.constant 0 : i32
    %c0_i32_0 = arith.constant 0 : i32
    %c0_i32_1 = arith.constant 0 : i32
    return %c0_i32, %c0_i32_0 : i32, i32
  }
  func.func @transform_20(%arg0: i32) -> (i32, i32) {
    %c0_i32 = arith.constant 0 : i32
    %c0_i32_0 = arith.constant 0 : i32
    %c0_i32_1 = arith.constant 0 : i32
    return %c0_i32, %c0_i32_0 : i32, i32
  }
  func.func @transform_21(%arg0: i32) -> (i32, i32) {
    %c0_i32 = arith.constant 0 : i32
    %c0_i32_0 = arith.constant 0 : i32
    %c0_i32_1 = arith.constant 0 : i32
    return %c0_i32, %c0_i32_0 : i32, i32
  }
  func.func @transform_22(%arg0: i32) -> (i32, i32) {
    %c0_i32 = arith.constant 0 : i32
    %c0_i32_0 = arith.constant 0 : i32
    %c0_i32_1 = arith.constant 0 : i32
    return %c0_i32, %c0_i32_0 : i32, i32
  }
  func.func @transform_23(%arg0: i32) -> (i32, i32) {
    %c0_i32 = arith.constant 0 : i32
    %c0_i32_0 = arith.constant 0 : i32
    %c0_i32_1 = arith.constant 0 : i32
    return %c0_i32, %c0_i32_0 : i32, i32
  }
  func.func @transform_24(%arg0: i32) -> (i32, i32) {
    %c0_i32 = arith.constant 0 : i32
    %c0_i32_0 = arith.constant 0 : i32
    %c0_i32_1 = arith.constant 0 : i32
    return %c0_i32, %c0_i32_0 : i32, i32
  }
  func.func @transform_25(%arg0: i32) -> (i32, i32) {
    %c0_i32 = arith.constant 0 : i32
    %c0_i32_0 = arith.constant 0 : i32
    %c0_i32_1 = arith.constant 0 : i32
    return %c0_i32, %c0_i32_0 : i32, i32
  }
  func.func @transform_26(%arg0: i32) -> (i32, i32) {
    %c0_i32 = arith.constant 0 : i32
    %c0_i32_0 = arith.constant 0 : i32
    %c0_i32_1 = arith.constant 0 : i32
    return %c0_i32, %c0_i32_0 : i32, i32
  }
  func.func @transform_27(%arg0: i32) -> (i32, i32) {
    %c0_i32 = arith.constant 0 : i32
    %c0_i32_0 = arith.constant 0 : i32
    %c0_i32_1 = arith.constant 0 : i32
    return %c0_i32, %c0_i32_0 : i32, i32
  }
  func.func @transform_28(%arg0: i32) -> (i32, i32) {
    %c0_i32 = arith.constant 0 : i32
    %c0_i32_0 = arith.constant 0 : i32
    %c0_i32_1 = arith.constant 0 : i32
    return %c0_i32, %c0_i32_0 : i32, i32
  }
  func.func @transform_29(%arg0: i32) -> (i32, i32) {
    %c0_i32 = arith.constant 0 : i32
    %c0_i32_0 = arith.constant 0 : i32
    %c0_i32_1 = arith.constant 0 : i32
    return %c0_i32, %c0_i32_0 : i32, i32
  }
  func.func @transform_30(%arg0: i32) -> (i32, i32) {
    %c0_i32 = arith.constant 0 : i32
    %c0_i32_0 = arith.constant 0 : i32
    %c0_i32_1 = arith.constant 0 : i32
    return %c0_i32, %c0_i32_0 : i32, i32
  }
  func.func @transform_31(%arg0: i32) -> (i32, i32) {
    %c0_i32 = arith.constant 0 : i32
    %c0_i32_0 = arith.constant 0 : i32
    %c0_i32_1 = arith.constant 0 : i32
    return %c0_i32, %c0_i32_0 : i32, i32
  }
  func.func @transform_32(%arg0: i32) -> (i32, i32) {
    %c0_i32 = arith.constant 0 : i32
    %c0_i32_0 = arith.constant 0 : i32
    %c0_i32_1 = arith.constant 0 : i32
    return %c0_i32, %c0_i32_0 : i32, i32
  }
  func.func @transform_33(%arg0: i32) -> (i32, i32) {
    %c0_i32 = arith.constant 0 : i32
    %c0_i32_0 = arith.constant 0 : i32
    %c0_i32_1 = arith.constant 0 : i32
    return %c0_i32, %c0_i32_0 : i32, i32
  }
  func.func @transform_34(%arg0: i32) -> (i32, i32) {
    %c0_i32 = arith.constant 0 : i32
    %c0_i32_0 = arith.constant 0 : i32
    %c0_i32_1 = arith.constant 0 : i32
    return %c0_i32, %c0_i32_0 : i32, i32
  }
  func.func @transform_35(%arg0: i32) -> (i32, i32) {
    %c0_i32 = arith.constant 0 : i32
    %c0_i32_0 = arith.constant 0 : i32
    %c0_i32_1 = arith.constant 0 : i32
    return %c0_i32, %c0_i32_0 : i32, i32
  }
  func.func @transform_36(%arg0: i32) -> (i32, i32) {
    %c0_i32 = arith.constant 0 : i32
    %c0_i32_0 = arith.constant 0 : i32
    %c0_i32_1 = arith.constant 0 : i32
    return %c0_i32, %c0_i32_0 : i32, i32
  }
  func.func @transform_37(%arg0: i32) -> (i32, i32) {
    %c0_i32 = arith.constant 0 : i32
    %c0_i32_0 = arith.constant 0 : i32
    %c0_i32_1 = arith.constant 0 : i32
    return %c0_i32, %c0_i32_0 : i32, i32
  }
  func.func @transform_38(%arg0: i32) -> (i32, i32) {
    %c0_i32 = arith.constant 0 : i32
    %c0_i32_0 = arith.constant 0 : i32
    %c0_i32_1 = arith.constant 0 : i32
    return %c0_i32, %c0_i32_0 : i32, i32
  }
  func.func @transform_39(%arg0: i32) -> (i32, i32) {
    %c0_i32 = arith.constant 0 : i32
    %c0_i32_0 = arith.constant 0 : i32
    %c0_i32_1 = arith.constant 0 : i32
    return %c0_i32, %c0_i32_0 : i32, i32
  }
  func.func @transform_40(%arg0: i32) -> (i32, i32) {
    %c0_i32 = arith.constant 0 : i32
    %c0_i32_0 = arith.constant 0 : i32
    %c0_i32_1 = arith.constant 0 : i32
    return %c0_i32, %c0_i32_0 : i32, i32
  }
  func.func @transform_41(%arg0: i32) -> (i32, i32) {
    %c0_i32 = arith.constant 0 : i32
    %c0_i32_0 = arith.constant 0 : i32
    %c0_i32_1 = arith.constant 0 : i32
    return %c0_i32, %c0_i32_0 : i32, i32
  }
  func.func @transform_42(%arg0: i32) -> (i32, i32) {
    %c0_i32 = arith.constant 0 : i32
    %c0_i32_0 = arith.constant 0 : i32
    %c0_i32_1 = arith.constant 0 : i32
    return %c0_i32, %c0_i32_0 : i32, i32
  }
  func.func @transform_43(%arg0: i32) -> (i32, i32) {
    %c0_i32 = arith.constant 0 : i32
    %c0_i32_0 = arith.constant 0 : i32
    %c0_i32_1 = arith.constant 0 : i32
    return %c0_i32, %c0_i32_0 : i32, i32
  }
  func.func @transform_44(%arg0: i32) -> (i32, i32) {
    %c0_i32 = arith.constant 0 : i32
    %c0_i32_0 = arith.constant 0 : i32
    %c0_i32_1 = arith.constant 0 : i32
    return %c0_i32, %c0_i32_0 : i32, i32
  }
  func.func @transform_45(%arg0: i32) -> (i32, i32) {
    %c0_i32 = arith.constant 0 : i32
    %c0_i32_0 = arith.constant 0 : i32
    %c0_i32_1 = arith.constant 0 : i32
    return %c0_i32, %c0_i32_0 : i32, i32
  }
  func.func @transform_46(%arg0: i32) -> (i32, i32) {
    %c0_i32 = arith.constant 0 : i32
    %c0_i32_0 = arith.constant 0 : i32
    %c0_i32_1 = arith.constant 0 : i32
    return %c0_i32, %c0_i32_0 : i32, i32
  }
  func.func @transform_47(%arg0: i32) -> (i32, i32) {
    %c0_i32 = arith.constant 0 : i32
    %c0_i32_0 = arith.constant 0 : i32
    %c0_i32_1 = arith.constant 0 : i32
    return %c0_i32, %c0_i32_0 : i32, i32
  }
  func.func @transform_48(%arg0: i32) -> (i32, i32) {
    %c0_i32 = arith.constant 0 : i32
    %c0_i32_0 = arith.constant 0 : i32
    %c0_i32_1 = arith.constant 0 : i32
    return %c0_i32, %c0_i32_0 : i32, i32
  }
  func.func @transform_49(%arg0: i32) -> (i32, i32) {
    %c0_i32 = arith.constant 0 : i32
    %c0_i32_0 = arith.constant 0 : i32
    %c0_i32_1 = arith.constant 0 : i32
    return %c0_i32, %c0_i32_0 : i32, i32
  }
  func.func @transform_50(%arg0: i32) -> (i32, i32) {
    %c0_i32 = arith.constant 0 : i32
    %c0_i32_0 = arith.constant 0 : i32
    %c0_i32_1 = arith.constant 0 : i32
    return %c0_i32, %c0_i32_0 : i32, i32
  }
  func.func @transform_51(%arg0: i32) -> (i32, i32) {
    %c0_i32 = arith.constant 0 : i32
    %c0_i32_0 = arith.constant 0 : i32
    %c0_i32_1 = arith.constant 0 : i32
    return %c0_i32, %c0_i32_0 : i32, i32
  }
  func.func @transform_52(%arg0: i32) -> (i32, i32) {
    %c0_i32 = arith.constant 0 : i32
    %c0_i32_0 = arith.constant 0 : i32
    %c0_i32_1 = arith.constant 0 : i32
    return %c0_i32, %c0_i32_0 : i32, i32
  }
  func.func @transform_53(%arg0: i32) -> (i32, i32) {
    %c0_i32 = arith.constant 0 : i32
    %c0_i32_0 = arith.constant 0 : i32
    %c0_i32_1 = arith.constant 0 : i32
    return %c0_i32, %c0_i32_0 : i32, i32
  }
  func.func @transform_54(%arg0: i32) -> (i32, i32) {
    %c0_i32 = arith.constant 0 : i32
    %c0_i32_0 = arith.constant 0 : i32
    %c0_i32_1 = arith.constant 0 : i32
    return %c0_i32, %c0_i32_0 : i32, i32
  }
  func.func @transform_55(%arg0: i32) -> (i32, i32) {
    %c0_i32 = arith.constant 0 : i32
    %c0_i32_0 = arith.constant 0 : i32
    %c0_i32_1 = arith.constant 0 : i32
    return %c0_i32, %c0_i32_0 : i32, i32
  }
  func.func @transform_56(%arg0: i32) -> (i32, i32) {
    %c0_i32 = arith.constant 0 : i32
    %c0_i32_0 = arith.constant 0 : i32
    %c0_i32_1 = arith.constant 0 : i32
    return %c0_i32, %c0_i32_0 : i32, i32
  }
  func.func @transform_57(%arg0: i32) -> (i32, i32) {
    %c0_i32 = arith.constant 0 : i32
    %c0_i32_0 = arith.constant 0 : i32
    %c0_i32_1 = arith.constant 0 : i32
    return %c0_i32, %c0_i32_0 : i32, i32
  }
  func.func @transform_58(%arg0: i32) -> (i32, i32) {
    %c0_i32 = arith.constant 0 : i32
    %c0_i32_0 = arith.constant 0 : i32
    %c0_i32_1 = arith.constant 0 : i32
    return %c0_i32, %c0_i32_0 : i32, i32
  }
  func.func @transform_59(%arg0: i32) -> (i32, i32) {
    %c0_i32 = arith.constant 0 : i32
    %c0_i32_0 = arith.constant 0 : i32
    %c0_i32_1 = arith.constant 0 : i32
    return %c0_i32, %c0_i32_0 : i32, i32
  }
  func.func @transform_60(%arg0: i32) -> (i32, i32) {
    %c0_i32 = arith.constant 0 : i32
    %c0_i32_0 = arith.constant 0 : i32
    %c0_i32_1 = arith.constant 0 : i32
    return %c0_i32, %c0_i32_0 : i32, i32
  }
  func.func @transform_61(%arg0: i32) -> (i32, i32, i32) {
    %c0_i32 = arith.constant 0 : i32
    %c0_i32_0 = arith.constant 0 : i32
    %c0_i32_1 = arith.constant 0 : i32
    return %arg0, %c0_i32, %c0_i32_0 : i32, i32, i32
  }
}

</mosaic_0001>

<llo_original>
// kernel: detection_forward.1
$region0: #{detection_forward.1}
  #allocation0 [shape = 'u32[]', space=smem, size = 0x4, offset = 0x4, fixed_abs, tag = 'smem constant byte address 0x4 - core index']
  #allocation1 [shape = 'u32[144,128]{1,0:T(1,128)}', space=vmem, size = 0x12000, scoped, tag = 'internal scratch']
  %s0 = inlined_call_operand.smem [shape: u32[62], index: -1, kind: input, shape index: {}]
  %s1 = sld [smem:[%s0]]
  %s2 = scalar_lea.smem %s0, 1
  %s3 = sld [smem:[%s2]]
  %s4 = scalar_lea.smem %s0, 2
  %s5 = sld [smem:[%s4]]
  %s6 = scalar_lea.smem %s0, 3
  %s7 = sld [smem:[%s6]]
  %s8 = scalar_lea.smem %s0, 4
  %s9 = sld [smem:[%s8]]
  %s10 = scalar_lea.smem %s0, 5
  %s11 = sld [smem:[%s10]]
  %s12 = scalar_lea.smem %s0, 6
  %s13 = sld [smem:[%s12]]
  %s14 = scalar_lea.smem %s0, 7
  %s15 = sld [smem:[%s14]]
  %s16 = scalar_lea.smem %s0, 8
  %s17 = sld [smem:[%s16]]
  %s18 = scalar_lea.smem %s0, 9
  %s19 = sld [smem:[%s18]]
  %s20 = scalar_lea.smem %s0, 10
  %s21 = sld [smem:[%s20]]
  %s22 = scalar_lea.smem %s0, 11
  %s23 = sld [smem:[%s22]]
  %s24 = scalar_lea.smem %s0, 12
  %s25 = sld [smem:[%s24]]
  %s26 = scalar_lea.smem %s0, 13
  %s27 = sld [smem:[%s26]]
  %s28 = scalar_lea.smem %s0, 14
  %s29 = sld [smem:[%s28]]
  %s30 = scalar_lea.smem %s0, 15
  %s31 = sld [smem:[%s30]]
  %s32 = scalar_lea.smem %s0, 16
  %s33 = sld [smem:[%s32]]
  %s34 = scalar_lea.smem %s0, 17
  %s35 = sld [smem:[%s34]]
  %s36 = scalar_lea.smem %s0, 18
  %s37 = sld [smem:[%s36]]
  %s38 = scalar_lea.smem %s0, 19
  %s39 = sld [smem:[%s38]]
  %s40 = scalar_lea.smem %s0, 20
  %s41 = sld [smem:[%s40]]
  %s42 = scalar_lea.smem %s0, 21
  %s43 = sld [smem:[%s42]]
  %s44 = scalar_lea.smem %s0, 22
  %s45 = sld [smem:[%s44]]
  %s46 = scalar_lea.smem %s0, 23
  %s47 = sld [smem:[%s46]]
  %s48 = scalar_lea.smem %s0, 24
  %s49 = sld [smem:[%s48]]
  %s50 = scalar_lea.smem %s0, 25
  %s51 = sld [smem:[%s50]]
  %s52 = scalar_lea.smem %s0, 26
  %s53 = sld [smem:[%s52]]
  %s54 = scalar_lea.smem %s0, 27
  %s55 = sld [smem:[%s54]]
  %s56 = scalar_lea.smem %s0, 28
  %s57 = sld [smem:[%s56]]
  %s58 = scalar_lea.smem %s0, 29
  %s59 = sld [smem:[%s58]]
  %s60 = scalar_lea.smem %s0, 30
  %s61 = sld [smem:[%s60]]
  %s62 = scalar_lea.smem %s0, 31
  %s63 = sld [smem:[%s62]]
  %s64 = scalar_lea.smem %s0, 32
  %s65 = sld [smem:[%s64]]
  %s66 = scalar_lea.smem %s0, 33
  %s67 = sld [smem:[%s66]]
  %s68 = scalar_lea.smem %s0, 34
  %s69 = sld [smem:[%s68]]
  %s70 = scalar_lea.smem %s0, 35
  %s71 = sld [smem:[%s70]]
  %s72 = scalar_lea.smem %s0, 36
  %s73 = sld [smem:[%s72]]
  %s74 = scalar_lea.smem %s0, 37
  %s75 = sld [smem:[%s74]]
  %s76 = scalar_lea.smem %s0, 38
  %s77 = sld [smem:[%s76]]
  %s78 = scalar_lea.smem %s0, 39
  %s79 = sld [smem:[%s78]]
  %s80 = scalar_lea.smem %s0, 40
  %s81 = sld [smem:[%s80]]
  %s82 = scalar_lea.smem %s0, 41
  %s83 = sld [smem:[%s82]]
  %s84 = scalar_lea.smem %s0, 42
  %s85 = sld [smem:[%s84]]
  %s86 = scalar_lea.smem %s0, 43
  %s87 = sld [smem:[%s86]]
  %s88 = scalar_lea.smem %s0, 44
  %s89 = sld [smem:[%s88]]
  %s90 = scalar_lea.smem %s0, 45
  %s91 = sld [smem:[%s90]]
  %s92 = scalar_lea.smem %s0, 46
  %s93 = sld [smem:[%s92]]
  %s94 = scalar_lea.smem %s0, 47
  %s95 = sld [smem:[%s94]]
  %s96 = scalar_lea.smem %s0, 48
  %s97 = sld [smem:[%s96]]
  %s98 = scalar_lea.smem %s0, 49
  %s99 = sld [smem:[%s98]]
  %s100 = scalar_lea.smem %s0, 50
  %s101 = sld [smem:[%s100]]
  %s102 = scalar_lea.smem %s0, 51
  %s103 = sld [smem:[%s102]]
  %s104 = scalar_lea.smem %s0, 52
  %s105 = sld [smem:[%s104]]
  %s106 = scalar_lea.smem %s0, 53
  %s107 = sld [smem:[%s106]]
  %s108 = scalar_lea.smem %s0, 54
  %s109 = sld [smem:[%s108]]
  %s110 = scalar_lea.smem %s0, 55
  %s111 = sld [smem:[%s110]]
  %s112 = scalar_lea.smem %s0, 56
  %s113 = sld [smem:[%s112]]
  %s114 = scalar_lea.smem %s0, 57
  %s115 = sld [smem:[%s114]]
  %s116 = scalar_lea.smem %s0, 58
  %s117 = sld [smem:[%s116]]
  %s118 = scalar_lea.smem %s0, 59
  %s119 = sld [smem:[%s118]]
  %s120 = scalar_lea.smem %s0, 60
  %s121 = sld [smem:[%s120]]
  %s122 = scalar_lea.smem %s0, 61
  %s123 = sld [smem:[%s122]]
  %s124 = sld [smem:[#allocation0]]
  $region485: #{detection_forward.1} parent=0
    _
  %s126 = ssub.s32 1, %s124
  %s127 = scalar_select 0, %s126, %s124
  $region1: #{detection_forward.1} parent=0
    #allocation2 [shape = 'u8[16384]{0}', space=vmem, size = 0x4000, scoped, tag = 'input window, operand 1, single buffered']
    #allocation3 [shape = 's32[2]{0}', space=sflag, size = 0x8, scoped, tag = 'scoped memory for detection_forward.1']
    #allocation4 [shape = 'u8[512]{0}', space=vmem, size = 0x400, scoped, tag = 'input window, operand 4, single buffered']
    #allocation5 [shape = 's32[1]{0}', space=sflag, size = 0x4, scoped, tag = 'scoped memory for detection_forward.1']
    #allocation6 [shape = 'u8[512]{0}', space=vmem, size = 0x400, scoped, tag = 'input window, operand 6, single buffered']
    #allocation7 [shape = 'u8[16384]{0}', space=vmem, size = 0x4000, scoped, tag = 'input window, operand 7, single buffered']
    #allocation8 [shape = 's32[1]{0}', space=sflag, size = 0x4, scoped, tag = 'scoped memory for detection_forward.1']
    #allocation9 [shape = 'u8[512]{0}', space=vmem, size = 0x400, scoped, tag = 'input window, operand 8, single buffered']
    #allocation10 [shape = 'u8[16384]{0}', space=vmem, size = 0x4000, scoped, tag = 'input window, operand 9, single buffered']
    #allocation11 [shape = 's32[1]{0}', space=sflag, size = 0x4, scoped, tag = 'scoped memory for detection_forward.1']
    #allocation12 [shape = 'u8[512]{0}', space=vmem, size = 0x400, scoped, tag = 'input window, operand 10, single buffered']
    #allocation13 [shape = 'u8[16384]{0}', space=vmem, size = 0x4000, scoped, tag = 'input window, operand 11, single buffered']
    #allocation14 [shape = 's32[1]{0}', space=sflag, size = 0x4, scoped, tag = 'scoped memory for detection_forward.1']
    #allocation15 [shape = 'u8[512]{0}', space=vmem, size = 0x400, scoped, tag = 'input window, operand 12, single buffered']
    #allocation16 [shape = 'u8[512]{0}', space=vmem, size = 0x400, scoped, tag = 'input window, operand 13, single buffered']
    #allocation17 [shape = 's32[1]{0}', space=sflag, size = 0x4, scoped, tag = 'scoped memory for detection_forward.1']
    #allocation18 [shape = 'u8[512]{0}', space=vmem, size = 0x400, scoped, tag = 'input window, operand 14, single buffered']
    #allocation19 [shape = 'u8[512]{0}', space=vmem, size = 0x400, scoped, tag = 'input window, operand 15, single buffered']
    #allocation20 [shape = 's32[1]{0}', space=sflag, size = 0x4, scoped, tag = 'scoped memory for detection_forward.1']
    #allocation21 [shape = 'u8[512]{0}', space=vmem, size = 0x400, scoped, tag = 'input window, operand 16, single buffered']
    #allocation22 [shape = 'u8[512]{0}', space=vmem, size = 0x400, scoped, tag = 'input window, operand 17, single buffered']
    #allocation23 [shape = 's32[1]{0}', space=sflag, size = 0x4, scoped, tag = 'scoped memory for detection_forward.1']
    #allocation24 [shape = 'u8[512]{0}', space=vmem, size = 0x400, scoped, tag = 'input window, operand 18, single buffered']
    #allocation25 [shape = 'u8[16384]{0}', space=vmem, size = 0x4000, scoped, tag = 'input window, operand 19, single buffered']
    #allocation26 [shape = 's32[1]{0}', space=sflag, size = 0x4, scoped, tag = 'scoped memory for detection_forward.1']
    #allocation27 [shape = 'u8[16384]{0}', space=vmem, size = 0x4000, scoped, tag = 'input window, operand 20, single buffered']
    #allocation28 [shape = 'u8[16384]{0}', space=vmem, size = 0x4000, scoped, tag = 'input window, operand 21, single buffered']
    #allocation29 [shape = 's32[1]{0}', space=sflag, size = 0x4, scoped, tag = 'scoped memory for detection_forward.1']
    #allocation30 [shape = 'u8[16384]{0}', space=vmem, size = 0x4000, scoped, tag = 'input window, operand 22, single buffered']
    #allocation31 [shape = 'u8[512]{0}', space=vmem, size = 0x400, scoped, tag = 'input window, operand 23, single buffered']
    #allocation32 [shape = 's32[1]{0}', space=sflag, size = 0x4, scoped, tag = 'scoped memory for detection_forward.1']
    #allocation33 [shape = 'u8[512]{0}', space=vmem, size = 0x400, scoped, tag = 'input window, operand 24, single buffered']
    #allocation34 [shape = 'u8[512]{0}', space=vmem, size = 0x400, scoped, tag = 'input window, operand 25, single buffered']
    #allocation35 [shape = 's32[1]{0}', space=sflag, size = 0x4, scoped, tag = 'scoped memory for detection_forward.1']
    #allocation36 [shape = 'u8[512]{0}', space=vmem, size = 0x400, scoped, tag = 'input window, operand 26, single buffered']
    #allocation37 [shape = 'u8[512]{0}', space=vmem, size = 0x400, scoped, tag = 'input window, operand 27, single buffered']
    #allocation38 [shape = 's32[1]{0}', space=sflag, size = 0x4, scoped, tag = 'scoped memory for detection_forward.1']
    #allocation39 [shape = 'u8[512]{0}', space=vmem, size = 0x400, scoped, tag = 'input window, operand 28, single buffered']
    #allocation40 [shape = 'u8[512]{0}', space=vmem, size = 0x400, scoped, tag = 'input window, operand 29, single buffered']
    #allocation41 [shape = 's32[1]{0}', space=sflag, size = 0x4, scoped, tag = 'scoped memory for detection_forward.1']
    #allocation42 [shape = 'u8[512]{0}', space=vmem, size = 0x400, scoped, tag = 'input window, operand 30, single buffered']
    #allocation43 [shape = 'u8[16384]{0}', space=vmem, size = 0x4000, scoped, tag = 'input window, operand 31, single buffered']
    #allocation44 [shape = 's32[1]{0}', space=sflag, size = 0x4, scoped, tag = 'scoped memory for detection_forward.1']
    #allocation45 [shape = 'u8[16384]{0}', space=vmem, size = 0x4000, scoped, tag = 'input window, operand 32, single buffered']
    #allocation46 [shape = 'u8[16384]{0}', space=vmem, size = 0x4000, scoped, tag = 'input window, operand 33, single buffered']
    #allocation47 [shape = 's32[1]{0}', space=sflag, size = 0x4, scoped, tag = 'scoped memory for detection_forward.1']
    #allocation48 [shape = 'u8[16384]{0}', space=vmem, size = 0x4000, scoped, tag = 'input window, operand 35, single buffered']
    #allocation49 [shape = 'u8[512]{0}', space=vmem, size = 0x400, scoped, tag = 'input window, operand 36, single buffered']
    #allocation50 [shape = 's32[1]{0}', space=sflag, size = 0x4, scoped, tag = 'scoped memory for detection_forward.1']
    #allocation51 [shape = 'u8[512]{0}', space=vmem, size = 0x400, scoped, tag = 'input window, operand 38, single buffered']
    #allocation52 [shape = 'u8[49152]{0}', space=vmem, size = 0xc000, scoped, tag = 'input window, operand 39, single buffered']
    #allocation53 [shape = 's32[1]{0}', space=sflag, size = 0x4, scoped, tag = 'scoped memory for detection_forward.1']
    #allocation54 [shape = 'u8[512]{0}', space=vmem, size = 0x400, scoped, tag = 'input window, operand 40, single buffered']
    #allocation55 [shape = 'u8[512]{0}', space=vmem, size = 0x400, scoped, tag = 'input window, operand 41, single buffered']
    #allocation56 [shape = 's32[1]{0}', space=sflag, size = 0x4, scoped, tag = 'scoped memory for detection_forward.1']
    #allocation57 [shape = 'u8[512]{0}', space=vmem, size = 0x400, scoped, tag = 'input window, operand 42, single buffered']
    #allocation58 [shape = 'u8[512]{0}', space=vmem, size = 0x400, scoped, tag = 'input window, operand 43, single buffered']
    #allocation59 [shape = 's32[1]{0}', space=sflag, size = 0x4, scoped, tag = 'scoped memory for detection_forward.1']
    #allocation60 [shape = 'u8[512]{0}', space=vmem, size = 0x400, scoped, tag = 'input window, operand 44, single buffered']
    #allocation61 [shape = 'u8[512]{0}', space=vmem, size = 0x400, scoped, tag = 'input window, operand 45, single buffered']
    #allocation62 [shape = 's32[1]{0}', space=sflag, size = 0x4, scoped, tag = 'scoped memory for detection_forward.1']
    #allocation63 [shape = 'u8[512]{0}', space=vmem, size = 0x400, scoped, tag = 'input window, operand 46, single buffered']
    #allocation64 [shape = 'u8[512]{0}', space=vmem, size = 0x400, scoped, tag = 'input window, operand 47, single buffered']
    #allocation65 [shape = 's32[1]{0}', space=sflag, size = 0x4, scoped, tag = 'scoped memory for detection_forward.1']
    #allocation66 [shape = 'u8[512]{0}', space=vmem, size = 0x400, scoped, tag = 'input window, operand 48, single buffered']
    #allocation67 [shape = 'u8[512]{0}', space=vmem, size = 0x400, scoped, tag = 'input window, operand 49, single buffered']
    #allocation68 [shape = 's32[1]{0}', space=sflag, size = 0x4, scoped, tag = 'scoped memory for detection_forward.1']
    #allocation69 [shape = 'u8[16384]{0}', space=vmem, size = 0x4000, scoped, tag = 'input window, operand 50, single buffered']
    #allocation70 [shape = 'u8[16384]{0}', space=vmem, size = 0x4000, scoped, tag = 'input window, operand 52, single buffered']
    #allocation71 [shape = 's32[1]{0}', space=sflag, size = 0x4, scoped, tag = 'scoped memory for detection_forward.1']
    #allocation72 [shape = 'u8[16384]{0}', space=vmem, size = 0x4000, scoped, tag = 'input window, operand 53, single buffered']
    #allocation73 [shape = 'u8[16384]{0}', space=vmem, size = 0x4000, scoped, tag = 'input window, operand 54, single buffered']
    #allocation74 [shape = 's32[1]{0}', space=sflag, size = 0x4, scoped, tag = 'scoped memory for detection_forward.1']
    #allocation75 [shape = 'u8[16384]{0}', space=vmem, size = 0x4000, scoped, tag = 'input window, operand 57, single buffered']
    #allocation76 [shape = 'u8[49152]{0}', space=vmem, size = 0xc000, scoped, tag = 'input window, operand 58, single buffered']
    #allocation77 [shape = 's32[1]{0}', space=sflag, size = 0x4, scoped, tag = 'scoped memory for detection_forward.1']
    #allocation78 [shape = 'u8[8192]{0}', space=vmem, size = 0x2000, scoped, tag = 'input window, operand 59, single buffered']
    #allocation79 [shape = 'u8[4096]{0}', space=vmem, size = 0x1000, scoped, tag = 'input window, operand 60, single buffered']
    #allocation80 [shape = 's32[1]{0}', space=sflag, size = 0x4, scoped, tag = 'scoped memory for detection_forward.1']
    %128 = vsyncpa [#allocation3], 0
    %129 = vsyncpa [#allocation5], 0
    %130 = vsyncpa [#allocation8], 0
    %131 = vsyncpa [#allocation11], 0
    %132 = vsyncpa [#allocation14], 0
    %133 = vsyncpa [#allocation17], 0
    %134 = vsyncpa [#allocation20], 0
    %135 = vsyncpa [#allocation23], 0
    %136 = vsyncpa [#allocation26], 0
    %137 = vsyncpa [#allocation29], 0
    %138 = vsyncpa [#allocation32], 0
    %139 = vsyncpa [#allocation35], 0
    %140 = vsyncpa [#allocation38], 0
    %141 = vsyncpa [#allocation41], 0
    %142 = vsyncpa [#allocation44], 0
    %143 = vsyncpa [#allocation47], 0
    %144 = vsyncpa [#allocation50], 0
    %145 = vsyncpa [#allocation53], 0
    %146 = vsyncpa [#allocation56], 0
    %147 = vsyncpa [#allocation59], 0
    %148 = vsyncpa [#allocation62], 0
    %149 = vsyncpa [#allocation65], 0
    %150 = vsyncpa [#allocation68], 0
    %151 = vsyncpa [#allocation71], 0
    %152 = vsyncpa [#allocation74], 0
    %153 = vsyncpa [#allocation77], 0
    %154 = vsyncpa [#allocation80], 0
    loop: start=0, step=1, limit=4
    $region2: #{detection_forward.1} parent=1 // loop_pre_header
      _
    $region3: #{detection_forward.1} parent=1 // loop_header
      %s156 = sphi 0, %s160
      %p157 = scmp.ge.s32.totalorder %s156, 4
      %s166 = sphi 0, %s168
      %s169 = sphi 0, %s166
      %s170 = sphi 0, %s169
      %s186 = sphi 0, %s170
      %s190 = sphi 0, %s190
      %s192 = sphi 0, %s190
      %s193 = sphi 0, %s192
      %s207 = sphi 0, %s193
      %s211 = sphi 0, %s211
      %s213 = sphi 0, %s211
      %s214 = sphi 0, %s213
      %s228 = sphi 0, %s214
      %s232 = sphi 0, %s232
      %s234 = sphi 0, %s232
      %s235 = sphi 0, %s234
      %s249 = sphi 0, %s235
      %s253 = sphi 0, %s253
      %s255 = sphi 0, %s253
      %s256 = sphi 0, %s255
      %s270 = sphi 0, %s256
      %s274 = sphi 0, %s274
      %s276 = sphi 0, %s274
      %s277 = sphi 0, %s276
      %s291 = sphi 0, %s277
      %s295 = sphi 0, %s295
      %s297 = sphi 0, %s295
      %s298 = sphi 0, %s297
      %s312 = sphi 0, %s298
      %s316 = sphi 0, %s316
      %s318 = sphi 0, %s316
      %s319 = sphi 0, %s318
      %s333 = sphi 0, %s319
      %s337 = sphi 0, %s337
      %s339 = sphi 0, %s337
      %s340 = sphi 0, %s339
      %s354 = sphi 0, %s340
      %s358 = sphi 0, %s358
      %s360 = sphi 0, %s358
      %s361 = sphi 0, %s360
      %s375 = sphi 0, %s361
      %s379 = sphi 0, %s379
      %s381 = sphi 0, %s379
      %s382 = sphi 0, %s381
      %s396 = sphi 0, %s382
      %s400 = sphi 0, %s400
      %s402 = sphi 0, %s400
      %s403 = sphi 0, %s402
      %s417 = sphi 0, %s403
      %s421 = sphi 0, %s421
      %s423 = sphi 0, %s421
      %s424 = sphi 0, %s423
      %s438 = sphi 0, %s424
      %s442 = sphi 0, %s442
      %s444 = sphi 0, %s442
      %s445 = sphi 0, %s444
      %s459 = sphi 0, %s445
      %s463 = sphi 0, %s463
      %s465 = sphi 0, %s463
      %s466 = sphi 0, %s465
      %s480 = sphi 0, %s466
      %s484 = sphi 0, %s484
      %s486 = sphi 0, %s484
      %s487 = sphi 0, %s486
      %s501 = sphi 0, %s487
      %s505 = sphi 0, %s505
      %s507 = sphi 0, %s505
      %s508 = sphi 0, %s507
      %s522 = sphi 0, %s508
      %s526 = sphi 0, %s526
      %s528 = sphi 0, %s526
      %s529 = sphi 0, %s528
      %s543 = sphi 0, %s529
      %s547 = sphi 0, %s547
      %s549 = sphi 0, %s547
      %s550 = sphi 0, %s549
      %s564 = sphi 0, %s550
      %s568 = sphi 0, %s568
      %s570 = sphi 0, %s568
      %s571 = sphi 0, %s570
      %s585 = sphi 0, %s571
      %s589 = sphi 0, %s589
      %s591 = sphi 0, %s589
      %s592 = sphi 0, %s591
      %s606 = sphi 0, %s592
      %s610 = sphi 0, %s610
      %s612 = sphi 0, %s610
      %s613 = sphi 0, %s612
      %s627 = sphi 0, %s613
      %s631 = sphi 0, %s631
      %s633 = sphi 0, %s631
      %s634 = sphi 0, %s633
      %s648 = sphi 0, %s634
      %s652 = sphi 0, %s652
      %s654 = sphi 0, %s652
      %s655 = sphi 0, %s654
      %s669 = sphi 0, %s655
      %s673 = sphi 0, %s673
      %s675 = sphi 0, %s673
      %s676 = sphi 0, %s675
      %s690 = sphi 0, %s676
      %s694 = sphi 0, %s694
      %s696 = sphi 0, %s694
      %s697 = sphi 0, %s696
      %s711 = sphi 0, %s697
      %s715 = sphi 0, %s715
      %s717 = sphi 0, %s715
      %s718 = sphi 0, %s717
      %s732 = sphi 0, %s718
      %s736 = sphi 0, %s736
      %s738 = sphi 0, %s736
      %s739 = sphi 0, %s738
      %s753 = sphi 0, %s739
      %s757 = sphi 0, %s757
      %s759 = sphi 0, %s757
      %s760 = sphi 0, %s759
      %s774 = sphi 0, %s760
      %s778 = sphi 0, %s778
      %s780 = sphi 0, %s778
      %s781 = sphi 0, %s780
      %s795 = sphi 0, %s781
      %s799 = sphi 0, %s799
      %s801 = sphi 0, %s799
      %s802 = sphi 0, %s801
      %s816 = sphi 0, %s802
      %s820 = sphi 0, %s820
      %s822 = sphi 0, %s820
      %s823 = sphi 0, %s822
      %s837 = sphi 0, %s823
      %s841 = sphi 0, %s841
      %s843 = sphi 0, %s841
      %s844 = sphi 0, %s843
      %s858 = sphi 0, %s844
      %s862 = sphi 0, %s862
      %s864 = sphi 0, %s862
      %s865 = sphi 0, %s864
      %s879 = sphi 0, %s865
      %s883 = sphi 0, %s883
      %s885 = sphi 0, %s883
      %s886 = sphi 0, %s885
      %s900 = sphi 0, %s886
      %s904 = sphi 0, %s904
      %s906 = sphi 0, %s904
      %s907 = sphi 0, %s906
      %s921 = sphi 0, %s907
      %s925 = sphi 0, %s925
      %s927 = sphi 0, %s925
      %s928 = sphi 0, %s927
      %s942 = sphi 0, %s928
      %s946 = sphi 0, %s946
      %s948 = sphi 0, %s946
      %s949 = sphi 0, %s948
      %s963 = sphi 0, %s949
      %s967 = sphi 0, %s967
      %s969 = sphi 0, %s967
      %s970 = sphi 0, %s969
      %s984 = sphi 0, %s970
      %s988 = sphi 0, %s988
      %s990 = sphi 0, %s988
      %s991 = sphi 0, %s990
      %s1005 = sphi 0, %s991
      %s1009 = sphi 0, %s1009
      %s1011 = sphi 0, %s1009
      %s1012 = sphi 0, %s1011
      %s1026 = sphi 0, %s1012
      %s1030 = sphi 0, %s1030
      %s1032 = sphi 0, %s1030
      %s1033 = sphi 0, %s1032
      %s1047 = sphi 0, %s1033
      %s1051 = sphi 0, %s1051
      %s1053 = sphi 0, %s1051
      %s1054 = sphi 0, %s1053
      %s1068 = sphi 0, %s1054
      %s1072 = sphi 0, %s1072
      %s1074 = sphi 0, %s1072
      %s1075 = sphi 0, %s1074
      %s1089 = sphi 0, %s1075
      %s1093 = sphi 0, %s1093
      %s1095 = sphi 0, %s1093
      %s1096 = sphi 0, %s1095
      %s1110 = sphi 0, %s1096
      %s1114 = sphi 0, %s1114
      %s1116 = sphi 0, %s1114
      %s1117 = sphi 0, %s1116
      %s1131 = sphi 0, %s1117
      %s1135 = sphi 0, %s1135
      %s1137 = sphi 0, %s1135
      %s1138 = sphi 0, %s1137
      %s1152 = sphi 0, %s1138
      %s1156 = sphi 0, %s1156
      %s1158 = sphi 0, %s1156
      %s1159 = sphi 0, %s1158
      %s1173 = sphi 0, %s1159
      %s1177 = sphi 0, %s1177
      %s1179 = sphi 0, %s1177
      %s1180 = sphi 0, %s1179
      %s1194 = sphi 0, %s1180
      %s1198 = sphi 0, %s1198
      %s1200 = sphi 0, %s1198
      %s1201 = sphi 0, %s1200
      %s1215 = sphi 0, %s1201
      %s1219 = sphi 0, %s1219
      %s1221 = sphi 0, %s1219
      %s1222 = sphi 0, %s1221
      %s1236 = sphi 0, %s1222
      %s1240 = sphi 0, %s1240
      %s1242 = sphi 0, %s1240
      %s1243 = sphi 0, %s1242
      %s1257 = sphi 0, %s1243
      %s1261 = sphi 0, %s1261
      %s1263 = sphi 0, %s1261
      %s1264 = sphi 0, %s1263
      %s1278 = sphi 0, %s1264
      %s1282 = sphi 0, %s1282
      %s1284 = sphi 0, %s1282
      %s1285 = sphi 0, %s1284
      %s1299 = sphi 0, %s1285
      %s1303 = sphi 0, %s1303
      %s1305 = sphi 0, %s1303
      %s1306 = sphi 0, %s1305
      %s1320 = sphi 0, %s1306
      %s1324 = sphi 0, %s1324
      %s1326 = sphi 0, %s1324
      %s1327 = sphi 0, %s1326
      %s1341 = sphi 0, %s1327
      %s1345 = sphi 0, %s1345
      %s1347 = sphi 0, %s1345
      %s1348 = sphi 0, %s1347
      %s1362 = sphi 0, %s1348
      %s1366 = sphi 0, %s1366
      %s1368 = sphi 0, %s1366
      %s1369 = sphi 0, %s1368
      %s1383 = sphi 0, %s1369
      %s1387 = sphi 0, %s1387
      %s1389 = sphi 0, %s1387
      %s1390 = sphi 0, %s1389
      %s1404 = sphi 0, %s1390
      %s1408 = sphi 0, %s1408
      %s1410 = sphi 0, %s1408
      %s1411 = sphi 0, %s1410
      %s1425 = sphi 0, %s1411
      %s1429 = sphi 0, %s1429
      %s1431 = sphi 0, %s1429
      %s1432 = sphi 0, %s1431
      %s1446 = sphi 0, %s1432
      %s1452 = sphi 0, %s1454
      %s1455 = sphi 0, %s1452
      %s1456 = sphi 0, %s1455
      %s1472 = sphi 0, %s1456
    $region4: #{detection_forward.1} parent=1 // loop_header_branch
      %159 = sbr.rel (%p157) target = $region8
    $region5: #{detection_forward.1} parent=1 // loop_body
      %s161 = ssub.s32 %s156, 1
      %s162 = ssub.s32 %s156, 2
      %s163 = sadd.s32 %s156, 1
      %s164 = ssub.s32 %s156, %s163
      %p165 = scmp.eq.s32.totalorder %s164, 0
      %s167 = sadd.s32 %s166, 1
      %s168 = scalar_select %p165, %s166, %s167
      %p171 = pneg %p165
      %p172 = scmp.eq.s32.totalorder %s156, 1
      %p173 = por %p171, %p172
      %p174 = scmp.ne.s32.totalorder %s166, %s169
      %p175 = scmp.eq.s32.totalorder %s156, 0
      %p176 = por %p174, %p175
      %p177 = scmp.ne.s32.totalorder %s166, %s169
      %p178 = scmp.eq.s32.totalorder %s161, 1
      %p179 = por %p177, %p178
      %p180 = scmp.ne.s32.totalorder %s169, %s170
      %p181 = scmp.eq.s32.totalorder %s161, 0
      %p182 = por %p180, %p181
      %p183 = scmp.ne.s32.totalorder %s169, %s170
      %p184 = scmp.eq.s32.totalorder %s162, 1
      %p185 = por %p183, %p184
      %p187 = scmp.ne.s32.totalorder %s170, %s186
      %p188 = scmp.eq.s32.totalorder %s162, 0
      %p189 = por %p187, %p188
      %s191 = sadd.s32 %s190, 1
      %p194 = scmp.eq.s32.totalorder %s156, 1
      %p195 = scmp.ne.s32.totalorder %s190, %s192
      %p196 = scmp.eq.s32.totalorder %s156, 0
      %p197 = por %p195, %p196
      %p198 = scmp.ne.s32.totalorder %s190, %s192
      %p199 = scmp.eq.s32.totalorder %s161, 1
      %p200 = por %p198, %p199
      %p201 = scmp.ne.s32.totalorder %s192, %s193
      %p202 = scmp.eq.s32.totalorder %s161, 0
      %p203 = por %p201, %p202
      %p204 = scmp.ne.s32.totalorder %s192, %s193
      %p205 = scmp.eq.s32.totalorder %s162, 1
      %p206 = por %p204, %p205
      %p208 = scmp.ne.s32.totalorder %s193, %s207
      %p209 = scmp.eq.s32.totalorder %s162, 0
      %p210 = por %p208, %p209
      %s212 = sadd.s32 %s211, 1
      %p215 = scmp.eq.s32.totalorder %s156, 1
      %p216 = scmp.ne.s32.totalorder %s211, %s213
      %p217 = scmp.eq.s32.totalorder %s156, 0
      %p218 = por %p216, %p217
      %p219 = scmp.ne.s32.totalorder %s211, %s213
      %p220 = scmp.eq.s32.totalorder %s161, 1
      %p221 = por %p219, %p220
      %p222 = scmp.ne.s32.totalorder %s213, %s214
      %p223 = scmp.eq.s32.totalorder %s161, 0
      %p224 = por %p222, %p223
      %p225 = scmp.ne.s32.totalorder %s213, %s214
      %p226 = scmp.eq.s32.totalorder %s162, 1
      %p227 = por %p225, %p226
      %p229 = scmp.ne.s32.totalorder %s214, %s228
      %p230 = scmp.eq.s32.totalorder %s162, 0
      %p231 = por %p229, %p230
      %s233 = sadd.s32 %s232, 1
      %p236 = scmp.eq.s32.totalorder %s156, 1
      %p237 = scmp.ne.s32.totalorder %s232, %s234
      %p238 = scmp.eq.s32.totalorder %s156, 0
      %p239 = por %p237, %p238
      %p240 = scmp.ne.s32.totalorder %s232, %s234
      %p241 = scmp.eq.s32.totalorder %s161, 1
      %p242 = por %p240, %p241
      %p243 = scmp.ne.s32.totalorder %s234, %s235
      %p244 = scmp.eq.s32.totalorder %s161, 0
      %p245 = por %p243, %p244
      %p246 = scmp.ne.s32.totalorder %s234, %s235
      %p247 = scmp.eq.s32.totalorder %s162, 1
      %p248 = por %p246, %p247
      %p250 = scmp.ne.s32.totalorder %s235, %s249
      %p251 = scmp.eq.s32.totalorder %s162, 0
      %p252 = por %p250, %p251
      %s254 = sadd.s32 %s253, 1
      %p257 = scmp.eq.s32.totalorder %s156, 1
      %p258 = scmp.ne.s32.totalorder %s253, %s255
      %p259 = scmp.eq.s32.totalorder %s156, 0
      %p260 = por %p258, %p259
      %p261 = scmp.ne.s32.totalorder %s253, %s255
      %p262 = scmp.eq.s32.totalorder %s161, 1
      %p263 = por %p261, %p262
      %p264 = scmp.ne.s32.totalorder %s255, %s256
      %p265 = scmp.eq.s32.totalorder %s161, 0
      %p266 = por %p264, %p265
      %p267 = scmp.ne.s32.totalorder %s255, %s256
      %p268 = scmp.eq.s32.totalorder %s162, 1
      %p269 = por %p267, %p268
      %p271 = scmp.ne.s32.totalorder %s256, %s270
      %p272 = scmp.eq.s32.totalorder %s162, 0
      %p273 = por %p271, %p272
      %s275 = sadd.s32 %s274, 1
      %p278 = scmp.eq.s32.totalorder %s156, 1
      %p279 = scmp.ne.s32.totalorder %s274, %s276
      %p280 = scmp.eq.s32.totalorder %s156, 0
      %p281 = por %p279, %p280
      %p282 = scmp.ne.s32.totalorder %s274, %s276
      %p283 = scmp.eq.s32.totalorder %s161, 1
      %p284 = por %p282, %p283
      %p285 = scmp.ne.s32.totalorder %s276, %s277
      %p286 = scmp.eq.s32.totalorder %s161, 0
      %p287 = por %p285, %p286
      %p288 = scmp.ne.s32.totalorder %s276, %s277
      %p289 = scmp.eq.s32.totalorder %s162, 1
      %p290 = por %p288, %p289
      %p292 = scmp.ne.s32.totalorder %s277, %s291
      %p293 = scmp.eq.s32.totalorder %s162, 0
      %p294 = por %p292, %p293
      %s296 = sadd.s32 %s295, 1
      %p299 = scmp.eq.s32.totalorder %s156, 1
      %p300 = scmp.ne.s32.totalorder %s295, %s297
      %p301 = scmp.eq.s32.totalorder %s156, 0
      %p302 = por %p300, %p301
      %p303 = scmp.ne.s32.totalorder %s295, %s297
      %p304 = scmp.eq.s32.totalorder %s161, 1
      %p305 = por %p303, %p304
      %p306 = scmp.ne.s32.totalorder %s297, %s298
      %p307 = scmp.eq.s32.totalorder %s161, 0
      %p308 = por %p306, %p307
      %p309 = scmp.ne.s32.totalorder %s297, %s298
      %p310 = scmp.eq.s32.totalorder %s162, 1
      %p311 = por %p309, %p310
      %p313 = scmp.ne.s32.totalorder %s298, %s312
      %p314 = scmp.eq.s32.totalorder %s162, 0
      %p315 = por %p313, %p314
      %s317 = sadd.s32 %s316, 1
      %p320 = scmp.eq.s32.totalorder %s156, 1
      %p321 = scmp.ne.s32.totalorder %s316, %s318
      %p322 = scmp.eq.s32.totalorder %s156, 0
      %p323 = por %p321, %p322
      %p324 = scmp.ne.s32.totalorder %s316, %s318
      %p325 = scmp.eq.s32.totalorder %s161, 1
      %p326 = por %p324, %p325
      %p327 = scmp.ne.s32.totalorder %s318, %s319
      %p328 = scmp.eq.s32.totalorder %s161, 0
      %p329 = por %p327, %p328
      %p330 = scmp.ne.s32.totalorder %s318, %s319
      %p331 = scmp.eq.s32.totalorder %s162, 1
      %p332 = por %p330, %p331
      %p334 = scmp.ne.s32.totalorder %s319, %s333
      %p335 = scmp.eq.s32.totalorder %s162, 0
      %p336 = por %p334, %p335
      %s338 = sadd.s32 %s337, 1
      %p341 = scmp.eq.s32.totalorder %s156, 1
      %p342 = scmp.ne.s32.totalorder %s337, %s339
      %p343 = scmp.eq.s32.totalorder %s156, 0
      %p344 = por %p342, %p343
      %p345 = scmp.ne.s32.totalorder %s337, %s339
      %p346 = scmp.eq.s32.totalorder %s161, 1
      %p347 = por %p345, %p346
      %p348 = scmp.ne.s32.totalorder %s339, %s340
      %p349 = scmp.eq.s32.totalorder %s161, 0
      %p350 = por %p348, %p349
      %p351 = scmp.ne.s32.totalorder %s339, %s340
      %p352 = scmp.eq.s32.totalorder %s162, 1
      %p353 = por %p351, %p352
      %p355 = scmp.ne.s32.totalorder %s340, %s354
      %p356 = scmp.eq.s32.totalorder %s162, 0
      %p357 = por %p355, %p356
      %s359 = sadd.s32 %s358, 1
      %p362 = scmp.eq.s32.totalorder %s156, 1
      %p363 = scmp.ne.s32.totalorder %s358, %s360
      %p364 = scmp.eq.s32.totalorder %s156, 0
      %p365 = por %p363, %p364
      %p366 = scmp.ne.s32.totalorder %s358, %s360
      %p367 = scmp.eq.s32.totalorder %s161, 1
      %p368 = por %p366, %p367
      %p369 = scmp.ne.s32.totalorder %s360, %s361
      %p370 = scmp.eq.s32.totalorder %s161, 0
      %p371 = por %p369, %p370
      %p372 = scmp.ne.s32.totalorder %s360, %s361
      %p373 = scmp.eq.s32.totalorder %s162, 1
      %p374 = por %p372, %p373
      %p376 = scmp.ne.s32.totalorder %s361, %s375
      %p377 = scmp.eq.s32.totalorder %s162, 0
      %p378 = por %p376, %p377
      %s380 = sadd.s32 %s379, 1
      %p383 = scmp.eq.s32.totalorder %s156, 1
      %p384 = scmp.ne.s32.totalorder %s379, %s381
      %p385 = scmp.eq.s32.totalorder %s156, 0
      %p386 = por %p384, %p385
      %p387 = scmp.ne.s32.totalorder %s379, %s381
      %p388 = scmp.eq.s32.totalorder %s161, 1
      %p389 = por %p387, %p388
      %p390 = scmp.ne.s32.totalorder %s381, %s382
      %p391 = scmp.eq.s32.totalorder %s161, 0
      %p392 = por %p390, %p391
      %p393 = scmp.ne.s32.totalorder %s381, %s382
      %p394 = scmp.eq.s32.totalorder %s162, 1
      %p395 = por %p393, %p394
      %p397 = scmp.ne.s32.totalorder %s382, %s396
      %p398 = scmp.eq.s32.totalorder %s162, 0
      %p399 = por %p397, %p398
      %s401 = sadd.s32 %s400, 1
      %p404 = scmp.eq.s32.totalorder %s156, 1
      %p405 = scmp.ne.s32.totalorder %s400, %s402
      %p406 = scmp.eq.s32.totalorder %s156, 0
      %p407 = por %p405, %p406
      %p408 = scmp.ne.s32.totalorder %s400, %s402
      %p409 = scmp.eq.s32.totalorder %s161, 1
      %p410 = por %p408, %p409
      %p411 = scmp.ne.s32.totalorder %s402, %s403
      %p412 = scmp.eq.s32.totalorder %s161, 0
      %p413 = por %p411, %p412
      %p414 = scmp.ne.s32.totalorder %s402, %s403
      %p415 = scmp.eq.s32.totalorder %s162, 1
      %p416 = por %p414, %p415
      %p418 = scmp.ne.s32.totalorder %s403, %s417
      %p419 = scmp.eq.s32.totalorder %s162, 0
      %p420 = por %p418, %p419
      %s422 = sadd.s32 %s421, 1
      %p425 = scmp.eq.s32.totalorder %s156, 1
      %p426 = scmp.ne.s32.totalorder %s421, %s423
      %p427 = scmp.eq.s32.totalorder %s156, 0
      %p428 = por %p426, %p427
      %p429 = scmp.ne.s32.totalorder %s421, %s423
      %p430 = scmp.eq.s32.totalorder %s161, 1
      %p431 = por %p429, %p430
      %p432 = scmp.ne.s32.totalorder %s423, %s424
      %p433 = scmp.eq.s32.totalorder %s161, 0
      %p434 = por %p432, %p433
      %p435 = scmp.ne.s32.totalorder %s423, %s424
      %p436 = scmp.eq.s32.totalorder %s162, 1
      %p437 = por %p435, %p436
      %p439 = scmp.ne.s32.totalorder %s424, %s438
      %p440 = scmp.eq.s32.totalorder %s162, 0
      %p441 = por %p439, %p440
      %s443 = sadd.s32 %s442, 1
      %p446 = scmp.eq.s32.totalorder %s156, 1
      %p447 = scmp.ne.s32.totalorder %s442, %s444
      %p448 = scmp.eq.s32.totalorder %s156, 0
      %p449 = por %p447, %p448
      %p450 = scmp.ne.s32.totalorder %s442, %s444
      %p451 = scmp.eq.s32.totalorder %s161, 1
      %p452 = por %p450, %p451
      %p453 = scmp.ne.s32.totalorder %s444, %s445
      %p454 = scmp.eq.s32.totalorder %s161, 0
      %p455 = por %p453, %p454
      %p456 = scmp.ne.s32.totalorder %s444, %s445
      %p457 = scmp.eq.s32.totalorder %s162, 1
      %p458 = por %p456, %p457
      %p460 = scmp.ne.s32.totalorder %s445, %s459
      %p461 = scmp.eq.s32.totalorder %s162, 0
      %p462 = por %p460, %p461
      %s464 = sadd.s32 %s463, 1
      %p467 = scmp.eq.s32.totalorder %s156, 1
      %p468 = scmp.ne.s32.totalorder %s463, %s465
      %p469 = scmp.eq.s32.totalorder %s156, 0
      %p470 = por %p468, %p469
      %p471 = scmp.ne.s32.totalorder %s463, %s465
      %p472 = scmp.eq.s32.totalorder %s161, 1
      %p473 = por %p471, %p472
      %p474 = scmp.ne.s32.totalorder %s465, %s466
      %p475 = scmp.eq.s32.totalorder %s161, 0
      %p476 = por %p474, %p475
      %p477 = scmp.ne.s32.totalorder %s465, %s466
      %p478 = scmp.eq.s32.totalorder %s162, 1
      %p479 = por %p477, %p478
      %p481 = scmp.ne.s32.totalorder %s466, %s480
      %p482 = scmp.eq.s32.totalorder %s162, 0
      %p483 = por %p481, %p482
      %s485 = sadd.s32 %s484, 1
      %p488 = scmp.eq.s32.totalorder %s156, 1
      %p489 = scmp.ne.s32.totalorder %s484, %s486
      %p490 = scmp.eq.s32.totalorder %s156, 0
      %p491 = por %p489, %p490
      %p492 = scmp.ne.s32.totalorder %s484, %s486
      %p493 = scmp.eq.s32.totalorder %s161, 1
      %p494 = por %p492, %p493
      %p495 = scmp.ne.s32.totalorder %s486, %s487
      %p496 = scmp.eq.s32.totalorder %s161, 0
      %p497 = por %p495, %p496
      %p498 = scmp.ne.s32.totalorder %s486, %s487
      %p499 = scmp.eq.s32.totalorder %s162, 1
      %p500 = por %p498, %p499
      %p502 = scmp.ne.s32.totalorder %s487, %s501
      %p503 = scmp.eq.s32.totalorder %s162, 0
      %p504 = por %p502, %p503
      %s506 = sadd.s32 %s505, 1
      %p509 = scmp.eq.s32.totalorder %s156, 1
      %p510 = scmp.ne.s32.totalorder %s505, %s507
      %p511 = scmp.eq.s32.totalorder %s156, 0
      %p512 = por %p510, %p511
      %p513 = scmp.ne.s32.totalorder %s505, %s507
      %p514 = scmp.eq.s32.totalorder %s161, 1
      %p515 = por %p513, %p514
      %p516 = scmp.ne.s32.totalorder %s507, %s508
      %p517 = scmp.eq.s32.totalorder %s161, 0
      %p518 = por %p516, %p517
      %p519 = scmp.ne.s32.totalorder %s507, %s508
      %p520 = scmp.eq.s32.totalorder %s162, 1
      %p521 = por %p519, %p520
      %p523 = scmp.ne.s32.totalorder %s508, %s522
      %p524 = scmp.eq.s32.totalorder %s162, 0
      %p525 = por %p523, %p524
      %s527 = sadd.s32 %s526, 1
      %p530 = scmp.eq.s32.totalorder %s156, 1
      %p531 = scmp.ne.s32.totalorder %s526, %s528
      %p532 = scmp.eq.s32.totalorder %s156, 0
      %p533 = por %p531, %p532
      %p534 = scmp.ne.s32.totalorder %s526, %s528
      %p535 = scmp.eq.s32.totalorder %s161, 1
      %p536 = por %p534, %p535
      %p537 = scmp.ne.s32.totalorder %s528, %s529
      %p538 = scmp.eq.s32.totalorder %s161, 0
      %p539 = por %p537, %p538
      %p540 = scmp.ne.s32.totalorder %s528, %s529
      %p541 = scmp.eq.s32.totalorder %s162, 1
      %p542 = por %p540, %p541
      %p544 = scmp.ne.s32.totalorder %s529, %s543
      %p545 = scmp.eq.s32.totalorder %s162, 0
      %p546 = por %p544, %p545
      %s548 = sadd.s32 %s547, 1
      %p551 = scmp.eq.s32.totalorder %s156, 1
      %p552 = scmp.ne.s32.totalorder %s547, %s549
      %p553 = scmp.eq.s32.totalorder %s156, 0
      %p554 = por %p552, %p553
      %p555 = scmp.ne.s32.totalorder %s547, %s549
      %p556 = scmp.eq.s32.totalorder %s161, 1
      %p557 = por %p555, %p556
      %p558 = scmp.ne.s32.totalorder %s549, %s550
      %p559 = scmp.eq.s32.totalorder %s161, 0
      %p560 = por %p558, %p559
      %p561 = scmp.ne.s32.totalorder %s549, %s550
      %p562 = scmp.eq.s32.totalorder %s162, 1
      %p563 = por %p561, %p562
      %p565 = scmp.ne.s32.totalorder %s550, %s564
      %p566 = scmp.eq.s32.totalorder %s162, 0
      %p567 = por %p565, %p566
      %s569 = sadd.s32 %s568, 1
      %p572 = scmp.eq.s32.totalorder %s156, 1
      %p573 = scmp.ne.s32.totalorder %s568, %s570
      %p574 = scmp.eq.s32.totalorder %s156, 0
      %p575 = por %p573, %p574
      %p576 = scmp.ne.s32.totalorder %s568, %s570
      %p577 = scmp.eq.s32.totalorder %s161, 1
      %p578 = por %p576, %p577
      %p579 = scmp.ne.s32.totalorder %s570, %s571
      %p580 = scmp.eq.s32.totalorder %s161, 0
      %p581 = por %p579, %p580
      %p582 = scmp.ne.s32.totalorder %s570, %s571
      %p583 = scmp.eq.s32.totalorder %s162, 1
      %p584 = por %p582, %p583
      %p586 = scmp.ne.s32.totalorder %s571, %s585
      %p587 = scmp.eq.s32.totalorder %s162, 0
      %p588 = por %p586, %p587
      %s590 = sadd.s32 %s589, 1
      %p593 = scmp.eq.s32.totalorder %s156, 1
      %p594 = scmp.ne.s32.totalorder %s589, %s591
      %p595 = scmp.eq.s32.totalorder %s156, 0
      %p596 = por %p594, %p595
      %p597 = scmp.ne.s32.totalorder %s589, %s591
      %p598 = scmp.eq.s32.totalorder %s161, 1
      %p599 = por %p597, %p598
      %p600 = scmp.ne.s32.totalorder %s591, %s592
      %p601 = scmp.eq.s32.totalorder %s161, 0
      %p602 = por %p600, %p601
      %p603 = scmp.ne.s32.totalorder %s591, %s592
      %p604 = scmp.eq.s32.totalorder %s162, 1
      %p605 = por %p603, %p604
      %p607 = scmp.ne.s32.totalorder %s592, %s606
      %p608 = scmp.eq.s32.totalorder %s162, 0
      %p609 = por %p607, %p608
      %s611 = sadd.s32 %s610, 1
      %p614 = scmp.eq.s32.totalorder %s156, 1
      %p615 = scmp.ne.s32.totalorder %s610, %s612
      %p616 = scmp.eq.s32.totalorder %s156, 0
      %p617 = por %p615, %p616
      %p618 = scmp.ne.s32.totalorder %s610, %s612
      %p619 = scmp.eq.s32.totalorder %s161, 1
      %p620 = por %p618, %p619
      %p621 = scmp.ne.s32.totalorder %s612, %s613
      %p622 = scmp.eq.s32.totalorder %s161, 0
      %p623 = por %p621, %p622
      %p624 = scmp.ne.s32.totalorder %s612, %s613
      %p625 = scmp.eq.s32.totalorder %s162, 1
      %p626 = por %p624, %p625
      %p628 = scmp.ne.s32.totalorder %s613, %s627
      %p629 = scmp.eq.s32.totalorder %s162, 0
      %p630 = por %p628, %p629
      %s632 = sadd.s32 %s631, 1
      %p635 = scmp.eq.s32.totalorder %s156, 1
      %p636 = scmp.ne.s32.totalorder %s631, %s633
      %p637 = scmp.eq.s32.totalorder %s156, 0
      %p638 = por %p636, %p637
      %p639 = scmp.ne.s32.totalorder %s631, %s633
      %p640 = scmp.eq.s32.totalorder %s161, 1
      %p641 = por %p639, %p640
      %p642 = scmp.ne.s32.totalorder %s633, %s634
      %p643 = scmp.eq.s32.totalorder %s161, 0
      %p644 = por %p642, %p643
      %p645 = scmp.ne.s32.totalorder %s633, %s634
      %p646 = scmp.eq.s32.totalorder %s162, 1
      %p647 = por %p645, %p646
      %p649 = scmp.ne.s32.totalorder %s634, %s648
      %p650 = scmp.eq.s32.totalorder %s162, 0
      %p651 = por %p649, %p650
      %s653 = sadd.s32 %s652, 1
      %p656 = scmp.eq.s32.totalorder %s156, 1
      %p657 = scmp.ne.s32.totalorder %s652, %s654
      %p658 = scmp.eq.s32.totalorder %s156, 0
      %p659 = por %p657, %p658
      %p660 = scmp.ne.s32.totalorder %s652, %s654
      %p661 = scmp.eq.s32.totalorder %s161, 1
      %p662 = por %p660, %p661
      %p663 = scmp.ne.s32.totalorder %s654, %s655
      %p664 = scmp.eq.s32.totalorder %s161, 0
      %p665 = por %p663, %p664
      %p666 = scmp.ne.s32.totalorder %s654, %s655
      %p667 = scmp.eq.s32.totalorder %s162, 1
      %p668 = por %p666, %p667
      %p670 = scmp.ne.s32.totalorder %s655, %s669
      %p671 = scmp.eq.s32.totalorder %s162, 0
      %p672 = por %p670, %p671
      %s674 = sadd.s32 %s673, 1
      %p677 = scmp.eq.s32.totalorder %s156, 1
      %p678 = scmp.ne.s32.totalorder %s673, %s675
      %p679 = scmp.eq.s32.totalorder %s156, 0
      %p680 = por %p678, %p679
      %p681 = scmp.ne.s32.totalorder %s673, %s675
      %p682 = scmp.eq.s32.totalorder %s161, 1
      %p683 = por %p681, %p682
      %p684 = scmp.ne.s32.totalorder %s675, %s676
      %p685 = scmp.eq.s32.totalorder %s161, 0
      %p686 = por %p684, %p685
      %p687 = scmp.ne.s32.totalorder %s675, %s676
      %p688 = scmp.eq.s32.totalorder %s162, 1
      %p689 = por %p687, %p688
      %p691 = scmp.ne.s32.totalorder %s676, %s690
      %p692 = scmp.eq.s32.totalorder %s162, 0
      %p693 = por %p691, %p692
      %s695 = sadd.s32 %s694, 1
      %p698 = scmp.eq.s32.totalorder %s156, 1
      %p699 = scmp.ne.s32.totalorder %s694, %s696
      %p700 = scmp.eq.s32.totalorder %s156, 0
      %p701 = por %p699, %p700
      %p702 = scmp.ne.s32.totalorder %s694, %s696
      %p703 = scmp.eq.s32.totalorder %s161, 1
      %p704 = por %p702, %p703
      %p705 = scmp.ne.s32.totalorder %s696, %s697
      %p706 = scmp.eq.s32.totalorder %s161, 0
      %p707 = por %p705, %p706
      %p708 = scmp.ne.s32.totalorder %s696, %s697
      %p709 = scmp.eq.s32.totalorder %s162, 1
      %p710 = por %p708, %p709
      %p712 = scmp.ne.s32.totalorder %s697, %s711
      %p713 = scmp.eq.s32.totalorder %s162, 0
      %p714 = por %p712, %p713
      %s716 = sadd.s32 %s715, 1
      %p719 = scmp.eq.s32.totalorder %s156, 1
      %p720 = scmp.ne.s32.totalorder %s715, %s717
      %p721 = scmp.eq.s32.totalorder %s156, 0
      %p722 = por %p720, %p721
      %p723 = scmp.ne.s32.totalorder %s715, %s717
      %p724 = scmp.eq.s32.totalorder %s161, 1
      %p725 = por %p723, %p724
      %p726 = scmp.ne.s32.totalorder %s717, %s718
      %p727 = scmp.eq.s32.totalorder %s161, 0
      %p728 = por %p726, %p727
      %p729 = scmp.ne.s32.totalorder %s717, %s718
      %p730 = scmp.eq.s32.totalorder %s162, 1
      %p731 = por %p729, %p730
      %p733 = scmp.ne.s32.totalorder %s718, %s732
      %p734 = scmp.eq.s32.totalorder %s162, 0
      %p735 = por %p733, %p734
      %s737 = sadd.s32 %s736, 1
      %p740 = scmp.eq.s32.totalorder %s156, 1
      %p741 = scmp.ne.s32.totalorder %s736, %s738
      %p742 = scmp.eq.s32.totalorder %s156, 0
      %p743 = por %p741, %p742
      %p744 = scmp.ne.s32.totalorder %s736, %s738
      %p745 = scmp.eq.s32.totalorder %s161, 1
      %p746 = por %p744, %p745
      %p747 = scmp.ne.s32.totalorder %s738, %s739
      %p748 = scmp.eq.s32.totalorder %s161, 0
      %p749 = por %p747, %p748
      %p750 = scmp.ne.s32.totalorder %s738, %s739
      %p751 = scmp.eq.s32.totalorder %s162, 1
      %p752 = por %p750, %p751
      %p754 = scmp.ne.s32.totalorder %s739, %s753
      %p755 = scmp.eq.s32.totalorder %s162, 0
      %p756 = por %p754, %p755
      %s758 = sadd.s32 %s757, 1
      %p761 = scmp.eq.s32.totalorder %s156, 1
      %p762 = scmp.ne.s32.totalorder %s757, %s759
      %p763 = scmp.eq.s32.totalorder %s156, 0
      %p764 = por %p762, %p763
      %p765 = scmp.ne.s32.totalorder %s757, %s759
      %p766 = scmp.eq.s32.totalorder %s161, 1
      %p767 = por %p765, %p766
      %p768 = scmp.ne.s32.totalorder %s759, %s760
      %p769 = scmp.eq.s32.totalorder %s161, 0
      %p770 = por %p768, %p769
      %p771 = scmp.ne.s32.totalorder %s759, %s760
      %p772 = scmp.eq.s32.totalorder %s162, 1
      %p773 = por %p771, %p772
      %p775 = scmp.ne.s32.totalorder %s760, %s774
      %p776 = scmp.eq.s32.totalorder %s162, 0
      %p777 = por %p775, %p776
      %s779 = sadd.s32 %s778, 1
      %p782 = scmp.eq.s32.totalorder %s156, 1
      %p783 = scmp.ne.s32.totalorder %s778, %s780
      %p784 = scmp.eq.s32.totalorder %s156, 0
      %p785 = por %p783, %p784
      %p786 = scmp.ne.s32.totalorder %s778, %s780
      %p787 = scmp.eq.s32.totalorder %s161, 1
      %p788 = por %p786, %p787
      %p789 = scmp.ne.s32.totalorder %s780, %s781
      %p790 = scmp.eq.s32.totalorder %s161, 0
      %p791 = por %p789, %p790
      %p792 = scmp.ne.s32.totalorder %s780, %s781
      %p793 = scmp.eq.s32.totalorder %s162, 1
      %p794 = por %p792, %p793
      %p796 = scmp.ne.s32.totalorder %s781, %s795
      %p797 = scmp.eq.s32.totalorder %s162, 0
      %p798 = por %p796, %p797
      %s800 = sadd.s32 %s799, 1
      %p803 = scmp.eq.s32.totalorder %s156, 1
      %p804 = scmp.ne.s32.totalorder %s799, %s801
      %p805 = scmp.eq.s32.totalorder %s156, 0
      %p806 = por %p804, %p805
      %p807 = scmp.ne.s32.totalorder %s799, %s801
      %p808 = scmp.eq.s32.totalorder %s161, 1
      %p809 = por %p807, %p808
      %p810 = scmp.ne.s32.totalorder %s801, %s802
      %p811 = scmp.eq.s32.totalorder %s161, 0
      %p812 = por %p810, %p811
      %p813 = scmp.ne.s32.totalorder %s801, %s802
      %p814 = scmp.eq.s32.totalorder %s162, 1
      %p815 = por %p813, %p814
      %p817 = scmp.ne.s32.totalorder %s802, %s816
      %p818 = scmp.eq.s32.totalorder %s162, 0
      %p819 = por %p817, %p818
      %s821 = sadd.s32 %s820, 1
      %p824 = scmp.eq.s32.totalorder %s156, 1
      %p825 = scmp.ne.s32.totalorder %s820, %s822
      %p826 = scmp.eq.s32.totalorder %s156, 0
      %p827 = por %p825, %p826
      %p828 = scmp.ne.s32.totalorder %s820, %s822
      %p829 = scmp.eq.s32.totalorder %s161, 1
      %p830 = por %p828, %p829
      %p831 = scmp.ne.s32.totalorder %s822, %s823
      %p832 = scmp.eq.s32.totalorder %s161, 0
      %p833 = por %p831, %p832
      %p834 = scmp.ne.s32.totalorder %s822, %s823
      %p835 = scmp.eq.s32.totalorder %s162, 1
      %p836 = por %p834, %p835
      %p838 = scmp.ne.s32.totalorder %s823, %s837
      %p839 = scmp.eq.s32.totalorder %s162, 0
      %p840 = por %p838, %p839
      %s842 = sadd.s32 %s841, 1
      %p845 = scmp.eq.s32.totalorder %s156, 1
      %p846 = scmp.ne.s32.totalorder %s841, %s843
      %p847 = scmp.eq.s32.totalorder %s156, 0
      %p848 = por %p846, %p847
      %p849 = scmp.ne.s32.totalorder %s841, %s843
      %p850 = scmp.eq.s32.totalorder %s161, 1
      %p851 = por %p849, %p850
      %p852 = scmp.ne.s32.totalorder %s843, %s844
      %p853 = scmp.eq.s32.totalorder %s161, 0
      %p854 = por %p852, %p853
      %p855 = scmp.ne.s32.totalorder %s843, %s844
      %p856 = scmp.eq.s32.totalorder %s162, 1
      %p857 = por %p855, %p856
      %p859 = scmp.ne.s32.totalorder %s844, %s858
      %p860 = scmp.eq.s32.totalorder %s162, 0
      %p861 = por %p859, %p860
      %s863 = sadd.s32 %s862, 1
      %p866 = scmp.eq.s32.totalorder %s156, 1
      %p867 = scmp.ne.s32.totalorder %s862, %s864
      %p868 = scmp.eq.s32.totalorder %s156, 0
      %p869 = por %p867, %p868
      %p870 = scmp.ne.s32.totalorder %s862, %s864
      %p871 = scmp.eq.s32.totalorder %s161, 1
      %p872 = por %p870, %p871
      %p873 = scmp.ne.s32.totalorder %s864, %s865
      %p874 = scmp.eq.s32.totalorder %s161, 0
      %p875 = por %p873, %p874
      %p876 = scmp.ne.s32.totalorder %s864, %s865
      %p877 = scmp.eq.s32.totalorder %s162, 1
      %p878 = por %p876, %p877
      %p880 = scmp.ne.s32.totalorder %s865, %s879
      %p881 = scmp.eq.s32.totalorder %s162, 0
      %p882 = por %p880, %p881
      %s884 = sadd.s32 %s883, 1
      %p887 = scmp.eq.s32.totalorder %s156, 1
      %p888 = scmp.ne.s32.totalorder %s883, %s885
      %p889 = scmp.eq.s32.totalorder %s156, 0
      %p890 = por %p888, %p889
      %p891 = scmp.ne.s32.totalorder %s883, %s885
      %p892 = scmp.eq.s32.totalorder %s161, 1
      %p893 = por %p891, %p892
      %p894 = scmp.ne.s32.totalorder %s885, %s886
      %p895 = scmp.eq.s32.totalorder %s161, 0
      %p896 = por %p894, %p895
      %p897 = scmp.ne.s32.totalorder %s885, %s886
      %p898 = scmp.eq.s32.totalorder %s162, 1
      %p899 = por %p897, %p898
      %p901 = scmp.ne.s32.totalorder %s886, %s900
      %p902 = scmp.eq.s32.totalorder %s162, 0
      %p903 = por %p901, %p902
      %s905 = sadd.s32 %s904, 1
      %p908 = scmp.eq.s32.totalorder %s156, 1
      %p909 = scmp.ne.s32.totalorder %s904, %s906
      %p910 = scmp.eq.s32.totalorder %s156, 0
      %p911 = por %p909, %p910
      %p912 = scmp.ne.s32.totalorder %s904, %s906
      %p913 = scmp.eq.s32.totalorder %s161, 1
      %p914 = por %p912, %p913
      %p915 = scmp.ne.s32.totalorder %s906, %s907
      %p916 = scmp.eq.s32.totalorder %s161, 0
      %p917 = por %p915, %p916
      %p918 = scmp.ne.s32.totalorder %s906, %s907
      %p919 = scmp.eq.s32.totalorder %s162, 1
      %p920 = por %p918, %p919
      %p922 = scmp.ne.s32.totalorder %s907, %s921
      %p923 = scmp.eq.s32.totalorder %s162, 0
      %p924 = por %p922, %p923
      %s926 = sadd.s32 %s925, 1
      %p929 = scmp.eq.s32.totalorder %s156, 1
      %p930 = scmp.ne.s32.totalorder %s925, %s927
      %p931 = scmp.eq.s32.totalorder %s156, 0
      %p932 = por %p930, %p931
      %p933 = scmp.ne.s32.totalorder %s925, %s927
      %p934 = scmp.eq.s32.totalorder %s161, 1
      %p935 = por %p933, %p934
      %p936 = scmp.ne.s32.totalorder %s927, %s928
      %p937 = scmp.eq.s32.totalorder %s161, 0
      %p938 = por %p936, %p937
      %p939 = scmp.ne.s32.totalorder %s927, %s928
      %p940 = scmp.eq.s32.totalorder %s162, 1
      %p941 = por %p939, %p940
      %p943 = scmp.ne.s32.totalorder %s928, %s942
      %p944 = scmp.eq.s32.totalorder %s162, 0
      %p945 = por %p943, %p944
      %s947 = sadd.s32 %s946, 1
      %p950 = scmp.eq.s32.totalorder %s156, 1
      %p951 = scmp.ne.s32.totalorder %s946, %s948
      %p952 = scmp.eq.s32.totalorder %s156, 0
      %p953 = por %p951, %p952
      %p954 = scmp.ne.s32.totalorder %s946, %s948
      %p955 = scmp.eq.s32.totalorder %s161, 1
      %p956 = por %p954, %p955
      %p957 = scmp.ne.s32.totalorder %s948, %s949
      %p958 = scmp.eq.s32.totalorder %s161, 0
      %p959 = por %p957, %p958
      %p960 = scmp.ne.s32.totalorder %s948, %s949
      %p961 = scmp.eq.s32.totalorder %s162, 1
      %p962 = por %p960, %p961
      %p964 = scmp.ne.s32.totalorder %s949, %s963
      %p965 = scmp.eq.s32.totalorder %s162, 0
      %p966 = por %p964, %p965
      %s968 = sadd.s32 %s967, 1
      %p971 = scmp.eq.s32.totalorder %s156, 1
      %p972 = scmp.ne.s32.totalorder %s967, %s969
      %p973 = scmp.eq.s32.totalorder %s156, 0
      %p974 = por %p972, %p973
      %p975 = scmp.ne.s32.totalorder %s967, %s969
      %p976 = scmp.eq.s32.totalorder %s161, 1
      %p977 = por %p975, %p976
      %p978 = scmp.ne.s32.totalorder %s969, %s970
      %p979 = scmp.eq.s32.totalorder %s161, 0
      %p980 = por %p978, %p979
      %p981 = scmp.ne.s32.totalorder %s969, %s970
      %p982 = scmp.eq.s32.totalorder %s162, 1
      %p983 = por %p981, %p982
      %p985 = scmp.ne.s32.totalorder %s970, %s984
      %p986 = scmp.eq.s32.totalorder %s162, 0
      %p987 = por %p985, %p986
      %s989 = sadd.s32 %s988, 1
      %p992 = scmp.eq.s32.totalorder %s156, 1
      %p993 = scmp.ne.s32.totalorder %s988, %s990
      %p994 = scmp.eq.s32.totalorder %s156, 0
      %p995 = por %p993, %p994
      %p996 = scmp.ne.s32.totalorder %s988, %s990
      %p997 = scmp.eq.s32.totalorder %s161, 1
      %p998 = por %p996, %p997
      %p999 = scmp.ne.s32.totalorder %s990, %s991
      %p1000 = scmp.eq.s32.totalorder %s161, 0
      %p1001 = por %p999, %p1000
      %p1002 = scmp.ne.s32.totalorder %s990, %s991
      %p1003 = scmp.eq.s32.totalorder %s162, 1
      %p1004 = por %p1002, %p1003
      %p1006 = scmp.ne.s32.totalorder %s991, %s1005
      %p1007 = scmp.eq.s32.totalorder %s162, 0
      %p1008 = por %p1006, %p1007
      %s1010 = sadd.s32 %s1009, 1
      %p1013 = scmp.eq.s32.totalorder %s156, 1
      %p1014 = scmp.ne.s32.totalorder %s1009, %s1011
      %p1015 = scmp.eq.s32.totalorder %s156, 0
      %p1016 = por %p1014, %p1015
      %p1017 = scmp.ne.s32.totalorder %s1009, %s1011
      %p1018 = scmp.eq.s32.totalorder %s161, 1
      %p1019 = por %p1017, %p1018
      %p1020 = scmp.ne.s32.totalorder %s1011, %s1012
      %p1021 = scmp.eq.s32.totalorder %s161, 0
      %p1022 = por %p1020, %p1021
      %p1023 = scmp.ne.s32.totalorder %s1011, %s1012
      %p1024 = scmp.eq.s32.totalorder %s162, 1
      %p1025 = por %p1023, %p1024
      %p1027 = scmp.ne.s32.totalorder %s1012, %s1026
      %p1028 = scmp.eq.s32.totalorder %s162, 0
      %p1029 = por %p1027, %p1028
      %s1031 = sadd.s32 %s1030, 1
      %p1034 = scmp.eq.s32.totalorder %s156, 1
      %p1035 = scmp.ne.s32.totalorder %s1030, %s1032
      %p1036 = scmp.eq.s32.totalorder %s156, 0
      %p1037 = por %p1035, %p1036
      %p1038 = scmp.ne.s32.totalorder %s1030, %s1032
      %p1039 = scmp.eq.s32.totalorder %s161, 1
      %p1040 = por %p1038, %p1039
      %p1041 = scmp.ne.s32.totalorder %s1032, %s1033
      %p1042 = scmp.eq.s32.totalorder %s161, 0
      %p1043 = por %p1041, %p1042
      %p1044 = scmp.ne.s32.totalorder %s1032, %s1033
      %p1045 = scmp.eq.s32.totalorder %s162, 1
      %p1046 = por %p1044, %p1045
      %p1048 = scmp.ne.s32.totalorder %s1033, %s1047
      %p1049 = scmp.eq.s32.totalorder %s162, 0
      %p1050 = por %p1048, %p1049
      %s1052 = sadd.s32 %s1051, 1
      %p1055 = scmp.eq.s32.totalorder %s156, 1
      %p1056 = scmp.ne.s32.totalorder %s1051, %s1053
      %p1057 = scmp.eq.s32.totalorder %s156, 0
      %p1058 = por %p1056, %p1057
      %p1059 = scmp.ne.s32.totalorder %s1051, %s1053
      %p1060 = scmp.eq.s32.totalorder %s161, 1
      %p1061 = por %p1059, %p1060
      %p1062 = scmp.ne.s32.totalorder %s1053, %s1054
      %p1063 = scmp.eq.s32.totalorder %s161, 0
      %p1064 = por %p1062, %p1063
      %p1065 = scmp.ne.s32.totalorder %s1053, %s1054
      %p1066 = scmp.eq.s32.totalorder %s162, 1
      %p1067 = por %p1065, %p1066
      %p1069 = scmp.ne.s32.totalorder %s1054, %s1068
      %p1070 = scmp.eq.s32.totalorder %s162, 0
      %p1071 = por %p1069, %p1070
      %s1073 = sadd.s32 %s1072, 1
      %p1076 = scmp.eq.s32.totalorder %s156, 1
      %p1077 = scmp.ne.s32.totalorder %s1072, %s1074
      %p1078 = scmp.eq.s32.totalorder %s156, 0
      %p1079 = por %p1077, %p1078
      %p1080 = scmp.ne.s32.totalorder %s1072, %s1074
      %p1081 = scmp.eq.s32.totalorder %s161, 1
      %p1082 = por %p1080, %p1081
      %p1083 = scmp.ne.s32.totalorder %s1074, %s1075
      %p1084 = scmp.eq.s32.totalorder %s161, 0
      %p1085 = por %p1083, %p1084
      %p1086 = scmp.ne.s32.totalorder %s1074, %s1075
      %p1087 = scmp.eq.s32.totalorder %s162, 1
      %p1088 = por %p1086, %p1087
      %p1090 = scmp.ne.s32.totalorder %s1075, %s1089
      %p1091 = scmp.eq.s32.totalorder %s162, 0
      %p1092 = por %p1090, %p1091
      %s1094 = sadd.s32 %s1093, 1
      %p1097 = scmp.eq.s32.totalorder %s156, 1
      %p1098 = scmp.ne.s32.totalorder %s1093, %s1095
      %p1099 = scmp.eq.s32.totalorder %s156, 0
      %p1100 = por %p1098, %p1099
      %p1101 = scmp.ne.s32.totalorder %s1093, %s1095
      %p1102 = scmp.eq.s32.totalorder %s161, 1
      %p1103 = por %p1101, %p1102
      %p1104 = scmp.ne.s32.totalorder %s1095, %s1096
      %p1105 = scmp.eq.s32.totalorder %s161, 0
      %p1106 = por %p1104, %p1105
      %p1107 = scmp.ne.s32.totalorder %s1095, %s1096
      %p1108 = scmp.eq.s32.totalorder %s162, 1
      %p1109 = por %p1107, %p1108
      %p1111 = scmp.ne.s32.totalorder %s1096, %s1110
      %p1112 = scmp.eq.s32.totalorder %s162, 0
      %p1113 = por %p1111, %p1112
      %s1115 = sadd.s32 %s1114, 1
      %p1118 = scmp.eq.s32.totalorder %s156, 1
      %p1119 = scmp.ne.s32.totalorder %s1114, %s1116
      %p1120 = scmp.eq.s32.totalorder %s156, 0
      %p1121 = por %p1119, %p1120
      %p1122 = scmp.ne.s32.totalorder %s1114, %s1116
      %p1123 = scmp.eq.s32.totalorder %s161, 1
      %p1124 = por %p1122, %p1123
      %p1125 = scmp.ne.s32.totalorder %s1116, %s1117
      %p1126 = scmp.eq.s32.totalorder %s161, 0
      %p1127 = por %p1125, %p1126
      %p1128 = scmp.ne.s32.totalorder %s1116, %s1117
      %p1129 = scmp.eq.s32.totalorder %s162, 1
      %p1130 = por %p1128, %p1129
      %p1132 = scmp.ne.s32.totalorder %s1117, %s1131
      %p1133 = scmp.eq.s32.totalorder %s162, 0
      %p1134 = por %p1132, %p1133
      %s1136 = sadd.s32 %s1135, 1
      %p1139 = scmp.eq.s32.totalorder %s156, 1
      %p1140 = scmp.ne.s32.totalorder %s1135, %s1137
      %p1141 = scmp.eq.s32.totalorder %s156, 0
      %p1142 = por %p1140, %p1141
      %p1143 = scmp.ne.s32.totalorder %s1135, %s1137
      %p1144 = scmp.eq.s32.totalorder %s161, 1
      %p1145 = por %p1143, %p1144
      %p1146 = scmp.ne.s32.totalorder %s1137, %s1138
      %p1147 = scmp.eq.s32.totalorder %s161, 0
      %p1148 = por %p1146, %p1147
      %p1149 = scmp.ne.s32.totalorder %s1137, %s1138
      %p1150 = scmp.eq.s32.totalorder %s162, 1
      %p1151 = por %p1149, %p1150
      %p1153 = scmp.ne.s32.totalorder %s1138, %s1152
      %p1154 = scmp.eq.s32.totalorder %s162, 0
      %p1155 = por %p1153, %p1154
      %s1157 = sadd.s32 %s1156, 1
      %p1160 = scmp.eq.s32.totalorder %s156, 1
      %p1161 = scmp.ne.s32.totalorder %s1156, %s1158
      %p1162 = scmp.eq.s32.totalorder %s156, 0
      %p1163 = por %p1161, %p1162
      %p1164 = scmp.ne.s32.totalorder %s1156, %s1158
      %p1165 = scmp.eq.s32.totalorder %s161, 1
      %p1166 = por %p1164, %p1165
      %p1167 = scmp.ne.s32.totalorder %s1158, %s1159
      %p1168 = scmp.eq.s32.totalorder %s161, 0
      %p1169 = por %p1167, %p1168
      %p1170 = scmp.ne.s32.totalorder %s1158, %s1159
      %p1171 = scmp.eq.s32.totalorder %s162, 1
      %p1172 = por %p1170, %p1171
      %p1174 = scmp.ne.s32.totalorder %s1159, %s1173
      %p1175 = scmp.eq.s32.totalorder %s162, 0
      %p1176 = por %p1174, %p1175
      %s1178 = sadd.s32 %s1177, 1
      %p1181 = scmp.eq.s32.totalorder %s156, 1
      %p1182 = scmp.ne.s32.totalorder %s1177, %s1179
      %p1183 = scmp.eq.s32.totalorder %s156, 0
      %p1184 = por %p1182, %p1183
      %p1185 = scmp.ne.s32.totalorder %s1177, %s1179
      %p1186 = scmp.eq.s32.totalorder %s161, 1
      %p1187 = por %p1185, %p1186
      %p1188 = scmp.ne.s32.totalorder %s1179, %s1180
      %p1189 = scmp.eq.s32.totalorder %s161, 0
      %p1190 = por %p1188, %p1189
      %p1191 = scmp.ne.s32.totalorder %s1179, %s1180
      %p1192 = scmp.eq.s32.totalorder %s162, 1
      %p1193 = por %p1191, %p1192
      %p1195 = scmp.ne.s32.totalorder %s1180, %s1194
      %p1196 = scmp.eq.s32.totalorder %s162, 0
      %p1197 = por %p1195, %p1196
      %s1199 = sadd.s32 %s1198, 1
      %p1202 = scmp.eq.s32.totalorder %s156, 1
      %p1203 = scmp.ne.s32.totalorder %s1198, %s1200
      %p1204 = scmp.eq.s32.totalorder %s156, 0
      %p1205 = por %p1203, %p1204
      %p1206 = scmp.ne.s32.totalorder %s1198, %s1200
      %p1207 = scmp.eq.s32.totalorder %s161, 1
      %p1208 = por %p1206, %p1207
      %p1209 = scmp.ne.s32.totalorder %s1200, %s1201
      %p1210 = scmp.eq.s32.totalorder %s161, 0
      %p1211 = por %p1209, %p1210
      %p1212 = scmp.ne.s32.totalorder %s1200, %s1201
      %p1213 = scmp.eq.s32.totalorder %s162, 1
      %p1214 = por %p1212, %p1213
      %p1216 = scmp.ne.s32.totalorder %s1201, %s1215
      %p1217 = scmp.eq.s32.totalorder %s162, 0
      %p1218 = por %p1216, %p1217
      %s1220 = sadd.s32 %s1219, 1
      %p1223 = scmp.eq.s32.totalorder %s156, 1
      %p1224 = scmp.ne.s32.totalorder %s1219, %s1221
      %p1225 = scmp.eq.s32.totalorder %s156, 0
      %p1226 = por %p1224, %p1225
      %p1227 = scmp.ne.s32.totalorder %s1219, %s1221
      %p1228 = scmp.eq.s32.totalorder %s161, 1
      %p1229 = por %p1227, %p1228
      %p1230 = scmp.ne.s32.totalorder %s1221, %s1222
      %p1231 = scmp.eq.s32.totalorder %s161, 0
      %p1232 = por %p1230, %p1231
      %p1233 = scmp.ne.s32.totalorder %s1221, %s1222
      %p1234 = scmp.eq.s32.totalorder %s162, 1
      %p1235 = por %p1233, %p1234
      %p1237 = scmp.ne.s32.totalorder %s1222, %s1236
      %p1238 = scmp.eq.s32.totalorder %s162, 0
      %p1239 = por %p1237, %p1238
      %s1241 = sadd.s32 %s1240, 1
      %p1244 = scmp.eq.s32.totalorder %s156, 1
      %p1245 = scmp.ne.s32.totalorder %s1240, %s1242
      %p1246 = scmp.eq.s32.totalorder %s156, 0
      %p1247 = por %p1245, %p1246
      %p1248 = scmp.ne.s32.totalorder %s1240, %s1242
      %p1249 = scmp.eq.s32.totalorder %s161, 1
      %p1250 = por %p1248, %p1249
      %p1251 = scmp.ne.s32.totalorder %s1242, %s1243
      %p1252 = scmp.eq.s32.totalorder %s161, 0
      %p1253 = por %p1251, %p1252
      %p1254 = scmp.ne.s32.totalorder %s1242, %s1243
      %p1255 = scmp.eq.s32.totalorder %s162, 1
      %p1256 = por %p1254, %p1255
      %p1258 = scmp.ne.s32.totalorder %s1243, %s1257
      %p1259 = scmp.eq.s32.totalorder %s162, 0
      %p1260 = por %p1258, %p1259
      %s1262 = sadd.s32 %s1261, 1
      %p1265 = scmp.eq.s32.totalorder %s156, 1
      %p1266 = scmp.ne.s32.totalorder %s1261, %s1263
      %p1267 = scmp.eq.s32.totalorder %s156, 0
      %p1268 = por %p1266, %p1267
      %p1269 = scmp.ne.s32.totalorder %s1261, %s1263
      %p1270 = scmp.eq.s32.totalorder %s161, 1
      %p1271 = por %p1269, %p1270
      %p1272 = scmp.ne.s32.totalorder %s1263, %s1264
      %p1273 = scmp.eq.s32.totalorder %s161, 0
      %p1274 = por %p1272, %p1273
      %p1275 = scmp.ne.s32.totalorder %s1263, %s1264
      %p1276 = scmp.eq.s32.totalorder %s162, 1
      %p1277 = por %p1275, %p1276
      %p1279 = scmp.ne.s32.totalorder %s1264, %s1278
      %p1280 = scmp.eq.s32.totalorder %s162, 0
      %p1281 = por %p1279, %p1280
      %s1283 = sadd.s32 %s1282, 1
      %p1286 = scmp.eq.s32.totalorder %s156, 1
      %p1287 = scmp.ne.s32.totalorder %s1282, %s1284
      %p1288 = scmp.eq.s32.totalorder %s156, 0
      %p1289 = por %p1287, %p1288
      %p1290 = scmp.ne.s32.totalorder %s1282, %s1284
      %p1291 = scmp.eq.s32.totalorder %s161, 1
      %p1292 = por %p1290, %p1291
      %p1293 = scmp.ne.s32.totalorder %s1284, %s1285
      %p1294 = scmp.eq.s32.totalorder %s161, 0
      %p1295 = por %p1293, %p1294
      %p1296 = scmp.ne.s32.totalorder %s1284, %s1285
      %p1297 = scmp.eq.s32.totalorder %s162, 1
      %p1298 = por %p1296, %p1297
      %p1300 = scmp.ne.s32.totalorder %s1285, %s1299
      %p1301 = scmp.eq.s32.totalorder %s162, 0
      %p1302 = por %p1300, %p1301
      %s1304 = sadd.s32 %s1303, 1
      %p1307 = scmp.eq.s32.totalorder %s156, 1
      %p1308 = scmp.ne.s32.totalorder %s1303, %s1305
      %p1309 = scmp.eq.s32.totalorder %s156, 0
      %p1310 = por %p1308, %p1309
      %p1311 = scmp.ne.s32.totalorder %s1303, %s1305
      %p1312 = scmp.eq.s32.totalorder %s161, 1
      %p1313 = por %p1311, %p1312
      %p1314 = scmp.ne.s32.totalorder %s1305, %s1306
      %p1315 = scmp.eq.s32.totalorder %s161, 0
      %p1316 = por %p1314, %p1315
      %p1317 = scmp.ne.s32.totalorder %s1305, %s1306
      %p1318 = scmp.eq.s32.totalorder %s162, 1
      %p1319 = por %p1317, %p1318
      %p1321 = scmp.ne.s32.totalorder %s1306, %s1320
      %p1322 = scmp.eq.s32.totalorder %s162, 0
      %p1323 = por %p1321, %p1322
      %s1325 = sadd.s32 %s1324, 1
      %p1328 = scmp.eq.s32.totalorder %s156, 1
      %p1329 = scmp.ne.s32.totalorder %s1324, %s1326
      %p1330 = scmp.eq.s32.totalorder %s156, 0
      %p1331 = por %p1329, %p1330
      %p1332 = scmp.ne.s32.totalorder %s1324, %s1326
      %p1333 = scmp.eq.s32.totalorder %s161, 1
      %p1334 = por %p1332, %p1333
      %p1335 = scmp.ne.s32.totalorder %s1326, %s1327
      %p1336 = scmp.eq.s32.totalorder %s161, 0
      %p1337 = por %p1335, %p1336
      %p1338 = scmp.ne.s32.totalorder %s1326, %s1327
      %p1339 = scmp.eq.s32.totalorder %s162, 1
      %p1340 = por %p1338, %p1339
      %p1342 = scmp.ne.s32.totalorder %s1327, %s1341
      %p1343 = scmp.eq.s32.totalorder %s162, 0
      %p1344 = por %p1342, %p1343
      %s1346 = sadd.s32 %s1345, 1
      %p1349 = scmp.eq.s32.totalorder %s156, 1
      %p1350 = scmp.ne.s32.totalorder %s1345, %s1347
      %p1351 = scmp.eq.s32.totalorder %s156, 0
      %p1352 = por %p1350, %p1351
      %p1353 = scmp.ne.s32.totalorder %s1345, %s1347
      %p1354 = scmp.eq.s32.totalorder %s161, 1
      %p1355 = por %p1353, %p1354
      %p1356 = scmp.ne.s32.totalorder %s1347, %s1348
      %p1357 = scmp.eq.s32.totalorder %s161, 0
      %p1358 = por %p1356, %p1357
      %p1359 = scmp.ne.s32.totalorder %s1347, %s1348
      %p1360 = scmp.eq.s32.totalorder %s162, 1
      %p1361 = por %p1359, %p1360
      %p1363 = scmp.ne.s32.totalorder %s1348, %s1362
      %p1364 = scmp.eq.s32.totalorder %s162, 0
      %p1365 = por %p1363, %p1364
      %s1367 = sadd.s32 %s1366, 1
      %p1370 = scmp.eq.s32.totalorder %s156, 1
      %p1371 = scmp.ne.s32.totalorder %s1366, %s1368
      %p1372 = scmp.eq.s32.totalorder %s156, 0
      %p1373 = por %p1371, %p1372
      %p1374 = scmp.ne.s32.totalorder %s1366, %s1368
      %p1375 = scmp.eq.s32.totalorder %s161, 1
      %p1376 = por %p1374, %p1375
      %p1377 = scmp.ne.s32.totalorder %s1368, %s1369
      %p1378 = scmp.eq.s32.totalorder %s161, 0
      %p1379 = por %p1377, %p1378
      %p1380 = scmp.ne.s32.totalorder %s1368, %s1369
      %p1381 = scmp.eq.s32.totalorder %s162, 1
      %p1382 = por %p1380, %p1381
      %p1384 = scmp.ne.s32.totalorder %s1369, %s1383
      %p1385 = scmp.eq.s32.totalorder %s162, 0
      %p1386 = por %p1384, %p1385
      %s1388 = sadd.s32 %s1387, 1
      %p1391 = scmp.eq.s32.totalorder %s156, 1
      %p1392 = scmp.ne.s32.totalorder %s1387, %s1389
      %p1393 = scmp.eq.s32.totalorder %s156, 0
      %p1394 = por %p1392, %p1393
      %p1395 = scmp.ne.s32.totalorder %s1387, %s1389
      %p1396 = scmp.eq.s32.totalorder %s161, 1
      %p1397 = por %p1395, %p1396
      %p1398 = scmp.ne.s32.totalorder %s1389, %s1390
      %p1399 = scmp.eq.s32.totalorder %s161, 0
      %p1400 = por %p1398, %p1399
      %p1401 = scmp.ne.s32.totalorder %s1389, %s1390
      %p1402 = scmp.eq.s32.totalorder %s162, 1
      %p1403 = por %p1401, %p1402
      %p1405 = scmp.ne.s32.totalorder %s1390, %s1404
      %p1406 = scmp.eq.s32.totalorder %s162, 0
      %p1407 = por %p1405, %p1406
      %s1409 = sadd.s32 %s1408, 1
      %p1412 = scmp.eq.s32.totalorder %s156, 1
      %p1413 = scmp.ne.s32.totalorder %s1408, %s1410
      %p1414 = scmp.eq.s32.totalorder %s156, 0
      %p1415 = por %p1413, %p1414
      %p1416 = scmp.ne.s32.totalorder %s1408, %s1410
      %p1417 = scmp.eq.s32.totalorder %s161, 1
      %p1418 = por %p1416, %p1417
      %p1419 = scmp.ne.s32.totalorder %s1410, %s1411
      %p1420 = scmp.eq.s32.totalorder %s161, 0
      %p1421 = por %p1419, %p1420
      %p1422 = scmp.ne.s32.totalorder %s1410, %s1411
      %p1423 = scmp.eq.s32.totalorder %s162, 1
      %p1424 = por %p1422, %p1423
      %p1426 = scmp.ne.s32.totalorder %s1411, %s1425
      %p1427 = scmp.eq.s32.totalorder %s162, 0
      %p1428 = por %p1426, %p1427
      %s1430 = sadd.s32 %s1429, 1
      %p1433 = scmp.eq.s32.totalorder %s156, 1
      %p1434 = scmp.ne.s32.totalorder %s1429, %s1431
      %p1435 = scmp.eq.s32.totalorder %s156, 0
      %p1436 = por %p1434, %p1435
      %p1437 = scmp.ne.s32.totalorder %s1429, %s1431
      %p1438 = scmp.eq.s32.totalorder %s161, 1
      %p1439 = por %p1437, %p1438
      %p1440 = scmp.ne.s32.totalorder %s1431, %s1432
      %p1441 = scmp.eq.s32.totalorder %s161, 0
      %p1442 = por %p1440, %p1441
      %p1443 = scmp.ne.s32.totalorder %s1431, %s1432
      %p1444 = scmp.eq.s32.totalorder %s162, 1
      %p1445 = por %p1443, %p1444
      %p1447 = scmp.ne.s32.totalorder %s1432, %s1446
      %p1448 = scmp.eq.s32.totalorder %s162, 0
      %p1449 = por %p1447, %p1448
      %s1450 = ssub.s32 %s156, %s163
      %p1451 = scmp.eq.s32.totalorder %s1450, 0
      %s1453 = sadd.s32 %s1452, 1
      %s1454 = scalar_select %p1451, %s1452, %s1453
      %p1457 = pneg %p1451
      %p1458 = scmp.eq.s32.totalorder %s156, 1
      %p1459 = por %p1457, %p1458
      %p1460 = scmp.ne.s32.totalorder %s1452, %s1455
      %p1461 = scmp.eq.s32.totalorder %s156, 0
      %p1462 = por %p1460, %p1461
      %p1463 = scmp.ne.s32.totalorder %s1452, %s1455
      %p1464 = scmp.eq.s32.totalorder %s161, 1
      %p1465 = por %p1463, %p1464
      %p1466 = scmp.ne.s32.totalorder %s1455, %s1456
      %p1467 = scmp.eq.s32.totalorder %s161, 0
      %p1468 = por %p1466, %p1467
      %p1469 = scmp.ne.s32.totalorder %s1455, %s1456
      %p1470 = scmp.eq.s32.totalorder %s162, 1
      %p1471 = por %p1469, %p1470
      %p1473 = scmp.ne.s32.totalorder %s1456, %s1472
      %p1474 = scmp.eq.s32.totalorder %s162, 0
      %p1475 = por %p1473, %p1474
      %p1476 = scmp.le.s32.totalorder 1, %s156
      %p1477 = scmp.lt.s32.totalorder %s156, 3
      %p1478 = pnand %p1476, %p1477
      %p1479 = pneg %p1478
      // Predicated region
      $region9: #{detection_forward.1} parent=5 // pred_check
        _
      $region10: #{detection_forward.1} parent=5 // pred_check_branch
        %1481 = sbr.rel (%p1478) target = $region12
      $region11: #{detection_forward.1} parent=5 // pred_region
        %s1482 = ssub.s32 %s156, 1
        // Predicated region
        $region13: #{detection_forward.1} parent=11 // pred_check
          %p1483 = pneg %p203
        $region14: #{detection_forward.1} parent=11 // pred_check_branch
          %1485 = sbr.rel (%p1483) target = $region16
        $region15: #{detection_forward.1} parent=11 // pred_region
          %s1487 = ssub.s32 512, 512
          %1488 = vsyncadd [#allocation3], %s1487
          %s1489 = sshll.u32 [#allocation2], 4
          %s1490 = int_to_ptr.vmem [resolvable:$true] %s1489
          %1495 = dma.hbm_to_vmem [thread:$0]  %s3, 512, %s1490, [#allocation3], 128, 128, 8
        $region16: #{detection_forward.1} parent=11 // pred_fallthru
          _
        // Predicated region
        $region17: #{detection_forward.1} parent=11 // pred_check
          %p1496 = pneg %p224
        $region18: #{detection_forward.1} parent=11 // pred_check_branch
          %1498 = sbr.rel (%p1496) target = $region20
        $region19: #{detection_forward.1} parent=11 // pred_region
          _
        $region20: #{detection_forward.1} parent=11 // pred_fallthru
          _
        // Predicated region
        $region21: #{detection_forward.1} parent=11 // pred_check
          %p1499 = pneg %p245
        $region22: #{detection_forward.1} parent=11 // pred_check_branch
          %1501 = sbr.rel (%p1499) target = $region24
        $region23: #{detection_forward.1} parent=11 // pred_region
          _
        $region24: #{detection_forward.1} parent=11 // pred_fallthru
          _
        // Predicated region
        $region25: #{detection_forward.1} parent=11 // pred_check
          %p1502 = pneg %p266
        $region26: #{detection_forward.1} parent=11 // pred_check_branch
          %1504 = sbr.rel (%p1502) target = $region28
        $region27: #{detection_forward.1} parent=11 // pred_region
          %s1506 = ssub.s32 16, 16
          %1507 = vsyncadd [#allocation5], %s1506
          %s1509 = sshll.u32 [#allocation4], 4
          %s1510 = int_to_ptr.vmem [resolvable:$true] %s1509
          %1512 = dma.hbm_to_vmem [thread:$0]  %s9, 16, %s1510, [#allocation5]
        $region28: #{detection_forward.1} parent=11 // pred_fallthru
          _
        // Predicated region
        $region29: #{detection_forward.1} parent=11 // pred_check
          %p1513 = pneg %p287
        $region30: #{detection_forward.1} parent=11 // pred_check_branch
          %1515 = sbr.rel (%p1513) target = $region32
        $region31: #{detection_forward.1} parent=11 // pred_region
          _
        $region32: #{detection_forward.1} parent=11 // pred_fallthru
          _
        // Predicated region
        $region33: #{detection_forward.1} parent=11 // pred_check
          %p1516 = pneg %p308
        $region34: #{detection_forward.1} parent=11 // pred_check_branch
          %1518 = sbr.rel (%p1516) target = $region36
        $region35: #{detection_forward.1} parent=11 // pred_region
          %s1520 = ssub.s32 16, 16
          %1521 = vsyncadd [#allocation5], %s1520
          %s1523 = sshll.u32 [#allocation6], 4
          %s1524 = int_to_ptr.vmem [resolvable:$true] %s1523
          %1526 = dma.hbm_to_vmem [thread:$0]  %s13, 16, %s1524, [#allocation5]
        $region36: #{detection_forward.1} parent=11 // pred_fallthru
          _
        // Predicated region
        $region37: #{detection_forward.1} parent=11 // pred_check
          %p1527 = pneg %p329
        $region38: #{detection_forward.1} parent=11 // pred_check_branch
          %1529 = sbr.rel (%p1527) target = $region40
        $region39: #{detection_forward.1} parent=11 // pred_region
          %s1531 = ssub.s32 512, 512
          %1532 = vsyncadd [#allocation8], %s1531
          %s1533 = sshll.u32 [#allocation7], 4
          %s1534 = int_to_ptr.vmem [resolvable:$true] %s1533
          %1539 = dma.hbm_to_vmem [thread:$0]  %s15, 512, %s1534, [#allocation8], 128, 128, 8
        $region40: #{detection_forward.1} parent=11 // pred_fallthru
          _
        // Predicated region
        $region41: #{detection_forward.1} parent=11 // pred_check
          %p1540 = pneg %p350
        $region42: #{detection_forward.1} parent=11 // pred_check_branch
          %1542 = sbr.rel (%p1540) target = $region44
        $region43: #{detection_forward.1} parent=11 // pred_region
          %s1544 = ssub.s32 16, 16
          %1545 = vsyncadd [#allocation8], %s1544
          %s1547 = sshll.u32 [#allocation9], 4
          %s1548 = int_to_ptr.vmem [resolvable:$true] %s1547
          %1550 = dma.hbm_to_vmem [thread:$0]  %s17, 16, %s1548, [#allocation8]
        $region44: #{detection_forward.1} parent=11 // pred_fallthru
          _
        // Predicated region
        $region45: #{detection_forward.1} parent=11 // pred_check
          %p1551 = pneg %p371
        $region46: #{detection_forward.1} parent=11 // pred_check_branch
          %1553 = sbr.rel (%p1551) target = $region48
        $region47: #{detection_forward.1} parent=11 // pred_region
          %s1555 = ssub.s32 512, 512
          %1556 = vsyncadd [#allocation11], %s1555
          %s1557 = sshll.u32 [#allocation10], 4
          %s1558 = int_to_ptr.vmem [resolvable:$true] %s1557
          %1563 = dma.hbm_to_vmem [thread:$0]  %s19, 512, %s1558, [#allocation11], 128, 128, 8
        $region48: #{detection_forward.1} parent=11 // pred_fallthru
          _
        // Predicated region
        $region49: #{detection_forward.1} parent=11 // pred_check
          %p1564 = pneg %p392
        $region50: #{detection_forward.1} parent=11 // pred_check_branch
          %1566 = sbr.rel (%p1564) target = $region52
        $region51: #{detection_forward.1} parent=11 // pred_region
          %s1568 = ssub.s32 16, 16
          %1569 = vsyncadd [#allocation11], %s1568
          %s1571 = sshll.u32 [#allocation12], 4
          %s1572 = int_to_ptr.vmem [resolvable:$true] %s1571
          %1574 = dma.hbm_to_vmem [thread:$0]  %s21, 16, %s1572, [#allocation11]
        $region52: #{detection_forward.1} parent=11 // pred_fallthru
          _
        // Predicated region
        $region53: #{detection_forward.1} parent=11 // pred_check
          %p1575 = pneg %p413
        $region54: #{detection_forward.1} parent=11 // pred_check_branch
          %1577 = sbr.rel (%p1575) target = $region56
        $region55: #{detection_forward.1} parent=11 // pred_region
          %s1579 = ssub.s32 512, 512
          %1580 = vsyncadd [#allocation14], %s1579
          %s1581 = sshll.u32 [#allocation13], 4
          %s1582 = int_to_ptr.vmem [resolvable:$true] %s1581
          %1587 = dma.hbm_to_vmem [thread:$0]  %s23, 512, %s1582, [#allocation14], 128, 128, 8
        $region56: #{detection_forward.1} parent=11 // pred_fallthru
          _
        // Predicated region
        $region57: #{detection_forward.1} parent=11 // pred_check
          %p1588 = pneg %p434
        $region58: #{detection_forward.1} parent=11 // pred_check_branch
          %1590 = sbr.rel (%p1588) target = $region60
        $region59: #{detection_forward.1} parent=11 // pred_region
          %s1592 = ssub.s32 16, 16
          %1593 = vsyncadd [#allocation14], %s1592
          %s1595 = sshll.u32 [#allocation15], 4
          %s1596 = int_to_ptr.vmem [resolvable:$true] %s1595
          %1598 = dma.hbm_to_vmem [thread:$0]  %s25, 16, %s1596, [#allocation14]
        $region60: #{detection_forward.1} parent=11 // pred_fallthru
          _
        // Predicated region
        $region61: #{detection_forward.1} parent=11 // pred_check
          %p1599 = pneg %p455
        $region62: #{detection_forward.1} parent=11 // pred_check_branch
          %1601 = sbr.rel (%p1599) target = $region64
        $region63: #{detection_forward.1} parent=11 // pred_region
          %s1603 = ssub.s32 16, 16
          %1604 = vsyncadd [#allocation17], %s1603
          %s1606 = sshll.u32 [#allocation16], 4
          %s1607 = int_to_ptr.vmem [resolvable:$true] %s1606
          %1609 = dma.hbm_to_vmem [thread:$0]  %s27, 16, %s1607, [#allocation17]
        $region64: #{detection_forward.1} parent=11 // pred_fallthru
          _
        // Predicated region
        $region65: #{detection_forward.1} parent=11 // pred_check
          %p1610 = pneg %p476
        $region66: #{detection_forward.1} parent=11 // pred_check_branch
          %1612 = sbr.rel (%p1610) target = $region68
        $region67: #{detection_forward.1} parent=11 // pred_region
          %s1614 = ssub.s32 16, 16
          %1615 = vsyncadd [#allocation17], %s1614
          %s1617 = sshll.u32 [#allocation18], 4
          %s1618 = int_to_ptr.vmem [resolvable:$true] %s1617
          %1620 = dma.hbm_to_vmem [thread:$0]  %s29, 16, %s1618, [#allocation17]
        $region68: #{detection_forward.1} parent=11 // pred_fallthru
          _
        // Predicated region
        $region69: #{detection_forward.1} parent=11 // pred_check
          %p1621 = pneg %p497
        $region70: #{detection_forward.1} parent=11 // pred_check_branch
          %1623 = sbr.rel (%p1621) target = $region72
        $region71: #{detection_forward.1} parent=11 // pred_region
          %s1625 = ssub.s32 16, 16
          %1626 = vsyncadd [#allocation20], %s1625
          %s1628 = sshll.u32 [#allocation19], 4
          %s1629 = int_to_ptr.vmem [resolvable:$true] %s1628
          %1631 = dma.hbm_to_vmem [thread:$0]  %s31, 16, %s1629, [#allocation20]
        $region72: #{detection_forward.1} parent=11 // pred_fallthru
          _
        // Predicated region
        $region73: #{detection_forward.1} parent=11 // pred_check
          %p1632 = pneg %p518
        $region74: #{detection_forward.1} parent=11 // pred_check_branch
          %1634 = sbr.rel (%p1632) target = $region76
        $region75: #{detection_forward.1} parent=11 // pred_region
          %s1636 = ssub.s32 16, 16
          %1637 = vsyncadd [#allocation20], %s1636
          %s1639 = sshll.u32 [#allocation21], 4
          %s1640 = int_to_ptr.vmem [resolvable:$true] %s1639
          %1642 = dma.hbm_to_vmem [thread:$0]  %s33, 16, %s1640, [#allocation20]
        $region76: #{detection_forward.1} parent=11 // pred_fallthru
          _
        // Predicated region
        $region77: #{detection_forward.1} parent=11 // pred_check
          %p1643 = pneg %p539
        $region78: #{detection_forward.1} parent=11 // pred_check_branch
          %1645 = sbr.rel (%p1643) target = $region80
        $region79: #{detection_forward.1} parent=11 // pred_region
          %s1647 = ssub.s32 16, 16
          %1648 = vsyncadd [#allocation23], %s1647
          %s1650 = sshll.u32 [#allocation22], 4
          %s1651 = int_to_ptr.vmem [resolvable:$true] %s1650
          %1653 = dma.hbm_to_vmem [thread:$0]  %s35, 16, %s1651, [#allocation23]
        $region80: #{detection_forward.1} parent=11 // pred_fallthru
          _
        // Predicated region
        $region81: #{detection_forward.1} parent=11 // pred_check
          %p1654 = pneg %p560
        $region82: #{detection_forward.1} parent=11 // pred_check_branch
          %1656 = sbr.rel (%p1654) target = $region84
        $region83: #{detection_forward.1} parent=11 // pred_region
          %s1658 = ssub.s32 16, 16
          %1659 = vsyncadd [#allocation23], %s1658
          %s1661 = sshll.u32 [#allocation24], 4
          %s1662 = int_to_ptr.vmem [resolvable:$true] %s1661
          %1664 = dma.hbm_to_vmem [thread:$0]  %s37, 16, %s1662, [#allocation23]
        $region84: #{detection_forward.1} parent=11 // pred_fallthru
          _
        // Predicated region
        $region85: #{detection_forward.1} parent=11 // pred_check
          %p1665 = pneg %p581
        $region86: #{detection_forward.1} parent=11 // pred_check_branch
          %1667 = sbr.rel (%p1665) target = $region88
        $region87: #{detection_forward.1} parent=11 // pred_region
          %s1669 = ssub.s32 512, 512
          %1670 = vsyncadd [#allocation26], %s1669
          %s1671 = sshll.u32 [#allocation25], 4
          %s1672 = int_to_ptr.vmem [resolvable:$true] %s1671
          %1677 = dma.hbm_to_vmem [thread:$0]  %s39, 512, %s1672, [#allocation26], 128, 128, 8
        $region88: #{detection_forward.1} parent=11 // pred_fallthru
          _
        // Predicated region
        $region89: #{detection_forward.1} parent=11 // pred_check
          %p1678 = pneg %p602
        $region90: #{detection_forward.1} parent=11 // pred_check_branch
          %1680 = sbr.rel (%p1678) target = $region92
        $region91: #{detection_forward.1} parent=11 // pred_region
          %s1682 = ssub.s32 512, 512
          %1683 = vsyncadd [#allocation26], %s1682
          %s1684 = sshll.u32 [#allocation27], 4
          %s1685 = int_to_ptr.vmem [resolvable:$true] %s1684
          %1690 = dma.hbm_to_vmem [thread:$0]  %s41, 512, %s1685, [#allocation26], 128, 128, 8
        $region92: #{detection_forward.1} parent=11 // pred_fallthru
          _
        // Predicated region
        $region93: #{detection_forward.1} parent=11 // pred_check
          %p1691 = pneg %p623
        $region94: #{detection_forward.1} parent=11 // pred_check_branch
          %1693 = sbr.rel (%p1691) target = $region96
        $region95: #{detection_forward.1} parent=11 // pred_region
          %s1695 = ssub.s32 512, 512
          %1696 = vsyncadd [#allocation29], %s1695
          %s1697 = sshll.u32 [#allocation28], 4
          %s1698 = int_to_ptr.vmem [resolvable:$true] %s1697
          %1703 = dma.hbm_to_vmem [thread:$0]  %s43, 512, %s1698, [#allocation29], 128, 128, 8
        $region96: #{detection_forward.1} parent=11 // pred_fallthru
          _
        // Predicated region
        $region97: #{detection_forward.1} parent=11 // pred_check
          %p1704 = pneg %p644
        $region98: #{detection_forward.1} parent=11 // pred_check_branch
          %1706 = sbr.rel (%p1704) target = $region100
        $region99: #{detection_forward.1} parent=11 // pred_region
          %s1708 = ssub.s32 512, 512
          %1709 = vsyncadd [#allocation29], %s1708
          %s1710 = sshll.u32 [#allocation30], 4
          %s1711 = int_to_ptr.vmem [resolvable:$true] %s1710
          %1716 = dma.hbm_to_vmem [thread:$0]  %s45, 512, %s1711, [#allocation29], 128, 128, 8
        $region100: #{detection_forward.1} parent=11 // pred_fallthru
          _
        // Predicated region
        $region101: #{detection_forward.1} parent=11 // pred_check
          %p1717 = pneg %p665
        $region102: #{detection_forward.1} parent=11 // pred_check_branch
          %1719 = sbr.rel (%p1717) target = $region104
        $region103: #{detection_forward.1} parent=11 // pred_region
          %s1721 = ssub.s32 16, 16
          %1722 = vsyncadd [#allocation32], %s1721
          %s1724 = sshll.u32 [#allocation31], 4
          %s1725 = int_to_ptr.vmem [resolvable:$true] %s1724
          %1727 = dma.hbm_to_vmem [thread:$0]  %s47, 16, %s1725, [#allocation32]
        $region104: #{detection_forward.1} parent=11 // pred_fallthru
          _
        // Predicated region
        $region105: #{detection_forward.1} parent=11 // pred_check
          %p1728 = pneg %p686
        $region106: #{detection_forward.1} parent=11 // pred_check_branch
          %1730 = sbr.rel (%p1728) target = $region108
        $region107: #{detection_forward.1} parent=11 // pred_region
          %s1732 = ssub.s32 16, 16
          %1733 = vsyncadd [#allocation32], %s1732
          %s1735 = sshll.u32 [#allocation33], 4
          %s1736 = int_to_ptr.vmem [resolvable:$true] %s1735
          %1738 = dma.hbm_to_vmem [thread:$0]  %s49, 16, %s1736, [#allocation32]
        $region108: #{detection_forward.1} parent=11 // pred_fallthru
          _
        // Predicated region
        $region109: #{detection_forward.1} parent=11 // pred_check
          %p1739 = pneg %p707
        $region110: #{detection_forward.1} parent=11 // pred_check_branch
          %1741 = sbr.rel (%p1739) target = $region112
        $region111: #{detection_forward.1} parent=11 // pred_region
          %s1743 = ssub.s32 16, 16
          %1744 = vsyncadd [#allocation35], %s1743
          %s1746 = sshll.u32 [#allocation34], 4
          %s1747 = int_to_ptr.vmem [resolvable:$true] %s1746
          %1749 = dma.hbm_to_vmem [thread:$0]  %s51, 16, %s1747, [#allocation35]
        $region112: #{detection_forward.1} parent=11 // pred_fallthru
          _
        // Predicated region
        $region113: #{detection_forward.1} parent=11 // pred_check
          %p1750 = pneg %p728
        $region114: #{detection_forward.1} parent=11 // pred_check_branch
          %1752 = sbr.rel (%p1750) target = $region116
        $region115: #{detection_forward.1} parent=11 // pred_region
          %s1754 = ssub.s32 16, 16
          %1755 = vsyncadd [#allocation35], %s1754
          %s1757 = sshll.u32 [#allocation36], 4
          %s1758 = int_to_ptr.vmem [resolvable:$true] %s1757
          %1760 = dma.hbm_to_vmem [thread:$0]  %s53, 16, %s1758, [#allocation35]
        $region116: #{detection_forward.1} parent=11 // pred_fallthru
          _
        // Predicated region
        $region117: #{detection_forward.1} parent=11 // pred_check
          %p1761 = pneg %p749
        $region118: #{detection_forward.1} parent=11 // pred_check_branch
          %1763 = sbr.rel (%p1761) target = $region120
        $region119: #{detection_forward.1} parent=11 // pred_region
          %s1765 = ssub.s32 16, 16
          %1766 = vsyncadd [#allocation38], %s1765
          %s1768 = sshll.u32 [#allocation37], 4
          %s1769 = int_to_ptr.vmem [resolvable:$true] %s1768
          %1771 = dma.hbm_to_vmem [thread:$0]  %s55, 16, %s1769, [#allocation38]
        $region120: #{detection_forward.1} parent=11 // pred_fallthru
          _
        // Predicated region
        $region121: #{detection_forward.1} parent=11 // pred_check
          %p1772 = pneg %p770
        $region122: #{detection_forward.1} parent=11 // pred_check_branch
          %1774 = sbr.rel (%p1772) target = $region124
        $region123: #{detection_forward.1} parent=11 // pred_region
          %s1776 = ssub.s32 16, 16
          %1777 = vsyncadd [#allocation38], %s1776
          %s1779 = sshll.u32 [#allocation39], 4
          %s1780 = int_to_ptr.vmem [resolvable:$true] %s1779
          %1782 = dma.hbm_to_vmem [thread:$0]  %s57, 16, %s1780, [#allocation38]
        $region124: #{detection_forward.1} parent=11 // pred_fallthru
          _
        // Predicated region
        $region125: #{detection_forward.1} parent=11 // pred_check
          %p1783 = pneg %p791
        $region126: #{detection_forward.1} parent=11 // pred_check_branch
          %1785 = sbr.rel (%p1783) target = $region128
        $region127: #{detection_forward.1} parent=11 // pred_region
          %s1787 = ssub.s32 16, 16
          %1788 = vsyncadd [#allocation41], %s1787
          %s1790 = sshll.u32 [#allocation40], 4
          %s1791 = int_to_ptr.vmem [resolvable:$true] %s1790
          %1793 = dma.hbm_to_vmem [thread:$0]  %s59, 16, %s1791, [#allocation41]
        $region128: #{detection_forward.1} parent=11 // pred_fallthru
          _
        // Predicated region
        $region129: #{detection_forward.1} parent=11 // pred_check
          %p1794 = pneg %p812
        $region130: #{detection_forward.1} parent=11 // pred_check_branch
          %1796 = sbr.rel (%p1794) target = $region132
        $region131: #{detection_forward.1} parent=11 // pred_region
          %s1798 = ssub.s32 16, 16
          %1799 = vsyncadd [#allocation41], %s1798
          %s1801 = sshll.u32 [#allocation42], 4
          %s1802 = int_to_ptr.vmem [resolvable:$true] %s1801
          %1804 = dma.hbm_to_vmem [thread:$0]  %s61, 16, %s1802, [#allocation41]
        $region132: #{detection_forward.1} parent=11 // pred_fallthru
          _
        // Predicated region
        $region133: #{detection_forward.1} parent=11 // pred_check
          %p1805 = pneg %p833
        $region134: #{detection_forward.1} parent=11 // pred_check_branch
          %1807 = sbr.rel (%p1805) target = $region136
        $region135: #{detection_forward.1} parent=11 // pred_region
          %s1809 = ssub.s32 512, 512
          %1810 = vsyncadd [#allocation44], %s1809
          %s1811 = sshll.u32 [#allocation43], 4
          %s1812 = int_to_ptr.vmem [resolvable:$true] %s1811
          %1817 = dma.hbm_to_vmem [thread:$0]  %s63, 512, %s1812, [#allocation44], 128, 128, 8
        $region136: #{detection_forward.1} parent=11 // pred_fallthru
          _
        // Predicated region
        $region137: #{detection_forward.1} parent=11 // pred_check
          %p1818 = pneg %p854
        $region138: #{detection_forward.1} parent=11 // pred_check_branch
          %1820 = sbr.rel (%p1818) target = $region140
        $region139: #{detection_forward.1} parent=11 // pred_region
          %s1822 = ssub.s32 512, 512
          %1823 = vsyncadd [#allocation44], %s1822
          %s1824 = sshll.u32 [#allocation45], 4
          %s1825 = int_to_ptr.vmem [resolvable:$true] %s1824
          %1830 = dma.hbm_to_vmem [thread:$0]  %s65, 512, %s1825, [#allocation44], 128, 128, 8
        $region140: #{detection_forward.1} parent=11 // pred_fallthru
          _
        // Predicated region
        $region141: #{detection_forward.1} parent=11 // pred_check
          %p1831 = pneg %p875
        $region142: #{detection_forward.1} parent=11 // pred_check_branch
          %1833 = sbr.rel (%p1831) target = $region144
        $region143: #{detection_forward.1} parent=11 // pred_region
          %s1835 = ssub.s32 512, 512
          %1836 = vsyncadd [#allocation47], %s1835
          %s1837 = sshll.u32 [#allocation46], 4
          %s1838 = int_to_ptr.vmem [resolvable:$true] %s1837
          %1843 = dma.hbm_to_vmem [thread:$0]  %s67, 512, %s1838, [#allocation47], 128, 128, 8
        $region144: #{detection_forward.1} parent=11 // pred_fallthru
          _
        // Predicated region
        $region145: #{detection_forward.1} parent=11 // pred_check
          %p1844 = pneg %p896
        $region146: #{detection_forward.1} parent=11 // pred_check_branch
          %1846 = sbr.rel (%p1844) target = $region148
        $region147: #{detection_forward.1} parent=11 // pred_region
          _
        $region148: #{detection_forward.1} parent=11 // pred_fallthru
          _
        // Predicated region
        $region149: #{detection_forward.1} parent=11 // pred_check
          %p1847 = pneg %p917
        $region150: #{detection_forward.1} parent=11 // pred_check_branch
          %1849 = sbr.rel (%p1847) target = $region152
        $region151: #{detection_forward.1} parent=11 // pred_region
          %s1851 = ssub.s32 512, 512
          %1852 = vsyncadd [#allocation47], %s1851
          %s1853 = sshll.u32 [#allocation48], 4
          %s1854 = int_to_ptr.vmem [resolvable:$true] %s1853
          %1859 = dma.hbm_to_vmem [thread:$0]  %s71, 512, %s1854, [#allocation47], 128, 128, 8
        $region152: #{detection_forward.1} parent=11 // pred_fallthru
          _
        // Predicated region
        $region153: #{detection_forward.1} parent=11 // pred_check
          %p1860 = pneg %p938
        $region154: #{detection_forward.1} parent=11 // pred_check_branch
          %1862 = sbr.rel (%p1860) target = $region156
        $region155: #{detection_forward.1} parent=11 // pred_region
          %s1864 = ssub.s32 16, 16
          %1865 = vsyncadd [#allocation50], %s1864
          %s1867 = sshll.u32 [#allocation49], 4
          %s1868 = int_to_ptr.vmem [resolvable:$true] %s1867
          %1870 = dma.hbm_to_vmem [thread:$0]  %s73, 16, %s1868, [#allocation50]
        $region156: #{detection_forward.1} parent=11 // pred_fallthru
          _
        // Predicated region
        $region157: #{detection_forward.1} parent=11 // pred_check
          %p1871 = pneg %p959
        $region158: #{detection_forward.1} parent=11 // pred_check_branch
          %1873 = sbr.rel (%p1871) target = $region160
        $region159: #{detection_forward.1} parent=11 // pred_region
          _
        $region160: #{detection_forward.1} parent=11 // pred_fallthru
          _
        // Predicated region
        $region161: #{detection_forward.1} parent=11 // pred_check
          %p1874 = pneg %p980
        $region162: #{detection_forward.1} parent=11 // pred_check_branch
          %1876 = sbr.rel (%p1874) target = $region164
        $region163: #{detection_forward.1} parent=11 // pred_region
          %s1878 = ssub.s32 16, 16
          %1879 = vsyncadd [#allocation50], %s1878
          %s1881 = sshll.u32 [#allocation51], 4
          %s1882 = int_to_ptr.vmem [resolvable:$true] %s1881
          %1884 = dma.hbm_to_vmem [thread:$0]  %s77, 16, %s1882, [#allocation50]
        $region164: #{detection_forward.1} parent=11 // pred_fallthru
          _
        // Predicated region
        $region165: #{detection_forward.1} parent=11 // pred_check
          %p1885 = pneg %p1001
        $region166: #{detection_forward.1} parent=11 // pred_check_branch
          %1887 = sbr.rel (%p1885) target = $region168
        $region167: #{detection_forward.1} parent=11 // pred_region
          %s1889 = ssub.s32 1536, 1536
          %1890 = vsyncadd [#allocation53], %s1889
          %s1891 = sshll.u32 [#allocation52], 4
          %s1892 = int_to_ptr.vmem [resolvable:$true] %s1891
          %1897 = dma.hbm_to_vmem [thread:$0]  %s79, 1536, %s1892, [#allocation53], 128, 128, 8
        $region168: #{detection_forward.1} parent=11 // pred_fallthru
          _
        // Predicated region
        $region169: #{detection_forward.1} parent=11 // pred_check
          %p1898 = pneg %p1022
        $region170: #{detection_forward.1} parent=11 // pred_check_branch
          %1900 = sbr.rel (%p1898) target = $region172
        $region171: #{detection_forward.1} parent=11 // pred_region
          %s1902 = ssub.s32 16, 16
          %1903 = vsyncadd [#allocation53], %s1902
          %s1905 = sshll.u32 [#allocation54], 4
          %s1906 = int_to_ptr.vmem [resolvable:$true] %s1905
          %1908 = dma.hbm_to_vmem [thread:$0]  %s81, 16, %s1906, [#allocation53]
        $region172: #{detection_forward.1} parent=11 // pred_fallthru
          _
        // Predicated region
        $region173: #{detection_forward.1} parent=11 // pred_check
          %p1909 = pneg %p1043
        $region174: #{detection_forward.1} parent=11 // pred_check_branch
          %1911 = sbr.rel (%p1909) target = $region176
        $region175: #{detection_forward.1} parent=11 // pred_region
          %s1913 = ssub.s32 16, 16
          %1914 = vsyncadd [#allocation56], %s1913
          %s1916 = sshll.u32 [#allocation55], 4
          %s1917 = int_to_ptr.vmem [resolvable:$true] %s1916
          %1919 = dma.hbm_to_vmem [thread:$0]  %s83, 16, %s1917, [#allocation56]
        $region176: #{detection_forward.1} parent=11 // pred_fallthru
          _
        // Predicated region
        $region177: #{detection_forward.1} parent=11 // pred_check
          %p1920 = pneg %p1064
        $region178: #{detection_forward.1} parent=11 // pred_check_branch
          %1922 = sbr.rel (%p1920) target = $region180
        $region179: #{detection_forward.1} parent=11 // pred_region
          %s1924 = ssub.s32 16, 16
          %1925 = vsyncadd [#allocation56], %s1924
          %s1927 = sshll.u32 [#allocation57], 4
          %s1928 = int_to_ptr.vmem [resolvable:$true] %s1927
          %1930 = dma.hbm_to_vmem [thread:$0]  %s85, 16, %s1928, [#allocation56]
        $region180: #{detection_forward.1} parent=11 // pred_fallthru
          _
        // Predicated region
        $region181: #{detection_forward.1} parent=11 // pred_check
          %p1931 = pneg %p1085
        $region182: #{detection_forward.1} parent=11 // pred_check_branch
          %1933 = sbr.rel (%p1931) target = $region184
        $region183: #{detection_forward.1} parent=11 // pred_region
          %s1935 = ssub.s32 16, 16
          %1936 = vsyncadd [#allocation59], %s1935
          %s1938 = sshll.u32 [#allocation58], 4
          %s1939 = int_to_ptr.vmem [resolvable:$true] %s1938
          %1941 = dma.hbm_to_vmem [thread:$0]  %s87, 16, %s1939, [#allocation59]
        $region184: #{detection_forward.1} parent=11 // pred_fallthru
          _
        // Predicated region
        $region185: #{detection_forward.1} parent=11 // pred_check
          %p1942 = pneg %p1106
        $region186: #{detection_forward.1} parent=11 // pred_check_branch
          %1944 = sbr.rel (%p1942) target = $region188
        $region187: #{detection_forward.1} parent=11 // pred_region
          %s1946 = ssub.s32 16, 16
          %1947 = vsyncadd [#allocation59], %s1946
          %s1949 = sshll.u32 [#allocation60], 4
          %s1950 = int_to_ptr.vmem [resolvable:$true] %s1949
          %1952 = dma.hbm_to_vmem [thread:$0]  %s89, 16, %s1950, [#allocation59]
        $region188: #{detection_forward.1} parent=11 // pred_fallthru
          _
        // Predicated region
        $region189: #{detection_forward.1} parent=11 // pred_check
          %p1953 = pneg %p1127
        $region190: #{detection_forward.1} parent=11 // pred_check_branch
          %1955 = sbr.rel (%p1953) target = $region192
        $region191: #{detection_forward.1} parent=11 // pred_region
          %s1957 = ssub.s32 16, 16
          %1958 = vsyncadd [#allocation62], %s1957
          %s1960 = sshll.u32 [#allocation61], 4
          %s1961 = int_to_ptr.vmem [resolvable:$true] %s1960
          %1963 = dma.hbm_to_vmem [thread:$0]  %s91, 16, %s1961, [#allocation62]
        $region192: #{detection_forward.1} parent=11 // pred_fallthru
          _
        // Predicated region
        $region193: #{detection_forward.1} parent=11 // pred_check
          %p1964 = pneg %p1148
        $region194: #{detection_forward.1} parent=11 // pred_check_branch
          %1966 = sbr.rel (%p1964) target = $region196
        $region195: #{detection_forward.1} parent=11 // pred_region
          %s1968 = ssub.s32 16, 16
          %1969 = vsyncadd [#allocation62], %s1968
          %s1971 = sshll.u32 [#allocation63], 4
          %s1972 = int_to_ptr.vmem [resolvable:$true] %s1971
          %1974 = dma.hbm_to_vmem [thread:$0]  %s93, 16, %s1972, [#allocation62]
        $region196: #{detection_forward.1} parent=11 // pred_fallthru
          _
        // Predicated region
        $region197: #{detection_forward.1} parent=11 // pred_check
          %p1975 = pneg %p1169
        $region198: #{detection_forward.1} parent=11 // pred_check_branch
          %1977 = sbr.rel (%p1975) target = $region200
        $region199: #{detection_forward.1} parent=11 // pred_region
          %s1979 = ssub.s32 16, 16
          %1980 = vsyncadd [#allocation65], %s1979
          %s1982 = sshll.u32 [#allocation64], 4
          %s1983 = int_to_ptr.vmem [resolvable:$true] %s1982
          %1985 = dma.hbm_to_vmem [thread:$0]  %s95, 16, %s1983, [#allocation65]
        $region200: #{detection_forward.1} parent=11 // pred_fallthru
          _
        // Predicated region
        $region201: #{detection_forward.1} parent=11 // pred_check
          %p1986 = pneg %p1190
        $region202: #{detection_forward.1} parent=11 // pred_check_branch
          %1988 = sbr.rel (%p1986) target = $region204
        $region203: #{detection_forward.1} parent=11 // pred_region
          %s1990 = ssub.s32 16, 16
          %1991 = vsyncadd [#allocation65], %s1990
          %s1993 = sshll.u32 [#allocation66], 4
          %s1994 = int_to_ptr.vmem [resolvable:$true] %s1993
          %1996 = dma.hbm_to_vmem [thread:$0]  %s97, 16, %s1994, [#allocation65]
        $region204: #{detection_forward.1} parent=11 // pred_fallthru
          _
        // Predicated region
        $region205: #{detection_forward.1} parent=11 // pred_check
          %p1997 = pneg %p1211
        $region206: #{detection_forward.1} parent=11 // pred_check_branch
          %1999 = sbr.rel (%p1997) target = $region208
        $region207: #{detection_forward.1} parent=11 // pred_region
          %s2001 = ssub.s32 16, 16
          %2002 = vsyncadd [#allocation68], %s2001
          %s2004 = sshll.u32 [#allocation67], 4
          %s2005 = int_to_ptr.vmem [resolvable:$true] %s2004
          %2007 = dma.hbm_to_vmem [thread:$0]  %s99, 16, %s2005, [#allocation68]
        $region208: #{detection_forward.1} parent=11 // pred_fallthru
          _
        // Predicated region
        $region209: #{detection_forward.1} parent=11 // pred_check
          %p2008 = pneg %p1232
        $region210: #{detection_forward.1} parent=11 // pred_check_branch
          %2010 = sbr.rel (%p2008) target = $region212
        $region211: #{detection_forward.1} parent=11 // pred_region
          %s2012 = ssub.s32 512, 512
          %2013 = vsyncadd [#allocation68], %s2012
          %s2014 = sshll.u32 [#allocation69], 4
          %s2015 = int_to_ptr.vmem [resolvable:$true] %s2014
          %2020 = dma.hbm_to_vmem [thread:$0]  %s101, 512, %s2015, [#allocation68], 128, 128, 8
        $region212: #{detection_forward.1} parent=11 // pred_fallthru
          _
        // Predicated region
        $region213: #{detection_forward.1} parent=11 // pred_check
          %p2021 = pneg %p1253
        $region214: #{detection_forward.1} parent=11 // pred_check_branch
          %2023 = sbr.rel (%p2021) target = $region216
        $region215: #{detection_forward.1} parent=11 // pred_region
          _
        $region216: #{detection_forward.1} parent=11 // pred_fallthru
          _
        // Predicated region
        $region217: #{detection_forward.1} parent=11 // pred_check
          %p2024 = pneg %p1274
        $region218: #{detection_forward.1} parent=11 // pred_check_branch
          %2026 = sbr.rel (%p2024) target = $region220
        $region219: #{detection_forward.1} parent=11 // pred_region
          %s2028 = ssub.s32 512, 512
          %2029 = vsyncadd [#allocation71], %s2028
          %s2030 = sshll.u32 [#allocation70], 4
          %s2031 = int_to_ptr.vmem [resolvable:$true] %s2030
          %2036 = dma.hbm_to_vmem [thread:$0]  %s105, 512, %s2031, [#allocation71], 128, 128, 8
        $region220: #{detection_forward.1} parent=11 // pred_fallthru
          _
        // Predicated region
        $region221: #{detection_forward.1} parent=11 // pred_check
          %p2037 = pneg %p1295
        $region222: #{detection_forward.1} parent=11 // pred_check_branch
          %2039 = sbr.rel (%p2037) target = $region224
        $region223: #{detection_forward.1} parent=11 // pred_region
          %s2041 = ssub.s32 512, 512
          %2042 = vsyncadd [#allocation71], %s2041
          %s2043 = sshll.u32 [#allocation72], 4
          %s2044 = int_to_ptr.vmem [resolvable:$true] %s2043
          %2049 = dma.hbm_to_vmem [thread:$0]  %s107, 512, %s2044, [#allocation71], 128, 128, 8
        $region224: #{detection_forward.1} parent=11 // pred_fallthru
          _
        // Predicated region
        $region225: #{detection_forward.1} parent=11 // pred_check
          %p2050 = pneg %p1316
        $region226: #{detection_forward.1} parent=11 // pred_check_branch
          %2052 = sbr.rel (%p2050) target = $region228
        $region227: #{detection_forward.1} parent=11 // pred_region
          %s2054 = ssub.s32 512, 512
          %2055 = vsyncadd [#allocation74], %s2054
          %s2056 = sshll.u32 [#allocation73], 4
          %s2057 = int_to_ptr.vmem [resolvable:$true] %s2056
          %2062 = dma.hbm_to_vmem [thread:$0]  %s109, 512, %s2057, [#allocation74], 128, 128, 8
        $region228: #{detection_forward.1} parent=11 // pred_fallthru
          _
        // Predicated region
        $region229: #{detection_forward.1} parent=11 // pred_check
          %p2063 = pneg %p1337
        $region230: #{detection_forward.1} parent=11 // pred_check_branch
          %2065 = sbr.rel (%p2063) target = $region232
        $region231: #{detection_forward.1} parent=11 // pred_region
          _
        $region232: #{detection_forward.1} parent=11 // pred_fallthru
          _
        // Predicated region
        $region233: #{detection_forward.1} parent=11 // pred_check
          %p2066 = pneg %p1358
        $region234: #{detection_forward.1} parent=11 // pred_check_branch
          %2068 = sbr.rel (%p2066) target = $region236
        $region235: #{detection_forward.1} parent=11 // pred_region
          _
        $region236: #{detection_forward.1} parent=11 // pred_fallthru
          _
        // Predicated region
        $region237: #{detection_forward.1} parent=11 // pred_check
          %p2069 = pneg %p1379
        $region238: #{detection_forward.1} parent=11 // pred_check_branch
          %2071 = sbr.rel (%p2069) target = $region240
        $region239: #{detection_forward.1} parent=11 // pred_region
          %s2073 = ssub.s32 512, 512
          %2074 = vsyncadd [#allocation74], %s2073
          %s2075 = sshll.u32 [#allocation75], 4
          %s2076 = int_to_ptr.vmem [resolvable:$true] %s2075
          %2081 = dma.hbm_to_vmem [thread:$0]  %s115, 512, %s2076, [#allocation74], 128, 128, 8
        $region240: #{detection_forward.1} parent=11 // pred_fallthru
          _
        // Predicated region
        $region241: #{detection_forward.1} parent=11 // pred_check
          %p2082 = pneg %p1400
        $region242: #{detection_forward.1} parent=11 // pred_check_branch
          %2084 = sbr.rel (%p2082) target = $region244
        $region243: #{detection_forward.1} parent=11 // pred_region
          %s2086 = ssub.s32 1536, 1536
          %2087 = vsyncadd [#allocation77], %s2086
          %s2088 = sshll.u32 [#allocation76], 4
          %s2089 = int_to_ptr.vmem [resolvable:$true] %s2088
          %2094 = dma.hbm_to_vmem [thread:$0]  %s117, 1536, %s2089, [#allocation77], 128, 128, 8
        $region244: #{detection_forward.1} parent=11 // pred_fallthru
          _
        // Predicated region
        $region245: #{detection_forward.1} parent=11 // pred_check
          %p2095 = pneg %p1421
        $region246: #{detection_forward.1} parent=11 // pred_check_branch
          %2097 = sbr.rel (%p2095) target = $region248
        $region247: #{detection_forward.1} parent=11 // pred_region
          %s2099 = ssub.s32 256, 256
          %2100 = vsyncadd [#allocation77], %s2099
          %s2101 = sshll.u32 [#allocation78], 4
          %s2102 = int_to_ptr.vmem [resolvable:$true] %s2101
          %2107 = dma.hbm_to_vmem [thread:$0]  %s119, 256, %s2102, [#allocation77], 128, 128, 8
        $region248: #{detection_forward.1} parent=11 // pred_fallthru
          _
        // Predicated region
        $region249: #{detection_forward.1} parent=11 // pred_check
          %p2108 = pneg %p1442
        $region250: #{detection_forward.1} parent=11 // pred_check_branch
          %2110 = sbr.rel (%p2108) target = $region252
        $region251: #{detection_forward.1} parent=11 // pred_region
          %s2112 = ssub.s32 128, 128
          %2113 = vsyncadd [#allocation80], %s2112
          %s2115 = sshll.u32 [#allocation79], 4
          %s2116 = int_to_ptr.vmem [resolvable:$true] %s2115
          %2118 = dma.hbm_to_vmem [thread:$0]  %s121, 128, %s2116, [#allocation80]
        $region252: #{detection_forward.1} parent=11 // pred_fallthru
          _
      $region12: #{detection_forward.1} parent=5 // pred_fallthru
        _
      %p2119 = scmp.lt.s32.totalorder %s156, 2
      // Predicated region
      $region253: #{detection_forward.1} parent=5 // pred_check
        %p2120 = pneg %p2119
      $region254: #{detection_forward.1} parent=5 // pred_check_branch
        %2122 = sbr.rel (%p2120) target = $region256
      $region255: #{detection_forward.1} parent=5 // pred_region
        // Predicated region
        $region257: #{detection_forward.1} parent=255 // pred_check
          %p2123 = pneg %p176
        $region258: #{detection_forward.1} parent=255 // pred_check_branch
          %2125 = sbr.rel (%p2123) target = $region260
        $region259: #{detection_forward.1} parent=255 // pred_region
          %p2126 = scmp.lt.s32.totalorder %s156, 1
          %s2127 = scalar_select %p2126, %s156, 1
          %s2128 = smul.addr %s2127, 2
          %s2129 = smul.addr %s2128, 8
          %s2130 = scalar_lea.vmem %s1, %s2129
        $region260: #{detection_forward.1} parent=255 // pred_fallthru
          _
      $region256: #{detection_forward.1} parent=5 // pred_fallthru
        _
      %p2131 = scmp.le.s32.totalorder 1, %s156
      %p2132 = scmp.lt.s32.totalorder %s156, 3
      %p2133 = pnand %p2131, %p2132
      %p2134 = pneg %p2133
      // Predicated region
      $region261: #{detection_forward.1} parent=5 // pred_check
        _
      $region262: #{detection_forward.1} parent=5 // pred_check_branch
        %2136 = sbr.rel (%p2133) target = $region264
      $region263: #{detection_forward.1} parent=5 // pred_region
        %s2137 = ssub.s32 %s156, 1
        // Predicated region
        $region265: #{detection_forward.1} parent=263 // pred_check
          %p2138 = pneg %p203
        $region266: #{detection_forward.1} parent=263 // pred_check_branch
          %2140 = sbr.rel (%p2138) target = $region268
        $region267: #{detection_forward.1} parent=263 // pred_region
          %2141 = dma.done [#allocation3], 512
        $region268: #{detection_forward.1} parent=263 // pred_fallthru
          _
        // Predicated region
        $region269: #{detection_forward.1} parent=263 // pred_check
          %p2142 = pneg %p266
        $region270: #{detection_forward.1} parent=263 // pred_check_branch
          %2144 = sbr.rel (%p2142) target = $region272
        $region271: #{detection_forward.1} parent=263 // pred_region
          %2145 = dma.done [#allocation5], 16
        $region272: #{detection_forward.1} parent=263 // pred_fallthru
          _
        // Predicated region
        $region273: #{detection_forward.1} parent=263 // pred_check
          %p2146 = pneg %p308
        $region274: #{detection_forward.1} parent=263 // pred_check_branch
          %2148 = sbr.rel (%p2146) target = $region276
        $region275: #{detection_forward.1} parent=263 // pred_region
          %2149 = dma.done [#allocation5], 16
        $region276: #{detection_forward.1} parent=263 // pred_fallthru
          _
        // Predicated region
        $region277: #{detection_forward.1} parent=263 // pred_check
          %p2150 = pneg %p329
        $region278: #{detection_forward.1} parent=263 // pred_check_branch
          %2152 = sbr.rel (%p2150) target = $region280
        $region279: #{detection_forward.1} parent=263 // pred_region
          %2153 = dma.done [#allocation8], 512
        $region280: #{detection_forward.1} parent=263 // pred_fallthru
          _
        // Predicated region
        $region281: #{detection_forward.1} parent=263 // pred_check
          %p2154 = pneg %p350
        $region282: #{detection_forward.1} parent=263 // pred_check_branch
          %2156 = sbr.rel (%p2154) target = $region284
        $region283: #{detection_forward.1} parent=263 // pred_region
          %2157 = dma.done [#allocation8], 16
        $region284: #{detection_forward.1} parent=263 // pred_fallthru
          _
        // Predicated region
        $region285: #{detection_forward.1} parent=263 // pred_check
          %p2158 = pneg %p371
        $region286: #{detection_forward.1} parent=263 // pred_check_branch
          %2160 = sbr.rel (%p2158) target = $region288
        $region287: #{detection_forward.1} parent=263 // pred_region
          %2161 = dma.done [#allocation11], 512
        $region288: #{detection_forward.1} parent=263 // pred_fallthru
          _
        // Predicated region
        $region289: #{detection_forward.1} parent=263 // pred_check
          %p2162 = pneg %p392
        $region290: #{detection_forward.1} parent=263 // pred_check_branch
          %2164 = sbr.rel (%p2162) target = $region292
        $region291: #{detection_forward.1} parent=263 // pred_region
          %2165 = dma.done [#allocation11], 16
        $region292: #{detection_forward.1} parent=263 // pred_fallthru
          _
        // Predicated region
        $region293: #{detection_forward.1} parent=263 // pred_check
          %p2166 = pneg %p413
        $region294: #{detection_forward.1} parent=263 // pred_check_branch
          %2168 = sbr.rel (%p2166) target = $region296
        $region295: #{detection_forward.1} parent=263 // pred_region
          %2169 = dma.done [#allocation14], 512
        $region296: #{detection_forward.1} parent=263 // pred_fallthru
          _
        // Predicated region
        $region297: #{detection_forward.1} parent=263 // pred_check
          %p2170 = pneg %p434
        $region298: #{detection_forward.1} parent=263 // pred_check_branch
          %2172 = sbr.rel (%p2170) target = $region300
        $region299: #{detection_forward.1} parent=263 // pred_region
          %2173 = dma.done [#allocation14], 16
        $region300: #{detection_forward.1} parent=263 // pred_fallthru
          _
        // Predicated region
        $region301: #{detection_forward.1} parent=263 // pred_check
          %p2174 = pneg %p455
        $region302: #{detection_forward.1} parent=263 // pred_check_branch
          %2176 = sbr.rel (%p2174) target = $region304
        $region303: #{detection_forward.1} parent=263 // pred_region
          %2177 = dma.done [#allocation17], 16
        $region304: #{detection_forward.1} parent=263 // pred_fallthru
          _
        // Predicated region
        $region305: #{detection_forward.1} parent=263 // pred_check
          %p2178 = pneg %p476
        $region306: #{detection_forward.1} parent=263 // pred_check_branch
          %2180 = sbr.rel (%p2178) target = $region308
        $region307: #{detection_forward.1} parent=263 // pred_region
          %2181 = dma.done [#allocation17], 16
        $region308: #{detection_forward.1} parent=263 // pred_fallthru
          _
        // Predicated region
        $region309: #{detection_forward.1} parent=263 // pred_check
          %p2182 = pneg %p497
        $region310: #{detection_forward.1} parent=263 // pred_check_branch
          %2184 = sbr.rel (%p2182) target = $region312
        $region311: #{detection_forward.1} parent=263 // pred_region
          %2185 = dma.done [#allocation20], 16
        $region312: #{detection_forward.1} parent=263 // pred_fallthru
          _
        // Predicated region
        $region313: #{detection_forward.1} parent=263 // pred_check
          %p2186 = pneg %p518
        $region314: #{detection_forward.1} parent=263 // pred_check_branch
          %2188 = sbr.rel (%p2186) target = $region316
        $region315: #{detection_forward.1} parent=263 // pred_region
          %2189 = dma.done [#allocation20], 16
        $region316: #{detection_forward.1} parent=263 // pred_fallthru
          _
        // Predicated region
        $region317: #{detection_forward.1} parent=263 // pred_check
          %p2190 = pneg %p539
        $region318: #{detection_forward.1} parent=263 // pred_check_branch
          %2192 = sbr.rel (%p2190) target = $region320
        $region319: #{detection_forward.1} parent=263 // pred_region
          %2193 = dma.done [#allocation23], 16
        $region320: #{detection_forward.1} parent=263 // pred_fallthru
          _
        // Predicated region
        $region321: #{detection_forward.1} parent=263 // pred_check
          %p2194 = pneg %p560
        $region322: #{detection_forward.1} parent=263 // pred_check_branch
          %2196 = sbr.rel (%p2194) target = $region324
        $region323: #{detection_forward.1} parent=263 // pred_region
          %2197 = dma.done [#allocation23], 16
        $region324: #{detection_forward.1} parent=263 // pred_fallthru
          _
        // Predicated region
        $region325: #{detection_forward.1} parent=263 // pred_check
          %p2198 = pneg %p581
        $region326: #{detection_forward.1} parent=263 // pred_check_branch
          %2200 = sbr.rel (%p2198) target = $region328
        $region327: #{detection_forward.1} parent=263 // pred_region
          %2201 = dma.done [#allocation26], 512
        $region328: #{detection_forward.1} parent=263 // pred_fallthru
          _
        // Predicated region
        $region329: #{detection_forward.1} parent=263 // pred_check
          %p2202 = pneg %p602
        $region330: #{detection_forward.1} parent=263 // pred_check_branch
          %2204 = sbr.rel (%p2202) target = $region332
        $region331: #{detection_forward.1} parent=263 // pred_region
          %2205 = dma.done [#allocation26], 512
        $region332: #{detection_forward.1} parent=263 // pred_fallthru
          _
        // Predicated region
        $region333: #{detection_forward.1} parent=263 // pred_check
          %p2206 = pneg %p623
        $region334: #{detection_forward.1} parent=263 // pred_check_branch
          %2208 = sbr.rel (%p2206) target = $region336
        $region335: #{detection_forward.1} parent=263 // pred_region
          %2209 = dma.done [#allocation29], 512
        $region336: #{detection_forward.1} parent=263 // pred_fallthru
          _
        // Predicated region
        $region337: #{detection_forward.1} parent=263 // pred_check
          %p2210 = pneg %p644
        $region338: #{detection_forward.1} parent=263 // pred_check_branch
          %2212 = sbr.rel (%p2210) target = $region340
        $region339: #{detection_forward.1} parent=263 // pred_region
          %2213 = dma.done [#allocation29], 512
        $region340: #{detection_forward.1} parent=263 // pred_fallthru
          _
        // Predicated region
        $region341: #{detection_forward.1} parent=263 // pred_check
          %p2214 = pneg %p665
        $region342: #{detection_forward.1} parent=263 // pred_check_branch
          %2216 = sbr.rel (%p2214) target = $region344
        $region343: #{detection_forward.1} parent=263 // pred_region
          %2217 = dma.done [#allocation32], 16
        $region344: #{detection_forward.1} parent=263 // pred_fallthru
          _
        // Predicated region
        $region345: #{detection_forward.1} parent=263 // pred_check
          %p2218 = pneg %p686
        $region346: #{detection_forward.1} parent=263 // pred_check_branch
          %2220 = sbr.rel (%p2218) target = $region348
        $region347: #{detection_forward.1} parent=263 // pred_region
          %2221 = dma.done [#allocation32], 16
        $region348: #{detection_forward.1} parent=263 // pred_fallthru
          _
        // Predicated region
        $region349: #{detection_forward.1} parent=263 // pred_check
          %p2222 = pneg %p707
        $region350: #{detection_forward.1} parent=263 // pred_check_branch
          %2224 = sbr.rel (%p2222) target = $region352
        $region351: #{detection_forward.1} parent=263 // pred_region
          %2225 = dma.done [#allocation35], 16
        $region352: #{detection_forward.1} parent=263 // pred_fallthru
          _
        // Predicated region
        $region353: #{detection_forward.1} parent=263 // pred_check
          %p2226 = pneg %p728
        $region354: #{detection_forward.1} parent=263 // pred_check_branch
          %2228 = sbr.rel (%p2226) target = $region356
        $region355: #{detection_forward.1} parent=263 // pred_region
          %2229 = dma.done [#allocation35], 16
        $region356: #{detection_forward.1} parent=263 // pred_fallthru
          _
        // Predicated region
        $region357: #{detection_forward.1} parent=263 // pred_check
          %p2230 = pneg %p749
        $region358: #{detection_forward.1} parent=263 // pred_check_branch
          %2232 = sbr.rel (%p2230) target = $region360
        $region359: #{detection_forward.1} parent=263 // pred_region
          %2233 = dma.done [#allocation38], 16
        $region360: #{detection_forward.1} parent=263 // pred_fallthru
          _
        // Predicated region
        $region361: #{detection_forward.1} parent=263 // pred_check
          %p2234 = pneg %p770
        $region362: #{detection_forward.1} parent=263 // pred_check_branch
          %2236 = sbr.rel (%p2234) target = $region364
        $region363: #{detection_forward.1} parent=263 // pred_region
          %2237 = dma.done [#allocation38], 16
        $region364: #{detection_forward.1} parent=263 // pred_fallthru
          _
        // Predicated region
        $region365: #{detection_forward.1} parent=263 // pred_check
          %p2238 = pneg %p791
        $region366: #{detection_forward.1} parent=263 // pred_check_branch
          %2240 = sbr.rel (%p2238) target = $region368
        $region367: #{detection_forward.1} parent=263 // pred_region
          %2241 = dma.done [#allocation41], 16
        $region368: #{detection_forward.1} parent=263 // pred_fallthru
          _
        // Predicated region
        $region369: #{detection_forward.1} parent=263 // pred_check
          %p2242 = pneg %p812
        $region370: #{detection_forward.1} parent=263 // pred_check_branch
          %2244 = sbr.rel (%p2242) target = $region372
        $region371: #{detection_forward.1} parent=263 // pred_region
          %2245 = dma.done [#allocation41], 16
        $region372: #{detection_forward.1} parent=263 // pred_fallthru
          _
        // Predicated region
        $region373: #{detection_forward.1} parent=263 // pred_check
          %p2246 = pneg %p833
        $region374: #{detection_forward.1} parent=263 // pred_check_branch
          %2248 = sbr.rel (%p2246) target = $region376
        $region375: #{detection_forward.1} parent=263 // pred_region
          %2249 = dma.done [#allocation44], 512
        $region376: #{detection_forward.1} parent=263 // pred_fallthru
          _
        // Predicated region
        $region377: #{detection_forward.1} parent=263 // pred_check
          %p2250 = pneg %p854
        $region378: #{detection_forward.1} parent=263 // pred_check_branch
          %2252 = sbr.rel (%p2250) target = $region380
        $region379: #{detection_forward.1} parent=263 // pred_region
          %2253 = dma.done [#allocation44], 512
        $region380: #{detection_forward.1} parent=263 // pred_fallthru
          _
        // Predicated region
        $region381: #{detection_forward.1} parent=263 // pred_check
          %p2254 = pneg %p875
        $region382: #{detection_forward.1} parent=263 // pred_check_branch
          %2256 = sbr.rel (%p2254) target = $region384
        $region383: #{detection_forward.1} parent=263 // pred_region
          %2257 = dma.done [#allocation47], 512
        $region384: #{detection_forward.1} parent=263 // pred_fallthru
          _
        // Predicated region
        $region385: #{detection_forward.1} parent=263 // pred_check
          %p2258 = pneg %p917
        $region386: #{detection_forward.1} parent=263 // pred_check_branch
          %2260 = sbr.rel (%p2258) target = $region388
        $region387: #{detection_forward.1} parent=263 // pred_region
          %2261 = dma.done [#allocation47], 512
        $region388: #{detection_forward.1} parent=263 // pred_fallthru
          _
        // Predicated region
        $region389: #{detection_forward.1} parent=263 // pred_check
          %p2262 = pneg %p938
        $region390: #{detection_forward.1} parent=263 // pred_check_branch
          %2264 = sbr.rel (%p2262) target = $region392
        $region391: #{detection_forward.1} parent=263 // pred_region
          %2265 = dma.done [#allocation50], 16
        $region392: #{detection_forward.1} parent=263 // pred_fallthru
          _
        // Predicated region
        $region393: #{detection_forward.1} parent=263 // pred_check
          %p2266 = pneg %p980
        $region394: #{detection_forward.1} parent=263 // pred_check_branch
          %2268 = sbr.rel (%p2266) target = $region396
        $region395: #{detection_forward.1} parent=263 // pred_region
          %2269 = dma.done [#allocation50], 16
        $region396: #{detection_forward.1} parent=263 // pred_fallthru
          _
        // Predicated region
        $region397: #{detection_forward.1} parent=263 // pred_check
          %p2270 = pneg %p1001
        $region398: #{detection_forward.1} parent=263 // pred_check_branch
          %2272 = sbr.rel (%p2270) target = $region400
        $region399: #{detection_forward.1} parent=263 // pred_region
          %2273 = dma.done [#allocation53], 1536
        $region400: #{detection_forward.1} parent=263 // pred_fallthru
          _
        // Predicated region
        $region401: #{detection_forward.1} parent=263 // pred_check
          %p2274 = pneg %p1022
        $region402: #{detection_forward.1} parent=263 // pred_check_branch
          %2276 = sbr.rel (%p2274) target = $region404
        $region403: #{detection_forward.1} parent=263 // pred_region
          %2277 = dma.done [#allocation53], 16
        $region404: #{detection_forward.1} parent=263 // pred_fallthru
          _
        // Predicated region
        $region405: #{detection_forward.1} parent=263 // pred_check
          %p2278 = pneg %p1043
        $region406: #{detection_forward.1} parent=263 // pred_check_branch
          %2280 = sbr.rel (%p2278) target = $region408
        $region407: #{detection_forward.1} parent=263 // pred_region
          %2281 = dma.done [#allocation56], 16
        $region408: #{detection_forward.1} parent=263 // pred_fallthru
          _
        // Predicated region
        $region409: #{detection_forward.1} parent=263 // pred_check
          %p2282 = pneg %p1064
        $region410: #{detection_forward.1} parent=263 // pred_check_branch
          %2284 = sbr.rel (%p2282) target = $region412
        $region411: #{detection_forward.1} parent=263 // pred_region
          %2285 = dma.done [#allocation56], 16
        $region412: #{detection_forward.1} parent=263 // pred_fallthru
          _
        // Predicated region
        $region413: #{detection_forward.1} parent=263 // pred_check
          %p2286 = pneg %p1085
        $region414: #{detection_forward.1} parent=263 // pred_check_branch
          %2288 = sbr.rel (%p2286) target = $region416
        $region415: #{detection_forward.1} parent=263 // pred_region
          %2289 = dma.done [#allocation59], 16
        $region416: #{detection_forward.1} parent=263 // pred_fallthru
          _
        // Predicated region
        $region417: #{detection_forward.1} parent=263 // pred_check
          %p2290 = pneg %p1106
        $region418: #{detection_forward.1} parent=263 // pred_check_branch
          %2292 = sbr.rel (%p2290) target = $region420
        $region419: #{detection_forward.1} parent=263 // pred_region
          %2293 = dma.done [#allocation59], 16
        $region420: #{detection_forward.1} parent=263 // pred_fallthru
          _
        // Predicated region
        $region421: #{detection_forward.1} parent=263 // pred_check
          %p2294 = pneg %p1127
        $region422: #{detection_forward.1} parent=263 // pred_check_branch
          %2296 = sbr.rel (%p2294) target = $region424
        $region423: #{detection_forward.1} parent=263 // pred_region
          %2297 = dma.done [#allocation62], 16
        $region424: #{detection_forward.1} parent=263 // pred_fallthru
          _
        // Predicated region
        $region425: #{detection_forward.1} parent=263 // pred_check
          %p2298 = pneg %p1148
        $region426: #{detection_forward.1} parent=263 // pred_check_branch
          %2300 = sbr.rel (%p2298) target = $region428
        $region427: #{detection_forward.1} parent=263 // pred_region
          %2301 = dma.done [#allocation62], 16
        $region428: #{detection_forward.1} parent=263 // pred_fallthru
          _
        // Predicated region
        $region429: #{detection_forward.1} parent=263 // pred_check
          %p2302 = pneg %p1169
        $region430: #{detection_forward.1} parent=263 // pred_check_branch
          %2304 = sbr.rel (%p2302) target = $region432
        $region431: #{detection_forward.1} parent=263 // pred_region
          %2305 = dma.done [#allocation65], 16
        $region432: #{detection_forward.1} parent=263 // pred_fallthru
          _
        // Predicated region
        $region433: #{detection_forward.1} parent=263 // pred_check
          %p2306 = pneg %p1190
        $region434: #{detection_forward.1} parent=263 // pred_check_branch
          %2308 = sbr.rel (%p2306) target = $region436
        $region435: #{detection_forward.1} parent=263 // pred_region
          %2309 = dma.done [#allocation65], 16
        $region436: #{detection_forward.1} parent=263 // pred_fallthru
          _
        // Predicated region
        $region437: #{detection_forward.1} parent=263 // pred_check
          %p2310 = pneg %p1211
        $region438: #{detection_forward.1} parent=263 // pred_check_branch
          %2312 = sbr.rel (%p2310) target = $region440
        $region439: #{detection_forward.1} parent=263 // pred_region
          %2313 = dma.done [#allocation68], 16
        $region440: #{detection_forward.1} parent=263 // pred_fallthru
          _
        // Predicated region
        $region441: #{detection_forward.1} parent=263 // pred_check
          %p2314 = pneg %p1232
        $region442: #{detection_forward.1} parent=263 // pred_check_branch
          %2316 = sbr.rel (%p2314) target = $region444
        $region443: #{detection_forward.1} parent=263 // pred_region
          %2317 = dma.done [#allocation68], 512
        $region444: #{detection_forward.1} parent=263 // pred_fallthru
          _
        // Predicated region
        $region445: #{detection_forward.1} parent=263 // pred_check
          %p2318 = pneg %p1274
        $region446: #{detection_forward.1} parent=263 // pred_check_branch
          %2320 = sbr.rel (%p2318) target = $region448
        $region447: #{detection_forward.1} parent=263 // pred_region
          %2321 = dma.done [#allocation71], 512
        $region448: #{detection_forward.1} parent=263 // pred_fallthru
          _
        // Predicated region
        $region449: #{detection_forward.1} parent=263 // pred_check
          %p2322 = pneg %p1295
        $region450: #{detection_forward.1} parent=263 // pred_check_branch
          %2324 = sbr.rel (%p2322) target = $region452
        $region451: #{detection_forward.1} parent=263 // pred_region
          %2325 = dma.done [#allocation71], 512
        $region452: #{detection_forward.1} parent=263 // pred_fallthru
          _
        // Predicated region
        $region453: #{detection_forward.1} parent=263 // pred_check
          %p2326 = pneg %p1316
        $region454: #{detection_forward.1} parent=263 // pred_check_branch
          %2328 = sbr.rel (%p2326) target = $region456
        $region455: #{detection_forward.1} parent=263 // pred_region
          %2329 = dma.done [#allocation74], 512
        $region456: #{detection_forward.1} parent=263 // pred_fallthru
          _
        // Predicated region
        $region457: #{detection_forward.1} parent=263 // pred_check
          %p2330 = pneg %p1379
        $region458: #{detection_forward.1} parent=263 // pred_check_branch
          %2332 = sbr.rel (%p2330) target = $region460
        $region459: #{detection_forward.1} parent=263 // pred_region
          %2333 = dma.done [#allocation74], 512
        $region460: #{detection_forward.1} parent=263 // pred_fallthru
          _
        // Predicated region
        $region461: #{detection_forward.1} parent=263 // pred_check
          %p2334 = pneg %p1400
        $region462: #{detection_forward.1} parent=263 // pred_check_branch
          %2336 = sbr.rel (%p2334) target = $region464
        $region463: #{detection_forward.1} parent=263 // pred_region
          %2337 = dma.done [#allocation77], 1536
        $region464: #{detection_forward.1} parent=263 // pred_fallthru
          _
        // Predicated region
        $region465: #{detection_forward.1} parent=263 // pred_check
          %p2338 = pneg %p1421
        $region466: #{detection_forward.1} parent=263 // pred_check_branch
          %2340 = sbr.rel (%p2338) target = $region468
        $region467: #{detection_forward.1} parent=263 // pred_region
          %2341 = dma.done [#allocation77], 256
        $region468: #{detection_forward.1} parent=263 // pred_fallthru
          _
        // Predicated region
        $region469: #{detection_forward.1} parent=263 // pred_check
          %p2342 = pneg %p1442
        $region470: #{detection_forward.1} parent=263 // pred_check_branch
          %2344 = sbr.rel (%p2342) target = $region472
        $region471: #{detection_forward.1} parent=263 // pred_region
          %2345 = dma.done [#allocation80], 128
        $region472: #{detection_forward.1} parent=263 // pred_fallthru
          _
        %p2346 = scmp.lt.s32.totalorder %s161, 1
        %s2347 = scalar_select %p2346, %s161, 1
        %s2348 = smul.addr %s2347, 2
        %s2349 = smul.addr %s2348, 8
        %s2350 = scalar_lea.vmem %s1, %s2349
        %p2351 = pneg %p182
        %p2352 = pneg %p179
        %p2353 = pneg %p203
        %p2354 = pneg %p200
        %p2355 = pneg %p224
        %p2356 = pneg %p221
        %p2357 = pneg %p245
        %p2358 = pneg %p242
        %p2359 = pneg %p266
        %p2360 = pneg %p263
        %p2361 = pneg %p287
        %p2362 = pneg %p284
        %p2363 = pneg %p308
        %p2364 = pneg %p305
        %p2365 = pneg %p329
        %p2366 = pneg %p326
        %p2367 = pneg %p350
        %p2368 = pneg %p347
        %p2369 = pneg %p371
        %p2370 = pneg %p368
        %p2371 = pneg %p392
        %p2372 = pneg %p389
        %p2373 = pneg %p413
        %p2374 = pneg %p410
        %p2375 = pneg %p434
        %p2376 = pneg %p431
        %p2377 = pneg %p455
        %p2378 = pneg %p452
        %p2379 = pneg %p476
        %p2380 = pneg %p473
        %p2381 = pneg %p497
        %p2382 = pneg %p494
        %p2383 = pneg %p518
        %p2384 = pneg %p515
        %p2385 = pneg %p539
        %p2386 = pneg %p536
        %p2387 = pneg %p560
        %p2388 = pneg %p557
        %p2389 = pneg %p581
        %p2390 = pneg %p578
        %p2391 = pneg %p602
        %p2392 = pneg %p599
        %p2393 = pneg %p623
        %p2394 = pneg %p620
        %p2395 = pneg %p644
        %p2396 = pneg %p641
        %p2397 = pneg %p665
        %p2398 = pneg %p662
        %p2399 = pneg %p686
        %p2400 = pneg %p683
        %p2401 = pneg %p707
        %p2402 = pneg %p704
        %p2403 = pneg %p728
        %p2404 = pneg %p725
        %p2405 = pneg %p749
        %p2406 = pneg %p746
        %p2407 = pneg %p770
        %p2408 = pneg %p767
        %p2409 = pneg %p791
        %p2410 = pneg %p788
        %p2411 = pneg %p812
        %p2412 = pneg %p809
        %p2413 = pneg %p833
        %p2414 = pneg %p830
        %p2415 = pneg %p854
        %p2416 = pneg %p851
        %p2417 = pneg %p875
        %p2418 = pneg %p872
        %p2419 = pneg %p896
        %p2420 = pneg %p893
        %p2421 = pneg %p917
        %p2422 = pneg %p914
        %p2423 = pneg %p938
        %p2424 = pneg %p935
        %p2425 = pneg %p959
        %p2426 = pneg %p956
        %p2427 = pneg %p980
        %p2428 = pneg %p977
        %p2429 = pneg %p1001
        %p2430 = pneg %p998
        %p2431 = pneg %p1022
        %p2432 = pneg %p1019
        %p2433 = pneg %p1043
        %p2434 = pneg %p1040
        %p2435 = pneg %p1064
        %p2436 = pneg %p1061
        %p2437 = pneg %p1085
        %p2438 = pneg %p1082
        %p2439 = pneg %p1106
        %p2440 = pneg %p1103
        %p2441 = pneg %p1127
        %p2442 = pneg %p1124
        %p2443 = pneg %p1148
        %p2444 = pneg %p1145
        %p2445 = pneg %p1169
        %p2446 = pneg %p1166
        %p2447 = pneg %p1190
        %p2448 = pneg %p1187
        %p2449 = pneg %p1211
        %p2450 = pneg %p1208
        %p2451 = pneg %p1232
        %p2452 = pneg %p1229
        %p2453 = pneg %p1253
        %p2454 = pneg %p1250
        %p2455 = pneg %p1274
        %p2456 = pneg %p1271
        %p2457 = pneg %p1295
        %p2458 = pneg %p1292
        %p2459 = pneg %p1316
        %p2460 = pneg %p1313
        %p2461 = pneg %p1337
        %p2462 = pneg %p1334
        %p2463 = pneg %p1358
        %p2464 = pneg %p1355
        %p2465 = pneg %p1379
        %p2466 = pneg %p1376
        %p2467 = pneg %p1400
        %p2468 = pneg %p1397
        %p2469 = pneg %p1421
        %p2470 = pneg %p1418
        %p2471 = pneg %p1442
        %p2472 = pneg %p1439
        %p2473 = pneg %p1468
        %p2474 = pneg %p1465
        %p2475 = scmp.lt.s32.totalorder %s161, 1
        %s2476 = scalar_select %p2475, %s161, 1
        %s2477 = smul.addr %s2476, 8
        %s2478 = scalar_lea.vmem %s123, %s2477
        %p2479 = scmp.lt.s32.totalorder %s161, 1
        %s2480 = scalar_select %p2479, %s161, 1
        %s2481 = smul.addr %s2480, 2
        %s2482 = smul.addr %s2481, 8
        %s2483 = scalar_lea.vmem %s1, %s2482
        %p2484 = scmp.lt.s32.totalorder %s161, 1
        %s2485 = scalar_select %p2484, %s161, 1
        %s2486 = smul.addr %s2485, 8
        %s2487 = scalar_lea.vmem %s123, %s2486
        %v2488 = vld [vmem:[#allocation2] sm:$0xff]
        %v2489 = vld [vmem:[#allocation2 + $0x8] sm:$0xff]
        %v2490 = vld [vmem:[#allocation2 + $0x10] sm:$0xff]
        %v2491 = vld [vmem:[#allocation2 + $0x18] sm:$0xff]
        %v2492 = vld [vmem:[%s5] sm:$0x1]
        %v2493 = vld [vmem:[%s7] sm:$0xff]
        %v2494 = vld [vmem:[%s7 + $0x8] sm:$0xff]
        %v2495 = vld [vmem:[%s7 + $0x10] sm:$0xff]
        %v2496 = vld [vmem:[%s7 + $0x18] sm:$0xff]
        %v2497 = vld [vmem:[%s7 + $0x20] sm:$0xff]
        %v2498 = vld [vmem:[%s7 + $0x28] sm:$0xff]
        %v2499 = vld [vmem:[%s7 + $0x30] sm:$0xff]
        %v2500 = vld [vmem:[%s7 + $0x38] sm:$0xff]
        %v2501 = vld [vmem:[%s7 + $0x40] sm:$0xff]
        %v2502 = vld [vmem:[%s7 + $0x48] sm:$0xff]
        %v2503 = vld [vmem:[%s7 + $0x50] sm:$0xff]
        %v2504 = vld [vmem:[%s7 + $0x58] sm:$0xff]
        %v2505 = vld [vmem:[#allocation4] sm:$0x1]
        %v2506 = vld [vmem:[%s11] sm:$0xff]
        %v2507 = vld [vmem:[%s11 + $0x8] sm:$0xff]
        %v2508 = vld [vmem:[%s11 + $0x10] sm:$0xff]
        %v2509 = vld [vmem:[%s11 + $0x18] sm:$0xff]
        %v2510 = vld [vmem:[%s11 + $0x20] sm:$0xff]
        %v2511 = vld [vmem:[%s11 + $0x28] sm:$0xff]
        %v2512 = vld [vmem:[%s11 + $0x30] sm:$0xff]
        %v2513 = vld [vmem:[%s11 + $0x38] sm:$0xff]
        %v2514 = vld [vmem:[%s11 + $0x40] sm:$0xff]
        %v2515 = vld [vmem:[%s11 + $0x48] sm:$0xff]
        %v2516 = vld [vmem:[%s11 + $0x50] sm:$0xff]
        %v2517 = vld [vmem:[%s11 + $0x58] sm:$0xff]
        %v2518 = vld [vmem:[#allocation6] sm:$0x1]
        %v2519 = vld [vmem:[#allocation7] sm:$0xff]
        %v2520 = vld [vmem:[#allocation7 + $0x8] sm:$0xff]
        %v2521 = vld [vmem:[#allocation7 + $0x10] sm:$0xff]
        %v2522 = vld [vmem:[#allocation7 + $0x18] sm:$0xff]
        %v2523 = vld [vmem:[#allocation9] sm:$0x1]
        %v2524 = vld [vmem:[#allocation10] sm:$0xff]
        %v2525 = vld [vmem:[#allocation10 + $0x8] sm:$0xff]
        %v2526 = vld [vmem:[#allocation10 + $0x10] sm:$0xff]
        %v2527 = vld [vmem:[#allocation10 + $0x18] sm:$0xff]
        %v2528 = vld [vmem:[#allocation12] sm:$0x1]
        %v2529 = vld [vmem:[#allocation13] sm:$0xff]
        %v2530 = vld [vmem:[#allocation13 + $0x8] sm:$0xff]
        %v2531 = vld [vmem:[#allocation13 + $0x10] sm:$0xff]
        %v2532 = vld [vmem:[#allocation13 + $0x18] sm:$0xff]
        %v2533 = vld [vmem:[#allocation15] sm:$0x1]
        %v2534 = vld [vmem:[#allocation16] sm:$0x1]
        %v2535 = vld [vmem:[#allocation18] sm:$0x1]
        %v2536 = vld [vmem:[#allocation19] sm:$0x1]
        %v2537 = vld [vmem:[#allocation21] sm:$0x1]
        %v2538 = vld [vmem:[#allocation22] sm:$0x1]
        %v2539 = vld [vmem:[#allocation24] sm:$0x1]
        %v2540 = vld [vmem:[#allocation25] sm:$0xff]
        %v2541 = vld [vmem:[#allocation25 + $0x8] sm:$0xff]
        %v2542 = vld [vmem:[#allocation25 + $0x10] sm:$0xff]
        %v2543 = vld [vmem:[#allocation25 + $0x18] sm:$0xff]
        %v2544 = vld [vmem:[#allocation27] sm:$0xff]
        %v2545 = vld [vmem:[#allocation27 + $0x8] sm:$0xff]
        %v2546 = vld [vmem:[#allocation27 + $0x10] sm:$0xff]
        %v2547 = vld [vmem:[#allocation27 + $0x18] sm:$0xff]
        %v2548 = vld [vmem:[#allocation28] sm:$0xff]
        %v2549 = vld [vmem:[#allocation28 + $0x8] sm:$0xff]
        %v2550 = vld [vmem:[#allocation28 + $0x10] sm:$0xff]
        %v2551 = vld [vmem:[#allocation28 + $0x18] sm:$0xff]
        %v2552 = vld [vmem:[#allocation30] sm:$0xff]
        %v2553 = vld [vmem:[#allocation30 + $0x8] sm:$0xff]
        %v2554 = vld [vmem:[#allocation30 + $0x10] sm:$0xff]
        %v2555 = vld [vmem:[#allocation30 + $0x18] sm:$0xff]
        %v2556 = vld [vmem:[#allocation31] sm:$0x1]
        %v2557 = vld [vmem:[#allocation33] sm:$0x1]
        %v2558 = vld [vmem:[#allocation34] sm:$0x1]
        %v2559 = vld [vmem:[#allocation36] sm:$0x1]
        %v2560 = vld [vmem:[#allocation37] sm:$0x1]
        %v2561 = vld [vmem:[#allocation39] sm:$0x1]
        %v2562 = vld [vmem:[#allocation40] sm:$0x1]
        %v2563 = vld [vmem:[#allocation42] sm:$0x1]
        %v2564 = vld [vmem:[#allocation43] sm:$0xff]
        %v2565 = vld [vmem:[#allocation43 + $0x8] sm:$0xff]
        %v2566 = vld [vmem:[#allocation43 + $0x10] sm:$0xff]
        %v2567 = vld [vmem:[#allocation43 + $0x18] sm:$0xff]
        %v2568 = vld [vmem:[#allocation45] sm:$0xff]
        %v2569 = vld [vmem:[#allocation45 + $0x8] sm:$0xff]
        %v2570 = vld [vmem:[#allocation45 + $0x10] sm:$0xff]
        %v2571 = vld [vmem:[#allocation45 + $0x18] sm:$0xff]
        %v2572 = vld [vmem:[#allocation46] sm:$0xff]
        %v2573 = vld [vmem:[#allocation46 + $0x8] sm:$0xff]
        %v2574 = vld [vmem:[#allocation46 + $0x10] sm:$0xff]
        %v2575 = vld [vmem:[#allocation46 + $0x18] sm:$0xff]
        %v2576 = vld [vmem:[%s69] sm:$0xff]
        %v2577 = vld [vmem:[%s69 + $0x8] sm:$0xff]
        %v2578 = vld [vmem:[%s69 + $0x10] sm:$0xff]
        %v2579 = vld [vmem:[%s69 + $0x18] sm:$0xff]
        %v2580 = vld [vmem:[%s69 + $0x20] sm:$0xff]
        %v2581 = vld [vmem:[%s69 + $0x28] sm:$0xff]
        %v2582 = vld [vmem:[%s69 + $0x30] sm:$0xff]
        %v2583 = vld [vmem:[%s69 + $0x38] sm:$0xff]
        %v2584 = vld [vmem:[#allocation48] sm:$0xff]
        %v2585 = vld [vmem:[#allocation48 + $0x8] sm:$0xff]
        %v2586 = vld [vmem:[#allocation48 + $0x10] sm:$0xff]
        %v2587 = vld [vmem:[#allocation48 + $0x18] sm:$0xff]
        %v2588 = vld [vmem:[#allocation49] sm:$0x1]
        %v2589 = vld [vmem:[%s75] sm:$0xff]
        %v2590 = vld [vmem:[%s75 + $0x8] sm:$0xff]
        %v2591 = vld [vmem:[%s75 + $0x10] sm:$0xff]
        %v2592 = vld [vmem:[%s75 + $0x18] sm:$0xff]
        %v2593 = vld [vmem:[%s75 + $0x20] sm:$0xff]
        %v2594 = vld [vmem:[%s75 + $0x28] sm:$0xff]
        %v2595 = vld [vmem:[%s75 + $0x30] sm:$0xff]
        %v2596 = vld [vmem:[%s75 + $0x38] sm:$0xff]
        %v2597 = vld [vmem:[%s75 + $0x40] sm:$0xff]
        %v2598 = vld [vmem:[%s75 + $0x48] sm:$0xff]
        %v2599 = vld [vmem:[%s75 + $0x50] sm:$0xff]
        %v2600 = vld [vmem:[%s75 + $0x58] sm:$0xff]
        %v2601 = vld [vmem:[#allocation51] sm:$0x1]
        %v2602 = vld [vmem:[#allocation52] sm:$0xff]
        %v2603 = vld [vmem:[#allocation52 + $0x8] sm:$0xff]
        %v2604 = vld [vmem:[#allocation52 + $0x10] sm:$0xff]
        %v2605 = vld [vmem:[#allocation52 + $0x18] sm:$0xff]
        %v2606 = vld [vmem:[#allocation52 + $0x20] sm:$0xff]
        %v2607 = vld [vmem:[#allocation52 + $0x28] sm:$0xff]
        %v2608 = vld [vmem:[#allocation52 + $0x30] sm:$0xff]
        %v2609 = vld [vmem:[#allocation52 + $0x38] sm:$0xff]
        %v2610 = vld [vmem:[#allocation52 + $0x40] sm:$0xff]
        %v2611 = vld [vmem:[#allocation52 + $0x48] sm:$0xff]
        %v2612 = vld [vmem:[#allocation52 + $0x50] sm:$0xff]
        %v2613 = vld [vmem:[#allocation52 + $0x58] sm:$0xff]
        %v2614 = vld [vmem:[#allocation54] sm:$0x1]
        %v2615 = vld [vmem:[#allocation55] sm:$0x1]
        %v2616 = vld [vmem:[#allocation57] sm:$0x1]
        %v2617 = vld [vmem:[#allocation58] sm:$0x1]
        %v2618 = vld [vmem:[#allocation60] sm:$0x1]
        %v2619 = vld [vmem:[#allocation61] sm:$0x1]
        %v2620 = vld [vmem:[#allocation63] sm:$0x1]
        %v2621 = vld [vmem:[#allocation64] sm:$0x1]
        %v2622 = vld [vmem:[#allocation66] sm:$0x1]
        %v2623 = vld [vmem:[#allocation67] sm:$0x1]
        %v2624 = vld [vmem:[#allocation69] sm:$0xff]
        %v2625 = vld [vmem:[#allocation69 + $0x8] sm:$0xff]
        %v2626 = vld [vmem:[#allocation69 + $0x10] sm:$0xff]
        %v2627 = vld [vmem:[#allocation69 + $0x18] sm:$0xff]
        %v2628 = vld [vmem:[%s103] sm:$0xff]
        %v2629 = vld [vmem:[%s103 + $0x8] sm:$0xff]
        %v2630 = vld [vmem:[%s103 + $0x10] sm:$0xff]
        %v2631 = vld [vmem:[%s103 + $0x18] sm:$0xff]
        %v2632 = vld [vmem:[%s103 + $0x20] sm:$0xff]
        %v2633 = vld [vmem:[%s103 + $0x28] sm:$0xff]
        %v2634 = vld [vmem:[%s103 + $0x30] sm:$0xff]
        %v2635 = vld [vmem:[%s103 + $0x38] sm:$0xff]
        %v2636 = vld [vmem:[#allocation70] sm:$0xff]
        %v2637 = vld [vmem:[#allocation70 + $0x8] sm:$0xff]
        %v2638 = vld [vmem:[#allocation70 + $0x10] sm:$0xff]
        %v2639 = vld [vmem:[#allocation70 + $0x18] sm:$0xff]
        %v2640 = vld [vmem:[#allocation72] sm:$0xff]
        %v2641 = vld [vmem:[#allocation72 + $0x8] sm:$0xff]
        %v2642 = vld [vmem:[#allocation72 + $0x10] sm:$0xff]
        %v2643 = vld [vmem:[#allocation72 + $0x18] sm:$0xff]
        %v2644 = vld [vmem:[#allocation73] sm:$0xff]
        %v2645 = vld [vmem:[#allocation73 + $0x8] sm:$0xff]
        %v2646 = vld [vmem:[#allocation73 + $0x10] sm:$0xff]
        %v2647 = vld [vmem:[#allocation73 + $0x18] sm:$0xff]
        %v2648 = vld [vmem:[%s111] sm:$0x1]
        %v2649 = vld [vmem:[%s113] sm:$0xff]
        %v2650 = vld [vmem:[%s113 + $0x8] sm:$0xff]
        %v2651 = vld [vmem:[%s113 + $0x10] sm:$0xff]
        %v2652 = vld [vmem:[%s113 + $0x18] sm:$0xff]
        %v2653 = vld [vmem:[%s113 + $0x20] sm:$0xff]
        %v2654 = vld [vmem:[%s113 + $0x28] sm:$0xff]
        %v2655 = vld [vmem:[%s113 + $0x30] sm:$0xff]
        %v2656 = vld [vmem:[%s113 + $0x38] sm:$0xff]
        %v2657 = vld [vmem:[%s113 + $0x40] sm:$0xff]
        %v2658 = vld [vmem:[%s113 + $0x48] sm:$0xff]
        %v2659 = vld [vmem:[%s113 + $0x50] sm:$0xff]
        %v2660 = vld [vmem:[%s113 + $0x58] sm:$0xff]
        %v2661 = vld [vmem:[#allocation75] sm:$0xff]
        %v2662 = vld [vmem:[#allocation75 + $0x8] sm:$0xff]
        %v2663 = vld [vmem:[#allocation75 + $0x10] sm:$0xff]
        %v2664 = vld [vmem:[#allocation75 + $0x18] sm:$0xff]
        %v2665 = vld [vmem:[#allocation76] sm:$0xff]
        %v2666 = vld [vmem:[#allocation76 + $0x8] sm:$0xff]
        %v2667 = vld [vmem:[#allocation76 + $0x10] sm:$0xff]
        %v2668 = vld [vmem:[#allocation76 + $0x18] sm:$0xff]
        %v2669 = vld [vmem:[#allocation76 + $0x20] sm:$0xff]
        %v2670 = vld [vmem:[#allocation76 + $0x28] sm:$0xff]
        %v2671 = vld [vmem:[#allocation76 + $0x30] sm:$0xff]
        %v2672 = vld [vmem:[#allocation76 + $0x38] sm:$0xff]
        %v2673 = vld [vmem:[#allocation76 + $0x40] sm:$0xff]
        %v2674 = vld [vmem:[#allocation76 + $0x48] sm:$0xff]
        %v2675 = vld [vmem:[#allocation76 + $0x50] sm:$0xff]
        %v2676 = vld [vmem:[#allocation76 + $0x58] sm:$0xff]
        %v2677 = vld [vmem:[#allocation78] sm:$0xff]
        %v2678 = vld [vmem:[#allocation78 + $0x8] sm:$0xff]
        %v2679 = vld [vmem:[#allocation79] sm:$0xff]
        %v2680 = vld [vmem:[%s2483] sm:$0xff]
        %v2681 = vld [vmem:[%s2483 + $0x8] sm:$0xff]
        %v2682 = vadd.f32 %v2680, %v2677
        %v2683 = vadd.f32 %v2681, %v2678
        %v2685 = vlaneseq
        %v2686 = vshrl.u32 %v2685, 7
        %v2687 = vsub.s32 0, %v2686
        %v2688 = vrot.slane %v2618, %v2687
        %vm2690 = vcmask 261120
        %v2692 = vsel %vm2690, %v2682, 0
        %v2695 = vsel %vm2690, %v2683, 0
        %2697 = vmatprep.subr.mxu0 0.0
        %2698 = vmatpush1.msra.mxu0 %v2640
        %2699 = vmatprep.subr.mxu0 0.0
        %2700 = vmatpush1.msra.mxu0 %v2641
        %2701 = vmatprep.subr.mxu0 0.0
        %2702 = vmatpush1.msra.mxu0 %v2642
        %2703 = vmatprep.subr.mxu0 0.0
        %2704 = vmatpush1.msra.mxu0 %v2643
        %2705 = vmatprep.subr.mxu0 0.0
        %2706 = vmatpush1.msra.mxu0 0.0
        %2707 = vmatprep.subr.mxu0 0.0
        %2708 = vmatpush1.msra.mxu0 0.0
        %2709 = vmatprep.subr.mxu0 0.0
        %2710 = vmatpush1.msra.mxu0 0.0
        %2711 = vmatprep.subr.mxu0 0.0
        %2712 = vmatpush1.msra.mxu0 0.0
        %2713 = vmatprep.subr.mxu0 0.0
        %2714 = vmatpush1.msra.mxu0 0.0
        %2715 = vmatprep.subr.mxu0 0.0
        %2716 = vmatpush1.msra.mxu0 0.0
        %2717 = vmatprep.subr.mxu0 0.0
        %2718 = vmatpush1.msra.mxu0 0.0
        %2719 = vmatprep.subr.mxu0 0.0
        %2720 = vmatpush1.msra.mxu0 0.0
        %2721 = vmatprep.subr.mxu0 0.0
        %2722 = vmatpush1.msra.mxu0 0.0
        %2723 = vmatprep.subr.mxu0 0.0
        %2724 = vmatpush1.msra.mxu0 0.0
        %2725 = vmatprep.subr.mxu0 0.0
        %2726 = vmatpush1.msra.mxu0 0.0
        %2727 = vmatprep.subr.mxu0 0.0
        %2728 = vmatpush1.msra.mxu0 0.0
        %2729 = vmatprep.subr.mxu0 0.0
        %2730 = vmatpush1.msra.mxu0 0.0
        %2731 = vmatprep.subr.mxu0 0.0
        %2732 = vmatpush1.msra.mxu0 0.0
        %2733 = vmatprep.subr.mxu0 0.0
        %2734 = vmatpush1.msra.mxu0 0.0
        %2735 = vmatprep.subr.mxu0 0.0
        %2736 = vmatpush1.msra.mxu0 0.0
        %2737 = vmatprep.subr.mxu0 0.0
        %2738 = vmatpush1.msra.mxu0 0.0
        %2739 = vmatprep.subr.mxu0 0.0
        %2740 = vmatpush1.msra.mxu0 0.0
        %2741 = vmatprep.subr.mxu0 0.0
        %2742 = vmatpush1.msra.mxu0 0.0
        %2743 = vmatprep.subr.mxu0 0.0
        %2744 = vmatpush1.msra.mxu0 0.0
        %2745 = vmatprep.subr.mxu0 0.0
        %2746 = vmatpush1.msra.mxu0 0.0
        %2747 = vmatprep.subr.mxu0 0.0
        %2748 = vmatpush1.msra.mxu0 0.0
        %2749 = vmatprep.subr.mxu0 0.0
        %2750 = vmatpush1.msra.mxu0 0.0
        %2751 = vmatprep.subr.mxu0 0.0
        %2752 = vmatpush1.msra.mxu0 0.0
        %2753 = vmatprep.subr.mxu0 0.0
        %2754 = vmatpush1.msra.mxu0 0.0
        %2755 = vmatprep.subr.mxu0 0.0
        %2756 = vmatpush1.msra.mxu0 0.0
        %2757 = vmatprep.subr.mxu0 0.0
        %2758 = vmatpush1.msra.mxu0 0.0
        %2759 = vmatprep.subr.mxu0 0.0
        %2760 = vmatpush1.msra.mxu0 0.0
        %2761 = vmatprep.mubr.f32.mxu0 0.0
        %2762 = vmatmul.mubr.f32.gmra.mrb[0].mxu0 %v2692
        %v2763 = vpop.f32.mrb[0].mxu0
        %v2764 = vadd.f32 %v2688, %v2763
        %v2765 = vpop.f32.mrb[0].mxu0
        %2766 = vmatprep.mubr.f32.mxu0 0.0
        %2767 = vmatmul.mubr.f32.gmra.mrb[0].mxu0 %v2695
        %v2768 = vpop.f32.mrb[0].mxu0
        %v2769 = vadd.f32 %v2688, %v2768
        %v2770 = vpop.f32.mrb[0].mxu0
        %2771 = vdwg.mxu0
        %v2773 = vlaneseq
        %v2774 = vshrl.u32 %v2773, 7
        %v2775 = vsub.s32 0, %v2774
        %v2776 = vrot.slane %v2619, %v2775
        %v2779 = vsel %vm2690, %v2680, 0
        %v2782 = vsel %vm2690, %v2681, 0
        %2784 = vmatprep.subr.mxu0 0.0
        %2785 = vmatpush1.msra.mxu0 %v2644
        %2786 = vmatprep.subr.mxu0 0.0
        %2787 = vmatpush1.msra.mxu0 %v2645
        %2788 = vmatprep.subr.mxu0 0.0
        %2789 = vmatpush1.msra.mxu0 %v2646
        %2790 = vmatprep.subr.mxu0 0.0
        %2791 = vmatpush1.msra.mxu0 %v2647
        %2792 = vmatprep.subr.mxu0 0.0
        %2793 = vmatpush1.msra.mxu0 0.0
        %2794 = vmatprep.subr.mxu0 0.0
        %2795 = vmatpush1.msra.mxu0 0.0
        %2796 = vmatprep.subr.mxu0 0.0
        %2797 = vmatpush1.msra.mxu0 0.0
        %2798 = vmatprep.subr.mxu0 0.0
        %2799 = vmatpush1.msra.mxu0 0.0
        %2800 = vmatprep.subr.mxu0 0.0
        %2801 = vmatpush1.msra.mxu0 0.0
        %2802 = vmatprep.subr.mxu0 0.0
        %2803 = vmatpush1.msra.mxu0 0.0
        %2804 = vmatprep.subr.mxu0 0.0
        %2805 = vmatpush1.msra.mxu0 0.0
        %2806 = vmatprep.subr.mxu0 0.0
        %2807 = vmatpush1.msra.mxu0 0.0
        %2808 = vmatprep.subr.mxu0 0.0
        %2809 = vmatpush1.msra.mxu0 0.0
        %2810 = vmatprep.subr.mxu0 0.0
        %2811 = vmatpush1.msra.mxu0 0.0
        %2812 = vmatprep.subr.mxu0 0.0
        %2813 = vmatpush1.msra.mxu0 0.0
        %2814 = vmatprep.subr.mxu0 0.0
        %2815 = vmatpush1.msra.mxu0 0.0
        %2816 = vmatprep.subr.mxu0 0.0
        %2817 = vmatpush1.msra.mxu0 0.0
        %2818 = vmatprep.subr.mxu0 0.0
        %2819 = vmatpush1.msra.mxu0 0.0
        %2820 = vmatprep.subr.mxu0 0.0
        %2821 = vmatpush1.msra.mxu0 0.0
        %2822 = vmatprep.subr.mxu0 0.0
        %2823 = vmatpush1.msra.mxu0 0.0
        %2824 = vmatprep.subr.mxu0 0.0
        %2825 = vmatpush1.msra.mxu0 0.0
        %2826 = vmatprep.subr.mxu0 0.0
        %2827 = vmatpush1.msra.mxu0 0.0
        %2828 = vmatprep.subr.mxu0 0.0
        %2829 = vmatpush1.msra.mxu0 0.0
        %2830 = vmatprep.subr.mxu0 0.0
        %2831 = vmatpush1.msra.mxu0 0.0
        %2832 = vmatprep.subr.mxu0 0.0
        %2833 = vmatpush1.msra.mxu0 0.0
        %2834 = vmatprep.subr.mxu0 0.0
        %2835 = vmatpush1.msra.mxu0 0.0
        %2836 = vmatprep.subr.mxu0 0.0
        %2837 = vmatpush1.msra.mxu0 0.0
        %2838 = vmatprep.subr.mxu0 0.0
        %2839 = vmatpush1.msra.mxu0 0.0
        %2840 = vmatprep.subr.mxu0 0.0
        %2841 = vmatpush1.msra.mxu0 0.0
        %2842 = vmatprep.subr.mxu0 0.0
        %2843 = vmatpush1.msra.mxu0 0.0
        %2844 = vmatprep.subr.mxu0 0.0
        %2845 = vmatpush1.msra.mxu0 0.0
        %2846 = vmatprep.subr.mxu0 0.0
        %2847 = vmatpush1.msra.mxu0 0.0
        %2848 = vmatprep.mubr.f32.mxu0 0.0
        %2849 = vmatmul.mubr.f32.gmra.mrb[0].mxu0 %v2779
        %v2850 = vpop.f32.mrb[0].mxu0
        %v2851 = vadd.f32 %v2776, %v2850
        %v2852 = vpop.f32.mrb[0].mxu0
        %2853 = vmatprep.mubr.f32.mxu0 0.0
        %2854 = vmatmul.mubr.f32.gmra.mrb[0].mxu0 %v2782
        %v2855 = vpop.f32.mrb[0].mxu0
        %v2856 = vadd.f32 %v2776, %v2855
        %v2857 = vpop.f32.mrb[0].mxu0
        %2858 = vdwg.mxu0
        %2861 = vrot.lane.b32.xlu0 %v2764, 96
        %v2862 = vpop.permute.xlu0 %2861
        %2863 = vrot.lane.b32.xlu0 %v2769, 96
        %v2864 = vpop.permute.xlu0 %2863
        %vm2865 = vcmask 64512
        %v2866 = vsel %vm2865, %v2764, 0
        %v2868 = vsel %vm2865, %v2769, 0
        %v2870 = vsel %vm2865, %v2862, 0
        %v2872 = vsel %vm2865, %v2864, 0
        %2874 = vmatprep.subr.mxu0 0.0
        %2875 = vmatpush1.xpose.msra.mxu0 %v2870
        %2876 = vmatprep.subr.mxu0 0.0
        %2877 = vmatpush1.xpose.msra.mxu0 %v2872
        %2878 = vmatprep.subr.mxu0 0.0
        %2879 = vmatpush1.xpose.msra.mxu0 0.0
        %2880 = vmatprep.subr.mxu0 0.0
        %2881 = vmatpush1.xpose.msra.mxu0 0.0
        %2882 = vmatprep.subr.mxu0 0.0
        %2883 = vmatpush1.xpose.msra.mxu0 0.0
        %2884 = vmatprep.subr.mxu0 0.0
        %2885 = vmatpush1.xpose.msra.mxu0 0.0
        %2886 = vmatprep.subr.mxu0 0.0
        %2887 = vmatpush1.xpose.msra.mxu0 0.0
        %2888 = vmatprep.subr.mxu0 0.0
        %2889 = vmatpush1.xpose.msra.mxu0 0.0
        %2890 = vmatprep.subr.mxu0 0.0
        %2891 = vmatpush1.xpose.msra.mxu0 0.0
        %2892 = vmatprep.subr.mxu0 0.0
        %2893 = vmatpush1.xpose.msra.mxu0 0.0
        %2894 = vmatprep.subr.mxu0 0.0
        %2895 = vmatpush1.xpose.msra.mxu0 0.0
        %2896 = vmatprep.subr.mxu0 0.0
        %2897 = vmatpush1.xpose.msra.mxu0 0.0
        %2898 = vmatprep.subr.mxu0 0.0
        %2899 = vmatpush1.xpose.msra.mxu0 0.0
        %2900 = vmatprep.subr.mxu0 0.0
        %2901 = vmatpush1.xpose.msra.mxu0 0.0
        %2902 = vmatprep.subr.mxu0 0.0
        %2903 = vmatpush1.xpose.msra.mxu0 0.0
        %2904 = vmatprep.subr.mxu0 0.0
        %2905 = vmatpush1.xpose.msra.mxu0 0.0
        %2906 = vmatprep.subr.mxu0 0.0
        %2907 = vmatpush1.xpose.msra.mxu0 0.0
        %2908 = vmatprep.subr.mxu0 0.0
        %2909 = vmatpush1.xpose.msra.mxu0 0.0
        %2910 = vmatprep.subr.mxu0 0.0
        %2911 = vmatpush1.xpose.msra.mxu0 0.0
        %2912 = vmatprep.subr.mxu0 0.0
        %2913 = vmatpush1.xpose.msra.mxu0 0.0
        %2914 = vmatprep.subr.mxu0 0.0
        %2915 = vmatpush1.xpose.msra.mxu0 0.0
        %2916 = vmatprep.subr.mxu0 0.0
        %2917 = vmatpush1.xpose.msra.mxu0 0.0
        %2918 = vmatprep.subr.mxu0 0.0
        %2919 = vmatpush1.xpose.msra.mxu0 0.0
        %2920 = vmatprep.subr.mxu0 0.0
        %2921 = vmatpush1.xpose.msra.mxu0 0.0
        %2922 = vmatprep.subr.mxu0 0.0
        %2923 = vmatpush1.xpose.msra.mxu0 0.0
        %2924 = vmatprep.subr.mxu0 0.0
        %2925 = vmatpush1.xpose.msra.mxu0 0.0
        %2926 = vmatprep.subr.mxu0 0.0
        %2927 = vmatpush1.xpose.msra.mxu0 0.0
        %2928 = vmatprep.subr.mxu0 0.0
        %2929 = vmatpush1.xpose.msra.mxu0 0.0
        %2930 = vmatprep.subr.mxu0 0.0
        %2931 = vmatpush1.xpose.msra.mxu0 0.0
        %2932 = vmatprep.subr.mxu0 0.0
        %2933 = vmatpush1.xpose.msra.mxu0 0.0
        %2934 = vmatprep.subr.mxu0 0.0
        %2935 = vmatpush1.xpose.msra.mxu0 0.0
        %2936 = vmatprep.subr.mxu0 0.0
        %2937 = vmatpush1.xpose.msra.mxu0 0.0
        %2938 = vmatprep.mubr.f32.mxu0 0.0
        %2939 = vmatmul.mubr.f32.gmra.mrb[0].mxu0 %v2866
        %v2940 = vpop.f32.mrb[0].mxu0
        %v2941 = vadd.f32 0.0, %v2940
        %v2942 = vpop.f32.mrb[0].mxu0
        %2943 = vmatprep.mubr.f32.mxu0 0.0
        %2944 = vmatmul.mubr.f32.gmra.mrb[0].mxu0 %v2868
        %v2945 = vpop.f32.mrb[0].mxu0
        %v2946 = vadd.f32 0.0, %v2945
        %v2947 = vpop.f32.mrb[0].mxu0
        %2948 = vdwg.mxu0
        %v2949 = vmul.f32 %v2941, 0.35355338
        %v2950 = vmul.f32 %v2946, 0.35355338
        %vm2951 = vcmask 130048
        %v2952 = vsel %vm2951, %v2949, -inf
        %2953 = vmax.xlane.f32.xlu0 %v2952
        %v2954 = vpop.xlane.xlu0 %2953
        %v2955 = vsel %vm2951, %v2950, -inf
        %2956 = vmax.xlane.f32.xlu0 %v2955
        %v2957 = vpop.xlane.xlu0 %2956
        %v2958 = vsub.f32 %v2949, %v2954
        %v2959 = vsub.f32 %v2950, %v2957
        %v2960 = vmul.f32 %v2958, 1.442695
        %v2961 = vpow.pop %v2960
        %v2962 = vmul.f32 %v2959, 1.442695
        %v2963 = vpow.pop %v2962
        %v2964 = vsel %vm2951, %v2961, 0.0
        %2965 = vadd.xlane.f32.xlu0 %v2964
        %v2966 = vpop.xlane.xlu0 %2965
        %v2967 = vsel %vm2951, %v2963, 0.0
        %2968 = vadd.xlane.f32.xlu0 %v2967
        %v2969 = vpop.xlane.xlu0 %2968
        %v2970 = vrcp.pop %v2966
        %v2971 = vrcp.pop %v2969
        %v2972 = vmul.f32 %v2961, %v2970
        %v2973 = vmul.f32 %v2963, %v2971
        %v2975 = vsel %vm2951, %v2972, 0
        %v2978 = vsel %vm2951, %v2973, 0
        %2980 = vmatprep.subr.mxu0 0.0
        %2981 = vmatpush1.msra.mxu0 %v2851
        %2982 = vmatprep.subr.mxu0 0.0
        %2983 = vmatpush1.msra.mxu0 %v2856
        %2984 = vmatprep.subr.mxu0 0.0
        %2985 = vmatpush1.msra.mxu0 0.0
        %2986 = vmatprep.subr.mxu0 0.0
        %2987 = vmatpush1.msra.mxu0 0.0
        %2988 = vmatprep.subr.mxu0 0.0
        %2989 = vmatpush1.msra.mxu0 0.0
        %2990 = vmatprep.subr.mxu0 0.0
        %2991 = vmatpush1.msra.mxu0 0.0
        %2992 = vmatprep.subr.mxu0 0.0
        %2993 = vmatpush1.msra.mxu0 0.0
        %2994 = vmatprep.subr.mxu0 0.0
        %2995 = vmatpush1.msra.mxu0 0.0
        %2996 = vmatprep.subr.mxu0 0.0
        %2997 = vmatpush1.msra.mxu0 0.0
        %2998 = vmatprep.subr.mxu0 0.0
        %2999 = vmatpush1.msra.mxu0 0.0
        %3000 = vmatprep.subr.mxu0 0.0
        %3001 = vmatpush1.msra.mxu0 0.0
        %3002 = vmatprep.subr.mxu0 0.0
        %3003 = vmatpush1.msra.mxu0 0.0
        %3004 = vmatprep.subr.mxu0 0.0
        %3005 = vmatpush1.msra.mxu0 0.0
        %3006 = vmatprep.subr.mxu0 0.0
        %3007 = vmatpush1.msra.mxu0 0.0
        %3008 = vmatprep.subr.mxu0 0.0
        %3009 = vmatpush1.msra.mxu0 0.0
        %3010 = vmatprep.subr.mxu0 0.0
        %3011 = vmatpush1.msra.mxu0 0.0
        %3012 = vmatprep.subr.mxu0 0.0
        %3013 = vmatpush1.msra.mxu0 0.0
        %3014 = vmatprep.subr.mxu0 0.0
        %3015 = vmatpush1.msra.mxu0 0.0
        %3016 = vmatprep.subr.mxu0 0.0
        %3017 = vmatpush1.msra.mxu0 0.0
        %3018 = vmatprep.subr.mxu0 0.0
        %3019 = vmatpush1.msra.mxu0 0.0
        %3020 = vmatprep.subr.mxu0 0.0
        %3021 = vmatpush1.msra.mxu0 0.0
        %3022 = vmatprep.subr.mxu0 0.0
        %3023 = vmatpush1.msra.mxu0 0.0
        %3024 = vmatprep.subr.mxu0 0.0
        %3025 = vmatpush1.msra.mxu0 0.0
        %3026 = vmatprep.subr.mxu0 0.0
        %3027 = vmatpush1.msra.mxu0 0.0
        %3028 = vmatprep.subr.mxu0 0.0
        %3029 = vmatpush1.msra.mxu0 0.0
        %3030 = vmatprep.subr.mxu0 0.0
        %3031 = vmatpush1.msra.mxu0 0.0
        %3032 = vmatprep.subr.mxu0 0.0
        %3033 = vmatpush1.msra.mxu0 0.0
        %3034 = vmatprep.subr.mxu0 0.0
        %3035 = vmatpush1.msra.mxu0 0.0
        %3036 = vmatprep.subr.mxu0 0.0
        %3037 = vmatpush1.msra.mxu0 0.0
        %3038 = vmatprep.subr.mxu0 0.0
        %3039 = vmatpush1.msra.mxu0 0.0
        %3040 = vmatprep.subr.mxu0 0.0
        %3041 = vmatpush1.msra.mxu0 0.0
        %3042 = vmatprep.subr.mxu0 0.0
        %3043 = vmatpush1.msra.mxu0 0.0
        %3044 = vmatprep.mubr.f32.mxu0 0.0
        %3045 = vmatmul.mubr.f32.gmra.mrb[0].mxu0 %v2975
        %v3046 = vpop.f32.mrb[0].mxu0
        %v3047 = vadd.f32 0.0, %v3046
        %v3048 = vpop.f32.mrb[0].mxu0
        %3049 = vmatprep.mubr.f32.mxu0 0.0
        %3050 = vmatmul.mubr.f32.gmra.mrb[0].mxu0 %v2978
        %v3051 = vpop.f32.mrb[0].mxu0
        %v3052 = vadd.f32 0.0, %v3051
        %v3053 = vpop.f32.mrb[0].mxu0
        %3054 = vdwg.mxu0
        %3055 = vrot.lane.b32.xlu0 %v2764, 120
        %v3056 = vpop.permute.xlu0 %3055
        %3057 = vrot.lane.b32.xlu0 %v2769, 120
        %v3058 = vpop.permute.xlu0 %3057
        %3059 = vrot.lane.b32.xlu0 %v2764, 88
        %v3060 = vpop.permute.xlu0 %3059
        %3061 = vrot.lane.b32.xlu0 %v2769, 88
        %v3062 = vpop.permute.xlu0 %3061
        %v3063 = vsel %vm2865, %v3056, 0
        %v3065 = vsel %vm2865, %v3058, 0
        %v3067 = vsel %vm2865, %v3060, 0
        %v3069 = vsel %vm2865, %v3062, 0
        %3071 = vmatprep.subr.mxu0 0.0
        %3072 = vmatpush1.xpose.msra.mxu0 %v3067
        %3073 = vmatprep.subr.mxu0 0.0
        %3074 = vmatpush1.xpose.msra.mxu0 %v3069
        %3075 = vmatprep.subr.mxu0 0.0
        %3076 = vmatpush1.xpose.msra.mxu0 0.0
        %3077 = vmatprep.subr.mxu0 0.0
        %3078 = vmatpush1.xpose.msra.mxu0 0.0
        %3079 = vmatprep.subr.mxu0 0.0
        %3080 = vmatpush1.xpose.msra.mxu0 0.0
        %3081 = vmatprep.subr.mxu0 0.0
        %3082 = vmatpush1.xpose.msra.mxu0 0.0
        %3083 = vmatprep.subr.mxu0 0.0
        %3084 = vmatpush1.xpose.msra.mxu0 0.0
        %3085 = vmatprep.subr.mxu0 0.0
        %3086 = vmatpush1.xpose.msra.mxu0 0.0
        %3087 = vmatprep.subr.mxu0 0.0
        %3088 = vmatpush1.xpose.msra.mxu0 0.0
        %3089 = vmatprep.subr.mxu0 0.0
        %3090 = vmatpush1.xpose.msra.mxu0 0.0
        %3091 = vmatprep.subr.mxu0 0.0
        %3092 = vmatpush1.xpose.msra.mxu0 0.0
        %3093 = vmatprep.subr.mxu0 0.0
        %3094 = vmatpush1.xpose.msra.mxu0 0.0
        %3095 = vmatprep.subr.mxu0 0.0
        %3096 = vmatpush1.xpose.msra.mxu0 0.0
        %3097 = vmatprep.subr.mxu0 0.0
        %3098 = vmatpush1.xpose.msra.mxu0 0.0
        %3099 = vmatprep.subr.mxu0 0.0
        %3100 = vmatpush1.xpose.msra.mxu0 0.0
        %3101 = vmatprep.subr.mxu0 0.0
        %3102 = vmatpush1.xpose.msra.mxu0 0.0
        %3103 = vmatprep.subr.mxu0 0.0
        %3104 = vmatpush1.xpose.msra.mxu0 0.0
        %3105 = vmatprep.subr.mxu0 0.0
        %3106 = vmatpush1.xpose.msra.mxu0 0.0
        %3107 = vmatprep.subr.mxu0 0.0
        %3108 = vmatpush1.xpose.msra.mxu0 0.0
        %3109 = vmatprep.subr.mxu0 0.0
        %3110 = vmatpush1.xpose.msra.mxu0 0.0
        %3111 = vmatprep.subr.mxu0 0.0
        %3112 = vmatpush1.xpose.msra.mxu0 0.0
        %3113 = vmatprep.subr.mxu0 0.0
        %3114 = vmatpush1.xpose.msra.mxu0 0.0
        %3115 = vmatprep.subr.mxu0 0.0
        %3116 = vmatpush1.xpose.msra.mxu0 0.0
        %3117 = vmatprep.subr.mxu0 0.0
        %3118 = vmatpush1.xpose.msra.mxu0 0.0
        %3119 = vmatprep.subr.mxu0 0.0
        %3120 = vmatpush1.xpose.msra.mxu0 0.0
        %3121 = vmatprep.subr.mxu0 0.0
        %3122 = vmatpush1.xpose.msra.mxu0 0.0
        %3123 = vmatprep.subr.mxu0 0.0
        %3124 = vmatpush1.xpose.msra.mxu0 0.0
        %3125 = vmatprep.subr.mxu0 0.0
        %3126 = vmatpush1.xpose.msra.mxu0 0.0
        %3127 = vmatprep.subr.mxu0 0.0
        %3128 = vmatpush1.xpose.msra.mxu0 0.0
        %3129 = vmatprep.subr.mxu0 0.0
        %3130 = vmatpush1.xpose.msra.mxu0 0.0
        %3131 = vmatprep.subr.mxu0 0.0
        %3132 = vmatpush1.xpose.msra.mxu0 0.0
        %3133 = vmatprep.subr.mxu0 0.0
        %3134 = vmatpush1.xpose.msra.mxu0 0.0
        %3135 = vmatprep.mubr.f32.mxu0 0.0
        %3136 = vmatmul.mubr.f32.gmra.mrb[0].mxu0 %v3063
        %v3137 = vpop.f32.mrb[0].mxu0
        %v3138 = vadd.f32 0.0, %v3137
        %v3139 = vpop.f32.mrb[0].mxu0
        %3140 = vmatprep.mubr.f32.mxu0 0.0
        %3141 = vmatmul.mubr.f32.gmra.mrb[0].mxu0 %v3065
        %v3142 = vpop.f32.mrb[0].mxu0
        %v3143 = vadd.f32 0.0, %v3142
        %v3144 = vpop.f32.mrb[0].mxu0
        %3145 = vdwg.mxu0
        %v3146 = vmul.f32 %v3138, 0.35355338
        %v3147 = vmul.f32 %v3143, 0.35355338
        %v3148 = vsel %vm2951, %v3146, -inf
        %3149 = vmax.xlane.f32.xlu0 %v3148
        %v3150 = vpop.xlane.xlu0 %3149
        %v3151 = vsel %vm2951, %v3147, -inf
        %3152 = vmax.xlane.f32.xlu0 %v3151
        %v3153 = vpop.xlane.xlu0 %3152
        %v3154 = vsub.f32 %v3146, %v3150
        %v3155 = vsub.f32 %v3147, %v3153
        %v3156 = vmul.f32 %v3154, 1.442695
        %v3157 = vpow.pop %v3156
        %v3158 = vmul.f32 %v3155, 1.442695
        %v3159 = vpow.pop %v3158
        %v3160 = vsel %vm2951, %v3157, 0.0
        %3161 = vadd.xlane.f32.xlu0 %v3160
        %v3162 = vpop.xlane.xlu0 %3161
        %v3163 = vsel %vm2951, %v3159, 0.0
        %3164 = vadd.xlane.f32.xlu0 %v3163
        %v3165 = vpop.xlane.xlu0 %3164
        %v3166 = vrcp.pop %v3162
        %v3167 = vrcp.pop %v3165
        %v3168 = vmul.f32 %v3157, %v3166
        %v3169 = vmul.f32 %v3159, %v3167
        %3172 = vrot.lane.b32.xlu0 %v2851, 120
        %v3173 = vpop.permute.xlu0 %3172
        %3174 = vrot.lane.b32.xlu0 %v2856, 120
        %v3175 = vpop.permute.xlu0 %3174
        %v3179 = vsel %vm2951, %v3168, 0
        %v3182 = vsel %vm2951, %v3169, 0
        %3184 = vmatprep.subr.mxu0 0.0
        %3185 = vmatpush1.msra.mxu0 %v3173
        %3186 = vmatprep.subr.mxu0 0.0
        %3187 = vmatpush1.msra.mxu0 %v3175
        %3188 = vmatprep.subr.mxu0 0.0
        %3189 = vmatpush1.msra.mxu0 0.0
        %3190 = vmatprep.subr.mxu0 0.0
        %3191 = vmatpush1.msra.mxu0 0.0
        %3192 = vmatprep.subr.mxu0 0.0
        %3193 = vmatpush1.msra.mxu0 0.0
        %3194 = vmatprep.subr.mxu0 0.0
        %3195 = vmatpush1.msra.mxu0 0.0
        %3196 = vmatprep.subr.mxu0 0.0
        %3197 = vmatpush1.msra.mxu0 0.0
        %3198 = vmatprep.subr.mxu0 0.0
        %3199 = vmatpush1.msra.mxu0 0.0
        %3200 = vmatprep.subr.mxu0 0.0
        %3201 = vmatpush1.msra.mxu0 0.0
        %3202 = vmatprep.subr.mxu0 0.0
        %3203 = vmatpush1.msra.mxu0 0.0
        %3204 = vmatprep.subr.mxu0 0.0
        %3205 = vmatpush1.msra.mxu0 0.0
        %3206 = vmatprep.subr.mxu0 0.0
        %3207 = vmatpush1.msra.mxu0 0.0
        %3208 = vmatprep.subr.mxu0 0.0
        %3209 = vmatpush1.msra.mxu0 0.0
        %3210 = vmatprep.subr.mxu0 0.0
        %3211 = vmatpush1.msra.mxu0 0.0
        %3212 = vmatprep.subr.mxu0 0.0
        %3213 = vmatpush1.msra.mxu0 0.0
        %3214 = vmatprep.subr.mxu0 0.0
        %3215 = vmatpush1.msra.mxu0 0.0
        %3216 = vmatprep.subr.mxu0 0.0
        %3217 = vmatpush1.msra.mxu0 0.0
        %3218 = vmatprep.subr.mxu0 0.0
        %3219 = vmatpush1.msra.mxu0 0.0
        %3220 = vmatprep.subr.mxu0 0.0
        %3221 = vmatpush1.msra.mxu0 0.0
        %3222 = vmatprep.subr.mxu0 0.0
        %3223 = vmatpush1.msra.mxu0 0.0
        %3224 = vmatprep.subr.mxu0 0.0
        %3225 = vmatpush1.msra.mxu0 0.0
        %3226 = vmatprep.subr.mxu0 0.0
        %3227 = vmatpush1.msra.mxu0 0.0
        %3228 = vmatprep.subr.mxu0 0.0
        %3229 = vmatpush1.msra.mxu0 0.0
        %3230 = vmatprep.subr.mxu0 0.0
        %3231 = vmatpush1.msra.mxu0 0.0
        %3232 = vmatprep.subr.mxu0 0.0
        %3233 = vmatpush1.msra.mxu0 0.0
        %3234 = vmatprep.subr.mxu0 0.0
        %3235 = vmatpush1.msra.mxu0 0.0
        %3236 = vmatprep.subr.mxu0 0.0
        %3237 = vmatpush1.msra.mxu0 0.0
        %3238 = vmatprep.subr.mxu0 0.0
        %3239 = vmatpush1.msra.mxu0 0.0
        %3240 = vmatprep.subr.mxu0 0.0
        %3241 = vmatpush1.msra.mxu0 0.0
        %3242 = vmatprep.subr.mxu0 0.0
        %3243 = vmatpush1.msra.mxu0 0.0
        %3244 = vmatprep.subr.mxu0 0.0
        %3245 = vmatpush1.msra.mxu0 0.0
        %3246 = vmatprep.subr.mxu0 0.0
        %3247 = vmatpush1.msra.mxu0 0.0
        %3248 = vmatprep.mubr.f32.mxu0 0.0
        %3249 = vmatmul.mubr.f32.gmra.mrb[0].mxu0 %v3179
        %v3250 = vpop.f32.mrb[0].mxu0
        %v3251 = vadd.f32 0.0, %v3250
        %v3252 = vpop.f32.mrb[0].mxu0
        %3253 = vmatprep.mubr.f32.mxu0 0.0
        %3254 = vmatmul.mubr.f32.gmra.mrb[0].mxu0 %v3182
        %v3255 = vpop.f32.mrb[0].mxu0
        %v3256 = vadd.f32 0.0, %v3255
        %v3257 = vpop.f32.mrb[0].mxu0
        %3258 = vdwg.mxu0
        %v3260 = vsel %vm2865, %v3251, 0
        %v3263 = vsel %vm2865, %v3256, 0
        %3265 = vmatprep.subr.mxu0 0.0
        %3266 = vmatpush1.msra.mxu0 %v2637
        %3267 = vmatprep.subr.mxu0 0.0
        %3268 = vmatpush1.msra.mxu0 0.0
        %3269 = vmatprep.subr.mxu0 0.0
        %3270 = vmatpush1.msra.mxu0 0.0
        %3271 = vmatprep.subr.mxu0 0.0
        %3272 = vmatpush1.msra.mxu0 0.0
        %3273 = vmatprep.subr.mxu0 0.0
        %3274 = vmatpush1.msra.mxu0 0.0
        %3275 = vmatprep.subr.mxu0 0.0
        %3276 = vmatpush1.msra.mxu0 0.0
        %3277 = vmatprep.subr.mxu0 0.0
        %3278 = vmatpush1.msra.mxu0 0.0
        %3279 = vmatprep.subr.mxu0 0.0
        %3280 = vmatpush1.msra.mxu0 0.0
        %3281 = vmatprep.subr.mxu0 0.0
        %3282 = vmatpush1.msra.mxu0 0.0
        %3283 = vmatprep.subr.mxu0 0.0
        %3284 = vmatpush1.msra.mxu0 0.0
        %3285 = vmatprep.subr.mxu0 0.0
        %3286 = vmatpush1.msra.mxu0 0.0
        %3287 = vmatprep.subr.mxu0 0.0
        %3288 = vmatpush1.msra.mxu0 0.0
        %3289 = vmatprep.subr.mxu0 0.0
        %3290 = vmatpush1.msra.mxu0 0.0
        %3291 = vmatprep.subr.mxu0 0.0
        %3292 = vmatpush1.msra.mxu0 0.0
        %3293 = vmatprep.subr.mxu0 0.0
        %3294 = vmatpush1.msra.mxu0 0.0
        %3295 = vmatprep.subr.mxu0 0.0
        %3296 = vmatpush1.msra.mxu0 0.0
        %3297 = vmatprep.subr.mxu0 0.0
        %3298 = vmatpush1.msra.mxu0 0.0
        %3299 = vmatprep.subr.mxu0 0.0
        %3300 = vmatpush1.msra.mxu0 0.0
        %3301 = vmatprep.subr.mxu0 0.0
        %3302 = vmatpush1.msra.mxu0 0.0
        %3303 = vmatprep.subr.mxu0 0.0
        %3304 = vmatpush1.msra.mxu0 0.0
        %3305 = vmatprep.subr.mxu0 0.0
        %3306 = vmatpush1.msra.mxu0 0.0
        %3307 = vmatprep.subr.mxu0 0.0
        %3308 = vmatpush1.msra.mxu0 0.0
        %3309 = vmatprep.subr.mxu0 0.0
        %3310 = vmatpush1.msra.mxu0 0.0
        %3311 = vmatprep.subr.mxu0 0.0
        %3312 = vmatpush1.msra.mxu0 0.0
        %3313 = vmatprep.subr.mxu0 0.0
        %3314 = vmatpush1.msra.mxu0 0.0
        %3315 = vmatprep.subr.mxu0 0.0
        %3316 = vmatpush1.msra.mxu0 0.0
        %3317 = vmatprep.subr.mxu0 0.0
        %3318 = vmatpush1.msra.mxu0 0.0
        %3319 = vmatprep.subr.mxu0 0.0
        %3320 = vmatpush1.msra.mxu0 0.0
        %3321 = vmatprep.subr.mxu0 0.0
        %3322 = vmatpush1.msra.mxu0 0.0
        %3323 = vmatprep.subr.mxu0 0.0
        %3324 = vmatpush1.msra.mxu0 0.0
        %3325 = vmatprep.subr.mxu0 0.0
        %3326 = vmatpush1.msra.mxu0 0.0
        %3327 = vmatprep.subr.mxu0 0.0
        %3328 = vmatpush1.msra.mxu0 0.0
        %3329 = vmatprep.mubr.f32.mxu0 0.0
        %3330 = vmatmul.mubr.f32.gmra.mrb[0].mxu0 %v3260
        %v3331 = vpop.f32.mrb[0].mxu0
        %v3332 = vadd.f32 0.0, %v3331
        %v3333 = vpop.f32.mrb[0].mxu0
        %3334 = vmatprep.mubr.f32.mxu0 0.0
        %3335 = vmatmul.mubr.f32.gmra.mrb[0].mxu0 %v3263
        %v3336 = vpop.f32.mrb[0].mxu0
        %v3337 = vadd.f32 0.0, %v3336
        %v3338 = vpop.f32.mrb[0].mxu0
        %3339 = vdwg.mxu0
        %v3341 = vsel %vm2865, %v3047, 0
        %v3344 = vsel %vm2865, %v3052, 0
        %3346 = vmatprep.subr.mxu0 0.0
        %3347 = vmatpush1.msra.mxu0 %v2636
        %3348 = vmatprep.subr.mxu0 0.0
        %3349 = vmatpush1.msra.mxu0 0.0
        %3350 = vmatprep.subr.mxu0 0.0
        %3351 = vmatpush1.msra.mxu0 0.0
        %3352 = vmatprep.subr.mxu0 0.0
        %3353 = vmatpush1.msra.mxu0 0.0
        %3354 = vmatprep.subr.mxu0 0.0
        %3355 = vmatpush1.msra.mxu0 0.0
        %3356 = vmatprep.subr.mxu0 0.0
        %3357 = vmatpush1.msra.mxu0 0.0
        %3358 = vmatprep.subr.mxu0 0.0
        %3359 = vmatpush1.msra.mxu0 0.0
        %3360 = vmatprep.subr.mxu0 0.0
        %3361 = vmatpush1.msra.mxu0 0.0
        %3362 = vmatprep.subr.mxu0 0.0
        %3363 = vmatpush1.msra.mxu0 0.0
        %3364 = vmatprep.subr.mxu0 0.0
        %3365 = vmatpush1.msra.mxu0 0.0
        %3366 = vmatprep.subr.mxu0 0.0
        %3367 = vmatpush1.msra.mxu0 0.0
        %3368 = vmatprep.subr.mxu0 0.0
        %3369 = vmatpush1.msra.mxu0 0.0
        %3370 = vmatprep.subr.mxu0 0.0
        %3371 = vmatpush1.msra.mxu0 0.0
        %3372 = vmatprep.subr.mxu0 0.0
        %3373 = vmatpush1.msra.mxu0 0.0
        %3374 = vmatprep.subr.mxu0 0.0
        %3375 = vmatpush1.msra.mxu0 0.0
        %3376 = vmatprep.subr.mxu0 0.0
        %3377 = vmatpush1.msra.mxu0 0.0
        %3378 = vmatprep.subr.mxu0 0.0
        %3379 = vmatpush1.msra.mxu0 0.0
        %3380 = vmatprep.subr.mxu0 0.0
        %3381 = vmatpush1.msra.mxu0 0.0
        %3382 = vmatprep.subr.mxu0 0.0
        %3383 = vmatpush1.msra.mxu0 0.0
        %3384 = vmatprep.subr.mxu0 0.0
        %3385 = vmatpush1.msra.mxu0 0.0
        %3386 = vmatprep.subr.mxu0 0.0
        %3387 = vmatpush1.msra.mxu0 0.0
        %3388 = vmatprep.subr.mxu0 0.0
        %3389 = vmatpush1.msra.mxu0 0.0
        %3390 = vmatprep.subr.mxu0 0.0
        %3391 = vmatpush1.msra.mxu0 0.0
        %3392 = vmatprep.subr.mxu0 0.0
        %3393 = vmatpush1.msra.mxu0 0.0
        %3394 = vmatprep.subr.mxu0 0.0
        %3395 = vmatpush1.msra.mxu0 0.0
        %3396 = vmatprep.subr.mxu0 0.0
        %3397 = vmatpush1.msra.mxu0 0.0
        %3398 = vmatprep.subr.mxu0 0.0
        %3399 = vmatpush1.msra.mxu0 0.0
        %3400 = vmatprep.subr.mxu0 0.0
        %3401 = vmatpush1.msra.mxu0 0.0
        %3402 = vmatprep.subr.mxu0 0.0
        %3403 = vmatpush1.msra.mxu0 0.0
        %3404 = vmatprep.subr.mxu0 0.0
        %3405 = vmatpush1.msra.mxu0 0.0
        %3406 = vmatprep.subr.mxu0 0.0
        %3407 = vmatpush1.msra.mxu0 0.0
        %3408 = vmatprep.subr.mxu0 0.0
        %3409 = vmatpush1.msra.mxu0 0.0
        %3410 = vmatprep.mubr.f32.mxu0 0.0
        %3411 = vmatmul.mubr.f32.gmra.mrb[0].mxu0 %v3341
        %v3412 = vpop.f32.mrb[0].mxu0
        %v3413 = vadd.f32 %v3332, %v3412
        %v3414 = vpop.f32.mrb[0].mxu0
        %3415 = vmatprep.mubr.f32.mxu0 0.0
        %3416 = vmatmul.mubr.f32.gmra.mrb[0].mxu0 %v3344
        %v3417 = vpop.f32.mrb[0].mxu0
        %v3418 = vadd.f32 %v3337, %v3417
        %v3419 = vpop.f32.mrb[0].mxu0
        %3420 = vdwg.mxu0
        %3421 = vrot.lane.b32.xlu0 %v2764, 112
        %v3422 = vpop.permute.xlu0 %3421
        %3423 = vrot.lane.b32.xlu0 %v2769, 112
        %v3424 = vpop.permute.xlu0 %3423
        %3425 = vrot.lane.b32.xlu0 %v2764, 80
        %v3426 = vpop.permute.xlu0 %3425
        %3427 = vrot.lane.b32.xlu0 %v2769, 80
        %v3428 = vpop.permute.xlu0 %3427
        %v3429 = vsel %vm2865, %v3422, 0
        %v3431 = vsel %vm2865, %v3424, 0
        %v3433 = vsel %vm2865, %v3426, 0
        %v3435 = vsel %vm2865, %v3428, 0
        %3437 = vmatprep.subr.mxu0 0.0
        %3438 = vmatpush1.xpose.msra.mxu0 %v3433
        %3439 = vmatprep.subr.mxu0 0.0
        %3440 = vmatpush1.xpose.msra.mxu0 %v3435
        %3441 = vmatprep.subr.mxu0 0.0
        %3442 = vmatpush1.xpose.msra.mxu0 0.0
        %3443 = vmatprep.subr.mxu0 0.0
        %3444 = vmatpush1.xpose.msra.mxu0 0.0
        %3445 = vmatprep.subr.mxu0 0.0
        %3446 = vmatpush1.xpose.msra.mxu0 0.0
        %3447 = vmatprep.subr.mxu0 0.0
        %3448 = vmatpush1.xpose.msra.mxu0 0.0
        %3449 = vmatprep.subr.mxu0 0.0
        %3450 = vmatpush1.xpose.msra.mxu0 0.0
        %3451 = vmatprep.subr.mxu0 0.0
        %3452 = vmatpush1.xpose.msra.mxu0 0.0
        %3453 = vmatprep.subr.mxu0 0.0
        %3454 = vmatpush1.xpose.msra.mxu0 0.0
        %3455 = vmatprep.subr.mxu0 0.0
        %3456 = vmatpush1.xpose.msra.mxu0 0.0
        %3457 = vmatprep.subr.mxu0 0.0
        %3458 = vmatpush1.xpose.msra.mxu0 0.0
        %3459 = vmatprep.subr.mxu0 0.0
        %3460 = vmatpush1.xpose.msra.mxu0 0.0
        %3461 = vmatprep.subr.mxu0 0.0
        %3462 = vmatpush1.xpose.msra.mxu0 0.0
        %3463 = vmatprep.subr.mxu0 0.0
        %3464 = vmatpush1.xpose.msra.mxu0 0.0
        %3465 = vmatprep.subr.mxu0 0.0
        %3466 = vmatpush1.xpose.msra.mxu0 0.0
        %3467 = vmatprep.subr.mxu0 0.0
        %3468 = vmatpush1.xpose.msra.mxu0 0.0
        %3469 = vmatprep.subr.mxu0 0.0
        %3470 = vmatpush1.xpose.msra.mxu0 0.0
        %3471 = vmatprep.subr.mxu0 0.0
        %3472 = vmatpush1.xpose.msra.mxu0 0.0
        %3473 = vmatprep.subr.mxu0 0.0
        %3474 = vmatpush1.xpose.msra.mxu0 0.0
        %3475 = vmatprep.subr.mxu0 0.0
        %3476 = vmatpush1.xpose.msra.mxu0 0.0
        %3477 = vmatprep.subr.mxu0 0.0
        %3478 = vmatpush1.xpose.msra.mxu0 0.0
        %3479 = vmatprep.subr.mxu0 0.0
        %3480 = vmatpush1.xpose.msra.mxu0 0.0
        %3481 = vmatprep.subr.mxu0 0.0
        %3482 = vmatpush1.xpose.msra.mxu0 0.0
        %3483 = vmatprep.subr.mxu0 0.0
        %3484 = vmatpush1.xpose.msra.mxu0 0.0
        %3485 = vmatprep.subr.mxu0 0.0
        %3486 = vmatpush1.xpose.msra.mxu0 0.0
        %3487 = vmatprep.subr.mxu0 0.0
        %3488 = vmatpush1.xpose.msra.mxu0 0.0
        %3489 = vmatprep.subr.mxu0 0.0
        %3490 = vmatpush1.xpose.msra.mxu0 0.0
        %3491 = vmatprep.subr.mxu0 0.0
        %3492 = vmatpush1.xpose.msra.mxu0 0.0
        %3493 = vmatprep.subr.mxu0 0.0
        %3494 = vmatpush1.xpose.msra.mxu0 0.0
        %3495 = vmatprep.subr.mxu0 0.0
        %3496 = vmatpush1.xpose.msra.mxu0 0.0
        %3497 = vmatprep.subr.mxu0 0.0
        %3498 = vmatpush1.xpose.msra.mxu0 0.0
        %3499 = vmatprep.subr.mxu0 0.0
        %3500 = vmatpush1.xpose.msra.mxu0 0.0
        %3501 = vmatprep.mubr.f32.mxu0 0.0
        %3502 = vmatmul.mubr.f32.gmra.mrb[0].mxu0 %v3429
        %v3503 = vpop.f32.mrb[0].mxu0
        %v3504 = vadd.f32 0.0, %v3503
        %v3505 = vpop.f32.mrb[0].mxu0
        %3506 = vmatprep.mubr.f32.mxu0 0.0
        %3507 = vmatmul.mubr.f32.gmra.mrb[0].mxu0 %v3431
        %v3508 = vpop.f32.mrb[0].mxu0
        %v3509 = vadd.f32 0.0, %v3508
        %v3510 = vpop.f32.mrb[0].mxu0
        %3511 = vdwg.mxu0
        %v3512 = vmul.f32 %v3504, 0.35355338
        %v3513 = vmul.f32 %v3509, 0.35355338
        %v3514 = vsel %vm2951, %v3512, -inf
        %3515 = vmax.xlane.f32.xlu0 %v3514
        %v3516 = vpop.xlane.xlu0 %3515
        %v3517 = vsel %vm2951, %v3513, -inf
        %3518 = vmax.xlane.f32.xlu0 %v3517
        %v3519 = vpop.xlane.xlu0 %3518
        %v3520 = vsub.f32 %v3512, %v3516
        %v3521 = vsub.f32 %v3513, %v3519
        %v3522 = vmul.f32 %v3520, 1.442695
        %v3523 = vpow.pop %v3522
        %v3524 = vmul.f32 %v3521, 1.442695
        %v3525 = vpow.pop %v3524
        %v3526 = vsel %vm2951, %v3523, 0.0
        %3527 = vadd.xlane.f32.xlu0 %v3526
        %v3528 = vpop.xlane.xlu0 %3527
        %v3529 = vsel %vm2951, %v3525, 0.0
        %3530 = vadd.xlane.f32.xlu0 %v3529
        %v3531 = vpop.xlane.xlu0 %3530
        %v3532 = vrcp.pop %v3528
        %v3533 = vrcp.pop %v3531
        %v3534 = vmul.f32 %v3523, %v3532
        %v3535 = vmul.f32 %v3525, %v3533
        %3536 = vrot.lane.b32.xlu0 %v2851, 112
        %v3537 = vpop.permute.xlu0 %3536
        %3538 = vrot.lane.b32.xlu0 %v2856, 112
        %v3539 = vpop.permute.xlu0 %3538
        %v3543 = vsel %vm2951, %v3534, 0
        %v3546 = vsel %vm2951, %v3535, 0
        %3548 = vmatprep.subr.mxu0 0.0
        %3549 = vmatpush1.msra.mxu0 %v3537
        %3550 = vmatprep.subr.mxu0 0.0
        %3551 = vmatpush1.msra.mxu0 %v3539
        %3552 = vmatprep.subr.mxu0 0.0
        %3553 = vmatpush1.msra.mxu0 0.0
        %3554 = vmatprep.subr.mxu0 0.0
        %3555 = vmatpush1.msra.mxu0 0.0
        %3556 = vmatprep.subr.mxu0 0.0
        %3557 = vmatpush1.msra.mxu0 0.0
        %3558 = vmatprep.subr.mxu0 0.0
        %3559 = vmatpush1.msra.mxu0 0.0
        %3560 = vmatprep.subr.mxu0 0.0
        %3561 = vmatpush1.msra.mxu0 0.0
        %3562 = vmatprep.subr.mxu0 0.0
        %3563 = vmatpush1.msra.mxu0 0.0
        %3564 = vmatprep.subr.mxu0 0.0
        %3565 = vmatpush1.msra.mxu0 0.0
        %3566 = vmatprep.subr.mxu0 0.0
        %3567 = vmatpush1.msra.mxu0 0.0
        %3568 = vmatprep.subr.mxu0 0.0
        %3569 = vmatpush1.msra.mxu0 0.0
        %3570 = vmatprep.subr.mxu0 0.0
        %3571 = vmatpush1.msra.mxu0 0.0
        %3572 = vmatprep.subr.mxu0 0.0
        %3573 = vmatpush1.msra.mxu0 0.0
        %3574 = vmatprep.subr.mxu0 0.0
        %3575 = vmatpush1.msra.mxu0 0.0
        %3576 = vmatprep.subr.mxu0 0.0
        %3577 = vmatpush1.msra.mxu0 0.0
        %3578 = vmatprep.subr.mxu0 0.0
        %3579 = vmatpush1.msra.mxu0 0.0
        %3580 = vmatprep.subr.mxu0 0.0
        %3581 = vmatpush1.msra.mxu0 0.0
        %3582 = vmatprep.subr.mxu0 0.0
        %3583 = vmatpush1.msra.mxu0 0.0
        %3584 = vmatprep.subr.mxu0 0.0
        %3585 = vmatpush1.msra.mxu0 0.0
        %3586 = vmatprep.subr.mxu0 0.0
        %3587 = vmatpush1.msra.mxu0 0.0
        %3588 = vmatprep.subr.mxu0 0.0
        %3589 = vmatpush1.msra.mxu0 0.0
        %3590 = vmatprep.subr.mxu0 0.0
        %3591 = vmatpush1.msra.mxu0 0.0
        %3592 = vmatprep.subr.mxu0 0.0
        %3593 = vmatpush1.msra.mxu0 0.0
        %3594 = vmatprep.subr.mxu0 0.0
        %3595 = vmatpush1.msra.mxu0 0.0
        %3596 = vmatprep.subr.mxu0 0.0
        %3597 = vmatpush1.msra.mxu0 0.0
        %3598 = vmatprep.subr.mxu0 0.0
        %3599 = vmatpush1.msra.mxu0 0.0
        %3600 = vmatprep.subr.mxu0 0.0
        %3601 = vmatpush1.msra.mxu0 0.0
        %3602 = vmatprep.subr.mxu0 0.0
        %3603 = vmatpush1.msra.mxu0 0.0
        %3604 = vmatprep.subr.mxu0 0.0
        %3605 = vmatpush1.msra.mxu0 0.0
        %3606 = vmatprep.subr.mxu0 0.0
        %3607 = vmatpush1.msra.mxu0 0.0
        %3608 = vmatprep.subr.mxu0 0.0
        %3609 = vmatpush1.msra.mxu0 0.0
        %3610 = vmatprep.subr.mxu0 0.0
        %3611 = vmatpush1.msra.mxu0 0.0
        %3612 = vmatprep.mubr.f32.mxu0 0.0
        %3613 = vmatmul.mubr.f32.gmra.mrb[0].mxu0 %v3543
        %v3614 = vpop.f32.mrb[0].mxu0
        %v3615 = vadd.f32 0.0, %v3614
        %v3616 = vpop.f32.mrb[0].mxu0
        %3617 = vmatprep.mubr.f32.mxu0 0.0
        %3618 = vmatmul.mubr.f32.gmra.mrb[0].mxu0 %v3546
        %v3619 = vpop.f32.mrb[0].mxu0
        %v3620 = vadd.f32 0.0, %v3619
        %v3621 = vpop.f32.mrb[0].mxu0
        %3622 = vdwg.mxu0
        %v3624 = vsel %vm2865, %v3615, 0
        %v3627 = vsel %vm2865, %v3620, 0
        %3629 = vmatprep.subr.mxu0 0.0
        %3630 = vmatpush1.msra.mxu0 %v2638
        %3631 = vmatprep.subr.mxu0 0.0
        %3632 = vmatpush1.msra.mxu0 0.0
        %3633 = vmatprep.subr.mxu0 0.0
        %3634 = vmatpush1.msra.mxu0 0.0
        %3635 = vmatprep.subr.mxu0 0.0
        %3636 = vmatpush1.msra.mxu0 0.0
        %3637 = vmatprep.subr.mxu0 0.0
        %3638 = vmatpush1.msra.mxu0 0.0
        %3639 = vmatprep.subr.mxu0 0.0
        %3640 = vmatpush1.msra.mxu0 0.0
        %3641 = vmatprep.subr.mxu0 0.0
        %3642 = vmatpush1.msra.mxu0 0.0
        %3643 = vmatprep.subr.mxu0 0.0
        %3644 = vmatpush1.msra.mxu0 0.0
        %3645 = vmatprep.subr.mxu0 0.0
        %3646 = vmatpush1.msra.mxu0 0.0
        %3647 = vmatprep.subr.mxu0 0.0
        %3648 = vmatpush1.msra.mxu0 0.0
        %3649 = vmatprep.subr.mxu0 0.0
        %3650 = vmatpush1.msra.mxu0 0.0
        %3651 = vmatprep.subr.mxu0 0.0
        %3652 = vmatpush1.msra.mxu0 0.0
        %3653 = vmatprep.subr.mxu0 0.0
        %3654 = vmatpush1.msra.mxu0 0.0
        %3655 = vmatprep.subr.mxu0 0.0
        %3656 = vmatpush1.msra.mxu0 0.0
        %3657 = vmatprep.subr.mxu0 0.0
        %3658 = vmatpush1.msra.mxu0 0.0
        %3659 = vmatprep.subr.mxu0 0.0
        %3660 = vmatpush1.msra.mxu0 0.0
        %3661 = vmatprep.subr.mxu0 0.0
        %3662 = vmatpush1.msra.mxu0 0.0
        %3663 = vmatprep.subr.mxu0 0.0
        %3664 = vmatpush1.msra.mxu0 0.0
        %3665 = vmatprep.subr.mxu0 0.0
        %3666 = vmatpush1.msra.mxu0 0.0
        %3667 = vmatprep.subr.mxu0 0.0
        %3668 = vmatpush1.msra.mxu0 0.0
        %3669 = vmatprep.subr.mxu0 0.0
        %3670 = vmatpush1.msra.mxu0 0.0
        %3671 = vmatprep.subr.mxu0 0.0
        %3672 = vmatpush1.msra.mxu0 0.0
        %3673 = vmatprep.subr.mxu0 0.0
        %3674 = vmatpush1.msra.mxu0 0.0
        %3675 = vmatprep.subr.mxu0 0.0
        %3676 = vmatpush1.msra.mxu0 0.0
        %3677 = vmatprep.subr.mxu0 0.0
        %3678 = vmatpush1.msra.mxu0 0.0
        %3679 = vmatprep.subr.mxu0 0.0
        %3680 = vmatpush1.msra.mxu0 0.0
        %3681 = vmatprep.subr.mxu0 0.0
        %3682 = vmatpush1.msra.mxu0 0.0
        %3683 = vmatprep.subr.mxu0 0.0
        %3684 = vmatpush1.msra.mxu0 0.0
        %3685 = vmatprep.subr.mxu0 0.0
        %3686 = vmatpush1.msra.mxu0 0.0
        %3687 = vmatprep.subr.mxu0 0.0
        %3688 = vmatpush1.msra.mxu0 0.0
        %3689 = vmatprep.subr.mxu0 0.0
        %3690 = vmatpush1.msra.mxu0 0.0
        %3691 = vmatprep.subr.mxu0 0.0
        %3692 = vmatpush1.msra.mxu0 0.0
        %3693 = vmatprep.mubr.f32.mxu0 0.0
        %3694 = vmatmul.mubr.f32.gmra.mrb[0].mxu0 %v3624
        %v3695 = vpop.f32.mrb[0].mxu0
        %v3696 = vadd.f32 0.0, %v3695
        %v3697 = vpop.f32.mrb[0].mxu0
        %3698 = vmatprep.mubr.f32.mxu0 0.0
        %3699 = vmatmul.mubr.f32.gmra.mrb[0].mxu0 %v3627
        %v3700 = vpop.f32.mrb[0].mxu0
        %v3701 = vadd.f32 0.0, %v3700
        %v3702 = vpop.f32.mrb[0].mxu0
        %3703 = vdwg.mxu0
        %v3704 = vadd.f32 %v3413, %v3696
        %v3705 = vadd.f32 %v3418, %v3701
        %3706 = vrot.lane.b32.xlu0 %v2764, 104
        %v3707 = vpop.permute.xlu0 %3706
        %3708 = vrot.lane.b32.xlu0 %v2769, 104
        %v3709 = vpop.permute.xlu0 %3708
        %3710 = vrot.lane.b32.xlu0 %v2764, 72
        %v3711 = vpop.permute.xlu0 %3710
        %3712 = vrot.lane.b32.xlu0 %v2769, 72
        %v3713 = vpop.permute.xlu0 %3712
        %v3714 = vsel %vm2865, %v3707, 0
        %v3716 = vsel %vm2865, %v3709, 0
        %v3718 = vsel %vm2865, %v3711, 0
        %v3720 = vsel %vm2865, %v3713, 0
        %3722 = vmatprep.subr.mxu0 0.0
        %3723 = vmatpush1.xpose.msra.mxu0 %v3718
        %3724 = vmatprep.subr.mxu0 0.0
        %3725 = vmatpush1.xpose.msra.mxu0 %v3720
        %3726 = vmatprep.subr.mxu0 0.0
        %3727 = vmatpush1.xpose.msra.mxu0 0.0
        %3728 = vmatprep.subr.mxu0 0.0
        %3729 = vmatpush1.xpose.msra.mxu0 0.0
        %3730 = vmatprep.subr.mxu0 0.0
        %3731 = vmatpush1.xpose.msra.mxu0 0.0
        %3732 = vmatprep.subr.mxu0 0.0
        %3733 = vmatpush1.xpose.msra.mxu0 0.0
        %3734 = vmatprep.subr.mxu0 0.0
        %3735 = vmatpush1.xpose.msra.mxu0 0.0
        %3736 = vmatprep.subr.mxu0 0.0
        %3737 = vmatpush1.xpose.msra.mxu0 0.0
        %3738 = vmatprep.subr.mxu0 0.0
        %3739 = vmatpush1.xpose.msra.mxu0 0.0
        %3740 = vmatprep.subr.mxu0 0.0
        %3741 = vmatpush1.xpose.msra.mxu0 0.0
        %3742 = vmatprep.subr.mxu0 0.0
        %3743 = vmatpush1.xpose.msra.mxu0 0.0
        %3744 = vmatprep.subr.mxu0 0.0
        %3745 = vmatpush1.xpose.msra.mxu0 0.0
        %3746 = vmatprep.subr.mxu0 0.0
        %3747 = vmatpush1.xpose.msra.mxu0 0.0
        %3748 = vmatprep.subr.mxu0 0.0
        %3749 = vmatpush1.xpose.msra.mxu0 0.0
        %3750 = vmatprep.subr.mxu0 0.0
        %3751 = vmatpush1.xpose.msra.mxu0 0.0
        %3752 = vmatprep.subr.mxu0 0.0
        %3753 = vmatpush1.xpose.msra.mxu0 0.0
        %3754 = vmatprep.subr.mxu0 0.0
        %3755 = vmatpush1.xpose.msra.mxu0 0.0
        %3756 = vmatprep.subr.mxu0 0.0
        %3757 = vmatpush1.xpose.msra.mxu0 0.0
        %3758 = vmatprep.subr.mxu0 0.0
        %3759 = vmatpush1.xpose.msra.mxu0 0.0
        %3760 = vmatprep.subr.mxu0 0.0
        %3761 = vmatpush1.xpose.msra.mxu0 0.0
        %3762 = vmatprep.subr.mxu0 0.0
        %3763 = vmatpush1.xpose.msra.mxu0 0.0
        %3764 = vmatprep.subr.mxu0 0.0
        %3765 = vmatpush1.xpose.msra.mxu0 0.0
        %3766 = vmatprep.subr.mxu0 0.0
        %3767 = vmatpush1.xpose.msra.mxu0 0.0
        %3768 = vmatprep.subr.mxu0 0.0
        %3769 = vmatpush1.xpose.msra.mxu0 0.0
        %3770 = vmatprep.subr.mxu0 0.0
        %3771 = vmatpush1.xpose.msra.mxu0 0.0
        %3772 = vmatprep.subr.mxu0 0.0
        %3773 = vmatpush1.xpose.msra.mxu0 0.0
        %3774 = vmatprep.subr.mxu0 0.0
        %3775 = vmatpush1.xpose.msra.mxu0 0.0
        %3776 = vmatprep.subr.mxu0 0.0
        %3777 = vmatpush1.xpose.msra.mxu0 0.0
        %3778 = vmatprep.subr.mxu0 0.0
        %3779 = vmatpush1.xpose.msra.mxu0 0.0
        %3780 = vmatprep.subr.mxu0 0.0
        %3781 = vmatpush1.xpose.msra.mxu0 0.0
        %3782 = vmatprep.subr.mxu0 0.0
        %3783 = vmatpush1.xpose.msra.mxu0 0.0
        %3784 = vmatprep.subr.mxu0 0.0
        %3785 = vmatpush1.xpose.msra.mxu0 0.0
        %3786 = vmatprep.mubr.f32.mxu0 0.0
        %3787 = vmatmul.mubr.f32.gmra.mrb[0].mxu0 %v3714
        %v3788 = vpop.f32.mrb[0].mxu0
        %v3789 = vadd.f32 0.0, %v3788
        %v3790 = vpop.f32.mrb[0].mxu0
        %3791 = vmatprep.mubr.f32.mxu0 0.0
        %3792 = vmatmul.mubr.f32.gmra.mrb[0].mxu0 %v3716
        %v3793 = vpop.f32.mrb[0].mxu0
        %v3794 = vadd.f32 0.0, %v3793
        %v3795 = vpop.f32.mrb[0].mxu0
        %3796 = vdwg.mxu0
        %v3797 = vmul.f32 %v3789, 0.35355338
        %v3798 = vmul.f32 %v3794, 0.35355338
        %v3799 = vsel %vm2951, %v3797, -inf
        %3800 = vmax.xlane.f32.xlu0 %v3799
        %v3801 = vpop.xlane.xlu0 %3800
        %v3802 = vsel %vm2951, %v3798, -inf
        %3803 = vmax.xlane.f32.xlu0 %v3802
        %v3804 = vpop.xlane.xlu0 %3803
        %v3805 = vsub.f32 %v3797, %v3801
        %v3806 = vsub.f32 %v3798, %v3804
        %v3807 = vmul.f32 %v3805, 1.442695
        %v3808 = vpow.pop %v3807
        %v3809 = vmul.f32 %v3806, 1.442695
        %v3810 = vpow.pop %v3809
        %v3811 = vsel %vm2951, %v3808, 0.0
        %3812 = vadd.xlane.f32.xlu0 %v3811
        %v3813 = vpop.xlane.xlu0 %3812
        %v3814 = vsel %vm2951, %v3810, 0.0
        %3815 = vadd.xlane.f32.xlu0 %v3814
        %v3816 = vpop.xlane.xlu0 %3815
        %v3817 = vrcp.pop %v3813
        %v3818 = vrcp.pop %v3816
        %v3819 = vmul.f32 %v3808, %v3817
        %v3820 = vmul.f32 %v3810, %v3818
        %3821 = vrot.lane.b32.xlu0 %v2851, 104
        %v3822 = vpop.permute.xlu0 %3821
        %3823 = vrot.lane.b32.xlu0 %v2856, 104
        %v3824 = vpop.permute.xlu0 %3823
        %v3828 = vsel %vm2951, %v3819, 0
        %v3831 = vsel %vm2951, %v3820, 0
        %3833 = vmatprep.subr.mxu0 0.0
        %3834 = vmatpush1.msra.mxu0 %v3822
        %3835 = vmatprep.subr.mxu0 0.0
        %3836 = vmatpush1.msra.mxu0 %v3824
        %3837 = vmatprep.subr.mxu0 0.0
        %3838 = vmatpush1.msra.mxu0 0.0
        %3839 = vmatprep.subr.mxu0 0.0
        %3840 = vmatpush1.msra.mxu0 0.0
        %3841 = vmatprep.subr.mxu0 0.0
        %3842 = vmatpush1.msra.mxu0 0.0
        %3843 = vmatprep.subr.mxu0 0.0
        %3844 = vmatpush1.msra.mxu0 0.0
        %3845 = vmatprep.subr.mxu0 0.0
        %3846 = vmatpush1.msra.mxu0 0.0
        %3847 = vmatprep.subr.mxu0 0.0
        %3848 = vmatpush1.msra.mxu0 0.0
        %3849 = vmatprep.subr.mxu0 0.0
        %3850 = vmatpush1.msra.mxu0 0.0
        %3851 = vmatprep.subr.mxu0 0.0
        %3852 = vmatpush1.msra.mxu0 0.0
        %3853 = vmatprep.subr.mxu0 0.0
        %3854 = vmatpush1.msra.mxu0 0.0
        %3855 = vmatprep.subr.mxu0 0.0
        %3856 = vmatpush1.msra.mxu0 0.0
        %3857 = vmatprep.subr.mxu0 0.0
        %3858 = vmatpush1.msra.mxu0 0.0
        %3859 = vmatprep.subr.mxu0 0.0
        %3860 = vmatpush1.msra.mxu0 0.0
        %3861 = vmatprep.subr.mxu0 0.0
        %3862 = vmatpush1.msra.mxu0 0.0
        %3863 = vmatprep.subr.mxu0 0.0
        %3864 = vmatpush1.msra.mxu0 0.0
        %3865 = vmatprep.subr.mxu0 0.0
        %3866 = vmatpush1.msra.mxu0 0.0
        %3867 = vmatprep.subr.mxu0 0.0
        %3868 = vmatpush1.msra.mxu0 0.0
        %3869 = vmatprep.subr.mxu0 0.0
        %3870 = vmatpush1.msra.mxu0 0.0
        %3871 = vmatprep.subr.mxu0 0.0
        %3872 = vmatpush1.msra.mxu0 0.0
        %3873 = vmatprep.subr.mxu0 0.0
        %3874 = vmatpush1.msra.mxu0 0.0
        %3875 = vmatprep.subr.mxu0 0.0
        %3876 = vmatpush1.msra.mxu0 0.0
        %3877 = vmatprep.subr.mxu0 0.0
        %3878 = vmatpush1.msra.mxu0 0.0
        %3879 = vmatprep.subr.mxu0 0.0
        %3880 = vmatpush1.msra.mxu0 0.0
        %3881 = vmatprep.subr.mxu0 0.0
        %3882 = vmatpush1.msra.mxu0 0.0
        %3883 = vmatprep.subr.mxu0 0.0
        %3884 = vmatpush1.msra.mxu0 0.0
        %3885 = vmatprep.subr.mxu0 0.0
        %3886 = vmatpush1.msra.mxu0 0.0
        %3887 = vmatprep.subr.mxu0 0.0
        %3888 = vmatpush1.msra.mxu0 0.0
        %3889 = vmatprep.subr.mxu0 0.0
        %3890 = vmatpush1.msra.mxu0 0.0
        %3891 = vmatprep.subr.mxu0 0.0
        %3892 = vmatpush1.msra.mxu0 0.0
        %3893 = vmatprep.subr.mxu0 0.0
        %3894 = vmatpush1.msra.mxu0 0.0
        %3895 = vmatprep.subr.mxu0 0.0
        %3896 = vmatpush1.msra.mxu0 0.0
        %3897 = vmatprep.mubr.f32.mxu0 0.0
        %3898 = vmatmul.mubr.f32.gmra.mrb[0].mxu0 %v3828
        %v3899 = vpop.f32.mrb[0].mxu0
        %v3900 = vadd.f32 0.0, %v3899
        %v3901 = vpop.f32.mrb[0].mxu0
        %3902 = vmatprep.mubr.f32.mxu0 0.0
        %3903 = vmatmul.mubr.f32.gmra.mrb[0].mxu0 %v3831
        %v3904 = vpop.f32.mrb[0].mxu0
        %v3905 = vadd.f32 0.0, %v3904
        %v3906 = vpop.f32.mrb[0].mxu0
        %3907 = vdwg.mxu0
        %v3909 = vsel %vm2865, %v3900, 0
        %v3912 = vsel %vm2865, %v3905, 0
        %3914 = vmatprep.subr.mxu0 0.0
        %3915 = vmatpush1.msra.mxu0 %v2639
        %3916 = vmatprep.subr.mxu0 0.0
        %3917 = vmatpush1.msra.mxu0 0.0
        %3918 = vmatprep.subr.mxu0 0.0
        %3919 = vmatpush1.msra.mxu0 0.0
        %3920 = vmatprep.subr.mxu0 0.0
        %3921 = vmatpush1.msra.mxu0 0.0
        %3922 = vmatprep.subr.mxu0 0.0
        %3923 = vmatpush1.msra.mxu0 0.0
        %3924 = vmatprep.subr.mxu0 0.0
        %3925 = vmatpush1.msra.mxu0 0.0
        %3926 = vmatprep.subr.mxu0 0.0
        %3927 = vmatpush1.msra.mxu0 0.0
        %3928 = vmatprep.subr.mxu0 0.0
        %3929 = vmatpush1.msra.mxu0 0.0
        %3930 = vmatprep.subr.mxu0 0.0
        %3931 = vmatpush1.msra.mxu0 0.0
        %3932 = vmatprep.subr.mxu0 0.0
        %3933 = vmatpush1.msra.mxu0 0.0
        %3934 = vmatprep.subr.mxu0 0.0
        %3935 = vmatpush1.msra.mxu0 0.0
        %3936 = vmatprep.subr.mxu0 0.0
        %3937 = vmatpush1.msra.mxu0 0.0
        %3938 = vmatprep.subr.mxu0 0.0
        %3939 = vmatpush1.msra.mxu0 0.0
        %3940 = vmatprep.subr.mxu0 0.0
        %3941 = vmatpush1.msra.mxu0 0.0
        %3942 = vmatprep.subr.mxu0 0.0
        %3943 = vmatpush1.msra.mxu0 0.0
        %3944 = vmatprep.subr.mxu0 0.0
        %3945 = vmatpush1.msra.mxu0 0.0
        %3946 = vmatprep.subr.mxu0 0.0
        %3947 = vmatpush1.msra.mxu0 0.0
        %3948 = vmatprep.subr.mxu0 0.0
        %3949 = vmatpush1.msra.mxu0 0.0
        %3950 = vmatprep.subr.mxu0 0.0
        %3951 = vmatpush1.msra.mxu0 0.0
        %3952 = vmatprep.subr.mxu0 0.0
        %3953 = vmatpush1.msra.mxu0 0.0
        %3954 = vmatprep.subr.mxu0 0.0
        %3955 = vmatpush1.msra.mxu0 0.0
        %3956 = vmatprep.subr.mxu0 0.0
        %3957 = vmatpush1.msra.mxu0 0.0
        %3958 = vmatprep.subr.mxu0 0.0
        %3959 = vmatpush1.msra.mxu0 0.0
        %3960 = vmatprep.subr.mxu0 0.0
        %3961 = vmatpush1.msra.mxu0 0.0
        %3962 = vmatprep.subr.mxu0 0.0
        %3963 = vmatpush1.msra.mxu0 0.0
        %3964 = vmatprep.subr.mxu0 0.0
        %3965 = vmatpush1.msra.mxu0 0.0
        %3966 = vmatprep.subr.mxu0 0.0
        %3967 = vmatpush1.msra.mxu0 0.0
        %3968 = vmatprep.subr.mxu0 0.0
        %3969 = vmatpush1.msra.mxu0 0.0
        %3970 = vmatprep.subr.mxu0 0.0
        %3971 = vmatpush1.msra.mxu0 0.0
        %3972 = vmatprep.subr.mxu0 0.0
        %3973 = vmatpush1.msra.mxu0 0.0
        %3974 = vmatprep.subr.mxu0 0.0
        %3975 = vmatpush1.msra.mxu0 0.0
        %3976 = vmatprep.subr.mxu0 0.0
        %3977 = vmatpush1.msra.mxu0 0.0
        %3978 = vmatprep.mubr.f32.mxu0 0.0
        %3979 = vmatmul.mubr.f32.gmra.mrb[0].mxu0 %v3909
        %v3980 = vpop.f32.mrb[0].mxu0
        %v3981 = vadd.f32 0.0, %v3980
        %v3982 = vpop.f32.mrb[0].mxu0
        %3983 = vmatprep.mubr.f32.mxu0 0.0
        %3984 = vmatmul.mubr.f32.gmra.mrb[0].mxu0 %v3912
        %v3985 = vpop.f32.mrb[0].mxu0
        %v3986 = vadd.f32 0.0, %v3985
        %v3987 = vpop.f32.mrb[0].mxu0
        %3988 = vdwg.mxu0
        %v3989 = vadd.f32 %v3704, %v3981
        %v3990 = vadd.f32 %v3705, %v3986
        %v3992 = vlaneseq
        %v3993 = vshrl.u32 %v3992, 7
        %v3994 = vsub.s32 0, %v3993
        %v3995 = vrot.slane %v2617, %v3994
        %v3997 = vadd.f32 %v3989, %v3995
        %v3998 = vadd.f32 %v3990, %v3995
        %v3999 = vadd.f32 %v2680, %v3997
        %v4000 = vadd.f32 %v2681, %v3998
        %v4001 = vsel %vm2690, %v3999, 0.0
        %4002 = vadd.xlane.f32.xlu0 %v4001
        %v4003 = vpop.xlane.xlu0 %4002
        %v4004 = vsel %vm2690, %v4000, 0.0
        %4005 = vadd.xlane.f32.xlu0 %v4004
        %v4006 = vpop.xlane.xlu0 %4005
        %v4007 = vrcp.pop 32.0
        %v4008 = vmul.f32 %v4003, %v4007
        %v4009 = vmul.f32 %v4006, %v4007
        %v4010 = vsub.f32 %v3999, %v4008
        %v4011 = vsub.f32 %v4000, %v4009
        %v4012 = vmul.f32 %v4010, %v4010
        %v4013 = vmul.f32 %v4011, %v4011
        %v4014 = vsel %vm2690, %v4012, 0.0
        %4015 = vadd.xlane.f32.xlu0 %v4014
        %v4016 = vpop.xlane.xlu0 %4015
        %v4017 = vsel %vm2690, %v4013, 0.0
        %4018 = vadd.xlane.f32.xlu0 %v4017
        %v4019 = vpop.xlane.xlu0 %4018
        %v4020 = vmul.f32 %v4016, %v4007
        %v4021 = vmul.f32 %v4019, %v4007
        %v4022 = vadd.f32 %v4020, 1e-05
        %v4023 = vadd.f32 %v4021, 1e-05
        %v4024 = vrsqrt.pop %v4022
        %v4025 = vrsqrt.pop %v4023
        %v4026 = vmul.f32 %v4010, %v4024
        %v4027 = vmul.f32 %v4011, %v4025
        %v4029 = vlaneseq
        %v4030 = vshrl.u32 %v4029, 7
        %v4031 = vsub.s32 0, %v4030
        %v4032 = vrot.slane %v2621, %v4031
        %v4034 = vmul.f32 %v4026, %v4032
        %v4035 = vmul.f32 %v4027, %v4032
        %v4037 = vlaneseq
        %v4038 = vshrl.u32 %v4037, 7
        %v4039 = vsub.s32 0, %v4038
        %v4040 = vrot.slane %v2620, %v4039
        %v4042 = vadd.f32 %v4034, %v4040
        %v4043 = vadd.f32 %v4035, %v4040
        %v4045 = vlaneseq
        %v4046 = vshrl.u32 %v4045, 7
        %v4047 = vsub.s32 0, %v4046
        %v4048 = vrot.slane %v2615, %v4047
        %v4051 = vsel %vm2690, %v4042, 0
        %v4054 = vsel %vm2690, %v4043, 0
        %4056 = vmatprep.subr.mxu0 0.0
        %4057 = vmatpush1.msra.mxu0 %v2624
        %4058 = vmatprep.subr.mxu0 0.0
        %4059 = vmatpush1.msra.mxu0 %v2625
        %4060 = vmatprep.subr.mxu0 0.0
        %4061 = vmatpush1.msra.mxu0 %v2626
        %4062 = vmatprep.subr.mxu0 0.0
        %4063 = vmatpush1.msra.mxu0 %v2627
        %4064 = vmatprep.subr.mxu0 0.0
        %4065 = vmatpush1.msra.mxu0 0.0
        %4066 = vmatprep.subr.mxu0 0.0
        %4067 = vmatpush1.msra.mxu0 0.0
        %4068 = vmatprep.subr.mxu0 0.0
        %4069 = vmatpush1.msra.mxu0 0.0
        %4070 = vmatprep.subr.mxu0 0.0
        %4071 = vmatpush1.msra.mxu0 0.0
        %4072 = vmatprep.subr.mxu0 0.0
        %4073 = vmatpush1.msra.mxu0 0.0
        %4074 = vmatprep.subr.mxu0 0.0
        %4075 = vmatpush1.msra.mxu0 0.0
        %4076 = vmatprep.subr.mxu0 0.0
        %4077 = vmatpush1.msra.mxu0 0.0
        %4078 = vmatprep.subr.mxu0 0.0
        %4079 = vmatpush1.msra.mxu0 0.0
        %4080 = vmatprep.subr.mxu0 0.0
        %4081 = vmatpush1.msra.mxu0 0.0
        %4082 = vmatprep.subr.mxu0 0.0
        %4083 = vmatpush1.msra.mxu0 0.0
        %4084 = vmatprep.subr.mxu0 0.0
        %4085 = vmatpush1.msra.mxu0 0.0
        %4086 = vmatprep.subr.mxu0 0.0
        %4087 = vmatpush1.msra.mxu0 0.0
        %4088 = vmatprep.subr.mxu0 0.0
        %4089 = vmatpush1.msra.mxu0 0.0
        %4090 = vmatprep.subr.mxu0 0.0
        %4091 = vmatpush1.msra.mxu0 0.0
        %4092 = vmatprep.subr.mxu0 0.0
        %4093 = vmatpush1.msra.mxu0 0.0
        %4094 = vmatprep.subr.mxu0 0.0
        %4095 = vmatpush1.msra.mxu0 0.0
        %4096 = vmatprep.subr.mxu0 0.0
        %4097 = vmatpush1.msra.mxu0 0.0
        %4098 = vmatprep.subr.mxu0 0.0
        %4099 = vmatpush1.msra.mxu0 0.0
        %4100 = vmatprep.subr.mxu0 0.0
        %4101 = vmatpush1.msra.mxu0 0.0
        %4102 = vmatprep.subr.mxu0 0.0
        %4103 = vmatpush1.msra.mxu0 0.0
        %4104 = vmatprep.subr.mxu0 0.0
        %4105 = vmatpush1.msra.mxu0 0.0
        %4106 = vmatprep.subr.mxu0 0.0
        %4107 = vmatpush1.msra.mxu0 0.0
        %4108 = vmatprep.subr.mxu0 0.0
        %4109 = vmatpush1.msra.mxu0 0.0
        %4110 = vmatprep.subr.mxu0 0.0
        %4111 = vmatpush1.msra.mxu0 0.0
        %4112 = vmatprep.subr.mxu0 0.0
        %4113 = vmatpush1.msra.mxu0 0.0
        %4114 = vmatprep.subr.mxu0 0.0
        %4115 = vmatpush1.msra.mxu0 0.0
        %4116 = vmatprep.subr.mxu0 0.0
        %4117 = vmatpush1.msra.mxu0 0.0
        %4118 = vmatprep.subr.mxu0 0.0
        %4119 = vmatpush1.msra.mxu0 0.0
        %4120 = vmatprep.mubr.f32.mxu0 0.0
        %4121 = vmatmul.mubr.f32.gmra.mrb[0].mxu0 %v4051
        %v4122 = vpop.f32.mrb[0].mxu0
        %v4123 = vadd.f32 %v4048, %v4122
        %v4124 = vpop.f32.mrb[0].mxu0
        %4125 = vmatprep.mubr.f32.mxu0 0.0
        %4126 = vmatmul.mubr.f32.gmra.mrb[0].mxu0 %v4054
        %v4127 = vpop.f32.mrb[0].mxu0
        %v4128 = vadd.f32 %v4048, %v4127
        %v4129 = vpop.f32.mrb[0].mxu0
        %4130 = vdwg.mxu0
        %v4131 = vmax.f32 %v4123, 0.0
        %v4132 = vmax.f32 %v4128, 0.0
        %v4134 = vlaneseq
        %v4135 = vshrl.u32 %v4134, 7
        %v4136 = vsub.s32 0, %v4135
        %v4137 = vrot.slane %v2616, %v4136
        %vm4139 = vcmask 523264
        %v4141 = vsel %vm4139, %v4131, 0
        %v4144 = vsel %vm4139, %v4132, 0
        %4146 = vmatprep.subr.mxu0 0.0
        %4147 = vmatpush1.msra.mxu0 %v2628
        %4148 = vmatprep.subr.mxu0 0.0
        %4149 = vmatpush1.msra.mxu0 %v2629
        %4150 = vmatprep.subr.mxu0 0.0
        %4151 = vmatpush1.msra.mxu0 %v2630
        %4152 = vmatprep.subr.mxu0 0.0
        %4153 = vmatpush1.msra.mxu0 %v2631
        %4154 = vmatprep.subr.mxu0 0.0
        %4155 = vmatpush1.msra.mxu0 %v2632
        %4156 = vmatprep.subr.mxu0 0.0
        %4157 = vmatpush1.msra.mxu0 %v2633
        %4158 = vmatprep.subr.mxu0 0.0
        %4159 = vmatpush1.msra.mxu0 %v2634
        %4160 = vmatprep.subr.mxu0 0.0
        %4161 = vmatpush1.msra.mxu0 %v2635
        %4162 = vmatprep.subr.mxu0 0.0
        %4163 = vmatpush1.msra.mxu0 0.0
        %4164 = vmatprep.subr.mxu0 0.0
        %4165 = vmatpush1.msra.mxu0 0.0
        %4166 = vmatprep.subr.mxu0 0.0
        %4167 = vmatpush1.msra.mxu0 0.0
        %4168 = vmatprep.subr.mxu0 0.0
        %4169 = vmatpush1.msra.mxu0 0.0
        %4170 = vmatprep.subr.mxu0 0.0
        %4171 = vmatpush1.msra.mxu0 0.0
        %4172 = vmatprep.subr.mxu0 0.0
        %4173 = vmatpush1.msra.mxu0 0.0
        %4174 = vmatprep.subr.mxu0 0.0
        %4175 = vmatpush1.msra.mxu0 0.0
        %4176 = vmatprep.subr.mxu0 0.0
        %4177 = vmatpush1.msra.mxu0 0.0
        %4178 = vmatprep.subr.mxu0 0.0
        %4179 = vmatpush1.msra.mxu0 0.0
        %4180 = vmatprep.subr.mxu0 0.0
        %4181 = vmatpush1.msra.mxu0 0.0
        %4182 = vmatprep.subr.mxu0 0.0
        %4183 = vmatpush1.msra.mxu0 0.0
        %4184 = vmatprep.subr.mxu0 0.0
        %4185 = vmatpush1.msra.mxu0 0.0
        %4186 = vmatprep.subr.mxu0 0.0
        %4187 = vmatpush1.msra.mxu0 0.0
        %4188 = vmatprep.subr.mxu0 0.0
        %4189 = vmatpush1.msra.mxu0 0.0
        %4190 = vmatprep.subr.mxu0 0.0
        %4191 = vmatpush1.msra.mxu0 0.0
        %4192 = vmatprep.subr.mxu0 0.0
        %4193 = vmatpush1.msra.mxu0 0.0
        %4194 = vmatprep.subr.mxu0 0.0
        %4195 = vmatpush1.msra.mxu0 0.0
        %4196 = vmatprep.subr.mxu0 0.0
        %4197 = vmatpush1.msra.mxu0 0.0
        %4198 = vmatprep.subr.mxu0 0.0
        %4199 = vmatpush1.msra.mxu0 0.0
        %4200 = vmatprep.subr.mxu0 0.0
        %4201 = vmatpush1.msra.mxu0 0.0
        %4202 = vmatprep.subr.mxu0 0.0
        %4203 = vmatpush1.msra.mxu0 0.0
        %4204 = vmatprep.subr.mxu0 0.0
        %4205 = vmatpush1.msra.mxu0 0.0
        %4206 = vmatprep.subr.mxu0 0.0
        %4207 = vmatpush1.msra.mxu0 0.0
        %4208 = vmatprep.subr.mxu0 0.0
        %4209 = vmatpush1.msra.mxu0 0.0
        %4210 = vmatprep.mubr.f32.mxu0 0.0
        %4211 = vmatmul.mubr.f32.gmra.mrb[0].mxu0 %v4141
        %v4212 = vpop.f32.mrb[0].mxu0
        %v4213 = vadd.f32 %v4137, %v4212
        %v4214 = vpop.f32.mrb[0].mxu0
        %4215 = vmatprep.mubr.f32.mxu0 0.0
        %4216 = vmatmul.mubr.f32.gmra.mrb[0].mxu0 %v4144
        %v4217 = vpop.f32.mrb[0].mxu0
        %v4218 = vadd.f32 %v4137, %v4217
        %v4219 = vpop.f32.mrb[0].mxu0
        %4220 = vdwg.mxu0
        %v4221 = vadd.f32 %v4042, %v4213
        %v4222 = vadd.f32 %v4043, %v4218
        %v4223 = vsel %vm2690, %v4221, 0.0
        %4224 = vadd.xlane.f32.xlu0 %v4223
        %v4225 = vpop.xlane.xlu0 %4224
        %v4226 = vsel %vm2690, %v4222, 0.0
        %4227 = vadd.xlane.f32.xlu0 %v4226
        %v4228 = vpop.xlane.xlu0 %4227
        %v4229 = vmul.f32 %v4225, %v4007
        %v4230 = vmul.f32 %v4228, %v4007
        %v4231 = vsub.f32 %v4221, %v4229
        %v4232 = vsub.f32 %v4222, %v4230
        %v4233 = vmul.f32 %v4231, %v4231
        %v4234 = vmul.f32 %v4232, %v4232
        %v4235 = vsel %vm2690, %v4233, 0.0
        %4236 = vadd.xlane.f32.xlu0 %v4235
        %v4237 = vpop.xlane.xlu0 %4236
        %v4238 = vsel %vm2690, %v4234, 0.0
        %4239 = vadd.xlane.f32.xlu0 %v4238
        %v4240 = vpop.xlane.xlu0 %4239
        %v4241 = vmul.f32 %v4237, %v4007
        %v4242 = vmul.f32 %v4240, %v4007
        %v4243 = vadd.f32 %v4241, 1e-05
        %v4244 = vadd.f32 %v4242, 1e-05
        %v4245 = vrsqrt.pop %v4243
        %v4246 = vrsqrt.pop %v4244
        %v4247 = vmul.f32 %v4231, %v4245
        %v4248 = vmul.f32 %v4232, %v4246
        %v4250 = vlaneseq
        %v4251 = vshrl.u32 %v4250, 7
        %v4252 = vsub.s32 0, %v4251
        %v4253 = vrot.slane %v2623, %v4252
        %v4255 = vmul.f32 %v4247, %v4253
        %v4256 = vmul.f32 %v4248, %v4253
        %v4258 = vlaneseq
        %v4259 = vshrl.u32 %v4258, 7
        %v4260 = vsub.s32 0, %v4259
        %v4261 = vrot.slane %v2622, %v4260
        %v4263 = vadd.f32 %v4255, %v4261
        %v4264 = vadd.f32 %v4256, %v4261
        %v4266 = vlaneseq
        %v4267 = vshrl.u32 %v4266, 7
        %v4268 = vsub.s32 0, %v4267
        %v4269 = vrot.slane %v2563, %v4268
        %v4272 = vsel %vm2690, %v2679, 0
        %4274 = vmatprep.subr.mxu0 0.0
        %4275 = vmatpush1.msra.mxu0 %v2568
        %4276 = vmatprep.subr.mxu0 0.0
        %4277 = vmatpush1.msra.mxu0 %v2569
        %4278 = vmatprep.subr.mxu0 0.0
        %4279 = vmatpush1.msra.mxu0 %v2570
        %4280 = vmatprep.subr.mxu0 0.0
        %4281 = vmatpush1.msra.mxu0 %v2571
        %4282 = vmatprep.subr.mxu0 0.0
        %4283 = vmatpush1.msra.mxu0 0.0
        %4284 = vmatprep.subr.mxu0 0.0
        %4285 = vmatpush1.msra.mxu0 0.0
        %4286 = vmatprep.subr.mxu0 0.0
        %4287 = vmatpush1.msra.mxu0 0.0
        %4288 = vmatprep.subr.mxu0 0.0
        %4289 = vmatpush1.msra.mxu0 0.0
        %4290 = vmatprep.subr.mxu0 0.0
        %4291 = vmatpush1.msra.mxu0 0.0
        %4292 = vmatprep.subr.mxu0 0.0
        %4293 = vmatpush1.msra.mxu0 0.0
        %4294 = vmatprep.subr.mxu0 0.0
        %4295 = vmatpush1.msra.mxu0 0.0
        %4296 = vmatprep.subr.mxu0 0.0
        %4297 = vmatpush1.msra.mxu0 0.0
        %4298 = vmatprep.subr.mxu0 0.0
        %4299 = vmatpush1.msra.mxu0 0.0
        %4300 = vmatprep.subr.mxu0 0.0
        %4301 = vmatpush1.msra.mxu0 0.0
        %4302 = vmatprep.subr.mxu0 0.0
        %4303 = vmatpush1.msra.mxu0 0.0
        %4304 = vmatprep.subr.mxu0 0.0
        %4305 = vmatpush1.msra.mxu0 0.0
        %4306 = vmatprep.subr.mxu0 0.0
        %4307 = vmatpush1.msra.mxu0 0.0
        %4308 = vmatprep.subr.mxu0 0.0
        %4309 = vmatpush1.msra.mxu0 0.0
        %4310 = vmatprep.subr.mxu0 0.0
        %4311 = vmatpush1.msra.mxu0 0.0
        %4312 = vmatprep.subr.mxu0 0.0
        %4313 = vmatpush1.msra.mxu0 0.0
        %4314 = vmatprep.subr.mxu0 0.0
        %4315 = vmatpush1.msra.mxu0 0.0
        %4316 = vmatprep.subr.mxu0 0.0
        %4317 = vmatpush1.msra.mxu0 0.0
        %4318 = vmatprep.subr.mxu0 0.0
        %4319 = vmatpush1.msra.mxu0 0.0
        %4320 = vmatprep.subr.mxu0 0.0
        %4321 = vmatpush1.msra.mxu0 0.0
        %4322 = vmatprep.subr.mxu0 0.0
        %4323 = vmatpush1.msra.mxu0 0.0
        %4324 = vmatprep.subr.mxu0 0.0
        %4325 = vmatpush1.msra.mxu0 0.0
        %4326 = vmatprep.subr.mxu0 0.0
        %4327 = vmatpush1.msra.mxu0 0.0
        %4328 = vmatprep.subr.mxu0 0.0
        %4329 = vmatpush1.msra.mxu0 0.0
        %4330 = vmatprep.subr.mxu0 0.0
        %4331 = vmatpush1.msra.mxu0 0.0
        %4332 = vmatprep.subr.mxu0 0.0
        %4333 = vmatpush1.msra.mxu0 0.0
        %4334 = vmatprep.subr.mxu0 0.0
        %4335 = vmatpush1.msra.mxu0 0.0
        %4336 = vmatprep.subr.mxu0 0.0
        %4337 = vmatpush1.msra.mxu0 0.0
        %4338 = vmatprep.mubr.f32.mxu0 0.0
        %4339 = vmatmul.mubr.f32.gmra.mrb[0].mxu0 %v4272
        %v4340 = vpop.f32.mrb[0].mxu0
        %v4341 = vadd.f32 %v4269, %v4340
        %v4342 = vpop.f32.mrb[0].mxu0
        %4343 = vdwg.mxu0
        %4345 = vrot.lane.b32.xlu0 %v4341, 96
        %v4346 = vpop.permute.xlu0 %4345
        %v4347 = vsel %vm2865, %v4341, 0
        %v4349 = vsel %vm2865, %v4346, 0
        %4351 = vmatprep.subr.mxu0 0.0
        %4352 = vmatpush1.xpose.msra.mxu0 %v4349
        %4353 = vmatprep.subr.mxu0 0.0
        %4354 = vmatpush1.xpose.msra.mxu0 0.0
        %4355 = vmatprep.subr.mxu0 0.0
        %4356 = vmatpush1.xpose.msra.mxu0 0.0
        %4357 = vmatprep.subr.mxu0 0.0
        %4358 = vmatpush1.xpose.msra.mxu0 0.0
        %4359 = vmatprep.subr.mxu0 0.0
        %4360 = vmatpush1.xpose.msra.mxu0 0.0
        %4361 = vmatprep.subr.mxu0 0.0
        %4362 = vmatpush1.xpose.msra.mxu0 0.0
        %4363 = vmatprep.subr.mxu0 0.0
        %4364 = vmatpush1.xpose.msra.mxu0 0.0
        %4365 = vmatprep.subr.mxu0 0.0
        %4366 = vmatpush1.xpose.msra.mxu0 0.0
        %4367 = vmatprep.subr.mxu0 0.0
        %4368 = vmatpush1.xpose.msra.mxu0 0.0
        %4369 = vmatprep.subr.mxu0 0.0
        %4370 = vmatpush1.xpose.msra.mxu0 0.0
        %4371 = vmatprep.subr.mxu0 0.0
        %4372 = vmatpush1.xpose.msra.mxu0 0.0
        %4373 = vmatprep.subr.mxu0 0.0
        %4374 = vmatpush1.xpose.msra.mxu0 0.0
        %4375 = vmatprep.subr.mxu0 0.0
        %4376 = vmatpush1.xpose.msra.mxu0 0.0
        %4377 = vmatprep.subr.mxu0 0.0
        %4378 = vmatpush1.xpose.msra.mxu0 0.0
        %4379 = vmatprep.subr.mxu0 0.0
        %4380 = vmatpush1.xpose.msra.mxu0 0.0
        %4381 = vmatprep.subr.mxu0 0.0
        %4382 = vmatpush1.xpose.msra.mxu0 0.0
        %4383 = vmatprep.subr.mxu0 0.0
        %4384 = vmatpush1.xpose.msra.mxu0 0.0
        %4385 = vmatprep.subr.mxu0 0.0
        %4386 = vmatpush1.xpose.msra.mxu0 0.0
        %4387 = vmatprep.subr.mxu0 0.0
        %4388 = vmatpush1.xpose.msra.mxu0 0.0
        %4389 = vmatprep.subr.mxu0 0.0
        %4390 = vmatpush1.xpose.msra.mxu0 0.0
        %4391 = vmatprep.subr.mxu0 0.0
        %4392 = vmatpush1.xpose.msra.mxu0 0.0
        %4393 = vmatprep.subr.mxu0 0.0
        %4394 = vmatpush1.xpose.msra.mxu0 0.0
        %4395 = vmatprep.subr.mxu0 0.0
        %4396 = vmatpush1.xpose.msra.mxu0 0.0
        %4397 = vmatprep.subr.mxu0 0.0
        %4398 = vmatpush1.xpose.msra.mxu0 0.0
        %4399 = vmatprep.subr.mxu0 0.0
        %4400 = vmatpush1.xpose.msra.mxu0 0.0
        %4401 = vmatprep.subr.mxu0 0.0
        %4402 = vmatpush1.xpose.msra.mxu0 0.0
        %4403 = vmatprep.subr.mxu0 0.0
        %4404 = vmatpush1.xpose.msra.mxu0 0.0
        %4405 = vmatprep.subr.mxu0 0.0
        %4406 = vmatpush1.xpose.msra.mxu0 0.0
        %4407 = vmatprep.subr.mxu0 0.0
        %4408 = vmatpush1.xpose.msra.mxu0 0.0
        %4409 = vmatprep.subr.mxu0 0.0
        %4410 = vmatpush1.xpose.msra.mxu0 0.0
        %4411 = vmatprep.subr.mxu0 0.0
        %4412 = vmatpush1.xpose.msra.mxu0 0.0
        %4413 = vmatprep.subr.mxu0 0.0
        %4414 = vmatpush1.xpose.msra.mxu0 0.0
        %4415 = vmatprep.mubr.f32.mxu0 0.0
        %4416 = vmatmul.mubr.f32.gmra.mrb[0].mxu0 %v4347
        %v4417 = vpop.f32.mrb[0].mxu0
        %v4418 = vadd.f32 0.0, %v4417
        %v4419 = vpop.f32.mrb[0].mxu0
        %4420 = vdwg.mxu0
        %v4421 = vmul.f32 %v4418, 0.35355338
        %v4422 = vsel %vm2865, %v4421, -inf
        %4423 = vmax.xlane.f32.xlu0 %v4422
        %v4424 = vpop.xlane.xlu0 %4423
        %v4425 = vsub.f32 %v4421, %v4424
        %v4426 = vmul.f32 %v4425, 1.442695
        %v4427 = vpow.pop %v4426
        %v4428 = vsel %vm2865, %v4427, 0.0
        %4429 = vadd.xlane.f32.xlu0 %v4428
        %v4430 = vpop.xlane.xlu0 %4429
        %v4431 = vrcp.pop %v4430
        %v4432 = vmul.f32 %v4427, %v4431
        %4433 = vrot.lane.b32.xlu0 %v4341, 64
        %v4434 = vpop.permute.xlu0 %4433
        %v4437 = vsel %vm2865, %v4432, 0
        %4439 = vmatprep.subr.mxu0 0.0
        %4440 = vmatpush1.msra.mxu0 %v4434
        %4441 = vmatprep.subr.mxu0 0.0
        %4442 = vmatpush1.msra.mxu0 0.0
        %4443 = vmatprep.subr.mxu0 0.0
        %4444 = vmatpush1.msra.mxu0 0.0
        %4445 = vmatprep.subr.mxu0 0.0
        %4446 = vmatpush1.msra.mxu0 0.0
        %4447 = vmatprep.subr.mxu0 0.0
        %4448 = vmatpush1.msra.mxu0 0.0
        %4449 = vmatprep.subr.mxu0 0.0
        %4450 = vmatpush1.msra.mxu0 0.0
        %4451 = vmatprep.subr.mxu0 0.0
        %4452 = vmatpush1.msra.mxu0 0.0
        %4453 = vmatprep.subr.mxu0 0.0
        %4454 = vmatpush1.msra.mxu0 0.0
        %4455 = vmatprep.subr.mxu0 0.0
        %4456 = vmatpush1.msra.mxu0 0.0
        %4457 = vmatprep.subr.mxu0 0.0
        %4458 = vmatpush1.msra.mxu0 0.0
        %4459 = vmatprep.subr.mxu0 0.0
        %4460 = vmatpush1.msra.mxu0 0.0
        %4461 = vmatprep.subr.mxu0 0.0
        %4462 = vmatpush1.msra.mxu0 0.0
        %4463 = vmatprep.subr.mxu0 0.0
        %4464 = vmatpush1.msra.mxu0 0.0
        %4465 = vmatprep.subr.mxu0 0.0
        %4466 = vmatpush1.msra.mxu0 0.0
        %4467 = vmatprep.subr.mxu0 0.0
        %4468 = vmatpush1.msra.mxu0 0.0
        %4469 = vmatprep.subr.mxu0 0.0
        %4470 = vmatpush1.msra.mxu0 0.0
        %4471 = vmatprep.subr.mxu0 0.0
        %4472 = vmatpush1.msra.mxu0 0.0
        %4473 = vmatprep.subr.mxu0 0.0
        %4474 = vmatpush1.msra.mxu0 0.0
        %4475 = vmatprep.subr.mxu0 0.0
        %4476 = vmatpush1.msra.mxu0 0.0
        %4477 = vmatprep.subr.mxu0 0.0
        %4478 = vmatpush1.msra.mxu0 0.0
        %4479 = vmatprep.subr.mxu0 0.0
        %4480 = vmatpush1.msra.mxu0 0.0
        %4481 = vmatprep.subr.mxu0 0.0
        %4482 = vmatpush1.msra.mxu0 0.0
        %4483 = vmatprep.subr.mxu0 0.0
        %4484 = vmatpush1.msra.mxu0 0.0
        %4485 = vmatprep.subr.mxu0 0.0
        %4486 = vmatpush1.msra.mxu0 0.0
        %4487 = vmatprep.subr.mxu0 0.0
        %4488 = vmatpush1.msra.mxu0 0.0
        %4489 = vmatprep.subr.mxu0 0.0
        %4490 = vmatpush1.msra.mxu0 0.0
        %4491 = vmatprep.subr.mxu0 0.0
        %4492 = vmatpush1.msra.mxu0 0.0
        %4493 = vmatprep.subr.mxu0 0.0
        %4494 = vmatpush1.msra.mxu0 0.0
        %4495 = vmatprep.subr.mxu0 0.0
        %4496 = vmatpush1.msra.mxu0 0.0
        %4497 = vmatprep.subr.mxu0 0.0
        %4498 = vmatpush1.msra.mxu0 0.0
        %4499 = vmatprep.subr.mxu0 0.0
        %4500 = vmatpush1.msra.mxu0 0.0
        %4501 = vmatprep.subr.mxu0 0.0
        %4502 = vmatpush1.msra.mxu0 0.0
        %4503 = vmatprep.mubr.f32.mxu0 0.0
        %4504 = vmatmul.mubr.f32.gmra.mrb[0].mxu0 %v4437
        %v4505 = vpop.f32.mrb[0].mxu0
        %v4506 = vadd.f32 0.0, %v4505
        %v4507 = vpop.f32.mrb[0].mxu0
        %4508 = vdwg.mxu0
        %4509 = vrot.lane.b32.xlu0 %v4341, 120
        %v4510 = vpop.permute.xlu0 %4509
        %4511 = vrot.lane.b32.xlu0 %v4341, 88
        %v4512 = vpop.permute.xlu0 %4511
        %v4513 = vsel %vm2865, %v4510, 0
        %v4515 = vsel %vm2865, %v4512, 0
        %4517 = vmatprep.subr.mxu0 0.0
        %4518 = vmatpush1.xpose.msra.mxu0 %v4515
        %4519 = vmatprep.subr.mxu0 0.0
        %4520 = vmatpush1.xpose.msra.mxu0 0.0
        %4521 = vmatprep.subr.mxu0 0.0
        %4522 = vmatpush1.xpose.msra.mxu0 0.0
        %4523 = vmatprep.subr.mxu0 0.0
        %4524 = vmatpush1.xpose.msra.mxu0 0.0
        %4525 = vmatprep.subr.mxu0 0.0
        %4526 = vmatpush1.xpose.msra.mxu0 0.0
        %4527 = vmatprep.subr.mxu0 0.0
        %4528 = vmatpush1.xpose.msra.mxu0 0.0
        %4529 = vmatprep.subr.mxu0 0.0
        %4530 = vmatpush1.xpose.msra.mxu0 0.0
        %4531 = vmatprep.subr.mxu0 0.0
        %4532 = vmatpush1.xpose.msra.mxu0 0.0
        %4533 = vmatprep.subr.mxu0 0.0
        %4534 = vmatpush1.xpose.msra.mxu0 0.0
        %4535 = vmatprep.subr.mxu0 0.0
        %4536 = vmatpush1.xpose.msra.mxu0 0.0
        %4537 = vmatprep.subr.mxu0 0.0
        %4538 = vmatpush1.xpose.msra.mxu0 0.0
        %4539 = vmatprep.subr.mxu0 0.0
        %4540 = vmatpush1.xpose.msra.mxu0 0.0
        %4541 = vmatprep.subr.mxu0 0.0
        %4542 = vmatpush1.xpose.msra.mxu0 0.0
        %4543 = vmatprep.subr.mxu0 0.0
        %4544 = vmatpush1.xpose.msra.mxu0 0.0
        %4545 = vmatprep.subr.mxu0 0.0
        %4546 = vmatpush1.xpose.msra.mxu0 0.0
        %4547 = vmatprep.subr.mxu0 0.0
        %4548 = vmatpush1.xpose.msra.mxu0 0.0
        %4549 = vmatprep.subr.mxu0 0.0
        %4550 = vmatpush1.xpose.msra.mxu0 0.0
        %4551 = vmatprep.subr.mxu0 0.0
        %4552 = vmatpush1.xpose.msra.mxu0 0.0
        %4553 = vmatprep.subr.mxu0 0.0
        %4554 = vmatpush1.xpose.msra.mxu0 0.0
        %4555 = vmatprep.subr.mxu0 0.0
        %4556 = vmatpush1.xpose.msra.mxu0 0.0
        %4557 = vmatprep.subr.mxu0 0.0
        %4558 = vmatpush1.xpose.msra.mxu0 0.0
        %4559 = vmatprep.subr.mxu0 0.0
        %4560 = vmatpush1.xpose.msra.mxu0 0.0
        %4561 = vmatprep.subr.mxu0 0.0
        %4562 = vmatpush1.xpose.msra.mxu0 0.0
        %4563 = vmatprep.subr.mxu0 0.0
        %4564 = vmatpush1.xpose.msra.mxu0 0.0
        %4565 = vmatprep.subr.mxu0 0.0
        %4566 = vmatpush1.xpose.msra.mxu0 0.0
        %4567 = vmatprep.subr.mxu0 0.0
        %4568 = vmatpush1.xpose.msra.mxu0 0.0
        %4569 = vmatprep.subr.mxu0 0.0
        %4570 = vmatpush1.xpose.msra.mxu0 0.0
        %4571 = vmatprep.subr.mxu0 0.0
        %4572 = vmatpush1.xpose.msra.mxu0 0.0
        %4573 = vmatprep.subr.mxu0 0.0
        %4574 = vmatpush1.xpose.msra.mxu0 0.0
        %4575 = vmatprep.subr.mxu0 0.0
        %4576 = vmatpush1.xpose.msra.mxu0 0.0
        %4577 = vmatprep.subr.mxu0 0.0
        %4578 = vmatpush1.xpose.msra.mxu0 0.0
        %4579 = vmatprep.subr.mxu0 0.0
        %4580 = vmatpush1.xpose.msra.mxu0 0.0
        %4581 = vmatprep.mubr.f32.mxu0 0.0
        %4582 = vmatmul.mubr.f32.gmra.mrb[0].mxu0 %v4513
        %v4583 = vpop.f32.mrb[0].mxu0
        %v4584 = vadd.f32 0.0, %v4583
        %v4585 = vpop.f32.mrb[0].mxu0
        %4586 = vdwg.mxu0
        %v4587 = vmul.f32 %v4584, 0.35355338
        %v4588 = vsel %vm2865, %v4587, -inf
        %4589 = vmax.xlane.f32.xlu0 %v4588
        %v4590 = vpop.xlane.xlu0 %4589
        %v4591 = vsub.f32 %v4587, %v4590
        %v4592 = vmul.f32 %v4591, 1.442695
        %v4593 = vpow.pop %v4592
        %v4594 = vsel %vm2865, %v4593, 0.0
        %4595 = vadd.xlane.f32.xlu0 %v4594
        %v4596 = vpop.xlane.xlu0 %4595
        %v4597 = vrcp.pop %v4596
        %v4598 = vmul.f32 %v4593, %v4597
        %4599 = vrot.lane.b32.xlu0 %v4341, 56
        %v4600 = vpop.permute.xlu0 %4599
        %v4603 = vsel %vm2865, %v4598, 0
        %4605 = vmatprep.subr.mxu0 0.0
        %4606 = vmatpush1.msra.mxu0 %v4600
        %4607 = vmatprep.subr.mxu0 0.0
        %4608 = vmatpush1.msra.mxu0 0.0
        %4609 = vmatprep.subr.mxu0 0.0
        %4610 = vmatpush1.msra.mxu0 0.0
        %4611 = vmatprep.subr.mxu0 0.0
        %4612 = vmatpush1.msra.mxu0 0.0
        %4613 = vmatprep.subr.mxu0 0.0
        %4614 = vmatpush1.msra.mxu0 0.0
        %4615 = vmatprep.subr.mxu0 0.0
        %4616 = vmatpush1.msra.mxu0 0.0
        %4617 = vmatprep.subr.mxu0 0.0
        %4618 = vmatpush1.msra.mxu0 0.0
        %4619 = vmatprep.subr.mxu0 0.0
        %4620 = vmatpush1.msra.mxu0 0.0
        %4621 = vmatprep.subr.mxu0 0.0
        %4622 = vmatpush1.msra.mxu0 0.0
        %4623 = vmatprep.subr.mxu0 0.0
        %4624 = vmatpush1.msra.mxu0 0.0
        %4625 = vmatprep.subr.mxu0 0.0
        %4626 = vmatpush1.msra.mxu0 0.0
        %4627 = vmatprep.subr.mxu0 0.0
        %4628 = vmatpush1.msra.mxu0 0.0
        %4629 = vmatprep.subr.mxu0 0.0
        %4630 = vmatpush1.msra.mxu0 0.0
        %4631 = vmatprep.subr.mxu0 0.0
        %4632 = vmatpush1.msra.mxu0 0.0
        %4633 = vmatprep.subr.mxu0 0.0
        %4634 = vmatpush1.msra.mxu0 0.0
        %4635 = vmatprep.subr.mxu0 0.0
        %4636 = vmatpush1.msra.mxu0 0.0
        %4637 = vmatprep.subr.mxu0 0.0
        %4638 = vmatpush1.msra.mxu0 0.0
        %4639 = vmatprep.subr.mxu0 0.0
        %4640 = vmatpush1.msra.mxu0 0.0
        %4641 = vmatprep.subr.mxu0 0.0
        %4642 = vmatpush1.msra.mxu0 0.0
        %4643 = vmatprep.subr.mxu0 0.0
        %4644 = vmatpush1.msra.mxu0 0.0
        %4645 = vmatprep.subr.mxu0 0.0
        %4646 = vmatpush1.msra.mxu0 0.0
        %4647 = vmatprep.subr.mxu0 0.0
        %4648 = vmatpush1.msra.mxu0 0.0
        %4649 = vmatprep.subr.mxu0 0.0
        %4650 = vmatpush1.msra.mxu0 0.0
        %4651 = vmatprep.subr.mxu0 0.0
        %4652 = vmatpush1.msra.mxu0 0.0
        %4653 = vmatprep.subr.mxu0 0.0
        %4654 = vmatpush1.msra.mxu0 0.0
        %4655 = vmatprep.subr.mxu0 0.0
        %4656 = vmatpush1.msra.mxu0 0.0
        %4657 = vmatprep.subr.mxu0 0.0
        %4658 = vmatpush1.msra.mxu0 0.0
        %4659 = vmatprep.subr.mxu0 0.0
        %4660 = vmatpush1.msra.mxu0 0.0
        %4661 = vmatprep.subr.mxu0 0.0
        %4662 = vmatpush1.msra.mxu0 0.0
        %4663 = vmatprep.subr.mxu0 0.0
        %4664 = vmatpush1.msra.mxu0 0.0
        %4665 = vmatprep.subr.mxu0 0.0
        %4666 = vmatpush1.msra.mxu0 0.0
        %4667 = vmatprep.subr.mxu0 0.0
        %4668 = vmatpush1.msra.mxu0 0.0
        %4669 = vmatprep.mubr.f32.mxu0 0.0
        %4670 = vmatmul.mubr.f32.gmra.mrb[0].mxu0 %v4603
        %v4671 = vpop.f32.mrb[0].mxu0
        %v4672 = vadd.f32 0.0, %v4671
        %v4673 = vpop.f32.mrb[0].mxu0
        %4674 = vdwg.mxu0
        %v4676 = vsel %vm2865, %v4672, 0
        %4678 = vmatprep.subr.mxu0 0.0
        %4679 = vmatpush1.msra.mxu0 %v2565
        %4680 = vmatprep.subr.mxu0 0.0
        %4681 = vmatpush1.msra.mxu0 0.0
        %4682 = vmatprep.subr.mxu0 0.0
        %4683 = vmatpush1.msra.mxu0 0.0
        %4684 = vmatprep.subr.mxu0 0.0
        %4685 = vmatpush1.msra.mxu0 0.0
        %4686 = vmatprep.subr.mxu0 0.0
        %4687 = vmatpush1.msra.mxu0 0.0
        %4688 = vmatprep.subr.mxu0 0.0
        %4689 = vmatpush1.msra.mxu0 0.0
        %4690 = vmatprep.subr.mxu0 0.0
        %4691 = vmatpush1.msra.mxu0 0.0
        %4692 = vmatprep.subr.mxu0 0.0
        %4693 = vmatpush1.msra.mxu0 0.0
        %4694 = vmatprep.subr.mxu0 0.0
        %4695 = vmatpush1.msra.mxu0 0.0
        %4696 = vmatprep.subr.mxu0 0.0
        %4697 = vmatpush1.msra.mxu0 0.0
        %4698 = vmatprep.subr.mxu0 0.0
        %4699 = vmatpush1.msra.mxu0 0.0
        %4700 = vmatprep.subr.mxu0 0.0
        %4701 = vmatpush1.msra.mxu0 0.0
        %4702 = vmatprep.subr.mxu0 0.0
        %4703 = vmatpush1.msra.mxu0 0.0
        %4704 = vmatprep.subr.mxu0 0.0
        %4705 = vmatpush1.msra.mxu0 0.0
        %4706 = vmatprep.subr.mxu0 0.0
        %4707 = vmatpush1.msra.mxu0 0.0
        %4708 = vmatprep.subr.mxu0 0.0
        %4709 = vmatpush1.msra.mxu0 0.0
        %4710 = vmatprep.subr.mxu0 0.0
        %4711 = vmatpush1.msra.mxu0 0.0
        %4712 = vmatprep.subr.mxu0 0.0
        %4713 = vmatpush1.msra.mxu0 0.0
        %4714 = vmatprep.subr.mxu0 0.0
        %4715 = vmatpush1.msra.mxu0 0.0
        %4716 = vmatprep.subr.mxu0 0.0
        %4717 = vmatpush1.msra.mxu0 0.0
        %4718 = vmatprep.subr.mxu0 0.0
        %4719 = vmatpush1.msra.mxu0 0.0
        %4720 = vmatprep.subr.mxu0 0.0
        %4721 = vmatpush1.msra.mxu0 0.0
        %4722 = vmatprep.subr.mxu0 0.0
        %4723 = vmatpush1.msra.mxu0 0.0
        %4724 = vmatprep.subr.mxu0 0.0
        %4725 = vmatpush1.msra.mxu0 0.0
        %4726 = vmatprep.subr.mxu0 0.0
        %4727 = vmatpush1.msra.mxu0 0.0
        %4728 = vmatprep.subr.mxu0 0.0
        %4729 = vmatpush1.msra.mxu0 0.0
        %4730 = vmatprep.subr.mxu0 0.0
        %4731 = vmatpush1.msra.mxu0 0.0
        %4732 = vmatprep.subr.mxu0 0.0
        %4733 = vmatpush1.msra.mxu0 0.0
        %4734 = vmatprep.subr.mxu0 0.0
        %4735 = vmatpush1.msra.mxu0 0.0
        %4736 = vmatprep.subr.mxu0 0.0
        %4737 = vmatpush1.msra.mxu0 0.0
        %4738 = vmatprep.subr.mxu0 0.0
        %4739 = vmatpush1.msra.mxu0 0.0
        %4740 = vmatprep.subr.mxu0 0.0
        %4741 = vmatpush1.msra.mxu0 0.0
        %4742 = vmatprep.mubr.f32.mxu0 0.0
        %4743 = vmatmul.mubr.f32.gmra.mrb[0].mxu0 %v4676
        %v4744 = vpop.f32.mrb[0].mxu0
        %v4745 = vadd.f32 0.0, %v4744
        %v4746 = vpop.f32.mrb[0].mxu0
        %4747 = vdwg.mxu0
        %v4749 = vsel %vm2865, %v4506, 0
        %4751 = vmatprep.subr.mxu0 0.0
        %4752 = vmatpush1.msra.mxu0 %v2564
        %4753 = vmatprep.subr.mxu0 0.0
        %4754 = vmatpush1.msra.mxu0 0.0
        %4755 = vmatprep.subr.mxu0 0.0
        %4756 = vmatpush1.msra.mxu0 0.0
        %4757 = vmatprep.subr.mxu0 0.0
        %4758 = vmatpush1.msra.mxu0 0.0
        %4759 = vmatprep.subr.mxu0 0.0
        %4760 = vmatpush1.msra.mxu0 0.0
        %4761 = vmatprep.subr.mxu0 0.0
        %4762 = vmatpush1.msra.mxu0 0.0
        %4763 = vmatprep.subr.mxu0 0.0
        %4764 = vmatpush1.msra.mxu0 0.0
        %4765 = vmatprep.subr.mxu0 0.0
        %4766 = vmatpush1.msra.mxu0 0.0
        %4767 = vmatprep.subr.mxu0 0.0
        %4768 = vmatpush1.msra.mxu0 0.0
        %4769 = vmatprep.subr.mxu0 0.0
        %4770 = vmatpush1.msra.mxu0 0.0
        %4771 = vmatprep.subr.mxu0 0.0
        %4772 = vmatpush1.msra.mxu0 0.0
        %4773 = vmatprep.subr.mxu0 0.0
        %4774 = vmatpush1.msra.mxu0 0.0
        %4775 = vmatprep.subr.mxu0 0.0
        %4776 = vmatpush1.msra.mxu0 0.0
        %4777 = vmatprep.subr.mxu0 0.0
        %4778 = vmatpush1.msra.mxu0 0.0
        %4779 = vmatprep.subr.mxu0 0.0
        %4780 = vmatpush1.msra.mxu0 0.0
        %4781 = vmatprep.subr.mxu0 0.0
        %4782 = vmatpush1.msra.mxu0 0.0
        %4783 = vmatprep.subr.mxu0 0.0
        %4784 = vmatpush1.msra.mxu0 0.0
        %4785 = vmatprep.subr.mxu0 0.0
        %4786 = vmatpush1.msra.mxu0 0.0
        %4787 = vmatprep.subr.mxu0 0.0
        %4788 = vmatpush1.msra.mxu0 0.0
        %4789 = vmatprep.subr.mxu0 0.0
        %4790 = vmatpush1.msra.mxu0 0.0
        %4791 = vmatprep.subr.mxu0 0.0
        %4792 = vmatpush1.msra.mxu0 0.0
        %4793 = vmatprep.subr.mxu0 0.0
        %4794 = vmatpush1.msra.mxu0 0.0
        %4795 = vmatprep.subr.mxu0 0.0
        %4796 = vmatpush1.msra.mxu0 0.0
        %4797 = vmatprep.subr.mxu0 0.0
        %4798 = vmatpush1.msra.mxu0 0.0
        %4799 = vmatprep.subr.mxu0 0.0
        %4800 = vmatpush1.msra.mxu0 0.0
        %4801 = vmatprep.subr.mxu0 0.0
        %4802 = vmatpush1.msra.mxu0 0.0
        %4803 = vmatprep.subr.mxu0 0.0
        %4804 = vmatpush1.msra.mxu0 0.0
        %4805 = vmatprep.subr.mxu0 0.0
        %4806 = vmatpush1.msra.mxu0 0.0
        %4807 = vmatprep.subr.mxu0 0.0
        %4808 = vmatpush1.msra.mxu0 0.0
        %4809 = vmatprep.subr.mxu0 0.0
        %4810 = vmatpush1.msra.mxu0 0.0
        %4811 = vmatprep.subr.mxu0 0.0
        %4812 = vmatpush1.msra.mxu0 0.0
        %4813 = vmatprep.subr.mxu0 0.0
        %4814 = vmatpush1.msra.mxu0 0.0
        %4815 = vmatprep.mubr.f32.mxu0 0.0
        %4816 = vmatmul.mubr.f32.gmra.mrb[0].mxu0 %v4749
        %v4817 = vpop.f32.mrb[0].mxu0
        %v4818 = vadd.f32 %v4745, %v4817
        %v4819 = vpop.f32.mrb[0].mxu0
        %4820 = vdwg.mxu0
        %4821 = vrot.lane.b32.xlu0 %v4341, 112
        %v4822 = vpop.permute.xlu0 %4821
        %4823 = vrot.lane.b32.xlu0 %v4341, 80
        %v4824 = vpop.permute.xlu0 %4823
        %v4825 = vsel %vm2865, %v4822, 0
        %v4827 = vsel %vm2865, %v4824, 0
        %4829 = vmatprep.subr.mxu0 0.0
        %4830 = vmatpush1.xpose.msra.mxu0 %v4827
        %4831 = vmatprep.subr.mxu0 0.0
        %4832 = vmatpush1.xpose.msra.mxu0 0.0
        %4833 = vmatprep.subr.mxu0 0.0
        %4834 = vmatpush1.xpose.msra.mxu0 0.0
        %4835 = vmatprep.subr.mxu0 0.0
        %4836 = vmatpush1.xpose.msra.mxu0 0.0
        %4837 = vmatprep.subr.mxu0 0.0
        %4838 = vmatpush1.xpose.msra.mxu0 0.0
        %4839 = vmatprep.subr.mxu0 0.0
        %4840 = vmatpush1.xpose.msra.mxu0 0.0
        %4841 = vmatprep.subr.mxu0 0.0
        %4842 = vmatpush1.xpose.msra.mxu0 0.0
        %4843 = vmatprep.subr.mxu0 0.0
        %4844 = vmatpush1.xpose.msra.mxu0 0.0
        %4845 = vmatprep.subr.mxu0 0.0
        %4846 = vmatpush1.xpose.msra.mxu0 0.0
        %4847 = vmatprep.subr.mxu0 0.0
        %4848 = vmatpush1.xpose.msra.mxu0 0.0
        %4849 = vmatprep.subr.mxu0 0.0
        %4850 = vmatpush1.xpose.msra.mxu0 0.0
        %4851 = vmatprep.subr.mxu0 0.0
        %4852 = vmatpush1.xpose.msra.mxu0 0.0
        %4853 = vmatprep.subr.mxu0 0.0
        %4854 = vmatpush1.xpose.msra.mxu0 0.0
        %4855 = vmatprep.subr.mxu0 0.0
        %4856 = vmatpush1.xpose.msra.mxu0 0.0
        %4857 = vmatprep.subr.mxu0 0.0
        %4858 = vmatpush1.xpose.msra.mxu0 0.0
        %4859 = vmatprep.subr.mxu0 0.0
        %4860 = vmatpush1.xpose.msra.mxu0 0.0
        %4861 = vmatprep.subr.mxu0 0.0
        %4862 = vmatpush1.xpose.msra.mxu0 0.0
        %4863 = vmatprep.subr.mxu0 0.0
        %4864 = vmatpush1.xpose.msra.mxu0 0.0
        %4865 = vmatprep.subr.mxu0 0.0
        %4866 = vmatpush1.xpose.msra.mxu0 0.0
        %4867 = vmatprep.subr.mxu0 0.0
        %4868 = vmatpush1.xpose.msra.mxu0 0.0
        %4869 = vmatprep.subr.mxu0 0.0
        %4870 = vmatpush1.xpose.msra.mxu0 0.0
        %4871 = vmatprep.subr.mxu0 0.0
        %4872 = vmatpush1.xpose.msra.mxu0 0.0
        %4873 = vmatprep.subr.mxu0 0.0
        %4874 = vmatpush1.xpose.msra.mxu0 0.0
        %4875 = vmatprep.subr.mxu0 0.0
        %4876 = vmatpush1.xpose.msra.mxu0 0.0
        %4877 = vmatprep.subr.mxu0 0.0
        %4878 = vmatpush1.xpose.msra.mxu0 0.0
        %4879 = vmatprep.subr.mxu0 0.0
        %4880 = vmatpush1.xpose.msra.mxu0 0.0
        %4881 = vmatprep.subr.mxu0 0.0
        %4882 = vmatpush1.xpose.msra.mxu0 0.0
        %4883 = vmatprep.subr.mxu0 0.0
        %4884 = vmatpush1.xpose.msra.mxu0 0.0
        %4885 = vmatprep.subr.mxu0 0.0
        %4886 = vmatpush1.xpose.msra.mxu0 0.0
        %4887 = vmatprep.subr.mxu0 0.0
        %4888 = vmatpush1.xpose.msra.mxu0 0.0
        %4889 = vmatprep.subr.mxu0 0.0
        %4890 = vmatpush1.xpose.msra.mxu0 0.0
        %4891 = vmatprep.subr.mxu0 0.0
        %4892 = vmatpush1.xpose.msra.mxu0 0.0
        %4893 = vmatprep.mubr.f32.mxu0 0.0
        %4894 = vmatmul.mubr.f32.gmra.mrb[0].mxu0 %v4825
        %v4895 = vpop.f32.mrb[0].mxu0
        %v4896 = vadd.f32 0.0, %v4895
        %v4897 = vpop.f32.mrb[0].mxu0
        %4898 = vdwg.mxu0
        %v4899 = vmul.f32 %v4896, 0.35355338
        %v4900 = vsel %vm2865, %v4899, -inf
        %4901 = vmax.xlane.f32.xlu0 %v4900
        %v4902 = vpop.xlane.xlu0 %4901
        %v4903 = vsub.f32 %v4899, %v4902
        %v4904 = vmul.f32 %v4903, 1.442695
        %v4905 = vpow.pop %v4904
        %v4906 = vsel %vm2865, %v4905, 0.0
        %4907 = vadd.xlane.f32.xlu0 %v4906
        %v4908 = vpop.xlane.xlu0 %4907
        %v4909 = vrcp.pop %v4908
        %v4910 = vmul.f32 %v4905, %v4909
        %4911 = vrot.lane.b32.xlu0 %v4341, 48
        %v4912 = vpop.permute.xlu0 %4911
        %v4915 = vsel %vm2865, %v4910, 0
        %4917 = vmatprep.subr.mxu0 0.0
        %4918 = vmatpush1.msra.mxu0 %v4912
        %4919 = vmatprep.subr.mxu0 0.0
        %4920 = vmatpush1.msra.mxu0 0.0
        %4921 = vmatprep.subr.mxu0 0.0
        %4922 = vmatpush1.msra.mxu0 0.0
        %4923 = vmatprep.subr.mxu0 0.0
        %4924 = vmatpush1.msra.mxu0 0.0
        %4925 = vmatprep.subr.mxu0 0.0
        %4926 = vmatpush1.msra.mxu0 0.0
        %4927 = vmatprep.subr.mxu0 0.0
        %4928 = vmatpush1.msra.mxu0 0.0
        %4929 = vmatprep.subr.mxu0 0.0
        %4930 = vmatpush1.msra.mxu0 0.0
        %4931 = vmatprep.subr.mxu0 0.0
        %4932 = vmatpush1.msra.mxu0 0.0
        %4933 = vmatprep.subr.mxu0 0.0
        %4934 = vmatpush1.msra.mxu0 0.0
        %4935 = vmatprep.subr.mxu0 0.0
        %4936 = vmatpush1.msra.mxu0 0.0
        %4937 = vmatprep.subr.mxu0 0.0
        %4938 = vmatpush1.msra.mxu0 0.0
        %4939 = vmatprep.subr.mxu0 0.0
        %4940 = vmatpush1.msra.mxu0 0.0
        %4941 = vmatprep.subr.mxu0 0.0
        %4942 = vmatpush1.msra.mxu0 0.0
        %4943 = vmatprep.subr.mxu0 0.0
        %4944 = vmatpush1.msra.mxu0 0.0
        %4945 = vmatprep.subr.mxu0 0.0
        %4946 = vmatpush1.msra.mxu0 0.0
        %4947 = vmatprep.subr.mxu0 0.0
        %4948 = vmatpush1.msra.mxu0 0.0
        %4949 = vmatprep.subr.mxu0 0.0
        %4950 = vmatpush1.msra.mxu0 0.0
        %4951 = vmatprep.subr.mxu0 0.0
        %4952 = vmatpush1.msra.mxu0 0.0
        %4953 = vmatprep.subr.mxu0 0.0
        %4954 = vmatpush1.msra.mxu0 0.0
        %4955 = vmatprep.subr.mxu0 0.0
        %4956 = vmatpush1.msra.mxu0 0.0
        %4957 = vmatprep.subr.mxu0 0.0
        %4958 = vmatpush1.msra.mxu0 0.0
        %4959 = vmatprep.subr.mxu0 0.0
        %4960 = vmatpush1.msra.mxu0 0.0
        %4961 = vmatprep.subr.mxu0 0.0
        %4962 = vmatpush1.msra.mxu0 0.0
        %4963 = vmatprep.subr.mxu0 0.0
        %4964 = vmatpush1.msra.mxu0 0.0
        %4965 = vmatprep.subr.mxu0 0.0
        %4966 = vmatpush1.msra.mxu0 0.0
        %4967 = vmatprep.subr.mxu0 0.0
        %4968 = vmatpush1.msra.mxu0 0.0
        %4969 = vmatprep.subr.mxu0 0.0
        %4970 = vmatpush1.msra.mxu0 0.0
        %4971 = vmatprep.subr.mxu0 0.0
        %4972 = vmatpush1.msra.mxu0 0.0
        %4973 = vmatprep.subr.mxu0 0.0
        %4974 = vmatpush1.msra.mxu0 0.0
        %4975 = vmatprep.subr.mxu0 0.0
        %4976 = vmatpush1.msra.mxu0 0.0
        %4977 = vmatprep.subr.mxu0 0.0
        %4978 = vmatpush1.msra.mxu0 0.0
        %4979 = vmatprep.subr.mxu0 0.0
        %4980 = vmatpush1.msra.mxu0 0.0
        %4981 = vmatprep.mubr.f32.mxu0 0.0
        %4982 = vmatmul.mubr.f32.gmra.mrb[0].mxu0 %v4915
        %v4983 = vpop.f32.mrb[0].mxu0
        %v4984 = vadd.f32 0.0, %v4983
        %v4985 = vpop.f32.mrb[0].mxu0
        %4986 = vdwg.mxu0
        %v4988 = vsel %vm2865, %v4984, 0
        %4990 = vmatprep.subr.mxu0 0.0
        %4991 = vmatpush1.msra.mxu0 %v2566
        %4992 = vmatprep.subr.mxu0 0.0
        %4993 = vmatpush1.msra.mxu0 0.0
        %4994 = vmatprep.subr.mxu0 0.0
        %4995 = vmatpush1.msra.mxu0 0.0
        %4996 = vmatprep.subr.mxu0 0.0
        %4997 = vmatpush1.msra.mxu0 0.0
        %4998 = vmatprep.subr.mxu0 0.0
        %4999 = vmatpush1.msra.mxu0 0.0
        %5000 = vmatprep.subr.mxu0 0.0
        %5001 = vmatpush1.msra.mxu0 0.0
        %5002 = vmatprep.subr.mxu0 0.0
        %5003 = vmatpush1.msra.mxu0 0.0
        %5004 = vmatprep.subr.mxu0 0.0
        %5005 = vmatpush1.msra.mxu0 0.0
        %5006 = vmatprep.subr.mxu0 0.0
        %5007 = vmatpush1.msra.mxu0 0.0
        %5008 = vmatprep.subr.mxu0 0.0
        %5009 = vmatpush1.msra.mxu0 0.0
        %5010 = vmatprep.subr.mxu0 0.0
        %5011 = vmatpush1.msra.mxu0 0.0
        %5012 = vmatprep.subr.mxu0 0.0
        %5013 = vmatpush1.msra.mxu0 0.0
        %5014 = vmatprep.subr.mxu0 0.0
        %5015 = vmatpush1.msra.mxu0 0.0
        %5016 = vmatprep.subr.mxu0 0.0
        %5017 = vmatpush1.msra.mxu0 0.0
        %5018 = vmatprep.subr.mxu0 0.0
        %5019 = vmatpush1.msra.mxu0 0.0
        %5020 = vmatprep.subr.mxu0 0.0
        %5021 = vmatpush1.msra.mxu0 0.0
        %5022 = vmatprep.subr.mxu0 0.0
        %5023 = vmatpush1.msra.mxu0 0.0
        %5024 = vmatprep.subr.mxu0 0.0
        %5025 = vmatpush1.msra.mxu0 0.0
        %5026 = vmatprep.subr.mxu0 0.0
        %5027 = vmatpush1.msra.mxu0 0.0
        %5028 = vmatprep.subr.mxu0 0.0
        %5029 = vmatpush1.msra.mxu0 0.0
        %5030 = vmatprep.subr.mxu0 0.0
        %5031 = vmatpush1.msra.mxu0 0.0
        %5032 = vmatprep.subr.mxu0 0.0
        %5033 = vmatpush1.msra.mxu0 0.0
        %5034 = vmatprep.subr.mxu0 0.0
        %5035 = vmatpush1.msra.mxu0 0.0
        %5036 = vmatprep.subr.mxu0 0.0
        %5037 = vmatpush1.msra.mxu0 0.0
        %5038 = vmatprep.subr.mxu0 0.0
        %5039 = vmatpush1.msra.mxu0 0.0
        %5040 = vmatprep.subr.mxu0 0.0
        %5041 = vmatpush1.msra.mxu0 0.0
        %5042 = vmatprep.subr.mxu0 0.0
        %5043 = vmatpush1.msra.mxu0 0.0
        %5044 = vmatprep.subr.mxu0 0.0
        %5045 = vmatpush1.msra.mxu0 0.0
        %5046 = vmatprep.subr.mxu0 0.0
        %5047 = vmatpush1.msra.mxu0 0.0
        %5048 = vmatprep.subr.mxu0 0.0
        %5049 = vmatpush1.msra.mxu0 0.0
        %5050 = vmatprep.subr.mxu0 0.0
        %5051 = vmatpush1.msra.mxu0 0.0
        %5052 = vmatprep.subr.mxu0 0.0
        %5053 = vmatpush1.msra.mxu0 0.0
        %5054 = vmatprep.mubr.f32.mxu0 0.0
        %5055 = vmatmul.mubr.f32.gmra.mrb[0].mxu0 %v4988
        %v5056 = vpop.f32.mrb[0].mxu0
        %v5057 = vadd.f32 0.0, %v5056
        %v5058 = vpop.f32.mrb[0].mxu0
        %5059 = vdwg.mxu0
        %v5060 = vadd.f32 %v4818, %v5057
        %5061 = vrot.lane.b32.xlu0 %v4341, 104
        %v5062 = vpop.permute.xlu0 %5061
        %5063 = vrot.lane.b32.xlu0 %v4341, 72
        %v5064 = vpop.permute.xlu0 %5063
        %v5065 = vsel %vm2865, %v5062, 0
        %v5067 = vsel %vm2865, %v5064, 0
        %5069 = vmatprep.subr.mxu0 0.0
        %5070 = vmatpush1.xpose.msra.mxu0 %v5067
        %5071 = vmatprep.subr.mxu0 0.0
        %5072 = vmatpush1.xpose.msra.mxu0 0.0
        %5073 = vmatprep.subr.mxu0 0.0
        %5074 = vmatpush1.xpose.msra.mxu0 0.0
        %5075 = vmatprep.subr.mxu0 0.0
        %5076 = vmatpush1.xpose.msra.mxu0 0.0
        %5077 = vmatprep.subr.mxu0 0.0
        %5078 = vmatpush1.xpose.msra.mxu0 0.0
        %5079 = vmatprep.subr.mxu0 0.0
        %5080 = vmatpush1.xpose.msra.mxu0 0.0
        %5081 = vmatprep.subr.mxu0 0.0
        %5082 = vmatpush1.xpose.msra.mxu0 0.0
        %5083 = vmatprep.subr.mxu0 0.0
        %5084 = vmatpush1.xpose.msra.mxu0 0.0
        %5085 = vmatprep.subr.mxu0 0.0
        %5086 = vmatpush1.xpose.msra.mxu0 0.0
        %5087 = vmatprep.subr.mxu0 0.0
        %5088 = vmatpush1.xpose.msra.mxu0 0.0
        %5089 = vmatprep.subr.mxu0 0.0
        %5090 = vmatpush1.xpose.msra.mxu0 0.0
        %5091 = vmatprep.subr.mxu0 0.0
        %5092 = vmatpush1.xpose.msra.mxu0 0.0
        %5093 = vmatprep.subr.mxu0 0.0
        %5094 = vmatpush1.xpose.msra.mxu0 0.0
        %5095 = vmatprep.subr.mxu0 0.0
        %5096 = vmatpush1.xpose.msra.mxu0 0.0
        %5097 = vmatprep.subr.mxu0 0.0
        %5098 = vmatpush1.xpose.msra.mxu0 0.0
        %5099 = vmatprep.subr.mxu0 0.0
        %5100 = vmatpush1.xpose.msra.mxu0 0.0
        %5101 = vmatprep.subr.mxu0 0.0
        %5102 = vmatpush1.xpose.msra.mxu0 0.0
        %5103 = vmatprep.subr.mxu0 0.0
        %5104 = vmatpush1.xpose.msra.mxu0 0.0
        %5105 = vmatprep.subr.mxu0 0.0
        %5106 = vmatpush1.xpose.msra.mxu0 0.0
        %5107 = vmatprep.subr.mxu0 0.0
        %5108 = vmatpush1.xpose.msra.mxu0 0.0
        %5109 = vmatprep.subr.mxu0 0.0
        %5110 = vmatpush1.xpose.msra.mxu0 0.0
        %5111 = vmatprep.subr.mxu0 0.0
        %5112 = vmatpush1.xpose.msra.mxu0 0.0
        %5113 = vmatprep.subr.mxu0 0.0
        %5114 = vmatpush1.xpose.msra.mxu0 0.0
        %5115 = vmatprep.subr.mxu0 0.0
        %5116 = vmatpush1.xpose.msra.mxu0 0.0
        %5117 = vmatprep.subr.mxu0 0.0
        %5118 = vmatpush1.xpose.msra.mxu0 0.0
        %5119 = vmatprep.subr.mxu0 0.0
        %5120 = vmatpush1.xpose.msra.mxu0 0.0
        %5121 = vmatprep.subr.mxu0 0.0
        %5122 = vmatpush1.xpose.msra.mxu0 0.0
        %5123 = vmatprep.subr.mxu0 0.0
        %5124 = vmatpush1.xpose.msra.mxu0 0.0
        %5125 = vmatprep.subr.mxu0 0.0
        %5126 = vmatpush1.xpose.msra.mxu0 0.0
        %5127 = vmatprep.subr.mxu0 0.0
        %5128 = vmatpush1.xpose.msra.mxu0 0.0
        %5129 = vmatprep.subr.mxu0 0.0
        %5130 = vmatpush1.xpose.msra.mxu0 0.0
        %5131 = vmatprep.subr.mxu0 0.0
        %5132 = vmatpush1.xpose.msra.mxu0 0.0
        %5133 = vmatprep.mubr.f32.mxu0 0.0
        %5134 = vmatmul.mubr.f32.gmra.mrb[0].mxu0 %v5065
        %v5135 = vpop.f32.mrb[0].mxu0
        %v5136 = vadd.f32 0.0, %v5135
        %v5137 = vpop.f32.mrb[0].mxu0
        %5138 = vdwg.mxu0
        %v5139 = vmul.f32 %v5136, 0.35355338
        %v5140 = vsel %vm2865, %v5139, -inf
        %5141 = vmax.xlane.f32.xlu0 %v5140
        %v5142 = vpop.xlane.xlu0 %5141
        %v5143 = vsub.f32 %v5139, %v5142
        %v5144 = vmul.f32 %v5143, 1.442695
        %v5145 = vpow.pop %v5144
        %v5146 = vsel %vm2865, %v5145, 0.0
        %5147 = vadd.xlane.f32.xlu0 %v5146
        %v5148 = vpop.xlane.xlu0 %5147
        %v5149 = vrcp.pop %v5148
        %v5150 = vmul.f32 %v5145, %v5149
        %5151 = vrot.lane.b32.xlu0 %v4341, 40
        %v5152 = vpop.permute.xlu0 %5151
        %v5155 = vsel %vm2865, %v5150, 0
        %5157 = vmatprep.subr.mxu0 0.0
        %5158 = vmatpush1.msra.mxu0 %v5152
        %5159 = vmatprep.subr.mxu0 0.0
        %5160 = vmatpush1.msra.mxu0 0.0
        %5161 = vmatprep.subr.mxu0 0.0
        %5162 = vmatpush1.msra.mxu0 0.0
        %5163 = vmatprep.subr.mxu0 0.0
        %5164 = vmatpush1.msra.mxu0 0.0
        %5165 = vmatprep.subr.mxu0 0.0
        %5166 = vmatpush1.msra.mxu0 0.0
        %5167 = vmatprep.subr.mxu0 0.0
        %5168 = vmatpush1.msra.mxu0 0.0
        %5169 = vmatprep.subr.mxu0 0.0
        %5170 = vmatpush1.msra.mxu0 0.0
        %5171 = vmatprep.subr.mxu0 0.0
        %5172 = vmatpush1.msra.mxu0 0.0
        %5173 = vmatprep.subr.mxu0 0.0
        %5174 = vmatpush1.msra.mxu0 0.0
        %5175 = vmatprep.subr.mxu0 0.0
        %5176 = vmatpush1.msra.mxu0 0.0
        %5177 = vmatprep.subr.mxu0 0.0
        %5178 = vmatpush1.msra.mxu0 0.0
        %5179 = vmatprep.subr.mxu0 0.0
        %5180 = vmatpush1.msra.mxu0 0.0
        %5181 = vmatprep.subr.mxu0 0.0
        %5182 = vmatpush1.msra.mxu0 0.0
        %5183 = vmatprep.subr.mxu0 0.0
        %5184 = vmatpush1.msra.mxu0 0.0
        %5185 = vmatprep.subr.mxu0 0.0
        %5186 = vmatpush1.msra.mxu0 0.0
        %5187 = vmatprep.subr.mxu0 0.0
        %5188 = vmatpush1.msra.mxu0 0.0
        %5189 = vmatprep.subr.mxu0 0.0
        %5190 = vmatpush1.msra.mxu0 0.0
        %5191 = vmatprep.subr.mxu0 0.0
        %5192 = vmatpush1.msra.mxu0 0.0
        %5193 = vmatprep.subr.mxu0 0.0
        %5194 = vmatpush1.msra.mxu0 0.0
        %5195 = vmatprep.subr.mxu0 0.0
        %5196 = vmatpush1.msra.mxu0 0.0
        %5197 = vmatprep.subr.mxu0 0.0
        %5198 = vmatpush1.msra.mxu0 0.0
        %5199 = vmatprep.subr.mxu0 0.0
        %5200 = vmatpush1.msra.mxu0 0.0
        %5201 = vmatprep.subr.mxu0 0.0
        %5202 = vmatpush1.msra.mxu0 0.0
        %5203 = vmatprep.subr.mxu0 0.0
        %5204 = vmatpush1.msra.mxu0 0.0
        %5205 = vmatprep.subr.mxu0 0.0
        %5206 = vmatpush1.msra.mxu0 0.0
        %5207 = vmatprep.subr.mxu0 0.0
        %5208 = vmatpush1.msra.mxu0 0.0
        %5209 = vmatprep.subr.mxu0 0.0
        %5210 = vmatpush1.msra.mxu0 0.0
        %5211 = vmatprep.subr.mxu0 0.0
        %5212 = vmatpush1.msra.mxu0 0.0
        %5213 = vmatprep.subr.mxu0 0.0
        %5214 = vmatpush1.msra.mxu0 0.0
        %5215 = vmatprep.subr.mxu0 0.0
        %5216 = vmatpush1.msra.mxu0 0.0
        %5217 = vmatprep.subr.mxu0 0.0
        %5218 = vmatpush1.msra.mxu0 0.0
        %5219 = vmatprep.subr.mxu0 0.0
        %5220 = vmatpush1.msra.mxu0 0.0
        %5221 = vmatprep.mubr.f32.mxu0 0.0
        %5222 = vmatmul.mubr.f32.gmra.mrb[0].mxu0 %v5155
        %v5223 = vpop.f32.mrb[0].mxu0
        %v5224 = vadd.f32 0.0, %v5223
        %v5225 = vpop.f32.mrb[0].mxu0
        %5226 = vdwg.mxu0
        %v5228 = vsel %vm2865, %v5224, 0
        %5230 = vmatprep.subr.mxu0 0.0
        %5231 = vmatpush1.msra.mxu0 %v2567
        %5232 = vmatprep.subr.mxu0 0.0
        %5233 = vmatpush1.msra.mxu0 0.0
        %5234 = vmatprep.subr.mxu0 0.0
        %5235 = vmatpush1.msra.mxu0 0.0
        %5236 = vmatprep.subr.mxu0 0.0
        %5237 = vmatpush1.msra.mxu0 0.0
        %5238 = vmatprep.subr.mxu0 0.0
        %5239 = vmatpush1.msra.mxu0 0.0
        %5240 = vmatprep.subr.mxu0 0.0
        %5241 = vmatpush1.msra.mxu0 0.0
        %5242 = vmatprep.subr.mxu0 0.0
        %5243 = vmatpush1.msra.mxu0 0.0
        %5244 = vmatprep.subr.mxu0 0.0
        %5245 = vmatpush1.msra.mxu0 0.0
        %5246 = vmatprep.subr.mxu0 0.0
        %5247 = vmatpush1.msra.mxu0 0.0
        %5248 = vmatprep.subr.mxu0 0.0
        %5249 = vmatpush1.msra.mxu0 0.0
        %5250 = vmatprep.subr.mxu0 0.0
        %5251 = vmatpush1.msra.mxu0 0.0
        %5252 = vmatprep.subr.mxu0 0.0
        %5253 = vmatpush1.msra.mxu0 0.0
        %5254 = vmatprep.subr.mxu0 0.0
        %5255 = vmatpush1.msra.mxu0 0.0
        %5256 = vmatprep.subr.mxu0 0.0
        %5257 = vmatpush1.msra.mxu0 0.0
        %5258 = vmatprep.subr.mxu0 0.0
        %5259 = vmatpush1.msra.mxu0 0.0
        %5260 = vmatprep.subr.mxu0 0.0
        %5261 = vmatpush1.msra.mxu0 0.0
        %5262 = vmatprep.subr.mxu0 0.0
        %5263 = vmatpush1.msra.mxu0 0.0
        %5264 = vmatprep.subr.mxu0 0.0
        %5265 = vmatpush1.msra.mxu0 0.0
        %5266 = vmatprep.subr.mxu0 0.0
        %5267 = vmatpush1.msra.mxu0 0.0
        %5268 = vmatprep.subr.mxu0 0.0
        %5269 = vmatpush1.msra.mxu0 0.0
        %5270 = vmatprep.subr.mxu0 0.0
        %5271 = vmatpush1.msra.mxu0 0.0
        %5272 = vmatprep.subr.mxu0 0.0
        %5273 = vmatpush1.msra.mxu0 0.0
        %5274 = vmatprep.subr.mxu0 0.0
        %5275 = vmatpush1.msra.mxu0 0.0
        %5276 = vmatprep.subr.mxu0 0.0
        %5277 = vmatpush1.msra.mxu0 0.0
        %5278 = vmatprep.subr.mxu0 0.0
        %5279 = vmatpush1.msra.mxu0 0.0
        %5280 = vmatprep.subr.mxu0 0.0
        %5281 = vmatpush1.msra.mxu0 0.0
        %5282 = vmatprep.subr.mxu0 0.0
        %5283 = vmatpush1.msra.mxu0 0.0
        %5284 = vmatprep.subr.mxu0 0.0
        %5285 = vmatpush1.msra.mxu0 0.0
        %5286 = vmatprep.subr.mxu0 0.0
        %5287 = vmatpush1.msra.mxu0 0.0
        %5288 = vmatprep.subr.mxu0 0.0
        %5289 = vmatpush1.msra.mxu0 0.0
        %5290 = vmatprep.subr.mxu0 0.0
        %5291 = vmatpush1.msra.mxu0 0.0
        %5292 = vmatprep.subr.mxu0 0.0
        %5293 = vmatpush1.msra.mxu0 0.0
        %5294 = vmatprep.mubr.f32.mxu0 0.0
        %5295 = vmatmul.mubr.f32.gmra.mrb[0].mxu0 %v5228
        %v5296 = vpop.f32.mrb[0].mxu0
        %v5297 = vadd.f32 0.0, %v5296
        %v5298 = vpop.f32.mrb[0].mxu0
        %5299 = vdwg.mxu0
        %v5300 = vadd.f32 %v5060, %v5297
        %v5302 = vlaneseq
        %v5303 = vshrl.u32 %v5302, 7
        %v5304 = vsub.s32 0, %v5303
        %v5305 = vrot.slane %v2562, %v5304
        %v5307 = vadd.f32 %v5300, %v5305
        %v5308 = vadd.f32 %v2679, %v5307
        %v5309 = vsel %vm2690, %v5308, 0.0
        %5310 = vadd.xlane.f32.xlu0 %v5309
        %v5311 = vpop.xlane.xlu0 %5310
        %v5312 = vmul.f32 %v5311, %v4007
        %v5313 = vsub.f32 %v5308, %v5312
        %v5314 = vmul.f32 %v5313, %v5313
        %v5315 = vsel %vm2690, %v5314, 0.0
        %5316 = vadd.xlane.f32.xlu0 %v5315
        %v5317 = vpop.xlane.xlu0 %5316
        %v5318 = vmul.f32 %v5317, %v4007
        %v5319 = vadd.f32 %v5318, 1e-05
        %v5320 = vrsqrt.pop %v5319
        %v5321 = vmul.f32 %v5313, %v5320
        %v5323 = vlaneseq
        %v5324 = vshrl.u32 %v5323, 7
        %v5325 = vsub.s32 0, %v5324
        %v5326 = vrot.slane %v2557, %v5325
        %v5328 = vmul.f32 %v5321, %v5326
        %v5330 = vlaneseq
        %v5331 = vshrl.u32 %v5330, 7
        %v5332 = vsub.s32 0, %v5331
        %v5333 = vrot.slane %v2556, %v5332
        %v5335 = vadd.f32 %v5328, %v5333
        %v5337 = vlaneseq
        %v5338 = vshrl.u32 %v5337, 7
        %v5339 = vsub.s32 0, %v5338
        %v5340 = vrot.slane %v2538, %v5339
        %v5343 = vsel %vm2690, %v5335, 0
        %5345 = vmatprep.subr.mxu0 0.0
        %5346 = vmatpush1.msra.mxu0 %v2548
        %5347 = vmatprep.subr.mxu0 0.0
        %5348 = vmatpush1.msra.mxu0 %v2549
        %5349 = vmatprep.subr.mxu0 0.0
        %5350 = vmatpush1.msra.mxu0 %v2550
        %5351 = vmatprep.subr.mxu0 0.0
        %5352 = vmatpush1.msra.mxu0 %v2551
        %5353 = vmatprep.subr.mxu0 0.0
        %5354 = vmatpush1.msra.mxu0 0.0
        %5355 = vmatprep.subr.mxu0 0.0
        %5356 = vmatpush1.msra.mxu0 0.0
        %5357 = vmatprep.subr.mxu0 0.0
        %5358 = vmatpush1.msra.mxu0 0.0
        %5359 = vmatprep.subr.mxu0 0.0
        %5360 = vmatpush1.msra.mxu0 0.0
        %5361 = vmatprep.subr.mxu0 0.0
        %5362 = vmatpush1.msra.mxu0 0.0
        %5363 = vmatprep.subr.mxu0 0.0
        %5364 = vmatpush1.msra.mxu0 0.0
        %5365 = vmatprep.subr.mxu0 0.0
        %5366 = vmatpush1.msra.mxu0 0.0
        %5367 = vmatprep.subr.mxu0 0.0
        %5368 = vmatpush1.msra.mxu0 0.0
        %5369 = vmatprep.subr.mxu0 0.0
        %5370 = vmatpush1.msra.mxu0 0.0
        %5371 = vmatprep.subr.mxu0 0.0
        %5372 = vmatpush1.msra.mxu0 0.0
        %5373 = vmatprep.subr.mxu0 0.0
        %5374 = vmatpush1.msra.mxu0 0.0
        %5375 = vmatprep.subr.mxu0 0.0
        %5376 = vmatpush1.msra.mxu0 0.0
        %5377 = vmatprep.subr.mxu0 0.0
        %5378 = vmatpush1.msra.mxu0 0.0
        %5379 = vmatprep.subr.mxu0 0.0
        %5380 = vmatpush1.msra.mxu0 0.0
        %5381 = vmatprep.subr.mxu0 0.0
        %5382 = vmatpush1.msra.mxu0 0.0
        %5383 = vmatprep.subr.mxu0 0.0
        %5384 = vmatpush1.msra.mxu0 0.0
        %5385 = vmatprep.subr.mxu0 0.0
        %5386 = vmatpush1.msra.mxu0 0.0
        %5387 = vmatprep.subr.mxu0 0.0
        %5388 = vmatpush1.msra.mxu0 0.0
        %5389 = vmatprep.subr.mxu0 0.0
        %5390 = vmatpush1.msra.mxu0 0.0
        %5391 = vmatprep.subr.mxu0 0.0
        %5392 = vmatpush1.msra.mxu0 0.0
        %5393 = vmatprep.subr.mxu0 0.0
        %5394 = vmatpush1.msra.mxu0 0.0
        %5395 = vmatprep.subr.mxu0 0.0
        %5396 = vmatpush1.msra.mxu0 0.0
        %5397 = vmatprep.subr.mxu0 0.0
        %5398 = vmatpush1.msra.mxu0 0.0
        %5399 = vmatprep.subr.mxu0 0.0
        %5400 = vmatpush1.msra.mxu0 0.0
        %5401 = vmatprep.subr.mxu0 0.0
        %5402 = vmatpush1.msra.mxu0 0.0
        %5403 = vmatprep.subr.mxu0 0.0
        %5404 = vmatpush1.msra.mxu0 0.0
        %5405 = vmatprep.subr.mxu0 0.0
        %5406 = vmatpush1.msra.mxu0 0.0
        %5407 = vmatprep.subr.mxu0 0.0
        %5408 = vmatpush1.msra.mxu0 0.0
        %5409 = vmatprep.mubr.f32.mxu0 0.0
        %5410 = vmatmul.mubr.f32.gmra.mrb[0].mxu0 %v5343
        %v5411 = vpop.f32.mrb[0].mxu0
        %v5412 = vadd.f32 %v5340, %v5411
        %v5413 = vpop.f32.mrb[0].mxu0
        %5414 = vdwg.mxu0
        %v5415 = vadd.f32 %v4263, %v2677
        %v5416 = vadd.f32 %v4264, %v2678
        %v5418 = vlaneseq
        %v5419 = vshrl.u32 %v5418, 7
        %v5420 = vsub.s32 0, %v5419
        %v5421 = vrot.slane %v2536, %v5420
        %v5424 = vsel %vm2690, %v5415, 0
        %v5427 = vsel %vm2690, %v5416, 0
        %5429 = vmatprep.subr.mxu0 0.0
        %5430 = vmatpush1.msra.mxu0 %v2540
        %5431 = vmatprep.subr.mxu0 0.0
        %5432 = vmatpush1.msra.mxu0 %v2541
        %5433 = vmatprep.subr.mxu0 0.0
        %5434 = vmatpush1.msra.mxu0 %v2542
        %5435 = vmatprep.subr.mxu0 0.0
        %5436 = vmatpush1.msra.mxu0 %v2543
        %5437 = vmatprep.subr.mxu0 0.0
        %5438 = vmatpush1.msra.mxu0 0.0
        %5439 = vmatprep.subr.mxu0 0.0
        %5440 = vmatpush1.msra.mxu0 0.0
        %5441 = vmatprep.subr.mxu0 0.0
        %5442 = vmatpush1.msra.mxu0 0.0
        %5443 = vmatprep.subr.mxu0 0.0
        %5444 = vmatpush1.msra.mxu0 0.0
        %5445 = vmatprep.subr.mxu0 0.0
        %5446 = vmatpush1.msra.mxu0 0.0
        %5447 = vmatprep.subr.mxu0 0.0
        %5448 = vmatpush1.msra.mxu0 0.0
        %5449 = vmatprep.subr.mxu0 0.0
        %5450 = vmatpush1.msra.mxu0 0.0
        %5451 = vmatprep.subr.mxu0 0.0
        %5452 = vmatpush1.msra.mxu0 0.0
        %5453 = vmatprep.subr.mxu0 0.0
        %5454 = vmatpush1.msra.mxu0 0.0
        %5455 = vmatprep.subr.mxu0 0.0
        %5456 = vmatpush1.msra.mxu0 0.0
        %5457 = vmatprep.subr.mxu0 0.0
        %5458 = vmatpush1.msra.mxu0 0.0
        %5459 = vmatprep.subr.mxu0 0.0
        %5460 = vmatpush1.msra.mxu0 0.0
        %5461 = vmatprep.subr.mxu0 0.0
        %5462 = vmatpush1.msra.mxu0 0.0
        %5463 = vmatprep.subr.mxu0 0.0
        %5464 = vmatpush1.msra.mxu0 0.0
        %5465 = vmatprep.subr.mxu0 0.0
        %5466 = vmatpush1.msra.mxu0 0.0
        %5467 = vmatprep.subr.mxu0 0.0
        %5468 = vmatpush1.msra.mxu0 0.0
        %5469 = vmatprep.subr.mxu0 0.0
        %5470 = vmatpush1.msra.mxu0 0.0
        %5471 = vmatprep.subr.mxu0 0.0
        %5472 = vmatpush1.msra.mxu0 0.0
        %5473 = vmatprep.subr.mxu0 0.0
        %5474 = vmatpush1.msra.mxu0 0.0
        %5475 = vmatprep.subr.mxu0 0.0
        %5476 = vmatpush1.msra.mxu0 0.0
        %5477 = vmatprep.subr.mxu0 0.0
        %5478 = vmatpush1.msra.mxu0 0.0
        %5479 = vmatprep.subr.mxu0 0.0
        %5480 = vmatpush1.msra.mxu0 0.0
        %5481 = vmatprep.subr.mxu0 0.0
        %5482 = vmatpush1.msra.mxu0 0.0
        %5483 = vmatprep.subr.mxu0 0.0
        %5484 = vmatpush1.msra.mxu0 0.0
        %5485 = vmatprep.subr.mxu0 0.0
        %5486 = vmatpush1.msra.mxu0 0.0
        %5487 = vmatprep.subr.mxu0 0.0
        %5488 = vmatpush1.msra.mxu0 0.0
        %5489 = vmatprep.subr.mxu0 0.0
        %5490 = vmatpush1.msra.mxu0 0.0
        %5491 = vmatprep.subr.mxu0 0.0
        %5492 = vmatpush1.msra.mxu0 0.0
        %5493 = vmatprep.mubr.f32.mxu0 0.0
        %5494 = vmatmul.mubr.f32.gmra.mrb[0].mxu0 %v5424
        %v5495 = vpop.f32.mrb[0].mxu0
        %v5496 = vadd.f32 %v5421, %v5495
        %v5497 = vpop.f32.mrb[0].mxu0
        %5498 = vmatprep.mubr.f32.mxu0 0.0
        %5499 = vmatmul.mubr.f32.gmra.mrb[0].mxu0 %v5427
        %v5500 = vpop.f32.mrb[0].mxu0
        %v5501 = vadd.f32 %v5421, %v5500
        %v5502 = vpop.f32.mrb[0].mxu0
        %5503 = vdwg.mxu0
        %v5505 = vlaneseq
        %v5506 = vshrl.u32 %v5505, 7
        %v5507 = vsub.s32 0, %v5506
        %v5508 = vrot.slane %v2539, %v5507
        %v5511 = vsel %vm2690, %v4263, 0
        %v5514 = vsel %vm2690, %v4264, 0
        %5516 = vmatprep.subr.mxu0 0.0
        %5517 = vmatpush1.msra.mxu0 %v2552
        %5518 = vmatprep.subr.mxu0 0.0
        %5519 = vmatpush1.msra.mxu0 %v2553
        %5520 = vmatprep.subr.mxu0 0.0
        %5521 = vmatpush1.msra.mxu0 %v2554
        %5522 = vmatprep.subr.mxu0 0.0
        %5523 = vmatpush1.msra.mxu0 %v2555
        %5524 = vmatprep.subr.mxu0 0.0
        %5525 = vmatpush1.msra.mxu0 0.0
        %5526 = vmatprep.subr.mxu0 0.0
        %5527 = vmatpush1.msra.mxu0 0.0
        %5528 = vmatprep.subr.mxu0 0.0
        %5529 = vmatpush1.msra.mxu0 0.0
        %5530 = vmatprep.subr.mxu0 0.0
        %5531 = vmatpush1.msra.mxu0 0.0
        %5532 = vmatprep.subr.mxu0 0.0
        %5533 = vmatpush1.msra.mxu0 0.0
        %5534 = vmatprep.subr.mxu0 0.0
        %5535 = vmatpush1.msra.mxu0 0.0
        %5536 = vmatprep.subr.mxu0 0.0
        %5537 = vmatpush1.msra.mxu0 0.0
        %5538 = vmatprep.subr.mxu0 0.0
        %5539 = vmatpush1.msra.mxu0 0.0
        %5540 = vmatprep.subr.mxu0 0.0
        %5541 = vmatpush1.msra.mxu0 0.0
        %5542 = vmatprep.subr.mxu0 0.0
        %5543 = vmatpush1.msra.mxu0 0.0
        %5544 = vmatprep.subr.mxu0 0.0
        %5545 = vmatpush1.msra.mxu0 0.0
        %5546 = vmatprep.subr.mxu0 0.0
        %5547 = vmatpush1.msra.mxu0 0.0
        %5548 = vmatprep.subr.mxu0 0.0
        %5549 = vmatpush1.msra.mxu0 0.0
        %5550 = vmatprep.subr.mxu0 0.0
        %5551 = vmatpush1.msra.mxu0 0.0
        %5552 = vmatprep.subr.mxu0 0.0
        %5553 = vmatpush1.msra.mxu0 0.0
        %5554 = vmatprep.subr.mxu0 0.0
        %5555 = vmatpush1.msra.mxu0 0.0
        %5556 = vmatprep.subr.mxu0 0.0
        %5557 = vmatpush1.msra.mxu0 0.0
        %5558 = vmatprep.subr.mxu0 0.0
        %5559 = vmatpush1.msra.mxu0 0.0
        %5560 = vmatprep.subr.mxu0 0.0
        %5561 = vmatpush1.msra.mxu0 0.0
        %5562 = vmatprep.subr.mxu0 0.0
        %5563 = vmatpush1.msra.mxu0 0.0
        %5564 = vmatprep.subr.mxu0 0.0
        %5565 = vmatpush1.msra.mxu0 0.0
        %5566 = vmatprep.subr.mxu0 0.0
        %5567 = vmatpush1.msra.mxu0 0.0
        %5568 = vmatprep.subr.mxu0 0.0
        %5569 = vmatpush1.msra.mxu0 0.0
        %5570 = vmatprep.subr.mxu0 0.0
        %5571 = vmatpush1.msra.mxu0 0.0
        %5572 = vmatprep.subr.mxu0 0.0
        %5573 = vmatpush1.msra.mxu0 0.0
        %5574 = vmatprep.subr.mxu0 0.0
        %5575 = vmatpush1.msra.mxu0 0.0
        %5576 = vmatprep.subr.mxu0 0.0
        %5577 = vmatpush1.msra.mxu0 0.0
        %5578 = vmatprep.subr.mxu0 0.0
        %5579 = vmatpush1.msra.mxu0 0.0
        %5580 = vmatprep.mubr.f32.mxu0 0.0
        %5581 = vmatmul.mubr.f32.gmra.mrb[0].mxu0 %v5511
        %v5582 = vpop.f32.mrb[0].mxu0
        %v5583 = vadd.f32 %v5508, %v5582
        %v5584 = vpop.f32.mrb[0].mxu0
        %5585 = vmatprep.mubr.f32.mxu0 0.0
        %5586 = vmatmul.mubr.f32.gmra.mrb[0].mxu0 %v5514
        %v5587 = vpop.f32.mrb[0].mxu0
        %v5588 = vadd.f32 %v5508, %v5587
        %v5589 = vpop.f32.mrb[0].mxu0
        %5590 = vdwg.mxu0
        %v5592 = vsel %vm2865, %v5412, 0
        %v5595 = vsel %vm2865, %v5496, 0
        %v5598 = vsel %vm2865, %v5501, 0
        %5600 = vmatprep.subr.mxu0 0.0
        %5601 = vmatpush1.xpose.msra.mxu0 %v5595
        %5602 = vmatprep.subr.mxu0 0.0
        %5603 = vmatpush1.xpose.msra.mxu0 %v5598
        %5604 = vmatprep.subr.mxu0 0.0
        %5605 = vmatpush1.xpose.msra.mxu0 0.0
        %5606 = vmatprep.subr.mxu0 0.0
        %5607 = vmatpush1.xpose.msra.mxu0 0.0
        %5608 = vmatprep.subr.mxu0 0.0
        %5609 = vmatpush1.xpose.msra.mxu0 0.0
        %5610 = vmatprep.subr.mxu0 0.0
        %5611 = vmatpush1.xpose.msra.mxu0 0.0
        %5612 = vmatprep.subr.mxu0 0.0
        %5613 = vmatpush1.xpose.msra.mxu0 0.0
        %5614 = vmatprep.subr.mxu0 0.0
        %5615 = vmatpush1.xpose.msra.mxu0 0.0
        %5616 = vmatprep.subr.mxu0 0.0
        %5617 = vmatpush1.xpose.msra.mxu0 0.0
        %5618 = vmatprep.subr.mxu0 0.0
        %5619 = vmatpush1.xpose.msra.mxu0 0.0
        %5620 = vmatprep.subr.mxu0 0.0
        %5621 = vmatpush1.xpose.msra.mxu0 0.0
        %5622 = vmatprep.subr.mxu0 0.0
        %5623 = vmatpush1.xpose.msra.mxu0 0.0
        %5624 = vmatprep.subr.mxu0 0.0
        %5625 = vmatpush1.xpose.msra.mxu0 0.0
        %5626 = vmatprep.subr.mxu0 0.0
        %5627 = vmatpush1.xpose.msra.mxu0 0.0
        %5628 = vmatprep.subr.mxu0 0.0
        %5629 = vmatpush1.xpose.msra.mxu0 0.0
        %5630 = vmatprep.subr.mxu0 0.0
        %5631 = vmatpush1.xpose.msra.mxu0 0.0
        %5632 = vmatprep.subr.mxu0 0.0
        %5633 = vmatpush1.xpose.msra.mxu0 0.0
        %5634 = vmatprep.subr.mxu0 0.0
        %5635 = vmatpush1.xpose.msra.mxu0 0.0
        %5636 = vmatprep.subr.mxu0 0.0
        %5637 = vmatpush1.xpose.msra.mxu0 0.0
        %5638 = vmatprep.subr.mxu0 0.0
        %5639 = vmatpush1.xpose.msra.mxu0 0.0
        %5640 = vmatprep.subr.mxu0 0.0
        %5641 = vmatpush1.xpose.msra.mxu0 0.0
        %5642 = vmatprep.subr.mxu0 0.0
        %5643 = vmatpush1.xpose.msra.mxu0 0.0
        %5644 = vmatprep.subr.mxu0 0.0
        %5645 = vmatpush1.xpose.msra.mxu0 0.0
        %5646 = vmatprep.subr.mxu0 0.0
        %5647 = vmatpush1.xpose.msra.mxu0 0.0
        %5648 = vmatprep.subr.mxu0 0.0
        %5649 = vmatpush1.xpose.msra.mxu0 0.0
        %5650 = vmatprep.subr.mxu0 0.0
        %5651 = vmatpush1.xpose.msra.mxu0 0.0
        %5652 = vmatprep.subr.mxu0 0.0
        %5653 = vmatpush1.xpose.msra.mxu0 0.0
        %5654 = vmatprep.subr.mxu0 0.0
        %5655 = vmatpush1.xpose.msra.mxu0 0.0
        %5656 = vmatprep.subr.mxu0 0.0
        %5657 = vmatpush1.xpose.msra.mxu0 0.0
        %5658 = vmatprep.subr.mxu0 0.0
        %5659 = vmatpush1.xpose.msra.mxu0 0.0
        %5660 = vmatprep.subr.mxu0 0.0
        %5661 = vmatpush1.xpose.msra.mxu0 0.0
        %5662 = vmatprep.subr.mxu0 0.0
        %5663 = vmatpush1.xpose.msra.mxu0 0.0
        %5664 = vmatprep.mubr.f32.mxu0 0.0
        %5665 = vmatmul.mubr.f32.gmra.mrb[0].mxu0 %v5592
        %v5666 = vpop.f32.mrb[0].mxu0
        %v5667 = vadd.f32 0.0, %v5666
        %v5668 = vpop.f32.mrb[0].mxu0
        %5669 = vdwg.mxu0
        %v5670 = vmul.f32 %v5667, 0.35355338
        %v5671 = vsel %vm2951, %v5670, -inf
        %5672 = vmax.xlane.f32.xlu0 %v5671
        %v5673 = vpop.xlane.xlu0 %5672
        %v5674 = vsub.f32 %v5670, %v5673
        %v5675 = vmul.f32 %v5674, 1.442695
        %v5676 = vpow.pop %v5675
        %v5677 = vsel %vm2951, %v5676, 0.0
        %5678 = vadd.xlane.f32.xlu0 %v5677
        %v5679 = vpop.xlane.xlu0 %5678
        %v5680 = vrcp.pop %v5679
        %v5681 = vmul.f32 %v5676, %v5680
        %v5683 = vsel %vm2951, %v5681, 0
        %5685 = vmatprep.subr.mxu0 0.0
        %5686 = vmatpush1.msra.mxu0 %v5583
        %5687 = vmatprep.subr.mxu0 0.0
        %5688 = vmatpush1.msra.mxu0 %v5588
        %5689 = vmatprep.subr.mxu0 0.0
        %5690 = vmatpush1.msra.mxu0 0.0
        %5691 = vmatprep.subr.mxu0 0.0
        %5692 = vmatpush1.msra.mxu0 0.0
        %5693 = vmatprep.subr.mxu0 0.0
        %5694 = vmatpush1.msra.mxu0 0.0
        %5695 = vmatprep.subr.mxu0 0.0
        %5696 = vmatpush1.msra.mxu0 0.0
        %5697 = vmatprep.subr.mxu0 0.0
        %5698 = vmatpush1.msra.mxu0 0.0
        %5699 = vmatprep.subr.mxu0 0.0
        %5700 = vmatpush1.msra.mxu0 0.0
        %5701 = vmatprep.subr.mxu0 0.0
        %5702 = vmatpush1.msra.mxu0 0.0
        %5703 = vmatprep.subr.mxu0 0.0
        %5704 = vmatpush1.msra.mxu0 0.0
        %5705 = vmatprep.subr.mxu0 0.0
        %5706 = vmatpush1.msra.mxu0 0.0
        %5707 = vmatprep.subr.mxu0 0.0
        %5708 = vmatpush1.msra.mxu0 0.0
        %5709 = vmatprep.subr.mxu0 0.0
        %5710 = vmatpush1.msra.mxu0 0.0
        %5711 = vmatprep.subr.mxu0 0.0
        %5712 = vmatpush1.msra.mxu0 0.0
        %5713 = vmatprep.subr.mxu0 0.0
        %5714 = vmatpush1.msra.mxu0 0.0
        %5715 = vmatprep.subr.mxu0 0.0
        %5716 = vmatpush1.msra.mxu0 0.0
        %5717 = vmatprep.subr.mxu0 0.0
        %5718 = vmatpush1.msra.mxu0 0.0
        %5719 = vmatprep.subr.mxu0 0.0
        %5720 = vmatpush1.msra.mxu0 0.0
        %5721 = vmatprep.subr.mxu0 0.0
        %5722 = vmatpush1.msra.mxu0 0.0
        %5723 = vmatprep.subr.mxu0 0.0
        %5724 = vmatpush1.msra.mxu0 0.0
        %5725 = vmatprep.subr.mxu0 0.0
        %5726 = vmatpush1.msra.mxu0 0.0
        %5727 = vmatprep.subr.mxu0 0.0
        %5728 = vmatpush1.msra.mxu0 0.0
        %5729 = vmatprep.subr.mxu0 0.0
        %5730 = vmatpush1.msra.mxu0 0.0
        %5731 = vmatprep.subr.mxu0 0.0
        %5732 = vmatpush1.msra.mxu0 0.0
        %5733 = vmatprep.subr.mxu0 0.0
        %5734 = vmatpush1.msra.mxu0 0.0
        %5735 = vmatprep.subr.mxu0 0.0
        %5736 = vmatpush1.msra.mxu0 0.0
        %5737 = vmatprep.subr.mxu0 0.0
        %5738 = vmatpush1.msra.mxu0 0.0
        %5739 = vmatprep.subr.mxu0 0.0
        %5740 = vmatpush1.msra.mxu0 0.0
        %5741 = vmatprep.subr.mxu0 0.0
        %5742 = vmatpush1.msra.mxu0 0.0
        %5743 = vmatprep.subr.mxu0 0.0
        %5744 = vmatpush1.msra.mxu0 0.0
        %5745 = vmatprep.subr.mxu0 0.0
        %5746 = vmatpush1.msra.mxu0 0.0
        %5747 = vmatprep.subr.mxu0 0.0
        %5748 = vmatpush1.msra.mxu0 0.0
        %5749 = vmatprep.mubr.f32.mxu0 0.0
        %5750 = vmatmul.mubr.f32.gmra.mrb[0].mxu0 %v5683
        %v5751 = vpop.f32.mrb[0].mxu0
        %v5752 = vadd.f32 0.0, %v5751
        %v5753 = vpop.f32.mrb[0].mxu0
        %5754 = vdwg.mxu0
        %5755 = vrot.lane.b32.xlu0 %v5412, 120
        %v5756 = vpop.permute.xlu0 %5755
        %5757 = vrot.lane.b32.xlu0 %v5496, 120
        %v5758 = vpop.permute.xlu0 %5757
        %5759 = vrot.lane.b32.xlu0 %v5501, 120
        %v5760 = vpop.permute.xlu0 %5759
        %v5761 = vsel %vm2865, %v5756, 0
        %v5763 = vsel %vm2865, %v5758, 0
        %v5765 = vsel %vm2865, %v5760, 0
        %5767 = vmatprep.subr.mxu0 0.0
        %5768 = vmatpush1.xpose.msra.mxu0 %v5763
        %5769 = vmatprep.subr.mxu0 0.0
        %5770 = vmatpush1.xpose.msra.mxu0 %v5765
        %5771 = vmatprep.subr.mxu0 0.0
        %5772 = vmatpush1.xpose.msra.mxu0 0.0
        %5773 = vmatprep.subr.mxu0 0.0
        %5774 = vmatpush1.xpose.msra.mxu0 0.0
        %5775 = vmatprep.subr.mxu0 0.0
        %5776 = vmatpush1.xpose.msra.mxu0 0.0
        %5777 = vmatprep.subr.mxu0 0.0
        %5778 = vmatpush1.xpose.msra.mxu0 0.0
        %5779 = vmatprep.subr.mxu0 0.0
        %5780 = vmatpush1.xpose.msra.mxu0 0.0
        %5781 = vmatprep.subr.mxu0 0.0
        %5782 = vmatpush1.xpose.msra.mxu0 0.0
        %5783 = vmatprep.subr.mxu0 0.0
        %5784 = vmatpush1.xpose.msra.mxu0 0.0
        %5785 = vmatprep.subr.mxu0 0.0
        %5786 = vmatpush1.xpose.msra.mxu0 0.0
        %5787 = vmatprep.subr.mxu0 0.0
        %5788 = vmatpush1.xpose.msra.mxu0 0.0
        %5789 = vmatprep.subr.mxu0 0.0
        %5790 = vmatpush1.xpose.msra.mxu0 0.0
        %5791 = vmatprep.subr.mxu0 0.0
        %5792 = vmatpush1.xpose.msra.mxu0 0.0
        %5793 = vmatprep.subr.mxu0 0.0
        %5794 = vmatpush1.xpose.msra.mxu0 0.0
        %5795 = vmatprep.subr.mxu0 0.0
        %5796 = vmatpush1.xpose.msra.mxu0 0.0
        %5797 = vmatprep.subr.mxu0 0.0
        %5798 = vmatpush1.xpose.msra.mxu0 0.0
        %5799 = vmatprep.subr.mxu0 0.0
        %5800 = vmatpush1.xpose.msra.mxu0 0.0
        %5801 = vmatprep.subr.mxu0 0.0
        %5802 = vmatpush1.xpose.msra.mxu0 0.0
        %5803 = vmatprep.subr.mxu0 0.0
        %5804 = vmatpush1.xpose.msra.mxu0 0.0
        %5805 = vmatprep.subr.mxu0 0.0
        %5806 = vmatpush1.xpose.msra.mxu0 0.0
        %5807 = vmatprep.subr.mxu0 0.0
        %5808 = vmatpush1.xpose.msra.mxu0 0.0
        %5809 = vmatprep.subr.mxu0 0.0
        %5810 = vmatpush1.xpose.msra.mxu0 0.0
        %5811 = vmatprep.subr.mxu0 0.0
        %5812 = vmatpush1.xpose.msra.mxu0 0.0
        %5813 = vmatprep.subr.mxu0 0.0
        %5814 = vmatpush1.xpose.msra.mxu0 0.0
        %5815 = vmatprep.subr.mxu0 0.0
        %5816 = vmatpush1.xpose.msra.mxu0 0.0
        %5817 = vmatprep.subr.mxu0 0.0
        %5818 = vmatpush1.xpose.msra.mxu0 0.0
        %5819 = vmatprep.subr.mxu0 0.0
        %5820 = vmatpush1.xpose.msra.mxu0 0.0
        %5821 = vmatprep.subr.mxu0 0.0
        %5822 = vmatpush1.xpose.msra.mxu0 0.0
        %5823 = vmatprep.subr.mxu0 0.0
        %5824 = vmatpush1.xpose.msra.mxu0 0.0
        %5825 = vmatprep.subr.mxu0 0.0
        %5826 = vmatpush1.xpose.msra.mxu0 0.0
        %5827 = vmatprep.subr.mxu0 0.0
        %5828 = vmatpush1.xpose.msra.mxu0 0.0
        %5829 = vmatprep.subr.mxu0 0.0
        %5830 = vmatpush1.xpose.msra.mxu0 0.0
        %5831 = vmatprep.mubr.f32.mxu0 0.0
        %5832 = vmatmul.mubr.f32.gmra.mrb[0].mxu0 %v5761
        %v5833 = vpop.f32.mrb[0].mxu0
        %v5834 = vadd.f32 0.0, %v5833
        %v5835 = vpop.f32.mrb[0].mxu0
        %5836 = vdwg.mxu0
        %v5837 = vmul.f32 %v5834, 0.35355338
        %v5838 = vsel %vm2951, %v5837, -inf
        %5839 = vmax.xlane.f32.xlu0 %v5838
        %v5840 = vpop.xlane.xlu0 %5839
        %v5841 = vsub.f32 %v5837, %v5840
        %v5842 = vmul.f32 %v5841, 1.442695
        %v5843 = vpow.pop %v5842
        %v5844 = vsel %vm2951, %v5843, 0.0
        %5845 = vadd.xlane.f32.xlu0 %v5844
        %v5846 = vpop.xlane.xlu0 %5845
        %v5847 = vrcp.pop %v5846
        %v5848 = vmul.f32 %v5843, %v5847
        %5851 = vrot.lane.b32.xlu0 %v5583, 120
        %v5852 = vpop.permute.xlu0 %5851
        %5853 = vrot.lane.b32.xlu0 %v5588, 120
        %v5854 = vpop.permute.xlu0 %5853
        %v5858 = vsel %vm2951, %v5848, 0
        %5860 = vmatprep.subr.mxu0 0.0
        %5861 = vmatpush1.msra.mxu0 %v5852
        %5862 = vmatprep.subr.mxu0 0.0
        %5863 = vmatpush1.msra.mxu0 %v5854
        %5864 = vmatprep.subr.mxu0 0.0
        %5865 = vmatpush1.msra.mxu0 0.0
        %5866 = vmatprep.subr.mxu0 0.0
        %5867 = vmatpush1.msra.mxu0 0.0
        %5868 = vmatprep.subr.mxu0 0.0
        %5869 = vmatpush1.msra.mxu0 0.0
        %5870 = vmatprep.subr.mxu0 0.0
        %5871 = vmatpush1.msra.mxu0 0.0
        %5872 = vmatprep.subr.mxu0 0.0
        %5873 = vmatpush1.msra.mxu0 0.0
        %5874 = vmatprep.subr.mxu0 0.0
        %5875 = vmatpush1.msra.mxu0 0.0
        %5876 = vmatprep.subr.mxu0 0.0
        %5877 = vmatpush1.msra.mxu0 0.0
        %5878 = vmatprep.subr.mxu0 0.0
        %5879 = vmatpush1.msra.mxu0 0.0
        %5880 = vmatprep.subr.mxu0 0.0
        %5881 = vmatpush1.msra.mxu0 0.0
        %5882 = vmatprep.subr.mxu0 0.0
        %5883 = vmatpush1.msra.mxu0 0.0
        %5884 = vmatprep.subr.mxu0 0.0
        %5885 = vmatpush1.msra.mxu0 0.0
        %5886 = vmatprep.subr.mxu0 0.0
        %5887 = vmatpush1.msra.mxu0 0.0
        %5888 = vmatprep.subr.mxu0 0.0
        %5889 = vmatpush1.msra.mxu0 0.0
        %5890 = vmatprep.subr.mxu0 0.0
        %5891 = vmatpush1.msra.mxu0 0.0
        %5892 = vmatprep.subr.mxu0 0.0
        %5893 = vmatpush1.msra.mxu0 0.0
        %5894 = vmatprep.subr.mxu0 0.0
        %5895 = vmatpush1.msra.mxu0 0.0
        %5896 = vmatprep.subr.mxu0 0.0
        %5897 = vmatpush1.msra.mxu0 0.0
        %5898 = vmatprep.subr.mxu0 0.0
        %5899 = vmatpush1.msra.mxu0 0.0
        %5900 = vmatprep.subr.mxu0 0.0
        %5901 = vmatpush1.msra.mxu0 0.0
        %5902 = vmatprep.subr.mxu0 0.0
        %5903 = vmatpush1.msra.mxu0 0.0
        %5904 = vmatprep.subr.mxu0 0.0
        %5905 = vmatpush1.msra.mxu0 0.0
        %5906 = vmatprep.subr.mxu0 0.0
        %5907 = vmatpush1.msra.mxu0 0.0
        %5908 = vmatprep.subr.mxu0 0.0
        %5909 = vmatpush1.msra.mxu0 0.0
        %5910 = vmatprep.subr.mxu0 0.0
        %5911 = vmatpush1.msra.mxu0 0.0
        %5912 = vmatprep.subr.mxu0 0.0
        %5913 = vmatpush1.msra.mxu0 0.0
        %5914 = vmatprep.subr.mxu0 0.0
        %5915 = vmatpush1.msra.mxu0 0.0
        %5916 = vmatprep.subr.mxu0 0.0
        %5917 = vmatpush1.msra.mxu0 0.0
        %5918 = vmatprep.subr.mxu0 0.0
        %5919 = vmatpush1.msra.mxu0 0.0
        %5920 = vmatprep.subr.mxu0 0.0
        %5921 = vmatpush1.msra.mxu0 0.0
        %5922 = vmatprep.subr.mxu0 0.0
        %5923 = vmatpush1.msra.mxu0 0.0
        %5924 = vmatprep.mubr.f32.mxu0 0.0
        %5925 = vmatmul.mubr.f32.gmra.mrb[0].mxu0 %v5858
        %v5926 = vpop.f32.mrb[0].mxu0
        %v5927 = vadd.f32 0.0, %v5926
        %v5928 = vpop.f32.mrb[0].mxu0
        %5929 = vdwg.mxu0
        %v5931 = vsel %vm2865, %v5927, 0
        %5933 = vmatprep.subr.mxu0 0.0
        %5934 = vmatpush1.msra.mxu0 %v2545
        %5935 = vmatprep.subr.mxu0 0.0
        %5936 = vmatpush1.msra.mxu0 0.0
        %5937 = vmatprep.subr.mxu0 0.0
        %5938 = vmatpush1.msra.mxu0 0.0
        %5939 = vmatprep.subr.mxu0 0.0
        %5940 = vmatpush1.msra.mxu0 0.0
        %5941 = vmatprep.subr.mxu0 0.0
        %5942 = vmatpush1.msra.mxu0 0.0
        %5943 = vmatprep.subr.mxu0 0.0
        %5944 = vmatpush1.msra.mxu0 0.0
        %5945 = vmatprep.subr.mxu0 0.0
        %5946 = vmatpush1.msra.mxu0 0.0
        %5947 = vmatprep.subr.mxu0 0.0
        %5948 = vmatpush1.msra.mxu0 0.0
        %5949 = vmatprep.subr.mxu0 0.0
        %5950 = vmatpush1.msra.mxu0 0.0
        %5951 = vmatprep.subr.mxu0 0.0
        %5952 = vmatpush1.msra.mxu0 0.0
        %5953 = vmatprep.subr.mxu0 0.0
        %5954 = vmatpush1.msra.mxu0 0.0
        %5955 = vmatprep.subr.mxu0 0.0
        %5956 = vmatpush1.msra.mxu0 0.0
        %5957 = vmatprep.subr.mxu0 0.0
        %5958 = vmatpush1.msra.mxu0 0.0
        %5959 = vmatprep.subr.mxu0 0.0
        %5960 = vmatpush1.msra.mxu0 0.0
        %5961 = vmatprep.subr.mxu0 0.0
        %5962 = vmatpush1.msra.mxu0 0.0
        %5963 = vmatprep.subr.mxu0 0.0
        %5964 = vmatpush1.msra.mxu0 0.0
        %5965 = vmatprep.subr.mxu0 0.0
        %5966 = vmatpush1.msra.mxu0 0.0
        %5967 = vmatprep.subr.mxu0 0.0
        %5968 = vmatpush1.msra.mxu0 0.0
        %5969 = vmatprep.subr.mxu0 0.0
        %5970 = vmatpush1.msra.mxu0 0.0
        %5971 = vmatprep.subr.mxu0 0.0
        %5972 = vmatpush1.msra.mxu0 0.0
        %5973 = vmatprep.subr.mxu0 0.0
        %5974 = vmatpush1.msra.mxu0 0.0
        %5975 = vmatprep.subr.mxu0 0.0
        %5976 = vmatpush1.msra.mxu0 0.0
        %5977 = vmatprep.subr.mxu0 0.0
        %5978 = vmatpush1.msra.mxu0 0.0
        %5979 = vmatprep.subr.mxu0 0.0
        %5980 = vmatpush1.msra.mxu0 0.0
        %5981 = vmatprep.subr.mxu0 0.0
        %5982 = vmatpush1.msra.mxu0 0.0
        %5983 = vmatprep.subr.mxu0 0.0
        %5984 = vmatpush1.msra.mxu0 0.0
        %5985 = vmatprep.subr.mxu0 0.0
        %5986 = vmatpush1.msra.mxu0 0.0
        %5987 = vmatprep.subr.mxu0 0.0
        %5988 = vmatpush1.msra.mxu0 0.0
        %5989 = vmatprep.subr.mxu0 0.0
        %5990 = vmatpush1.msra.mxu0 0.0
        %5991 = vmatprep.subr.mxu0 0.0
        %5992 = vmatpush1.msra.mxu0 0.0
        %5993 = vmatprep.subr.mxu0 0.0
        %5994 = vmatpush1.msra.mxu0 0.0
        %5995 = vmatprep.subr.mxu0 0.0
        %5996 = vmatpush1.msra.mxu0 0.0
        %5997 = vmatprep.mubr.f32.mxu0 0.0
        %5998 = vmatmul.mubr.f32.gmra.mrb[0].mxu0 %v5931
        %v5999 = vpop.f32.mrb[0].mxu0
        %v6000 = vadd.f32 0.0, %v5999
        %v6001 = vpop.f32.mrb[0].mxu0
        %6002 = vdwg.mxu0
        %v6004 = vsel %vm2865, %v5752, 0
        %6006 = vmatprep.subr.mxu0 0.0
        %6007 = vmatpush1.msra.mxu0 %v2544
        %6008 = vmatprep.subr.mxu0 0.0
        %6009 = vmatpush1.msra.mxu0 0.0
        %6010 = vmatprep.subr.mxu0 0.0
        %6011 = vmatpush1.msra.mxu0 0.0
        %6012 = vmatprep.subr.mxu0 0.0
        %6013 = vmatpush1.msra.mxu0 0.0
        %6014 = vmatprep.subr.mxu0 0.0
        %6015 = vmatpush1.msra.mxu0 0.0
        %6016 = vmatprep.subr.mxu0 0.0
        %6017 = vmatpush1.msra.mxu0 0.0
        %6018 = vmatprep.subr.mxu0 0.0
        %6019 = vmatpush1.msra.mxu0 0.0
        %6020 = vmatprep.subr.mxu0 0.0
        %6021 = vmatpush1.msra.mxu0 0.0
        %6022 = vmatprep.subr.mxu0 0.0
        %6023 = vmatpush1.msra.mxu0 0.0
        %6024 = vmatprep.subr.mxu0 0.0
        %6025 = vmatpush1.msra.mxu0 0.0
        %6026 = vmatprep.subr.mxu0 0.0
        %6027 = vmatpush1.msra.mxu0 0.0
        %6028 = vmatprep.subr.mxu0 0.0
        %6029 = vmatpush1.msra.mxu0 0.0
        %6030 = vmatprep.subr.mxu0 0.0
        %6031 = vmatpush1.msra.mxu0 0.0
        %6032 = vmatprep.subr.mxu0 0.0
        %6033 = vmatpush1.msra.mxu0 0.0
        %6034 = vmatprep.subr.mxu0 0.0
        %6035 = vmatpush1.msra.mxu0 0.0
        %6036 = vmatprep.subr.mxu0 0.0
        %6037 = vmatpush1.msra.mxu0 0.0
        %6038 = vmatprep.subr.mxu0 0.0
        %6039 = vmatpush1.msra.mxu0 0.0
        %6040 = vmatprep.subr.mxu0 0.0
        %6041 = vmatpush1.msra.mxu0 0.0
        %6042 = vmatprep.subr.mxu0 0.0
        %6043 = vmatpush1.msra.mxu0 0.0
        %6044 = vmatprep.subr.mxu0 0.0
        %6045 = vmatpush1.msra.mxu0 0.0
        %6046 = vmatprep.subr.mxu0 0.0
        %6047 = vmatpush1.msra.mxu0 0.0
        %6048 = vmatprep.subr.mxu0 0.0
        %6049 = vmatpush1.msra.mxu0 0.0
        %6050 = vmatprep.subr.mxu0 0.0
        %6051 = vmatpush1.msra.mxu0 0.0
        %6052 = vmatprep.subr.mxu0 0.0
        %6053 = vmatpush1.msra.mxu0 0.0
        %6054 = vmatprep.subr.mxu0 0.0
        %6055 = vmatpush1.msra.mxu0 0.0
        %6056 = vmatprep.subr.mxu0 0.0
        %6057 = vmatpush1.msra.mxu0 0.0
        %6058 = vmatprep.subr.mxu0 0.0
        %6059 = vmatpush1.msra.mxu0 0.0
        %6060 = vmatprep.subr.mxu0 0.0
        %6061 = vmatpush1.msra.mxu0 0.0
        %6062 = vmatprep.subr.mxu0 0.0
        %6063 = vmatpush1.msra.mxu0 0.0
        %6064 = vmatprep.subr.mxu0 0.0
        %6065 = vmatpush1.msra.mxu0 0.0
        %6066 = vmatprep.subr.mxu0 0.0
        %6067 = vmatpush1.msra.mxu0 0.0
        %6068 = vmatprep.subr.mxu0 0.0
        %6069 = vmatpush1.msra.mxu0 0.0
        %6070 = vmatprep.mubr.f32.mxu0 0.0
        %6071 = vmatmul.mubr.f32.gmra.mrb[0].mxu0 %v6004
        %v6072 = vpop.f32.mrb[0].mxu0
        %v6073 = vadd.f32 %v6000, %v6072
        %v6074 = vpop.f32.mrb[0].mxu0
        %6075 = vdwg.mxu0
        %6076 = vrot.lane.b32.xlu0 %v5412, 112
        %v6077 = vpop.permute.xlu0 %6076
        %6078 = vrot.lane.b32.xlu0 %v5496, 112
        %v6079 = vpop.permute.xlu0 %6078
        %6080 = vrot.lane.b32.xlu0 %v5501, 112
        %v6081 = vpop.permute.xlu0 %6080
        %v6082 = vsel %vm2865, %v6077, 0
        %v6084 = vsel %vm2865, %v6079, 0
        %v6086 = vsel %vm2865, %v6081, 0
        %6088 = vmatprep.subr.mxu0 0.0
        %6089 = vmatpush1.xpose.msra.mxu0 %v6084
        %6090 = vmatprep.subr.mxu0 0.0
        %6091 = vmatpush1.xpose.msra.mxu0 %v6086
        %6092 = vmatprep.subr.mxu0 0.0
        %6093 = vmatpush1.xpose.msra.mxu0 0.0
        %6094 = vmatprep.subr.mxu0 0.0
        %6095 = vmatpush1.xpose.msra.mxu0 0.0
        %6096 = vmatprep.subr.mxu0 0.0
        %6097 = vmatpush1.xpose.msra.mxu0 0.0
        %6098 = vmatprep.subr.mxu0 0.0
        %6099 = vmatpush1.xpose.msra.mxu0 0.0
        %6100 = vmatprep.subr.mxu0 0.0
        %6101 = vmatpush1.xpose.msra.mxu0 0.0
        %6102 = vmatprep.subr.mxu0 0.0
        %6103 = vmatpush1.xpose.msra.mxu0 0.0
        %6104 = vmatprep.subr.mxu0 0.0
        %6105 = vmatpush1.xpose.msra.mxu0 0.0
        %6106 = vmatprep.subr.mxu0 0.0
        %6107 = vmatpush1.xpose.msra.mxu0 0.0
        %6108 = vmatprep.subr.mxu0 0.0
        %6109 = vmatpush1.xpose.msra.mxu0 0.0
        %6110 = vmatprep.subr.mxu0 0.0
        %6111 = vmatpush1.xpose.msra.mxu0 0.0
        %6112 = vmatprep.subr.mxu0 0.0
        %6113 = vmatpush1.xpose.msra.mxu0 0.0
        %6114 = vmatprep.subr.mxu0 0.0
        %6115 = vmatpush1.xpose.msra.mxu0 0.0
        %6116 = vmatprep.subr.mxu0 0.0
        %6117 = vmatpush1.xpose.msra.mxu0 0.0
        %6118 = vmatprep.subr.mxu0 0.0
        %6119 = vmatpush1.xpose.msra.mxu0 0.0
        %6120 = vmatprep.subr.mxu0 0.0
        %6121 = vmatpush1.xpose.msra.mxu0 0.0
        %6122 = vmatprep.subr.mxu0 0.0
        %6123 = vmatpush1.xpose.msra.mxu0 0.0
        %6124 = vmatprep.subr.mxu0 0.0
        %6125 = vmatpush1.xpose.msra.mxu0 0.0
        %6126 = vmatprep.subr.mxu0 0.0
        %6127 = vmatpush1.xpose.msra.mxu0 0.0
        %6128 = vmatprep.subr.mxu0 0.0
        %6129 = vmatpush1.xpose.msra.mxu0 0.0
        %6130 = vmatprep.subr.mxu0 0.0
        %6131 = vmatpush1.xpose.msra.mxu0 0.0
        %6132 = vmatprep.subr.mxu0 0.0
        %6133 = vmatpush1.xpose.msra.mxu0 0.0
        %6134 = vmatprep.subr.mxu0 0.0
        %6135 = vmatpush1.xpose.msra.mxu0 0.0
        %6136 = vmatprep.subr.mxu0 0.0
        %6137 = vmatpush1.xpose.msra.mxu0 0.0
        %6138 = vmatprep.subr.mxu0 0.0
        %6139 = vmatpush1.xpose.msra.mxu0 0.0
        %6140 = vmatprep.subr.mxu0 0.0
        %6141 = vmatpush1.xpose.msra.mxu0 0.0
        %6142 = vmatprep.subr.mxu0 0.0
        %6143 = vmatpush1.xpose.msra.mxu0 0.0
        %6144 = vmatprep.subr.mxu0 0.0
        %6145 = vmatpush1.xpose.msra.mxu0 0.0
        %6146 = vmatprep.subr.mxu0 0.0
        %6147 = vmatpush1.xpose.msra.mxu0 0.0
        %6148 = vmatprep.subr.mxu0 0.0
        %6149 = vmatpush1.xpose.msra.mxu0 0.0
        %6150 = vmatprep.subr.mxu0 0.0
        %6151 = vmatpush1.xpose.msra.mxu0 0.0
        %6152 = vmatprep.mubr.f32.mxu0 0.0
        %6153 = vmatmul.mubr.f32.gmra.mrb[0].mxu0 %v6082
        %v6154 = vpop.f32.mrb[0].mxu0
        %v6155 = vadd.f32 0.0, %v6154
        %v6156 = vpop.f32.mrb[0].mxu0
        %6157 = vdwg.mxu0
        %v6158 = vmul.f32 %v6155, 0.35355338
        %v6159 = vsel %vm2951, %v6158, -inf
        %6160 = vmax.xlane.f32.xlu0 %v6159
        %v6161 = vpop.xlane.xlu0 %6160
        %v6162 = vsub.f32 %v6158, %v6161
        %v6163 = vmul.f32 %v6162, 1.442695
        %v6164 = vpow.pop %v6163
        %v6165 = vsel %vm2951, %v6164, 0.0
        %6166 = vadd.xlane.f32.xlu0 %v6165
        %v6167 = vpop.xlane.xlu0 %6166
        %v6168 = vrcp.pop %v6167
        %v6169 = vmul.f32 %v6164, %v6168
        %6170 = vrot.lane.b32.xlu0 %v5583, 112
        %v6171 = vpop.permute.xlu0 %6170
        %6172 = vrot.lane.b32.xlu0 %v5588, 112
        %v6173 = vpop.permute.xlu0 %6172
        %v6177 = vsel %vm2951, %v6169, 0
        %6179 = vmatprep.subr.mxu0 0.0
        %6180 = vmatpush1.msra.mxu0 %v6171
        %6181 = vmatprep.subr.mxu0 0.0
        %6182 = vmatpush1.msra.mxu0 %v6173
        %6183 = vmatprep.subr.mxu0 0.0
        %6184 = vmatpush1.msra.mxu0 0.0
        %6185 = vmatprep.subr.mxu0 0.0
        %6186 = vmatpush1.msra.mxu0 0.0
        %6187 = vmatprep.subr.mxu0 0.0
        %6188 = vmatpush1.msra.mxu0 0.0
        %6189 = vmatprep.subr.mxu0 0.0
        %6190 = vmatpush1.msra.mxu0 0.0
        %6191 = vmatprep.subr.mxu0 0.0
        %6192 = vmatpush1.msra.mxu0 0.0
        %6193 = vmatprep.subr.mxu0 0.0
        %6194 = vmatpush1.msra.mxu0 0.0
        %6195 = vmatprep.subr.mxu0 0.0
        %6196 = vmatpush1.msra.mxu0 0.0
        %6197 = vmatprep.subr.mxu0 0.0
        %6198 = vmatpush1.msra.mxu0 0.0
        %6199 = vmatprep.subr.mxu0 0.0
        %6200 = vmatpush1.msra.mxu0 0.0
        %6201 = vmatprep.subr.mxu0 0.0
        %6202 = vmatpush1.msra.mxu0 0.0
        %6203 = vmatprep.subr.mxu0 0.0
        %6204 = vmatpush1.msra.mxu0 0.0
        %6205 = vmatprep.subr.mxu0 0.0
        %6206 = vmatpush1.msra.mxu0 0.0
        %6207 = vmatprep.subr.mxu0 0.0
        %6208 = vmatpush1.msra.mxu0 0.0
        %6209 = vmatprep.subr.mxu0 0.0
        %6210 = vmatpush1.msra.mxu0 0.0
        %6211 = vmatprep.subr.mxu0 0.0
        %6212 = vmatpush1.msra.mxu0 0.0
        %6213 = vmatprep.subr.mxu0 0.0
        %6214 = vmatpush1.msra.mxu0 0.0
        %6215 = vmatprep.subr.mxu0 0.0
        %6216 = vmatpush1.msra.mxu0 0.0
        %6217 = vmatprep.subr.mxu0 0.0
        %6218 = vmatpush1.msra.mxu0 0.0
        %6219 = vmatprep.subr.mxu0 0.0
        %6220 = vmatpush1.msra.mxu0 0.0
        %6221 = vmatprep.subr.mxu0 0.0
        %6222 = vmatpush1.msra.mxu0 0.0
        %6223 = vmatprep.subr.mxu0 0.0
        %6224 = vmatpush1.msra.mxu0 0.0
        %6225 = vmatprep.subr.mxu0 0.0
        %6226 = vmatpush1.msra.mxu0 0.0
        %6227 = vmatprep.subr.mxu0 0.0
        %6228 = vmatpush1.msra.mxu0 0.0
        %6229 = vmatprep.subr.mxu0 0.0
        %6230 = vmatpush1.msra.mxu0 0.0
        %6231 = vmatprep.subr.mxu0 0.0
        %6232 = vmatpush1.msra.mxu0 0.0
        %6233 = vmatprep.subr.mxu0 0.0
        %6234 = vmatpush1.msra.mxu0 0.0
        %6235 = vmatprep.subr.mxu0 0.0
        %6236 = vmatpush1.msra.mxu0 0.0
        %6237 = vmatprep.subr.mxu0 0.0
        %6238 = vmatpush1.msra.mxu0 0.0
        %6239 = vmatprep.subr.mxu0 0.0
        %6240 = vmatpush1.msra.mxu0 0.0
        %6241 = vmatprep.subr.mxu0 0.0
        %6242 = vmatpush1.msra.mxu0 0.0
        %6243 = vmatprep.mubr.f32.mxu0 0.0
        %6244 = vmatmul.mubr.f32.gmra.mrb[0].mxu0 %v6177
        %v6245 = vpop.f32.mrb[0].mxu0
        %v6246 = vadd.f32 0.0, %v6245
        %v6247 = vpop.f32.mrb[0].mxu0
        %6248 = vdwg.mxu0
        %v6250 = vsel %vm2865, %v6246, 0
        %6252 = vmatprep.subr.mxu0 0.0
        %6253 = vmatpush1.msra.mxu0 %v2546
        %6254 = vmatprep.subr.mxu0 0.0
        %6255 = vmatpush1.msra.mxu0 0.0
        %6256 = vmatprep.subr.mxu0 0.0
        %6257 = vmatpush1.msra.mxu0 0.0
        %6258 = vmatprep.subr.mxu0 0.0
        %6259 = vmatpush1.msra.mxu0 0.0
        %6260 = vmatprep.subr.mxu0 0.0
        %6261 = vmatpush1.msra.mxu0 0.0
        %6262 = vmatprep.subr.mxu0 0.0
        %6263 = vmatpush1.msra.mxu0 0.0
        %6264 = vmatprep.subr.mxu0 0.0
        %6265 = vmatpush1.msra.mxu0 0.0
        %6266 = vmatprep.subr.mxu0 0.0
        %6267 = vmatpush1.msra.mxu0 0.0
        %6268 = vmatprep.subr.mxu0 0.0
        %6269 = vmatpush1.msra.mxu0 0.0
        %6270 = vmatprep.subr.mxu0 0.0
        %6271 = vmatpush1.msra.mxu0 0.0
        %6272 = vmatprep.subr.mxu0 0.0
        %6273 = vmatpush1.msra.mxu0 0.0
        %6274 = vmatprep.subr.mxu0 0.0
        %6275 = vmatpush1.msra.mxu0 0.0
        %6276 = vmatprep.subr.mxu0 0.0
        %6277 = vmatpush1.msra.mxu0 0.0
        %6278 = vmatprep.subr.mxu0 0.0
        %6279 = vmatpush1.msra.mxu0 0.0
        %6280 = vmatprep.subr.mxu0 0.0
        %6281 = vmatpush1.msra.mxu0 0.0
        %6282 = vmatprep.subr.mxu0 0.0
        %6283 = vmatpush1.msra.mxu0 0.0
        %6284 = vmatprep.subr.mxu0 0.0
        %6285 = vmatpush1.msra.mxu0 0.0
        %6286 = vmatprep.subr.mxu0 0.0
        %6287 = vmatpush1.msra.mxu0 0.0
        %6288 = vmatprep.subr.mxu0 0.0
        %6289 = vmatpush1.msra.mxu0 0.0
        %6290 = vmatprep.subr.mxu0 0.0
        %6291 = vmatpush1.msra.mxu0 0.0
        %6292 = vmatprep.subr.mxu0 0.0
        %6293 = vmatpush1.msra.mxu0 0.0
        %6294 = vmatprep.subr.mxu0 0.0
        %6295 = vmatpush1.msra.mxu0 0.0
        %6296 = vmatprep.subr.mxu0 0.0
        %6297 = vmatpush1.msra.mxu0 0.0
        %6298 = vmatprep.subr.mxu0 0.0
        %6299 = vmatpush1.msra.mxu0 0.0
        %6300 = vmatprep.subr.mxu0 0.0
        %6301 = vmatpush1.msra.mxu0 0.0
        %6302 = vmatprep.subr.mxu0 0.0
        %6303 = vmatpush1.msra.mxu0 0.0
        %6304 = vmatprep.subr.mxu0 0.0
        %6305 = vmatpush1.msra.mxu0 0.0
        %6306 = vmatprep.subr.mxu0 0.0
        %6307 = vmatpush1.msra.mxu0 0.0
        %6308 = vmatprep.subr.mxu0 0.0
        %6309 = vmatpush1.msra.mxu0 0.0
        %6310 = vmatprep.subr.mxu0 0.0
        %6311 = vmatpush1.msra.mxu0 0.0
        %6312 = vmatprep.subr.mxu0 0.0
        %6313 = vmatpush1.msra.mxu0 0.0
        %6314 = vmatprep.subr.mxu0 0.0
        %6315 = vmatpush1.msra.mxu0 0.0
        %6316 = vmatprep.mubr.f32.mxu0 0.0
        %6317 = vmatmul.mubr.f32.gmra.mrb[0].mxu0 %v6250
        %v6318 = vpop.f32.mrb[0].mxu0
        %v6319 = vadd.f32 0.0, %v6318
        %v6320 = vpop.f32.mrb[0].mxu0
        %6321 = vdwg.mxu0
        %v6322 = vadd.f32 %v6073, %v6319
        %6323 = vrot.lane.b32.xlu0 %v5412, 104
        %v6324 = vpop.permute.xlu0 %6323
        %6325 = vrot.lane.b32.xlu0 %v5496, 104
        %v6326 = vpop.permute.xlu0 %6325
        %6327 = vrot.lane.b32.xlu0 %v5501, 104
        %v6328 = vpop.permute.xlu0 %6327
        %v6329 = vsel %vm2865, %v6324, 0
        %v6331 = vsel %vm2865, %v6326, 0
        %v6333 = vsel %vm2865, %v6328, 0
        %6335 = vmatprep.subr.mxu0 0.0
        %6336 = vmatpush1.xpose.msra.mxu0 %v6331
        %6337 = vmatprep.subr.mxu0 0.0
        %6338 = vmatpush1.xpose.msra.mxu0 %v6333
        %6339 = vmatprep.subr.mxu0 0.0
        %6340 = vmatpush1.xpose.msra.mxu0 0.0
        %6341 = vmatprep.subr.mxu0 0.0
        %6342 = vmatpush1.xpose.msra.mxu0 0.0
        %6343 = vmatprep.subr.mxu0 0.0
        %6344 = vmatpush1.xpose.msra.mxu0 0.0
        %6345 = vmatprep.subr.mxu0 0.0
        %6346 = vmatpush1.xpose.msra.mxu0 0.0
        %6347 = vmatprep.subr.mxu0 0.0
        %6348 = vmatpush1.xpose.msra.mxu0 0.0
        %6349 = vmatprep.subr.mxu0 0.0
        %6350 = vmatpush1.xpose.msra.mxu0 0.0
        %6351 = vmatprep.subr.mxu0 0.0
        %6352 = vmatpush1.xpose.msra.mxu0 0.0
        %6353 = vmatprep.subr.mxu0 0.0
        %6354 = vmatpush1.xpose.msra.mxu0 0.0
        %6355 = vmatprep.subr.mxu0 0.0
        %6356 = vmatpush1.xpose.msra.mxu0 0.0
        %6357 = vmatprep.subr.mxu0 0.0
        %6358 = vmatpush1.xpose.msra.mxu0 0.0
        %6359 = vmatprep.subr.mxu0 0.0
        %6360 = vmatpush1.xpose.msra.mxu0 0.0
        %6361 = vmatprep.subr.mxu0 0.0
        %6362 = vmatpush1.xpose.msra.mxu0 0.0
        %6363 = vmatprep.subr.mxu0 0.0
        %6364 = vmatpush1.xpose.msra.mxu0 0.0
        %6365 = vmatprep.subr.mxu0 0.0
        %6366 = vmatpush1.xpose.msra.mxu0 0.0
        %6367 = vmatprep.subr.mxu0 0.0
        %6368 = vmatpush1.xpose.msra.mxu0 0.0
        %6369 = vmatprep.subr.mxu0 0.0
        %6370 = vmatpush1.xpose.msra.mxu0 0.0
        %6371 = vmatprep.subr.mxu0 0.0
        %6372 = vmatpush1.xpose.msra.mxu0 0.0
        %6373 = vmatprep.subr.mxu0 0.0
        %6374 = vmatpush1.xpose.msra.mxu0 0.0
        %6375 = vmatprep.subr.mxu0 0.0
        %6376 = vmatpush1.xpose.msra.mxu0 0.0
        %6377 = vmatprep.subr.mxu0 0.0
        %6378 = vmatpush1.xpose.msra.mxu0 0.0
        %6379 = vmatprep.subr.mxu0 0.0
        %6380 = vmatpush1.xpose.msra.mxu0 0.0
        %6381 = vmatprep.subr.mxu0 0.0
        %6382 = vmatpush1.xpose.msra.mxu0 0.0
        %6383 = vmatprep.subr.mxu0 0.0
        %6384 = vmatpush1.xpose.msra.mxu0 0.0
        %6385 = vmatprep.subr.mxu0 0.0
        %6386 = vmatpush1.xpose.msra.mxu0 0.0
        %6387 = vmatprep.subr.mxu0 0.0
        %6388 = vmatpush1.xpose.msra.mxu0 0.0
        %6389 = vmatprep.subr.mxu0 0.0
        %6390 = vmatpush1.xpose.msra.mxu0 0.0
        %6391 = vmatprep.subr.mxu0 0.0
        %6392 = vmatpush1.xpose.msra.mxu0 0.0
        %6393 = vmatprep.subr.mxu0 0.0
        %6394 = vmatpush1.xpose.msra.mxu0 0.0
        %6395 = vmatprep.subr.mxu0 0.0
        %6396 = vmatpush1.xpose.msra.mxu0 0.0
        %6397 = vmatprep.subr.mxu0 0.0
        %6398 = vmatpush1.xpose.msra.mxu0 0.0
        %6399 = vmatprep.mubr.f32.mxu0 0.0
        %6400 = vmatmul.mubr.f32.gmra.mrb[0].mxu0 %v6329
        %v6401 = vpop.f32.mrb[0].mxu0
        %v6402 = vadd.f32 0.0, %v6401
        %v6403 = vpop.f32.mrb[0].mxu0
        %6404 = vdwg.mxu0
        %v6405 = vmul.f32 %v6402, 0.35355338
        %v6406 = vsel %vm2951, %v6405, -inf
        %6407 = vmax.xlane.f32.xlu0 %v6406
        %v6408 = vpop.xlane.xlu0 %6407
        %v6409 = vsub.f32 %v6405, %v6408
        %v6410 = vmul.f32 %v6409, 1.442695
        %v6411 = vpow.pop %v6410
        %v6412 = vsel %vm2951, %v6411, 0.0
        %6413 = vadd.xlane.f32.xlu0 %v6412
        %v6414 = vpop.xlane.xlu0 %6413
        %v6415 = vrcp.pop %v6414
        %v6416 = vmul.f32 %v6411, %v6415
        %6417 = vrot.lane.b32.xlu0 %v5583, 104
        %v6418 = vpop.permute.xlu0 %6417
        %6419 = vrot.lane.b32.xlu0 %v5588, 104
        %v6420 = vpop.permute.xlu0 %6419
        %v6424 = vsel %vm2951, %v6416, 0
        %6426 = vmatprep.subr.mxu0 0.0
        %6427 = vmatpush1.msra.mxu0 %v6418
        %6428 = vmatprep.subr.mxu0 0.0
        %6429 = vmatpush1.msra.mxu0 %v6420
        %6430 = vmatprep.subr.mxu0 0.0
        %6431 = vmatpush1.msra.mxu0 0.0
        %6432 = vmatprep.subr.mxu0 0.0
        %6433 = vmatpush1.msra.mxu0 0.0
        %6434 = vmatprep.subr.mxu0 0.0
        %6435 = vmatpush1.msra.mxu0 0.0
        %6436 = vmatprep.subr.mxu0 0.0
        %6437 = vmatpush1.msra.mxu0 0.0
        %6438 = vmatprep.subr.mxu0 0.0
        %6439 = vmatpush1.msra.mxu0 0.0
        %6440 = vmatprep.subr.mxu0 0.0
        %6441 = vmatpush1.msra.mxu0 0.0
        %6442 = vmatprep.subr.mxu0 0.0
        %6443 = vmatpush1.msra.mxu0 0.0
        %6444 = vmatprep.subr.mxu0 0.0
        %6445 = vmatpush1.msra.mxu0 0.0
        %6446 = vmatprep.subr.mxu0 0.0
        %6447 = vmatpush1.msra.mxu0 0.0
        %6448 = vmatprep.subr.mxu0 0.0
        %6449 = vmatpush1.msra.mxu0 0.0
        %6450 = vmatprep.subr.mxu0 0.0
        %6451 = vmatpush1.msra.mxu0 0.0
        %6452 = vmatprep.subr.mxu0 0.0
        %6453 = vmatpush1.msra.mxu0 0.0
        %6454 = vmatprep.subr.mxu0 0.0
        %6455 = vmatpush1.msra.mxu0 0.0
        %6456 = vmatprep.subr.mxu0 0.0
        %6457 = vmatpush1.msra.mxu0 0.0
        %6458 = vmatprep.subr.mxu0 0.0
        %6459 = vmatpush1.msra.mxu0 0.0
        %6460 = vmatprep.subr.mxu0 0.0
        %6461 = vmatpush1.msra.mxu0 0.0
        %6462 = vmatprep.subr.mxu0 0.0
        %6463 = vmatpush1.msra.mxu0 0.0
        %6464 = vmatprep.subr.mxu0 0.0
        %6465 = vmatpush1.msra.mxu0 0.0
        %6466 = vmatprep.subr.mxu0 0.0
        %6467 = vmatpush1.msra.mxu0 0.0
        %6468 = vmatprep.subr.mxu0 0.0
        %6469 = vmatpush1.msra.mxu0 0.0
        %6470 = vmatprep.subr.mxu0 0.0
        %6471 = vmatpush1.msra.mxu0 0.0
        %6472 = vmatprep.subr.mxu0 0.0
        %6473 = vmatpush1.msra.mxu0 0.0
        %6474 = vmatprep.subr.mxu0 0.0
        %6475 = vmatpush1.msra.mxu0 0.0
        %6476 = vmatprep.subr.mxu0 0.0
        %6477 = vmatpush1.msra.mxu0 0.0
        %6478 = vmatprep.subr.mxu0 0.0
        %6479 = vmatpush1.msra.mxu0 0.0
        %6480 = vmatprep.subr.mxu0 0.0
        %6481 = vmatpush1.msra.mxu0 0.0
        %6482 = vmatprep.subr.mxu0 0.0
        %6483 = vmatpush1.msra.mxu0 0.0
        %6484 = vmatprep.subr.mxu0 0.0
        %6485 = vmatpush1.msra.mxu0 0.0
        %6486 = vmatprep.subr.mxu0 0.0
        %6487 = vmatpush1.msra.mxu0 0.0
        %6488 = vmatprep.subr.mxu0 0.0
        %6489 = vmatpush1.msra.mxu0 0.0
        %6490 = vmatprep.mubr.f32.mxu0 0.0
        %6491 = vmatmul.mubr.f32.gmra.mrb[0].mxu0 %v6424
        %v6492 = vpop.f32.mrb[0].mxu0
        %v6493 = vadd.f32 0.0, %v6492
        %v6494 = vpop.f32.mrb[0].mxu0
        %6495 = vdwg.mxu0
        %v6497 = vsel %vm2865, %v6493, 0
        %6499 = vmatprep.subr.mxu0 0.0
        %6500 = vmatpush1.msra.mxu0 %v2547
        %6501 = vmatprep.subr.mxu0 0.0
        %6502 = vmatpush1.msra.mxu0 0.0
        %6503 = vmatprep.subr.mxu0 0.0
        %6504 = vmatpush1.msra.mxu0 0.0
        %6505 = vmatprep.subr.mxu0 0.0
        %6506 = vmatpush1.msra.mxu0 0.0
        %6507 = vmatprep.subr.mxu0 0.0
        %6508 = vmatpush1.msra.mxu0 0.0
        %6509 = vmatprep.subr.mxu0 0.0
        %6510 = vmatpush1.msra.mxu0 0.0
        %6511 = vmatprep.subr.mxu0 0.0
        %6512 = vmatpush1.msra.mxu0 0.0
        %6513 = vmatprep.subr.mxu0 0.0
        %6514 = vmatpush1.msra.mxu0 0.0
        %6515 = vmatprep.subr.mxu0 0.0
        %6516 = vmatpush1.msra.mxu0 0.0
        %6517 = vmatprep.subr.mxu0 0.0
        %6518 = vmatpush1.msra.mxu0 0.0
        %6519 = vmatprep.subr.mxu0 0.0
        %6520 = vmatpush1.msra.mxu0 0.0
        %6521 = vmatprep.subr.mxu0 0.0
        %6522 = vmatpush1.msra.mxu0 0.0
        %6523 = vmatprep.subr.mxu0 0.0
        %6524 = vmatpush1.msra.mxu0 0.0
        %6525 = vmatprep.subr.mxu0 0.0
        %6526 = vmatpush1.msra.mxu0 0.0
        %6527 = vmatprep.subr.mxu0 0.0
        %6528 = vmatpush1.msra.mxu0 0.0
        %6529 = vmatprep.subr.mxu0 0.0
        %6530 = vmatpush1.msra.mxu0 0.0
        %6531 = vmatprep.subr.mxu0 0.0
        %6532 = vmatpush1.msra.mxu0 0.0
        %6533 = vmatprep.subr.mxu0 0.0
        %6534 = vmatpush1.msra.mxu0 0.0
        %6535 = vmatprep.subr.mxu0 0.0
        %6536 = vmatpush1.msra.mxu0 0.0
        %6537 = vmatprep.subr.mxu0 0.0
        %6538 = vmatpush1.msra.mxu0 0.0
        %6539 = vmatprep.subr.mxu0 0.0
        %6540 = vmatpush1.msra.mxu0 0.0
        %6541 = vmatprep.subr.mxu0 0.0
        %6542 = vmatpush1.msra.mxu0 0.0
        %6543 = vmatprep.subr.mxu0 0.0
        %6544 = vmatpush1.msra.mxu0 0.0
        %6545 = vmatprep.subr.mxu0 0.0
        %6546 = vmatpush1.msra.mxu0 0.0
        %6547 = vmatprep.subr.mxu0 0.0
        %6548 = vmatpush1.msra.mxu0 0.0
        %6549 = vmatprep.subr.mxu0 0.0
        %6550 = vmatpush1.msra.mxu0 0.0
        %6551 = vmatprep.subr.mxu0 0.0
        %6552 = vmatpush1.msra.mxu0 0.0
        %6553 = vmatprep.subr.mxu0 0.0
        %6554 = vmatpush1.msra.mxu0 0.0
        %6555 = vmatprep.subr.mxu0 0.0
        %6556 = vmatpush1.msra.mxu0 0.0
        %6557 = vmatprep.subr.mxu0 0.0
        %6558 = vmatpush1.msra.mxu0 0.0
        %6559 = vmatprep.subr.mxu0 0.0
        %6560 = vmatpush1.msra.mxu0 0.0
        %6561 = vmatprep.subr.mxu0 0.0
        %6562 = vmatpush1.msra.mxu0 0.0
        %6563 = vmatprep.mubr.f32.mxu0 0.0
        %6564 = vmatmul.mubr.f32.gmra.mrb[0].mxu0 %v6497
        %v6565 = vpop.f32.mrb[0].mxu0
        %v6566 = vadd.f32 0.0, %v6565
        %v6567 = vpop.f32.mrb[0].mxu0
        %6568 = vdwg.mxu0
        %v6569 = vadd.f32 %v6322, %v6566
        %v6571 = vlaneseq
        %v6572 = vshrl.u32 %v6571, 7
        %v6573 = vsub.s32 0, %v6572
        %v6574 = vrot.slane %v2537, %v6573
        %v6576 = vadd.f32 %v6569, %v6574
        %v6577 = vadd.f32 %v5335, %v6576
        %v6578 = vsel %vm2690, %v6577, 0.0
        %6579 = vadd.xlane.f32.xlu0 %v6578
        %v6580 = vpop.xlane.xlu0 %6579
        %v6581 = vmul.f32 %v6580, %v4007
        %v6582 = vsub.f32 %v6577, %v6581
        %v6583 = vmul.f32 %v6582, %v6582
        %v6584 = vsel %vm2690, %v6583, 0.0
        %6585 = vadd.xlane.f32.xlu0 %v6584
        %v6586 = vpop.xlane.xlu0 %6585
        %v6587 = vmul.f32 %v6586, %v4007
        %v6588 = vadd.f32 %v6587, 1e-05
        %v6589 = vrsqrt.pop %v6588
        %v6590 = vmul.f32 %v6582, %v6589
        %v6592 = vlaneseq
        %v6593 = vshrl.u32 %v6592, 7
        %v6594 = vsub.s32 0, %v6593
        %v6595 = vrot.slane %v2559, %v6594
        %v6597 = vmul.f32 %v6590, %v6595
        %v6599 = vlaneseq
        %v6600 = vshrl.u32 %v6599, 7
        %v6601 = vsub.s32 0, %v6600
        %v6602 = vrot.slane %v2558, %v6601
        %v6604 = vadd.f32 %v6597, %v6602
        %v6606 = vlaneseq
        %v6607 = vshrl.u32 %v6606, 7
        %v6608 = vsub.s32 0, %v6607
        %v6609 = vrot.slane %v2534, %v6608
        %v6612 = vsel %vm2690, %v6604, 0
        %6614 = vmatprep.subr.mxu0 0.0
        %6615 = vmatpush1.msra.mxu0 %v2572
        %6616 = vmatprep.subr.mxu0 0.0
        %6617 = vmatpush1.msra.mxu0 %v2573
        %6618 = vmatprep.subr.mxu0 0.0
        %6619 = vmatpush1.msra.mxu0 %v2574
        %6620 = vmatprep.subr.mxu0 0.0
        %6621 = vmatpush1.msra.mxu0 %v2575
        %6622 = vmatprep.subr.mxu0 0.0
        %6623 = vmatpush1.msra.mxu0 0.0
        %6624 = vmatprep.subr.mxu0 0.0
        %6625 = vmatpush1.msra.mxu0 0.0
        %6626 = vmatprep.subr.mxu0 0.0
        %6627 = vmatpush1.msra.mxu0 0.0
        %6628 = vmatprep.subr.mxu0 0.0
        %6629 = vmatpush1.msra.mxu0 0.0
        %6630 = vmatprep.subr.mxu0 0.0
        %6631 = vmatpush1.msra.mxu0 0.0
        %6632 = vmatprep.subr.mxu0 0.0
        %6633 = vmatpush1.msra.mxu0 0.0
        %6634 = vmatprep.subr.mxu0 0.0
        %6635 = vmatpush1.msra.mxu0 0.0
        %6636 = vmatprep.subr.mxu0 0.0
        %6637 = vmatpush1.msra.mxu0 0.0
        %6638 = vmatprep.subr.mxu0 0.0
        %6639 = vmatpush1.msra.mxu0 0.0
        %6640 = vmatprep.subr.mxu0 0.0
        %6641 = vmatpush1.msra.mxu0 0.0
        %6642 = vmatprep.subr.mxu0 0.0
        %6643 = vmatpush1.msra.mxu0 0.0
        %6644 = vmatprep.subr.mxu0 0.0
        %6645 = vmatpush1.msra.mxu0 0.0
        %6646 = vmatprep.subr.mxu0 0.0
        %6647 = vmatpush1.msra.mxu0 0.0
        %6648 = vmatprep.subr.mxu0 0.0
        %6649 = vmatpush1.msra.mxu0 0.0
        %6650 = vmatprep.subr.mxu0 0.0
        %6651 = vmatpush1.msra.mxu0 0.0
        %6652 = vmatprep.subr.mxu0 0.0
        %6653 = vmatpush1.msra.mxu0 0.0
        %6654 = vmatprep.subr.mxu0 0.0
        %6655 = vmatpush1.msra.mxu0 0.0
        %6656 = vmatprep.subr.mxu0 0.0
        %6657 = vmatpush1.msra.mxu0 0.0
        %6658 = vmatprep.subr.mxu0 0.0
        %6659 = vmatpush1.msra.mxu0 0.0
        %6660 = vmatprep.subr.mxu0 0.0
        %6661 = vmatpush1.msra.mxu0 0.0
        %6662 = vmatprep.subr.mxu0 0.0
        %6663 = vmatpush1.msra.mxu0 0.0
        %6664 = vmatprep.subr.mxu0 0.0
        %6665 = vmatpush1.msra.mxu0 0.0
        %6666 = vmatprep.subr.mxu0 0.0
        %6667 = vmatpush1.msra.mxu0 0.0
        %6668 = vmatprep.subr.mxu0 0.0
        %6669 = vmatpush1.msra.mxu0 0.0
        %6670 = vmatprep.subr.mxu0 0.0
        %6671 = vmatpush1.msra.mxu0 0.0
        %6672 = vmatprep.subr.mxu0 0.0
        %6673 = vmatpush1.msra.mxu0 0.0
        %6674 = vmatprep.subr.mxu0 0.0
        %6675 = vmatpush1.msra.mxu0 0.0
        %6676 = vmatprep.subr.mxu0 0.0
        %6677 = vmatpush1.msra.mxu0 0.0
        %6678 = vmatprep.mubr.f32.mxu0 0.0
        %6679 = vmatmul.mubr.f32.gmra.mrb[0].mxu0 %v6612
        %v6680 = vpop.f32.mrb[0].mxu0
        %v6681 = vadd.f32 %v6609, %v6680
        %v6682 = vpop.f32.mrb[0].mxu0
        %6683 = vdwg.mxu0
        %v6684 = vmax.f32 %v6681, 0.0
        %v6686 = vlaneseq
        %v6687 = vshrl.u32 %v6686, 7
        %v6688 = vsub.s32 0, %v6687
        %v6689 = vrot.slane %v2535, %v6688
        %v6692 = vsel %vm4139, %v6684, 0
        %6694 = vmatprep.subr.mxu0 0.0
        %6695 = vmatpush1.msra.mxu0 %v2576
        %6696 = vmatprep.subr.mxu0 0.0
        %6697 = vmatpush1.msra.mxu0 %v2577
        %6698 = vmatprep.subr.mxu0 0.0
        %6699 = vmatpush1.msra.mxu0 %v2578
        %6700 = vmatprep.subr.mxu0 0.0
        %6701 = vmatpush1.msra.mxu0 %v2579
        %6702 = vmatprep.subr.mxu0 0.0
        %6703 = vmatpush1.msra.mxu0 %v2580
        %6704 = vmatprep.subr.mxu0 0.0
        %6705 = vmatpush1.msra.mxu0 %v2581
        %6706 = vmatprep.subr.mxu0 0.0
        %6707 = vmatpush1.msra.mxu0 %v2582
        %6708 = vmatprep.subr.mxu0 0.0
        %6709 = vmatpush1.msra.mxu0 %v2583
        %6710 = vmatprep.subr.mxu0 0.0
        %6711 = vmatpush1.msra.mxu0 0.0
        %6712 = vmatprep.subr.mxu0 0.0
        %6713 = vmatpush1.msra.mxu0 0.0
        %6714 = vmatprep.subr.mxu0 0.0
        %6715 = vmatpush1.msra.mxu0 0.0
        %6716 = vmatprep.subr.mxu0 0.0
        %6717 = vmatpush1.msra.mxu0 0.0
        %6718 = vmatprep.subr.mxu0 0.0
        %6719 = vmatpush1.msra.mxu0 0.0
        %6720 = vmatprep.subr.mxu0 0.0
        %6721 = vmatpush1.msra.mxu0 0.0
        %6722 = vmatprep.subr.mxu0 0.0
        %6723 = vmatpush1.msra.mxu0 0.0
        %6724 = vmatprep.subr.mxu0 0.0
        %6725 = vmatpush1.msra.mxu0 0.0
        %6726 = vmatprep.subr.mxu0 0.0
        %6727 = vmatpush1.msra.mxu0 0.0
        %6728 = vmatprep.subr.mxu0 0.0
        %6729 = vmatpush1.msra.mxu0 0.0
        %6730 = vmatprep.subr.mxu0 0.0
        %6731 = vmatpush1.msra.mxu0 0.0
        %6732 = vmatprep.subr.mxu0 0.0
        %6733 = vmatpush1.msra.mxu0 0.0
        %6734 = vmatprep.subr.mxu0 0.0
        %6735 = vmatpush1.msra.mxu0 0.0
        %6736 = vmatprep.subr.mxu0 0.0
        %6737 = vmatpush1.msra.mxu0 0.0
        %6738 = vmatprep.subr.mxu0 0.0
        %6739 = vmatpush1.msra.mxu0 0.0
        %6740 = vmatprep.subr.mxu0 0.0
        %6741 = vmatpush1.msra.mxu0 0.0
        %6742 = vmatprep.subr.mxu0 0.0
        %6743 = vmatpush1.msra.mxu0 0.0
        %6744 = vmatprep.subr.mxu0 0.0
        %6745 = vmatpush1.msra.mxu0 0.0
        %6746 = vmatprep.subr.mxu0 0.0
        %6747 = vmatpush1.msra.mxu0 0.0
        %6748 = vmatprep.subr.mxu0 0.0
        %6749 = vmatpush1.msra.mxu0 0.0
        %6750 = vmatprep.subr.mxu0 0.0
        %6751 = vmatpush1.msra.mxu0 0.0
        %6752 = vmatprep.subr.mxu0 0.0
        %6753 = vmatpush1.msra.mxu0 0.0
        %6754 = vmatprep.subr.mxu0 0.0
        %6755 = vmatpush1.msra.mxu0 0.0
        %6756 = vmatprep.subr.mxu0 0.0
        %6757 = vmatpush1.msra.mxu0 0.0
        %6758 = vmatprep.mubr.f32.mxu0 0.0
        %6759 = vmatmul.mubr.f32.gmra.mrb[0].mxu0 %v6692
        %v6760 = vpop.f32.mrb[0].mxu0
        %v6761 = vadd.f32 %v6689, %v6760
        %v6762 = vpop.f32.mrb[0].mxu0
        %6763 = vdwg.mxu0
        %v6764 = vadd.f32 %v6604, %v6761
        %v6765 = vsel %vm2690, %v6764, 0.0
        %6766 = vadd.xlane.f32.xlu0 %v6765
        %v6767 = vpop.xlane.xlu0 %6766
        %v6768 = vmul.f32 %v6767, %v4007
        %v6769 = vsub.f32 %v6764, %v6768
        %v6770 = vmul.f32 %v6769, %v6769
        %v6771 = vsel %vm2690, %v6770, 0.0
        %6772 = vadd.xlane.f32.xlu0 %v6771
        %v6773 = vpop.xlane.xlu0 %6772
        %v6774 = vmul.f32 %v6773, %v4007
        %v6775 = vadd.f32 %v6774, 1e-05
        %v6776 = vrsqrt.pop %v6775
        %v6777 = vmul.f32 %v6769, %v6776
        %v6779 = vlaneseq
        %v6780 = vshrl.u32 %v6779, 7
        %v6781 = vsub.s32 0, %v6780
        %v6782 = vrot.slane %v2561, %v6781
        %v6784 = vmul.f32 %v6777, %v6782
        %v6786 = vlaneseq
        %v6787 = vshrl.u32 %v6786, 7
        %v6788 = vsub.s32 0, %v6787
        %v6789 = vrot.slane %v2560, %v6788
        %v6791 = vadd.f32 %v6784, %v6789
        %v6793 = vlaneseq
        %v6794 = vshrl.u32 %v6793, 7
        %v6795 = vsub.s32 0, %v6794
        %v6796 = vrot.slane %v2523, %v6795
        %v6799 = vsel %vm2690, %v6791, 0
        %6801 = vmatprep.subr.mxu0 0.0
        %6802 = vmatpush1.msra.mxu0 %v2519
        %6803 = vmatprep.subr.mxu0 0.0
        %6804 = vmatpush1.msra.mxu0 %v2520
        %6805 = vmatprep.subr.mxu0 0.0
        %6806 = vmatpush1.msra.mxu0 %v2521
        %6807 = vmatprep.subr.mxu0 0.0
        %6808 = vmatpush1.msra.mxu0 %v2522
        %6809 = vmatprep.subr.mxu0 0.0
        %6810 = vmatpush1.msra.mxu0 0.0
        %6811 = vmatprep.subr.mxu0 0.0
        %6812 = vmatpush1.msra.mxu0 0.0
        %6813 = vmatprep.subr.mxu0 0.0
        %6814 = vmatpush1.msra.mxu0 0.0
        %6815 = vmatprep.subr.mxu0 0.0
        %6816 = vmatpush1.msra.mxu0 0.0
        %6817 = vmatprep.subr.mxu0 0.0
        %6818 = vmatpush1.msra.mxu0 0.0
        %6819 = vmatprep.subr.mxu0 0.0
        %6820 = vmatpush1.msra.mxu0 0.0
        %6821 = vmatprep.subr.mxu0 0.0
        %6822 = vmatpush1.msra.mxu0 0.0
        %6823 = vmatprep.subr.mxu0 0.0
        %6824 = vmatpush1.msra.mxu0 0.0
        %6825 = vmatprep.subr.mxu0 0.0
        %6826 = vmatpush1.msra.mxu0 0.0
        %6827 = vmatprep.subr.mxu0 0.0
        %6828 = vmatpush1.msra.mxu0 0.0
        %6829 = vmatprep.subr.mxu0 0.0
        %6830 = vmatpush1.msra.mxu0 0.0
        %6831 = vmatprep.subr.mxu0 0.0
        %6832 = vmatpush1.msra.mxu0 0.0
        %6833 = vmatprep.subr.mxu0 0.0
        %6834 = vmatpush1.msra.mxu0 0.0
        %6835 = vmatprep.subr.mxu0 0.0
        %6836 = vmatpush1.msra.mxu0 0.0
        %6837 = vmatprep.subr.mxu0 0.0
        %6838 = vmatpush1.msra.mxu0 0.0
        %6839 = vmatprep.subr.mxu0 0.0
        %6840 = vmatpush1.msra.mxu0 0.0
        %6841 = vmatprep.subr.mxu0 0.0
        %6842 = vmatpush1.msra.mxu0 0.0
        %6843 = vmatprep.subr.mxu0 0.0
        %6844 = vmatpush1.msra.mxu0 0.0
        %6845 = vmatprep.subr.mxu0 0.0
        %6846 = vmatpush1.msra.mxu0 0.0
        %6847 = vmatprep.subr.mxu0 0.0
        %6848 = vmatpush1.msra.mxu0 0.0
        %6849 = vmatprep.subr.mxu0 0.0
        %6850 = vmatpush1.msra.mxu0 0.0
        %6851 = vmatprep.subr.mxu0 0.0
        %6852 = vmatpush1.msra.mxu0 0.0
        %6853 = vmatprep.subr.mxu0 0.0
        %6854 = vmatpush1.msra.mxu0 0.0
        %6855 = vmatprep.subr.mxu0 0.0
        %6856 = vmatpush1.msra.mxu0 0.0
        %6857 = vmatprep.subr.mxu0 0.0
        %6858 = vmatpush1.msra.mxu0 0.0
        %6859 = vmatprep.subr.mxu0 0.0
        %6860 = vmatpush1.msra.mxu0 0.0
        %6861 = vmatprep.subr.mxu0 0.0
        %6862 = vmatpush1.msra.mxu0 0.0
        %6863 = vmatprep.subr.mxu0 0.0
        %6864 = vmatpush1.msra.mxu0 0.0
        %6865 = vmatprep.mubr.f32.mxu0 0.0
        %6866 = vmatmul.mubr.f32.gmra.mrb[0].mxu0 %v6799
        %v6867 = vpop.f32.mrb[0].mxu0
        %v6868 = vadd.f32 %v6796, %v6867
        %v6869 = vpop.f32.mrb[0].mxu0
        %6870 = vdwg.mxu0
        %v6871 = vxor.u32 %v6868, 2147483648
        %v6872 = vmul.f32 %v6871, 1.442695
        %v6873 = vpow.pop %v6872
        %v6874 = vadd.f32 %v6873, 1.0
        %v6875 = vrcp.pop %v6874
        %v6876 = vmul.f32 1.0, %v6875
        %v6878 = vlaneseq
        %v6879 = vshrl.u32 %v6878, 7
        %v6880 = vsub.s32 0, %v6879
        %v6881 = vrot.slane %v2528, %v6880
        %v6884 = vsel %vm2690, %v6876, 0
        %6886 = vmatprep.subr.mxu0 0.0
        %6887 = vmatpush1.msra.mxu0 %v2524
        %6888 = vmatprep.subr.mxu0 0.0
        %6889 = vmatpush1.msra.mxu0 %v2525
        %6890 = vmatprep.subr.mxu0 0.0
        %6891 = vmatpush1.msra.mxu0 %v2526
        %6892 = vmatprep.subr.mxu0 0.0
        %6893 = vmatpush1.msra.mxu0 %v2527
        %6894 = vmatprep.subr.mxu0 0.0
        %6895 = vmatpush1.msra.mxu0 0.0
        %6896 = vmatprep.subr.mxu0 0.0
        %6897 = vmatpush1.msra.mxu0 0.0
        %6898 = vmatprep.subr.mxu0 0.0
        %6899 = vmatpush1.msra.mxu0 0.0
        %6900 = vmatprep.subr.mxu0 0.0
        %6901 = vmatpush1.msra.mxu0 0.0
        %6902 = vmatprep.subr.mxu0 0.0
        %6903 = vmatpush1.msra.mxu0 0.0
        %6904 = vmatprep.subr.mxu0 0.0
        %6905 = vmatpush1.msra.mxu0 0.0
        %6906 = vmatprep.subr.mxu0 0.0
        %6907 = vmatpush1.msra.mxu0 0.0
        %6908 = vmatprep.subr.mxu0 0.0
        %6909 = vmatpush1.msra.mxu0 0.0
        %6910 = vmatprep.subr.mxu0 0.0
        %6911 = vmatpush1.msra.mxu0 0.0
        %6912 = vmatprep.subr.mxu0 0.0
        %6913 = vmatpush1.msra.mxu0 0.0
        %6914 = vmatprep.subr.mxu0 0.0
        %6915 = vmatpush1.msra.mxu0 0.0
        %6916 = vmatprep.subr.mxu0 0.0
        %6917 = vmatpush1.msra.mxu0 0.0
        %6918 = vmatprep.subr.mxu0 0.0
        %6919 = vmatpush1.msra.mxu0 0.0
        %6920 = vmatprep.subr.mxu0 0.0
        %6921 = vmatpush1.msra.mxu0 0.0
        %6922 = vmatprep.subr.mxu0 0.0
        %6923 = vmatpush1.msra.mxu0 0.0
        %6924 = vmatprep.subr.mxu0 0.0
        %6925 = vmatpush1.msra.mxu0 0.0
        %6926 = vmatprep.subr.mxu0 0.0
        %6927 = vmatpush1.msra.mxu0 0.0
        %6928 = vmatprep.subr.mxu0 0.0
        %6929 = vmatpush1.msra.mxu0 0.0
        %6930 = vmatprep.subr.mxu0 0.0
        %6931 = vmatpush1.msra.mxu0 0.0
        %6932 = vmatprep.subr.mxu0 0.0
        %6933 = vmatpush1.msra.mxu0 0.0
        %6934 = vmatprep.subr.mxu0 0.0
        %6935 = vmatpush1.msra.mxu0 0.0
        %6936 = vmatprep.subr.mxu0 0.0
        %6937 = vmatpush1.msra.mxu0 0.0
        %6938 = vmatprep.subr.mxu0 0.0
        %6939 = vmatpush1.msra.mxu0 0.0
        %6940 = vmatprep.subr.mxu0 0.0
        %6941 = vmatpush1.msra.mxu0 0.0
        %6942 = vmatprep.subr.mxu0 0.0
        %6943 = vmatpush1.msra.mxu0 0.0
        %6944 = vmatprep.subr.mxu0 0.0
        %6945 = vmatpush1.msra.mxu0 0.0
        %6946 = vmatprep.subr.mxu0 0.0
        %6947 = vmatpush1.msra.mxu0 0.0
        %6948 = vmatprep.subr.mxu0 0.0
        %6949 = vmatpush1.msra.mxu0 0.0
        %6950 = vmatprep.mubr.f32.mxu0 0.0
        %6951 = vmatmul.mubr.f32.gmra.mrb[0].mxu0 %v6884
        %v6952 = vpop.f32.mrb[0].mxu0
        %v6953 = vadd.f32 %v6881, %v6952
        %v6954 = vpop.f32.mrb[0].mxu0
        %6955 = vdwg.mxu0
        %v6956 = vxor.u32 %v6953, 2147483648
        %v6957 = vmul.f32 %v6956, 1.442695
        %v6958 = vpow.pop %v6957
        %v6959 = vadd.f32 %v6958, 1.0
        %v6960 = vrcp.pop %v6959
        %v6961 = vmul.f32 1.0, %v6960
        %v6963 = vlaneseq
        %v6964 = vshrl.u32 %v6963, 7
        %v6965 = vsub.s32 0, %v6964
        %v6966 = vrot.slane %v2533, %v6965
        %v6969 = vsel %vm2690, %v6961, 0
        %6971 = vmatprep.subr.mxu0 0.0
        %6972 = vmatpush1.msra.mxu0 %v2529
        %6973 = vmatprep.subr.mxu0 0.0
        %6974 = vmatpush1.msra.mxu0 %v2530
        %6975 = vmatprep.subr.mxu0 0.0
        %6976 = vmatpush1.msra.mxu0 %v2531
        %6977 = vmatprep.subr.mxu0 0.0
        %6978 = vmatpush1.msra.mxu0 %v2532
        %6979 = vmatprep.subr.mxu0 0.0
        %6980 = vmatpush1.msra.mxu0 0.0
        %6981 = vmatprep.subr.mxu0 0.0
        %6982 = vmatpush1.msra.mxu0 0.0
        %6983 = vmatprep.subr.mxu0 0.0
        %6984 = vmatpush1.msra.mxu0 0.0
        %6985 = vmatprep.subr.mxu0 0.0
        %6986 = vmatpush1.msra.mxu0 0.0
        %6987 = vmatprep.subr.mxu0 0.0
        %6988 = vmatpush1.msra.mxu0 0.0
        %6989 = vmatprep.subr.mxu0 0.0
        %6990 = vmatpush1.msra.mxu0 0.0
        %6991 = vmatprep.subr.mxu0 0.0
        %6992 = vmatpush1.msra.mxu0 0.0
        %6993 = vmatprep.subr.mxu0 0.0
        %6994 = vmatpush1.msra.mxu0 0.0
        %6995 = vmatprep.subr.mxu0 0.0
        %6996 = vmatpush1.msra.mxu0 0.0
        %6997 = vmatprep.subr.mxu0 0.0
        %6998 = vmatpush1.msra.mxu0 0.0
        %6999 = vmatprep.subr.mxu0 0.0
        %7000 = vmatpush1.msra.mxu0 0.0
        %7001 = vmatprep.subr.mxu0 0.0
        %7002 = vmatpush1.msra.mxu0 0.0
        %7003 = vmatprep.subr.mxu0 0.0
        %7004 = vmatpush1.msra.mxu0 0.0
        %7005 = vmatprep.subr.mxu0 0.0
        %7006 = vmatpush1.msra.mxu0 0.0
        %7007 = vmatprep.subr.mxu0 0.0
        %7008 = vmatpush1.msra.mxu0 0.0
        %7009 = vmatprep.subr.mxu0 0.0
        %7010 = vmatpush1.msra.mxu0 0.0
        %7011 = vmatprep.subr.mxu0 0.0
        %7012 = vmatpush1.msra.mxu0 0.0
        %7013 = vmatprep.subr.mxu0 0.0
        %7014 = vmatpush1.msra.mxu0 0.0
        %7015 = vmatprep.subr.mxu0 0.0
        %7016 = vmatpush1.msra.mxu0 0.0
        %7017 = vmatprep.subr.mxu0 0.0
        %7018 = vmatpush1.msra.mxu0 0.0
        %7019 = vmatprep.subr.mxu0 0.0
        %7020 = vmatpush1.msra.mxu0 0.0
        %7021 = vmatprep.subr.mxu0 0.0
        %7022 = vmatpush1.msra.mxu0 0.0
        %7023 = vmatprep.subr.mxu0 0.0
        %7024 = vmatpush1.msra.mxu0 0.0
        %7025 = vmatprep.subr.mxu0 0.0
        %7026 = vmatpush1.msra.mxu0 0.0
        %7027 = vmatprep.subr.mxu0 0.0
        %7028 = vmatpush1.msra.mxu0 0.0
        %7029 = vmatprep.subr.mxu0 0.0
        %7030 = vmatpush1.msra.mxu0 0.0
        %7031 = vmatprep.subr.mxu0 0.0
        %7032 = vmatpush1.msra.mxu0 0.0
        %7033 = vmatprep.subr.mxu0 0.0
        %7034 = vmatpush1.msra.mxu0 0.0
        %7035 = vmatprep.mubr.f32.mxu0 0.0
        %7036 = vmatmul.mubr.f32.gmra.mrb[0].mxu0 %v6969
        %v7037 = vpop.f32.mrb[0].mxu0
        %v7038 = vadd.f32 %v6966, %v7037
        %v7039 = vpop.f32.mrb[0].mxu0
        %7040 = vdwg.mxu0
        %v7041 = vxor.u32 %v7038, 2147483648
        %v7042 = vmul.f32 %v7041, 1.442695
        %v7043 = vpow.pop %v7042
        %v7044 = vadd.f32 %v7043, 1.0
        %v7045 = vrcp.pop %v7044
        %v7046 = vmul.f32 1.0, %v7045
        %v7048 = vlaneseq
        %v7049 = vshrl.u32 %v7048, 7
        %v7050 = vsub.s32 0, %v7049
        %v7051 = vrot.slane %v2492, %v7050
        %7053 = vmatprep.subr.mxu0 0.0
        %7054 = vmatpush1.msra.mxu0 %v2488
        %7055 = vmatprep.subr.mxu0 0.0
        %7056 = vmatpush1.msra.mxu0 %v2489
        %7057 = vmatprep.subr.mxu0 0.0
        %7058 = vmatpush1.msra.mxu0 %v2490
        %7059 = vmatprep.subr.mxu0 0.0
        %7060 = vmatpush1.msra.mxu0 %v2491
        %7061 = vmatprep.subr.mxu0 0.0
        %7062 = vmatpush1.msra.mxu0 0.0
        %7063 = vmatprep.subr.mxu0 0.0
        %7064 = vmatpush1.msra.mxu0 0.0
        %7065 = vmatprep.subr.mxu0 0.0
        %7066 = vmatpush1.msra.mxu0 0.0
        %7067 = vmatprep.subr.mxu0 0.0
        %7068 = vmatpush1.msra.mxu0 0.0
        %7069 = vmatprep.subr.mxu0 0.0
        %7070 = vmatpush1.msra.mxu0 0.0
        %7071 = vmatprep.subr.mxu0 0.0
        %7072 = vmatpush1.msra.mxu0 0.0
        %7073 = vmatprep.subr.mxu0 0.0
        %7074 = vmatpush1.msra.mxu0 0.0
        %7075 = vmatprep.subr.mxu0 0.0
        %7076 = vmatpush1.msra.mxu0 0.0
        %7077 = vmatprep.subr.mxu0 0.0
        %7078 = vmatpush1.msra.mxu0 0.0
        %7079 = vmatprep.subr.mxu0 0.0
        %7080 = vmatpush1.msra.mxu0 0.0
        %7081 = vmatprep.subr.mxu0 0.0
        %7082 = vmatpush1.msra.mxu0 0.0
        %7083 = vmatprep.subr.mxu0 0.0
        %7084 = vmatpush1.msra.mxu0 0.0
        %7085 = vmatprep.subr.mxu0 0.0
        %7086 = vmatpush1.msra.mxu0 0.0
        %7087 = vmatprep.subr.mxu0 0.0
        %7088 = vmatpush1.msra.mxu0 0.0
        %7089 = vmatprep.subr.mxu0 0.0
        %7090 = vmatpush1.msra.mxu0 0.0
        %7091 = vmatprep.subr.mxu0 0.0
        %7092 = vmatpush1.msra.mxu0 0.0
        %7093 = vmatprep.subr.mxu0 0.0
        %7094 = vmatpush1.msra.mxu0 0.0
        %7095 = vmatprep.subr.mxu0 0.0
        %7096 = vmatpush1.msra.mxu0 0.0
        %7097 = vmatprep.subr.mxu0 0.0
        %7098 = vmatpush1.msra.mxu0 0.0
        %7099 = vmatprep.subr.mxu0 0.0
        %7100 = vmatpush1.msra.mxu0 0.0
        %7101 = vmatprep.subr.mxu0 0.0
        %7102 = vmatpush1.msra.mxu0 0.0
        %7103 = vmatprep.subr.mxu0 0.0
        %7104 = vmatpush1.msra.mxu0 0.0
        %7105 = vmatprep.subr.mxu0 0.0
        %7106 = vmatpush1.msra.mxu0 0.0
        %7107 = vmatprep.subr.mxu0 0.0
        %7108 = vmatpush1.msra.mxu0 0.0
        %7109 = vmatprep.subr.mxu0 0.0
        %7110 = vmatpush1.msra.mxu0 0.0
        %7111 = vmatprep.subr.mxu0 0.0
        %7112 = vmatpush1.msra.mxu0 0.0
        %7113 = vmatprep.subr.mxu0 0.0
        %7114 = vmatpush1.msra.mxu0 0.0
        %7115 = vmatprep.subr.mxu0 0.0
        %7116 = vmatpush1.msra.mxu0 0.0
        %7117 = vmatprep.mubr.f32.mxu0 0.0
        %7118 = vmatmul.mubr.f32.gmra.mrb[0].mxu0 %v6799
        %v7119 = vpop.f32.mrb[0].mxu0
        %v7120 = vadd.f32 %v7051, %v7119
        %v7121 = vpop.f32.mrb[0].mxu0
        %7122 = vdwg.mxu0
        %v7123 = vxor.u32 %v7120, 2147483648
        %v7124 = vmul.f32 %v7123, 1.442695
        %v7125 = vpow.pop %v7124
        %v7126 = vadd.f32 %v7125, 1.0
        %v7127 = vrcp.pop %v7126
        %v7128 = vmul.f32 1.0, %v7127
        %v7130 = vlaneseq
        %v7131 = vshrl.u32 %v7130, 7
        %v7132 = vsub.s32 0, %v7131
        %v7133 = vrot.slane %v2505, %v7132
        %vm7135 = vcmask 785408
        %v7137 = vsel %vm7135, %v7128, 0
        %7139 = vmatprep.subr.mxu0 0.0
        %7140 = vmatpush1.msra.mxu0 %v2493
        %7141 = vmatprep.subr.mxu0 0.0
        %7142 = vmatpush1.msra.mxu0 %v2494
        %7143 = vmatprep.subr.mxu0 0.0
        %7144 = vmatpush1.msra.mxu0 %v2495
        %7145 = vmatprep.subr.mxu0 0.0
        %7146 = vmatpush1.msra.mxu0 %v2496
        %7147 = vmatprep.subr.mxu0 0.0
        %7148 = vmatpush1.msra.mxu0 %v2497
        %7149 = vmatprep.subr.mxu0 0.0
        %7150 = vmatpush1.msra.mxu0 %v2498
        %7151 = vmatprep.subr.mxu0 0.0
        %7152 = vmatpush1.msra.mxu0 %v2499
        %7153 = vmatprep.subr.mxu0 0.0
        %7154 = vmatpush1.msra.mxu0 %v2500
        %7155 = vmatprep.subr.mxu0 0.0
        %7156 = vmatpush1.msra.mxu0 %v2501
        %7157 = vmatprep.subr.mxu0 0.0
        %7158 = vmatpush1.msra.mxu0 %v2502
        %7159 = vmatprep.subr.mxu0 0.0
        %7160 = vmatpush1.msra.mxu0 %v2503
        %7161 = vmatprep.subr.mxu0 0.0
        %7162 = vmatpush1.msra.mxu0 %v2504
        %7163 = vmatprep.subr.mxu0 0.0
        %7164 = vmatpush1.msra.mxu0 0.0
        %7165 = vmatprep.subr.mxu0 0.0
        %7166 = vmatpush1.msra.mxu0 0.0
        %7167 = vmatprep.subr.mxu0 0.0
        %7168 = vmatpush1.msra.mxu0 0.0
        %7169 = vmatprep.subr.mxu0 0.0
        %7170 = vmatpush1.msra.mxu0 0.0
        %7171 = vmatprep.subr.mxu0 0.0
        %7172 = vmatpush1.msra.mxu0 0.0
        %7173 = vmatprep.subr.mxu0 0.0
        %7174 = vmatpush1.msra.mxu0 0.0
        %7175 = vmatprep.subr.mxu0 0.0
        %7176 = vmatpush1.msra.mxu0 0.0
        %7177 = vmatprep.subr.mxu0 0.0
        %7178 = vmatpush1.msra.mxu0 0.0
        %7179 = vmatprep.subr.mxu0 0.0
        %7180 = vmatpush1.msra.mxu0 0.0
        %7181 = vmatprep.subr.mxu0 0.0
        %7182 = vmatpush1.msra.mxu0 0.0
        %7183 = vmatprep.subr.mxu0 0.0
        %7184 = vmatpush1.msra.mxu0 0.0
        %7185 = vmatprep.subr.mxu0 0.0
        %7186 = vmatpush1.msra.mxu0 0.0
        %7187 = vmatprep.subr.mxu0 0.0
        %7188 = vmatpush1.msra.mxu0 0.0
        %7189 = vmatprep.subr.mxu0 0.0
        %7190 = vmatpush1.msra.mxu0 0.0
        %7191 = vmatprep.subr.mxu0 0.0
        %7192 = vmatpush1.msra.mxu0 0.0
        %7193 = vmatprep.subr.mxu0 0.0
        %7194 = vmatpush1.msra.mxu0 0.0
        %7195 = vmatprep.subr.mxu0 0.0
        %7196 = vmatpush1.msra.mxu0 0.0
        %7197 = vmatprep.subr.mxu0 0.0
        %7198 = vmatpush1.msra.mxu0 0.0
        %7199 = vmatprep.subr.mxu0 0.0
        %7200 = vmatpush1.msra.mxu0 0.0
        %7201 = vmatprep.subr.mxu0 0.0
        %7202 = vmatpush1.msra.mxu0 0.0
        %7203 = vmatprep.mubr.f32.mxu0 0.0
        %7204 = vmatmul.mubr.f32.gmra.mrb[0].mxu0 %v7137
        %v7205 = vpop.f32.mrb[0].mxu0
        %v7206 = vadd.f32 %v7133, %v7205
        %v7207 = vpop.f32.mrb[0].mxu0
        %7208 = vdwg.mxu0
        %v7209 = vxor.u32 %v7206, 2147483648
        %v7210 = vmul.f32 %v7209, 1.442695
        %v7211 = vpow.pop %v7210
        %v7212 = vadd.f32 %v7211, 1.0
        %v7213 = vrcp.pop %v7212
        %v7214 = vmul.f32 1.0, %v7213
        %v7216 = vlaneseq
        %v7217 = vshrl.u32 %v7216, 7
        %v7218 = vsub.s32 0, %v7217
        %v7219 = vrot.slane %v2518, %v7218
        %v7222 = vsel %vm7135, %v7214, 0
        %7224 = vmatprep.subr.mxu0 0.0
        %7225 = vmatpush1.msra.mxu0 %v2506
        %7226 = vmatprep.subr.mxu0 0.0
        %7227 = vmatpush1.msra.mxu0 %v2507
        %7228 = vmatprep.subr.mxu0 0.0
        %7229 = vmatpush1.msra.mxu0 %v2508
        %7230 = vmatprep.subr.mxu0 0.0
        %7231 = vmatpush1.msra.mxu0 %v2509
        %7232 = vmatprep.subr.mxu0 0.0
        %7233 = vmatpush1.msra.mxu0 %v2510
        %7234 = vmatprep.subr.mxu0 0.0
        %7235 = vmatpush1.msra.mxu0 %v2511
        %7236 = vmatprep.subr.mxu0 0.0
        %7237 = vmatpush1.msra.mxu0 %v2512
        %7238 = vmatprep.subr.mxu0 0.0
        %7239 = vmatpush1.msra.mxu0 %v2513
        %7240 = vmatprep.subr.mxu0 0.0
        %7241 = vmatpush1.msra.mxu0 %v2514
        %7242 = vmatprep.subr.mxu0 0.0
        %7243 = vmatpush1.msra.mxu0 %v2515
        %7244 = vmatprep.subr.mxu0 0.0
        %7245 = vmatpush1.msra.mxu0 %v2516
        %7246 = vmatprep.subr.mxu0 0.0
        %7247 = vmatpush1.msra.mxu0 %v2517
        %7248 = vmatprep.subr.mxu0 0.0
        %7249 = vmatpush1.msra.mxu0 0.0
        %7250 = vmatprep.subr.mxu0 0.0
        %7251 = vmatpush1.msra.mxu0 0.0
        %7252 = vmatprep.subr.mxu0 0.0
        %7253 = vmatpush1.msra.mxu0 0.0
        %7254 = vmatprep.subr.mxu0 0.0
        %7255 = vmatpush1.msra.mxu0 0.0
        %7256 = vmatprep.subr.mxu0 0.0
        %7257 = vmatpush1.msra.mxu0 0.0
        %7258 = vmatprep.subr.mxu0 0.0
        %7259 = vmatpush1.msra.mxu0 0.0
        %7260 = vmatprep.subr.mxu0 0.0
        %7261 = vmatpush1.msra.mxu0 0.0
        %7262 = vmatprep.subr.mxu0 0.0
        %7263 = vmatpush1.msra.mxu0 0.0
        %7264 = vmatprep.subr.mxu0 0.0
        %7265 = vmatpush1.msra.mxu0 0.0
        %7266 = vmatprep.subr.mxu0 0.0
        %7267 = vmatpush1.msra.mxu0 0.0
        %7268 = vmatprep.subr.mxu0 0.0
        %7269 = vmatpush1.msra.mxu0 0.0
        %7270 = vmatprep.subr.mxu0 0.0
        %7271 = vmatpush1.msra.mxu0 0.0
        %7272 = vmatprep.subr.mxu0 0.0
        %7273 = vmatpush1.msra.mxu0 0.0
        %7274 = vmatprep.subr.mxu0 0.0
        %7275 = vmatpush1.msra.mxu0 0.0
        %7276 = vmatprep.subr.mxu0 0.0
        %7277 = vmatpush1.msra.mxu0 0.0
        %7278 = vmatprep.subr.mxu0 0.0
        %7279 = vmatpush1.msra.mxu0 0.0
        %7280 = vmatprep.subr.mxu0 0.0
        %7281 = vmatpush1.msra.mxu0 0.0
        %7282 = vmatprep.subr.mxu0 0.0
        %7283 = vmatpush1.msra.mxu0 0.0
        %7284 = vmatprep.subr.mxu0 0.0
        %7285 = vmatpush1.msra.mxu0 0.0
        %7286 = vmatprep.subr.mxu0 0.0
        %7287 = vmatpush1.msra.mxu0 0.0
        %7288 = vmatprep.mubr.f32.mxu0 0.0
        %7289 = vmatmul.mubr.f32.gmra.mrb[0].mxu0 %v7222
        %v7290 = vpop.f32.mrb[0].mxu0
        %v7291 = vadd.f32 %v7219, %v7290
        %v7292 = vpop.f32.mrb[0].mxu0
        %7293 = vdwg.mxu0
        %v7294 = vxor.u32 %v7291, 2147483648
        %v7295 = vmul.f32 %v7294, 1.442695
        %v7296 = vpow.pop %v7295
        %v7297 = vadd.f32 %v7296, 1.0
        %v7298 = vrcp.pop %v7297
        %v7299 = vmul.f32 1.0, %v7298
        %v7301 = vlaneseq
        %v7302 = vshrl.u32 %v7301, 7
        %v7303 = vsub.s32 0, %v7302
        %v7304 = vrot.slane %v2588, %v7303
        %7306 = vmatprep.subr.mxu0 0.0
        %7307 = vmatpush1.msra.mxu0 %v2584
        %7308 = vmatprep.subr.mxu0 0.0
        %7309 = vmatpush1.msra.mxu0 %v2585
        %7310 = vmatprep.subr.mxu0 0.0
        %7311 = vmatpush1.msra.mxu0 %v2586
        %7312 = vmatprep.subr.mxu0 0.0
        %7313 = vmatpush1.msra.mxu0 %v2587
        %7314 = vmatprep.subr.mxu0 0.0
        %7315 = vmatpush1.msra.mxu0 0.0
        %7316 = vmatprep.subr.mxu0 0.0
        %7317 = vmatpush1.msra.mxu0 0.0
        %7318 = vmatprep.subr.mxu0 0.0
        %7319 = vmatpush1.msra.mxu0 0.0
        %7320 = vmatprep.subr.mxu0 0.0
        %7321 = vmatpush1.msra.mxu0 0.0
        %7322 = vmatprep.subr.mxu0 0.0
        %7323 = vmatpush1.msra.mxu0 0.0
        %7324 = vmatprep.subr.mxu0 0.0
        %7325 = vmatpush1.msra.mxu0 0.0
        %7326 = vmatprep.subr.mxu0 0.0
        %7327 = vmatpush1.msra.mxu0 0.0
        %7328 = vmatprep.subr.mxu0 0.0
        %7329 = vmatpush1.msra.mxu0 0.0
        %7330 = vmatprep.subr.mxu0 0.0
        %7331 = vmatpush1.msra.mxu0 0.0
        %7332 = vmatprep.subr.mxu0 0.0
        %7333 = vmatpush1.msra.mxu0 0.0
        %7334 = vmatprep.subr.mxu0 0.0
        %7335 = vmatpush1.msra.mxu0 0.0
        %7336 = vmatprep.subr.mxu0 0.0
        %7337 = vmatpush1.msra.mxu0 0.0
        %7338 = vmatprep.subr.mxu0 0.0
        %7339 = vmatpush1.msra.mxu0 0.0
        %7340 = vmatprep.subr.mxu0 0.0
        %7341 = vmatpush1.msra.mxu0 0.0
        %7342 = vmatprep.subr.mxu0 0.0
        %7343 = vmatpush1.msra.mxu0 0.0
        %7344 = vmatprep.subr.mxu0 0.0
        %7345 = vmatpush1.msra.mxu0 0.0
        %7346 = vmatprep.subr.mxu0 0.0
        %7347 = vmatpush1.msra.mxu0 0.0
        %7348 = vmatprep.subr.mxu0 0.0
        %7349 = vmatpush1.msra.mxu0 0.0
        %7350 = vmatprep.subr.mxu0 0.0
        %7351 = vmatpush1.msra.mxu0 0.0
        %7352 = vmatprep.subr.mxu0 0.0
        %7353 = vmatpush1.msra.mxu0 0.0
        %7354 = vmatprep.subr.mxu0 0.0
        %7355 = vmatpush1.msra.mxu0 0.0
        %7356 = vmatprep.subr.mxu0 0.0
        %7357 = vmatpush1.msra.mxu0 0.0
        %7358 = vmatprep.subr.mxu0 0.0
        %7359 = vmatpush1.msra.mxu0 0.0
        %7360 = vmatprep.subr.mxu0 0.0
        %7361 = vmatpush1.msra.mxu0 0.0
        %7362 = vmatprep.subr.mxu0 0.0
        %7363 = vmatpush1.msra.mxu0 0.0
        %7364 = vmatprep.subr.mxu0 0.0
        %7365 = vmatpush1.msra.mxu0 0.0
        %7366 = vmatprep.subr.mxu0 0.0
        %7367 = vmatpush1.msra.mxu0 0.0
        %7368 = vmatprep.subr.mxu0 0.0
        %7369 = vmatpush1.msra.mxu0 0.0
        %7370 = vmatprep.mubr.f32.mxu0 0.0
        %7371 = vmatmul.mubr.f32.gmra.mrb[0].mxu0 %v6799
        %v7372 = vpop.f32.mrb[0].mxu0
        %v7373 = vadd.f32 %v7304, %v7372
        %v7374 = vpop.f32.mrb[0].mxu0
        %7375 = vdwg.mxu0
        %v7376 = vxor.u32 %v7373, 2147483648
        %v7377 = vmul.f32 %v7376, 1.442695
        %v7378 = vpow.pop %v7377
        %v7379 = vadd.f32 %v7378, 1.0
        %v7380 = vrcp.pop %v7379
        %v7381 = vmul.f32 1.0, %v7380
        %v7383 = vlaneseq
        %v7384 = vshrl.u32 %v7383, 7
        %v7385 = vsub.s32 0, %v7384
        %v7386 = vrot.slane %v2601, %v7385
        %v7389 = vsel %vm7135, %v7381, 0
        %7391 = vmatprep.subr.mxu0 0.0
        %7392 = vmatpush1.msra.mxu0 %v2589
        %7393 = vmatprep.subr.mxu0 0.0
        %7394 = vmatpush1.msra.mxu0 %v2590
        %7395 = vmatprep.subr.mxu0 0.0
        %7396 = vmatpush1.msra.mxu0 %v2591
        %7397 = vmatprep.subr.mxu0 0.0
        %7398 = vmatpush1.msra.mxu0 %v2592
        %7399 = vmatprep.subr.mxu0 0.0
        %7400 = vmatpush1.msra.mxu0 %v2593
        %7401 = vmatprep.subr.mxu0 0.0
        %7402 = vmatpush1.msra.mxu0 %v2594
        %7403 = vmatprep.subr.mxu0 0.0
        %7404 = vmatpush1.msra.mxu0 %v2595
        %7405 = vmatprep.subr.mxu0 0.0
        %7406 = vmatpush1.msra.mxu0 %v2596
        %7407 = vmatprep.subr.mxu0 0.0
        %7408 = vmatpush1.msra.mxu0 %v2597
        %7409 = vmatprep.subr.mxu0 0.0
        %7410 = vmatpush1.msra.mxu0 %v2598
        %7411 = vmatprep.subr.mxu0 0.0
        %7412 = vmatpush1.msra.mxu0 %v2599
        %7413 = vmatprep.subr.mxu0 0.0
        %7414 = vmatpush1.msra.mxu0 %v2600
        %7415 = vmatprep.subr.mxu0 0.0
        %7416 = vmatpush1.msra.mxu0 0.0
        %7417 = vmatprep.subr.mxu0 0.0
        %7418 = vmatpush1.msra.mxu0 0.0
        %7419 = vmatprep.subr.mxu0 0.0
        %7420 = vmatpush1.msra.mxu0 0.0
        %7421 = vmatprep.subr.mxu0 0.0
        %7422 = vmatpush1.msra.mxu0 0.0
        %7423 = vmatprep.subr.mxu0 0.0
        %7424 = vmatpush1.msra.mxu0 0.0
        %7425 = vmatprep.subr.mxu0 0.0
        %7426 = vmatpush1.msra.mxu0 0.0
        %7427 = vmatprep.subr.mxu0 0.0
        %7428 = vmatpush1.msra.mxu0 0.0
        %7429 = vmatprep.subr.mxu0 0.0
        %7430 = vmatpush1.msra.mxu0 0.0
        %7431 = vmatprep.subr.mxu0 0.0
        %7432 = vmatpush1.msra.mxu0 0.0
        %7433 = vmatprep.subr.mxu0 0.0
        %7434 = vmatpush1.msra.mxu0 0.0
        %7435 = vmatprep.subr.mxu0 0.0
        %7436 = vmatpush1.msra.mxu0 0.0
        %7437 = vmatprep.subr.mxu0 0.0
        %7438 = vmatpush1.msra.mxu0 0.0
        %7439 = vmatprep.subr.mxu0 0.0
        %7440 = vmatpush1.msra.mxu0 0.0
        %7441 = vmatprep.subr.mxu0 0.0
        %7442 = vmatpush1.msra.mxu0 0.0
        %7443 = vmatprep.subr.mxu0 0.0
        %7444 = vmatpush1.msra.mxu0 0.0
        %7445 = vmatprep.subr.mxu0 0.0
        %7446 = vmatpush1.msra.mxu0 0.0
        %7447 = vmatprep.subr.mxu0 0.0
        %7448 = vmatpush1.msra.mxu0 0.0
        %7449 = vmatprep.subr.mxu0 0.0
        %7450 = vmatpush1.msra.mxu0 0.0
        %7451 = vmatprep.subr.mxu0 0.0
        %7452 = vmatpush1.msra.mxu0 0.0
        %7453 = vmatprep.subr.mxu0 0.0
        %7454 = vmatpush1.msra.mxu0 0.0
        %7455 = vmatprep.mubr.f32.mxu0 0.0
        %7456 = vmatmul.mubr.f32.gmra.mrb[0].mxu0 %v7389
        %v7457 = vpop.f32.mrb[0].mxu0
        %v7458 = vadd.f32 %v7386, %v7457
        %v7459 = vpop.f32.mrb[0].mxu0
        %7460 = vdwg.mxu0
        %v7461 = vxor.u32 %v7458, 2147483648
        %v7462 = vmul.f32 %v7461, 1.442695
        %v7463 = vpow.pop %v7462
        %v7464 = vadd.f32 %v7463, 1.0
        %v7465 = vrcp.pop %v7464
        %v7466 = vmul.f32 1.0, %v7465
        %v7468 = vlaneseq
        %v7469 = vshrl.u32 %v7468, 7
        %v7470 = vsub.s32 0, %v7469
        %v7471 = vrot.slane %v2614, %v7470
        %v7474 = vsel %vm7135, %v7466, 0
        %7476 = vmatprep.subr.mxu0 0.0
        %7477 = vmatpush1.msra.mxu0 %v2602
        %7478 = vmatprep.subr.mxu0 0.0
        %7479 = vmatpush1.msra.mxu0 %v2603
        %7480 = vmatprep.subr.mxu0 0.0
        %7481 = vmatpush1.msra.mxu0 %v2604
        %7482 = vmatprep.subr.mxu0 0.0
        %7483 = vmatpush1.msra.mxu0 %v2605
        %7484 = vmatprep.subr.mxu0 0.0
        %7485 = vmatpush1.msra.mxu0 %v2606
        %7486 = vmatprep.subr.mxu0 0.0
        %7487 = vmatpush1.msra.mxu0 %v2607
        %7488 = vmatprep.subr.mxu0 0.0
        %7489 = vmatpush1.msra.mxu0 %v2608
        %7490 = vmatprep.subr.mxu0 0.0
        %7491 = vmatpush1.msra.mxu0 %v2609
        %7492 = vmatprep.subr.mxu0 0.0
        %7493 = vmatpush1.msra.mxu0 %v2610
        %7494 = vmatprep.subr.mxu0 0.0
        %7495 = vmatpush1.msra.mxu0 %v2611
        %7496 = vmatprep.subr.mxu0 0.0
        %7497 = vmatpush1.msra.mxu0 %v2612
        %7498 = vmatprep.subr.mxu0 0.0
        %7499 = vmatpush1.msra.mxu0 %v2613
        %7500 = vmatprep.subr.mxu0 0.0
        %7501 = vmatpush1.msra.mxu0 0.0
        %7502 = vmatprep.subr.mxu0 0.0
        %7503 = vmatpush1.msra.mxu0 0.0
        %7504 = vmatprep.subr.mxu0 0.0
        %7505 = vmatpush1.msra.mxu0 0.0
        %7506 = vmatprep.subr.mxu0 0.0
        %7507 = vmatpush1.msra.mxu0 0.0
        %7508 = vmatprep.subr.mxu0 0.0
        %7509 = vmatpush1.msra.mxu0 0.0
        %7510 = vmatprep.subr.mxu0 0.0
        %7511 = vmatpush1.msra.mxu0 0.0
        %7512 = vmatprep.subr.mxu0 0.0
        %7513 = vmatpush1.msra.mxu0 0.0
        %7514 = vmatprep.subr.mxu0 0.0
        %7515 = vmatpush1.msra.mxu0 0.0
        %7516 = vmatprep.subr.mxu0 0.0
        %7517 = vmatpush1.msra.mxu0 0.0
        %7518 = vmatprep.subr.mxu0 0.0
        %7519 = vmatpush1.msra.mxu0 0.0
        %7520 = vmatprep.subr.mxu0 0.0
        %7521 = vmatpush1.msra.mxu0 0.0
        %7522 = vmatprep.subr.mxu0 0.0
        %7523 = vmatpush1.msra.mxu0 0.0
        %7524 = vmatprep.subr.mxu0 0.0
        %7525 = vmatpush1.msra.mxu0 0.0
        %7526 = vmatprep.subr.mxu0 0.0
        %7527 = vmatpush1.msra.mxu0 0.0
        %7528 = vmatprep.subr.mxu0 0.0
        %7529 = vmatpush1.msra.mxu0 0.0
        %7530 = vmatprep.subr.mxu0 0.0
        %7531 = vmatpush1.msra.mxu0 0.0
        %7532 = vmatprep.subr.mxu0 0.0
        %7533 = vmatpush1.msra.mxu0 0.0
        %7534 = vmatprep.subr.mxu0 0.0
        %7535 = vmatpush1.msra.mxu0 0.0
        %7536 = vmatprep.subr.mxu0 0.0
        %7537 = vmatpush1.msra.mxu0 0.0
        %7538 = vmatprep.subr.mxu0 0.0
        %7539 = vmatpush1.msra.mxu0 0.0
        %7540 = vmatprep.mubr.f32.mxu0 0.0
        %7541 = vmatmul.mubr.f32.gmra.mrb[0].mxu0 %v7474
        %v7542 = vpop.f32.mrb[0].mxu0
        %v7543 = vadd.f32 %v7471, %v7542
        %v7544 = vpop.f32.mrb[0].mxu0
        %7545 = vdwg.mxu0
        %v7546 = vxor.u32 %v7543, 2147483648
        %v7547 = vmul.f32 %v7546, 1.442695
        %v7548 = vpow.pop %v7547
        %v7549 = vadd.f32 %v7548, 1.0
        %v7550 = vrcp.pop %v7549
        %v7551 = vmul.f32 1.0, %v7550
        %v7553 = vsel %vm7135, %v7299, 0
        %7555 = vmatprep.subr.mxu0 0.0
        %7556 = vmatpush1.msra.mxu0 %v2649
        %7557 = vmatprep.subr.mxu0 0.0
        %7558 = vmatpush1.msra.mxu0 %v2650
        %7559 = vmatprep.subr.mxu0 0.0
        %7560 = vmatpush1.msra.mxu0 %v2651
        %7561 = vmatprep.subr.mxu0 0.0
        %7562 = vmatpush1.msra.mxu0 %v2652
        %7563 = vmatprep.subr.mxu0 0.0
        %7564 = vmatpush1.msra.mxu0 %v2653
        %7565 = vmatprep.subr.mxu0 0.0
        %7566 = vmatpush1.msra.mxu0 %v2654
        %7567 = vmatprep.subr.mxu0 0.0
        %7568 = vmatpush1.msra.mxu0 %v2655
        %7569 = vmatprep.subr.mxu0 0.0
        %7570 = vmatpush1.msra.mxu0 %v2656
        %7571 = vmatprep.subr.mxu0 0.0
        %7572 = vmatpush1.msra.mxu0 %v2657
        %7573 = vmatprep.subr.mxu0 0.0
        %7574 = vmatpush1.msra.mxu0 %v2658
        %7575 = vmatprep.subr.mxu0 0.0
        %7576 = vmatpush1.msra.mxu0 %v2659
        %7577 = vmatprep.subr.mxu0 0.0
        %7578 = vmatpush1.msra.mxu0 %v2660
        %7579 = vmatprep.subr.mxu0 0.0
        %7580 = vmatpush1.msra.mxu0 0.0
        %7581 = vmatprep.subr.mxu0 0.0
        %7582 = vmatpush1.msra.mxu0 0.0
        %7583 = vmatprep.subr.mxu0 0.0
        %7584 = vmatpush1.msra.mxu0 0.0
        %7585 = vmatprep.subr.mxu0 0.0
        %7586 = vmatpush1.msra.mxu0 0.0
        %7587 = vmatprep.subr.mxu0 0.0
        %7588 = vmatpush1.msra.mxu0 0.0
        %7589 = vmatprep.subr.mxu0 0.0
        %7590 = vmatpush1.msra.mxu0 0.0
        %7591 = vmatprep.subr.mxu0 0.0
        %7592 = vmatpush1.msra.mxu0 0.0
        %7593 = vmatprep.subr.mxu0 0.0
        %7594 = vmatpush1.msra.mxu0 0.0
        %7595 = vmatprep.subr.mxu0 0.0
        %7596 = vmatpush1.msra.mxu0 0.0
        %7597 = vmatprep.subr.mxu0 0.0
        %7598 = vmatpush1.msra.mxu0 0.0
        %7599 = vmatprep.subr.mxu0 0.0
        %7600 = vmatpush1.msra.mxu0 0.0
        %7601 = vmatprep.subr.mxu0 0.0
        %7602 = vmatpush1.msra.mxu0 0.0
        %7603 = vmatprep.subr.mxu0 0.0
        %7604 = vmatpush1.msra.mxu0 0.0
        %7605 = vmatprep.subr.mxu0 0.0
        %7606 = vmatpush1.msra.mxu0 0.0
        %7607 = vmatprep.subr.mxu0 0.0
        %7608 = vmatpush1.msra.mxu0 0.0
        %7609 = vmatprep.subr.mxu0 0.0
        %7610 = vmatpush1.msra.mxu0 0.0
        %7611 = vmatprep.subr.mxu0 0.0
        %7612 = vmatpush1.msra.mxu0 0.0
        %7613 = vmatprep.subr.mxu0 0.0
        %7614 = vmatpush1.msra.mxu0 0.0
        %7615 = vmatprep.subr.mxu0 0.0
        %7616 = vmatpush1.msra.mxu0 0.0
        %7617 = vmatprep.subr.mxu0 0.0
        %7618 = vmatpush1.msra.mxu0 0.0
        %7619 = vmatprep.mubr.f32.mxu0 0.0
        %7620 = vmatmul.mubr.f32.gmra.mrb[0].mxu0 %v7553
        %v7621 = vpop.f32.mrb[0].mxu0
        %v7622 = vadd.f32 0.0, %v7621
        %v7623 = vpop.f32.mrb[0].mxu0
        %7624 = vdwg.mxu0
        %v7626 = vsel %vm2690, %v7046, 0
        %7628 = vmatprep.subr.mxu0 0.0
        %7629 = vmatpush1.msra.mxu0 %v2661
        %7630 = vmatprep.subr.mxu0 0.0
        %7631 = vmatpush1.msra.mxu0 %v2662
        %7632 = vmatprep.subr.mxu0 0.0
        %7633 = vmatpush1.msra.mxu0 %v2663
        %7634 = vmatprep.subr.mxu0 0.0
        %7635 = vmatpush1.msra.mxu0 %v2664
        %7636 = vmatprep.subr.mxu0 0.0
        %7637 = vmatpush1.msra.mxu0 0.0
        %7638 = vmatprep.subr.mxu0 0.0
        %7639 = vmatpush1.msra.mxu0 0.0
        %7640 = vmatprep.subr.mxu0 0.0
        %7641 = vmatpush1.msra.mxu0 0.0
        %7642 = vmatprep.subr.mxu0 0.0
        %7643 = vmatpush1.msra.mxu0 0.0
        %7644 = vmatprep.subr.mxu0 0.0
        %7645 = vmatpush1.msra.mxu0 0.0
        %7646 = vmatprep.subr.mxu0 0.0
        %7647 = vmatpush1.msra.mxu0 0.0
        %7648 = vmatprep.subr.mxu0 0.0
        %7649 = vmatpush1.msra.mxu0 0.0
        %7650 = vmatprep.subr.mxu0 0.0
        %7651 = vmatpush1.msra.mxu0 0.0
        %7652 = vmatprep.subr.mxu0 0.0
        %7653 = vmatpush1.msra.mxu0 0.0
        %7654 = vmatprep.subr.mxu0 0.0
        %7655 = vmatpush1.msra.mxu0 0.0
        %7656 = vmatprep.subr.mxu0 0.0
        %7657 = vmatpush1.msra.mxu0 0.0
        %7658 = vmatprep.subr.mxu0 0.0
        %7659 = vmatpush1.msra.mxu0 0.0
        %7660 = vmatprep.subr.mxu0 0.0
        %7661 = vmatpush1.msra.mxu0 0.0
        %7662 = vmatprep.subr.mxu0 0.0
        %7663 = vmatpush1.msra.mxu0 0.0
        %7664 = vmatprep.subr.mxu0 0.0
        %7665 = vmatpush1.msra.mxu0 0.0
        %7666 = vmatprep.subr.mxu0 0.0
        %7667 = vmatpush1.msra.mxu0 0.0
        %7668 = vmatprep.subr.mxu0 0.0
        %7669 = vmatpush1.msra.mxu0 0.0
        %7670 = vmatprep.subr.mxu0 0.0
        %7671 = vmatpush1.msra.mxu0 0.0
        %7672 = vmatprep.subr.mxu0 0.0
        %7673 = vmatpush1.msra.mxu0 0.0
        %7674 = vmatprep.subr.mxu0 0.0
        %7675 = vmatpush1.msra.mxu0 0.0
        %7676 = vmatprep.subr.mxu0 0.0
        %7677 = vmatpush1.msra.mxu0 0.0
        %7678 = vmatprep.subr.mxu0 0.0
        %7679 = vmatpush1.msra.mxu0 0.0
        %7680 = vmatprep.subr.mxu0 0.0
        %7681 = vmatpush1.msra.mxu0 0.0
        %7682 = vmatprep.subr.mxu0 0.0
        %7683 = vmatpush1.msra.mxu0 0.0
        %7684 = vmatprep.subr.mxu0 0.0
        %7685 = vmatpush1.msra.mxu0 0.0
        %7686 = vmatprep.subr.mxu0 0.0
        %7687 = vmatpush1.msra.mxu0 0.0
        %7688 = vmatprep.subr.mxu0 0.0
        %7689 = vmatpush1.msra.mxu0 0.0
        %7690 = vmatprep.subr.mxu0 0.0
        %7691 = vmatpush1.msra.mxu0 0.0
        %7692 = vmatprep.mubr.f32.mxu0 0.0
        %7693 = vmatmul.mubr.f32.gmra.mrb[0].mxu0 %v7626
        %v7694 = vpop.f32.mrb[0].mxu0
        %v7695 = vadd.f32 %v7622, %v7694
        %v7696 = vpop.f32.mrb[0].mxu0
        %7697 = vdwg.mxu0
        %v7699 = vsel %vm7135, %v7551, 0
        %7701 = vmatprep.subr.mxu0 0.0
        %7702 = vmatpush1.msra.mxu0 %v2665
        %7703 = vmatprep.subr.mxu0 0.0
        %7704 = vmatpush1.msra.mxu0 %v2666
        %7705 = vmatprep.subr.mxu0 0.0
        %7706 = vmatpush1.msra.mxu0 %v2667
        %7707 = vmatprep.subr.mxu0 0.0
        %7708 = vmatpush1.msra.mxu0 %v2668
        %7709 = vmatprep.subr.mxu0 0.0
        %7710 = vmatpush1.msra.mxu0 %v2669
        %7711 = vmatprep.subr.mxu0 0.0
        %7712 = vmatpush1.msra.mxu0 %v2670
        %7713 = vmatprep.subr.mxu0 0.0
        %7714 = vmatpush1.msra.mxu0 %v2671
        %7715 = vmatprep.subr.mxu0 0.0
        %7716 = vmatpush1.msra.mxu0 %v2672
        %7717 = vmatprep.subr.mxu0 0.0
        %7718 = vmatpush1.msra.mxu0 %v2673
        %7719 = vmatprep.subr.mxu0 0.0
        %7720 = vmatpush1.msra.mxu0 %v2674
        %7721 = vmatprep.subr.mxu0 0.0
        %7722 = vmatpush1.msra.mxu0 %v2675
        %7723 = vmatprep.subr.mxu0 0.0
        %7724 = vmatpush1.msra.mxu0 %v2676
        %7725 = vmatprep.subr.mxu0 0.0
        %7726 = vmatpush1.msra.mxu0 0.0
        %7727 = vmatprep.subr.mxu0 0.0
        %7728 = vmatpush1.msra.mxu0 0.0
        %7729 = vmatprep.subr.mxu0 0.0
        %7730 = vmatpush1.msra.mxu0 0.0
        %7731 = vmatprep.subr.mxu0 0.0
        %7732 = vmatpush1.msra.mxu0 0.0
        %7733 = vmatprep.subr.mxu0 0.0
        %7734 = vmatpush1.msra.mxu0 0.0
        %7735 = vmatprep.subr.mxu0 0.0
        %7736 = vmatpush1.msra.mxu0 0.0
        %7737 = vmatprep.subr.mxu0 0.0
        %7738 = vmatpush1.msra.mxu0 0.0
        %7739 = vmatprep.subr.mxu0 0.0
        %7740 = vmatpush1.msra.mxu0 0.0
        %7741 = vmatprep.subr.mxu0 0.0
        %7742 = vmatpush1.msra.mxu0 0.0
        %7743 = vmatprep.subr.mxu0 0.0
        %7744 = vmatpush1.msra.mxu0 0.0
        %7745 = vmatprep.subr.mxu0 0.0
        %7746 = vmatpush1.msra.mxu0 0.0
        %7747 = vmatprep.subr.mxu0 0.0
        %7748 = vmatpush1.msra.mxu0 0.0
        %7749 = vmatprep.subr.mxu0 0.0
        %7750 = vmatpush1.msra.mxu0 0.0
        %7751 = vmatprep.subr.mxu0 0.0
        %7752 = vmatpush1.msra.mxu0 0.0
        %7753 = vmatprep.subr.mxu0 0.0
        %7754 = vmatpush1.msra.mxu0 0.0
        %7755 = vmatprep.subr.mxu0 0.0
        %7756 = vmatpush1.msra.mxu0 0.0
        %7757 = vmatprep.subr.mxu0 0.0
        %7758 = vmatpush1.msra.mxu0 0.0
        %7759 = vmatprep.subr.mxu0 0.0
        %7760 = vmatpush1.msra.mxu0 0.0
        %7761 = vmatprep.subr.mxu0 0.0
        %7762 = vmatpush1.msra.mxu0 0.0
        %7763 = vmatprep.subr.mxu0 0.0
        %7764 = vmatpush1.msra.mxu0 0.0
        %7765 = vmatprep.mubr.f32.mxu0 0.0
        %7766 = vmatmul.mubr.f32.gmra.mrb[0].mxu0 %v7699
        %v7767 = vpop.f32.mrb[0].mxu0
        %v7768 = vadd.f32 0.0, %v7767
        %v7769 = vpop.f32.mrb[0].mxu0
        %7770 = vdwg.mxu0
        %v7771 = vadd.f32 %v7695, %v7768
        %v7773 = vlaneseq
        %v7774 = vshrl.u32 %v7773, 7
        %v7775 = vsub.s32 0, %v7774
        %v7776 = vrot.slane %v2648, %v7775
        %v7778 = vadd.f32 %v7771, %v7776
        %7779 = vst [vmem:[%s2487] sm:$0xff] %v7778
        %p7780 = scmp.lt.s32.totalorder %s161, 1
        %s7781 = scalar_select %p7780, %s161, 1
        %s7782 = smul.addr %s7781, 8
        %s7783 = scalar_lea.vmem %s123, %s7782
        // Predicated region
        $region473: #{detection_forward.1} parent=263 // pred_check
          %p7784 = pneg %p1465
        $region474: #{detection_forward.1} parent=263 // pred_check_branch
          %7786 = sbr.rel (%p7784) target = $region476
        $region475: #{detection_forward.1} parent=263 // pred_region
          _
        $region476: #{detection_forward.1} parent=263 // pred_fallthru
          _
      $region264: #{detection_forward.1} parent=5 // pred_fallthru
        _
      %p7787 = scmp.le.s32.totalorder 2, %s156
      // Predicated region
      $region477: #{detection_forward.1} parent=5 // pred_check
        %p7788 = pneg %p7787
      $region478: #{detection_forward.1} parent=5 // pred_check_branch
        %7790 = sbr.rel (%p7788) target = $region480
      $region479: #{detection_forward.1} parent=5 // pred_region
        %s7791 = ssub.s32 %s156, 2
        // Predicated region
        $region481: #{detection_forward.1} parent=479 // pred_check
          %p7792 = pneg %p1471
        $region482: #{detection_forward.1} parent=479 // pred_check_branch
          %7794 = sbr.rel (%p7792) target = $region484
        $region483: #{detection_forward.1} parent=479 // pred_region
          %p7795 = scmp.lt.s32.totalorder %s162, 1
          %s7796 = scalar_select %p7795, %s162, 1
          %s7797 = smul.addr %s7796, 8
          %s7798 = scalar_lea.vmem %s123, %s7797
        $region484: #{detection_forward.1} parent=479 // pred_fallthru
          _
      $region480: #{detection_forward.1} parent=5 // pred_fallthru
        _
    $region6: #{detection_forward.1} parent=1 // loop_footer
      %s160 = sadd.s32 1, %s156
    $region7: #{detection_forward.1} parent=1 // loop_footer_branch
      %155 = sbr.rel target = $region3
    $region8: #{detection_forward.1} parent=1 // loop_exit
      _
    %7799 = vsyncpa [#allocation3], 1
    %s7800 = scalar_lea.sflag [#allocation3], 1
    %7801 = vsyncpa %s7800, 1
    %7802 = vsyncpa [#allocation5], 1
    %7803 = vsyncpa [#allocation8], 1
    %7804 = vsyncpa [#allocation11], 1
    %7805 = vsyncpa [#allocation14], 1
    %7806 = vsyncpa [#allocation17], 1
    %7807 = vsyncpa [#allocation20], 1
    %7808 = vsyncpa [#allocation23], 1
    %7809 = vsyncpa [#allocation26], 1
    %7810 = vsyncpa [#allocation29], 1
    %7811 = vsyncpa [#allocation32], 1
    %7812 = vsyncpa [#allocation35], 1
    %7813 = vsyncpa [#allocation38], 1
    %7814 = vsyncpa [#allocation41], 1
    %7815 = vsyncpa [#allocation44], 1
    %7816 = vsyncpa [#allocation47], 1
    %7817 = vsyncpa [#allocation50], 1
    %7818 = vsyncpa [#allocation53], 1
    %7819 = vsyncpa [#allocation56], 1
    %7820 = vsyncpa [#allocation59], 1
    %7821 = vsyncpa [#allocation62], 1
    %7822 = vsyncpa [#allocation65], 1
    %7823 = vsyncpa [#allocation68], 1
    %7824 = vsyncpa [#allocation71], 1
    %7825 = vsyncpa [#allocation74], 1
    %7826 = vsyncpa [#allocation77], 1
    %7827 = vsyncpa [#allocation80], 1

</llo_original>
